<compile_context>
chip_gen: v6e
topology: v6e:2x2x1
jax: 0.10.0
libtpu: 0.0.40
codegen_flags: <defaults>
</compile_context>

<pallas_src>
import jax
import jax.numpy as jnp
from jax.experimental import pallas as pl
from jax.experimental.pallas import tpu as pltpu

VOCAB = 16       # vocab size (small, synthetic)
HIDDEN = 256     # hidden_size: matches the original module; lane-dense (2 x 128)
SEQ_LEN = 8      # tokens processed per pallas_call


def gru_seq_kernel(tok_ref, emb_ref, wih_ref, whh_ref, bgi_ref, bhhn_ref, h0_ref,
                   out_ref, x_scr, gi_scr):
    """Whole-sequence GRU (PyTorch nn.GRU, gate order r, z, n) in one program.

    Phase 1: gather embedding rows for all T tokens (tokens in SMEM).
    Phase 2: batched input projection GI = X @ Wih_all + b   (one M=T matmul).
    Phase 3: fully-unrolled serial recurrence; one fused (1,H)x(H,3H) matmul,
             f32 gate math, per-step row write into the VMEM-resident output.
    """
    T, H = out_ref.shape

    # --- Phase 1: fused embedding gather (dynamic row index from SMEM) --------
    for t in range(T):                                   # static trip count
        tok = tok_ref[t]                                 # scalar int32 (SMEM)
        x_scr[pl.ds(t, 1), :] = emb_ref[pl.ds(tok, 1), :]

    # --- Phase 2: batched input projection over all timesteps -----------------
    gi_scr[...] = (
        jnp.dot(x_scr[...].astype(wih_ref.dtype), wih_ref[...],
                preferred_element_type=jnp.float32)
        + bgi_ref[...])

    # --- Phase 3: serial recurrence, fully unrolled ---------------------------
    h = h0_ref[...]                                      # (1, H) f32, loop-carried value
    for t in range(T):
        gi = gi_scr[pl.ds(t, 1), :]                      # (1, 3H) f32, static slice
        gh = jnp.dot(h.astype(whh_ref.dtype), whh_ref[...],
                     preferred_element_type=jnp.float32)  # (1, 3H) f32
        r = jax.nn.sigmoid(gi[:, 0 * H:1 * H] + gh[:, 0 * H:1 * H])
        z = jax.nn.sigmoid(gi[:, 1 * H:2 * H] + gh[:, 1 * H:2 * H])
        n = jnp.tanh(gi[:, 2 * H:3 * H] + r * (gh[:, 2 * H:3 * H] + bhhn_ref[...]))
        h = (1.0 - z) * n + z * h
        out_ref[pl.ds(t, 1), :] = h.astype(out_ref.dtype)


@jax.jit
def gru_sequence_pallas(tokens, emb, wih_all, whh_all, bias_gi, bhh_n, h0):
    """tokens: (T,) int32, emb: (V,H) f32, h0: (1,H) f32 -> all hidden states (T,H) f32."""
    T = tokens.shape[0]
    V, H = emb.shape
    resident = lambda shape: pl.BlockSpec(shape, lambda i, tok: (0,) * len(shape))
    return pl.pallas_call(
        gru_seq_kernel,
        out_shape=jax.ShapeDtypeStruct((T, H), jnp.float32),
        grid_spec=pltpu.PrefetchScalarGridSpec(
            num_scalar_prefetch=1,          # tokens -> SMEM
            grid=(1,),                      # single program: recurrence is in-kernel
            in_specs=[
                resident((V, H)),           # embedding table (f32), VMEM-resident
                resident((H, 3 * H)),       # Wih_all (bf16), VMEM-resident
                resident((H, 3 * H)),       # Whh_all (bf16), VMEM-resident
                resident((1, 3 * H)),       # fused gi bias (f32)
                resident((1, H)),           # b_hh_n (f32)
                resident((1, H)),           # h0 (f32)
            ],
            out_specs=pl.BlockSpec((T, H), lambda i, tok: (0, 0)),
            scratch_shapes=[
                pltpu.VMEM((T, H), jnp.float32),       # gathered embeddings X
                pltpu.VMEM((T, 3 * H), jnp.float32),   # GI for the whole sequence
            ]),
    )(tokens, emb, wih_all, whh_all, bias_gi, bhh_n, h0)


class EncoderRNNPallas:
    """JAX/Pallas port of EncoderRNN; one pallas_call processes a whole sequence."""

    def __init__(self, input_size, hidden_size, key):
        self.hidden_size = hidden_size
        H = hidden_size
        k_emb, k_wih, k_whh, k_bih, k_bhh = jax.random.split(key, 5)
        bound = 1.0 / jnp.sqrt(H)
        # nn.Embedding(input_size, H): N(0, 1) init.
        self.embedding = jax.random.normal(k_emb, (input_size, H), jnp.float32)
        # nn.GRU weights, PyTorch chunking (gate order r, z, n), U(-1/sqrt(H), 1/sqrt(H)).
        wih = jax.random.uniform(k_wih, (3, H, H), minval=-bound, maxval=bound)
        whh = jax.random.uniform(k_whh, (3, H, H), minval=-bound, maxval=bound)
        bih = jax.random.uniform(k_bih, (3, H), minval=-bound, maxval=bound)
        bhh = jax.random.uniform(k_bhh, (3, H), minval=-bound, maxval=bound)
        # Fused, transposed, bf16 layout: (H_in, 3H_out), gate columns [r | z | n].
        # (bf16 weights are MXU-native; accumulation stays f32. For very long
        #  sequences where recurrence drift matters, keep Whh in f32 instead.)
        self.wih_all = jnp.concatenate([wih[g].T for g in range(3)],
                                       axis=1).astype(jnp.bfloat16)
        self.whh_all = jnp.concatenate([whh[g].T for g in range(3)],
                                       axis=1).astype(jnp.bfloat16)
        # Folded gi bias: [b_ir + b_hr | b_iz + b_hz | b_in]; b_hn stays separate.
        self.bias_gi = jnp.concatenate(
            [bih[0] + bhh[0], bih[1] + bhh[1], bih[2]],
            axis=0).reshape(1, 3 * H).astype(jnp.float32)
        self.bhh_n = bhh[2].reshape(1, H).astype(jnp.float32)

    def init_hidden(self):
        return jnp.zeros((1, 1, self.hidden_size), jnp.float32)

    def encode(self, tokens, hidden):
        """Run the GRU over a token sequence (equivalent to T PyTorch forward calls).

        Returns (outputs (T, 1, H), final hidden (1, 1, H)); outputs[t] is the
        hidden state after consuming tokens[t].
        """
        H = self.hidden_size
        tokens = jnp.asarray(tokens, jnp.int32)
        h0 = hidden.reshape(1, H).astype(jnp.float32)
        outs = gru_sequence_pallas(tokens, self.embedding, self.wih_all,
                                   self.whh_all, self.bias_gi, self.bhh_n, h0)
        T = outs.shape[0]
        return outs.reshape(T, 1, H), outs[-1].reshape(1, 1, H)

    def __call__(self, token_id, hidden):
        """Single-token forward, matching EncoderRNN.forward(input, hidden).

        Note: per-token launches are dominated by dispatch overhead; prefer
        encode() over whole sequences when possible.
        """
        out, h_new = self.encode(jnp.atleast_1d(token_id), hidden)
        return out[0:1], h_new


def _reference_encode(tokens, emb, h0, wih_all, whh_all, bias_gi, bhh_n):
    """Pure-JAX reference (same bf16 weights / f32 accumulation) for verification."""
    H = h0.shape[-1]
    x = emb[tokens]                                               # (T, H) f32 gather
    gi_all = jnp.dot(x.astype(wih_all.dtype), wih_all,
                     preferred_element_type=jnp.float32) + bias_gi
    h = h0
    outs = []
    for t in range(x.shape[0]):
        gi = gi_all[t:t + 1]
        gh = jnp.dot(h.astype(whh_all.dtype), whh_all,
                     preferred_element_type=jnp.float32)
        r = jax.nn.sigmoid(gi[:, :H] + gh[:, :H])
        z = jax.nn.sigmoid(gi[:, H:2 * H] + gh[:, H:2 * H])
        n = jnp.tanh(gi[:, 2 * H:] + r * (gh[:, 2 * H:] + bhh_n))
        h = (1.0 - z) * n + z * h
        outs.append(h)
    return jnp.concatenate(outs, axis=0)


if __name__ == "__main__":
    key = jax.random.PRNGKey(0)
    k_params, k_tok = jax.random.split(key)
    enc = EncoderRNNPallas(VOCAB, HIDDEN, k_params)

    tokens = jax.random.randint(k_tok, (SEQ_LEN,), 0, VOCAB, dtype=jnp.int32)
    hidden = enc.init_hidden()                       # (1, 1, H) zeros

    outputs, final_hidden = enc.encode(tokens, hidden)
    outputs = jax.block_until_ready(outputs)
    final_hidden = jax.block_until_ready(final_hidden)

    # Correctness check against the pure-JAX GRU recurrence.
    h0 = hidden.reshape(1, HIDDEN)
    ref = _reference_encode(tokens, enc.embedding, h0, enc.wih_all, enc.whh_all,
                            enc.bias_gi, enc.bhh_n)

    assert outputs.shape == (SEQ_LEN, 1, HIDDEN)
    assert final_hidden.shape == (1, 1, HIDDEN)
    assert jnp.allclose(outputs.reshape(SEQ_LEN, HIDDEN), ref,
                        atol=2e-3, rtol=2e-3)
    assert jnp.allclose(final_hidden.reshape(1, HIDDEN), ref[-1:],
                        atol=2e-3, rtol=2e-3)

    # Single-token forward keeps the original per-call module semantics.
    out1, h1 = enc(tokens[0], hidden)
    out1 = jax.block_until_ready(out1)
    assert out1.shape == (1, 1, HIDDEN) and h1.shape == (1, 1, HIDDEN)
    assert jnp.allclose(out1.reshape(1, HIDDEN), ref[0:1], atol=2e-3, rtol=2e-3)
    assert jnp.allclose(h1.reshape(1, HIDDEN), ref[0:1], atol=2e-3, rtol=2e-3)

    print("KERNEL_OK")
</pallas_src>

<mosaic_0001>
module attributes {stable_mosaic.version = 11 : i64} {
  func.func @gru_seq_kernel(%arg0: i32, %arg1: memref<8xi32, #tpu.memory_space<smem>>, %arg2: memref<16x256xf32, #tpu.memory_space<vmem>>, %arg3: memref<256x768xbf16, #tpu.memory_space<vmem>>, %arg4: memref<256x768xbf16, #tpu.memory_space<vmem>>, %arg5: memref<1x768xf32, #tpu.memory_space<vmem>>, %arg6: memref<1x256xf32, #tpu.memory_space<vmem>>, %arg7: memref<1x256xf32, #tpu.memory_space<vmem>>, %arg8: memref<8x256xf32, #tpu.memory_space<vmem>>, %arg9: memref<8x256xf32, #tpu.memory_space<vmem>>, %arg10: memref<8x768xf32, #tpu.memory_space<vmem>>) attributes {dimension_semantics = [#tpu.dimension_semantics<arbitrary>], iteration_bounds = array<i64: 1>, scalar_prefetch = 1 : i64, scratch_operands = 2 : i64, tpu.core_type = #tpu.core_type<tc>, window_params = [{pipeline_mode = #tpu.pipeline_mode<synchronous>, transform_indices = @transform_0, window_bounds = array<i64: 16, 256>}, {pipeline_mode = #tpu.pipeline_mode<synchronous>, transform_indices = @transform_1, window_bounds = array<i64: 256, 768>}, {pipeline_mode = #tpu.pipeline_mode<synchronous>, transform_indices = @transform_2, window_bounds = array<i64: 256, 768>}, {pipeline_mode = #tpu.pipeline_mode<synchronous>, transform_indices = @transform_3, window_bounds = array<i64: 1, 768>}, {pipeline_mode = #tpu.pipeline_mode<synchronous>, transform_indices = @transform_4, window_bounds = array<i64: 1, 256>}, {pipeline_mode = #tpu.pipeline_mode<synchronous>, transform_indices = @transform_5, window_bounds = array<i64: 1, 256>}, {pipeline_mode = #tpu.pipeline_mode<synchronous>, transform_indices = @transform_6, window_bounds = array<i64: 8, 256>}]} {
    %c0 = arith.constant 0 : index
    %0 = memref.load %arg1[%c0] : memref<8xi32, #tpu.memory_space<smem>>
    %1 = arith.index_cast %0 : i32 to index
    %c0_0 = arith.constant 0 : index
    %2 = vector.load %arg2[%1, %c0_0] : memref<16x256xf32, #tpu.memory_space<vmem>>, vector<1x256xf32>
    %c0_1 = arith.constant 0 : index
    %c0_2 = arith.constant 0 : index
    %3 = vector.load %arg9[%c0_1, %c0_2] : memref<8x256xf32, #tpu.memory_space<vmem>>, vector<1x256xf32>
    tpu.vector_store %arg9[%c0_1, %c0_2], %2 {strides = array<i32>} : memref<8x256xf32, #tpu.memory_space<vmem>>, vector<1x256xf32>,
    %c1 = arith.constant 1 : index
    %4 = memref.load %arg1[%c1] : memref<8xi32, #tpu.memory_space<smem>>
    %5 = arith.index_cast %4 : i32 to index
    %c0_3 = arith.constant 0 : index
    %6 = vector.load %arg2[%5, %c0_3] : memref<16x256xf32, #tpu.memory_space<vmem>>, vector<1x256xf32>
    %c1_4 = arith.constant 1 : index
    %c0_5 = arith.constant 0 : index
    %7 = vector.load %arg9[%c1_4, %c0_5] : memref<8x256xf32, #tpu.memory_space<vmem>>, vector<1x256xf32>
    tpu.vector_store %arg9[%c1_4, %c0_5], %6 {strides = array<i32>} : memref<8x256xf32, #tpu.memory_space<vmem>>, vector<1x256xf32>,
    %c2 = arith.constant 2 : index
    %8 = memref.load %arg1[%c2] : memref<8xi32, #tpu.memory_space<smem>>
    %9 = arith.index_cast %8 : i32 to index
    %c0_6 = arith.constant 0 : index
    %10 = vector.load %arg2[%9, %c0_6] : memref<16x256xf32, #tpu.memory_space<vmem>>, vector<1x256xf32>
    %c2_7 = arith.constant 2 : index
    %c0_8 = arith.constant 0 : index
    %11 = vector.load %arg9[%c2_7, %c0_8] : memref<8x256xf32, #tpu.memory_space<vmem>>, vector<1x256xf32>
    tpu.vector_store %arg9[%c2_7, %c0_8], %10 {strides = array<i32>} : memref<8x256xf32, #tpu.memory_space<vmem>>, vector<1x256xf32>,
    %c3 = arith.constant 3 : index
    %12 = memref.load %arg1[%c3] : memref<8xi32, #tpu.memory_space<smem>>
    %13 = arith.index_cast %12 : i32 to index
    %c0_9 = arith.constant 0 : index
    %14 = vector.load %arg2[%13, %c0_9] : memref<16x256xf32, #tpu.memory_space<vmem>>, vector<1x256xf32>
    %c3_10 = arith.constant 3 : index
    %c0_11 = arith.constant 0 : index
    %15 = vector.load %arg9[%c3_10, %c0_11] : memref<8x256xf32, #tpu.memory_space<vmem>>, vector<1x256xf32>
    tpu.vector_store %arg9[%c3_10, %c0_11], %14 {strides = array<i32>} : memref<8x256xf32, #tpu.memory_space<vmem>>, vector<1x256xf32>,
    %c4 = arith.constant 4 : index
    %16 = memref.load %arg1[%c4] : memref<8xi32, #tpu.memory_space<smem>>
    %17 = arith.index_cast %16 : i32 to index
    %c0_12 = arith.constant 0 : index
    %18 = vector.load %arg2[%17, %c0_12] : memref<16x256xf32, #tpu.memory_space<vmem>>, vector<1x256xf32>
    %c4_13 = arith.constant 4 : index
    %c0_14 = arith.constant 0 : index
    %19 = vector.load %arg9[%c4_13, %c0_14] : memref<8x256xf32, #tpu.memory_space<vmem>>, vector<1x256xf32>
    tpu.vector_store %arg9[%c4_13, %c0_14], %18 {strides = array<i32>} : memref<8x256xf32, #tpu.memory_space<vmem>>, vector<1x256xf32>,
    %c5 = arith.constant 5 : index
    %20 = memref.load %arg1[%c5] : memref<8xi32, #tpu.memory_space<smem>>
    %21 = arith.index_cast %20 : i32 to index
    %c0_15 = arith.constant 0 : index
    %22 = vector.load %arg2[%21, %c0_15] : memref<16x256xf32, #tpu.memory_space<vmem>>, vector<1x256xf32>
    %c5_16 = arith.constant 5 : index
    %c0_17 = arith.constant 0 : index
    %23 = vector.load %arg9[%c5_16, %c0_17] : memref<8x256xf32, #tpu.memory_space<vmem>>, vector<1x256xf32>
    tpu.vector_store %arg9[%c5_16, %c0_17], %22 {strides = array<i32>} : memref<8x256xf32, #tpu.memory_space<vmem>>, vector<1x256xf32>,
    %c6 = arith.constant 6 : index
    %24 = memref.load %arg1[%c6] : memref<8xi32, #tpu.memory_space<smem>>
    %25 = arith.index_cast %24 : i32 to index
    %c0_18 = arith.constant 0 : index
    %26 = vector.load %arg2[%25, %c0_18] : memref<16x256xf32, #tpu.memory_space<vmem>>, vector<1x256xf32>
    %c6_19 = arith.constant 6 : index
    %c0_20 = arith.constant 0 : index
    %27 = vector.load %arg9[%c6_19, %c0_20] : memref<8x256xf32, #tpu.memory_space<vmem>>, vector<1x256xf32>
    tpu.vector_store %arg9[%c6_19, %c0_20], %26 {strides = array<i32>} : memref<8x256xf32, #tpu.memory_space<vmem>>, vector<1x256xf32>,
    %c7 = arith.constant 7 : index
    %28 = memref.load %arg1[%c7] : memref<8xi32, #tpu.memory_space<smem>>
    %29 = arith.index_cast %28 : i32 to index
    %c0_21 = arith.constant 0 : index
    %30 = vector.load %arg2[%29, %c0_21] : memref<16x256xf32, #tpu.memory_space<vmem>>, vector<1x256xf32>
    %c7_22 = arith.constant 7 : index
    %c0_23 = arith.constant 0 : index
    %31 = vector.load %arg9[%c7_22, %c0_23] : memref<8x256xf32, #tpu.memory_space<vmem>>, vector<1x256xf32>
    tpu.vector_store %arg9[%c7_22, %c0_23], %30 {strides = array<i32>} : memref<8x256xf32, #tpu.memory_space<vmem>>, vector<1x256xf32>,
    %c0_24 = arith.constant 0 : index
    %c0_25 = arith.constant 0 : index
    %32 = vector.load %arg9[%c0_24, %c0_25] : memref<8x256xf32, #tpu.memory_space<vmem>>, vector<8x256xf32>
    %33 = arith.truncf %32 : vector<8x256xf32> to vector<8x256xbf16>
    %c0_26 = arith.constant 0 : index
    %c0_27 = arith.constant 0 : index
    %34 = vector.load %arg3[%c0_26, %c0_27] : memref<256x768xbf16, #tpu.memory_space<vmem>>, vector<256x768xbf16>
    %cst = arith.constant dense<0.000000e+00> : vector<8x768xf32>
    %35 = tpu.matmul %33, %34, %cst {dimension_numbers = #tpu.dot_dimension_numbers<[1], [0], [0], [1], [0, 0, 1, 1], [], []>} : vector<8x256xbf16>, vector<256x768xbf16>, vector<8x768xf32> -> vector<8x768xf32>
    %c0_28 = arith.constant 0 : index
    %c0_29 = arith.constant 0 : index
    %36 = vector.load %arg5[%c0_28, %c0_29] : memref<1x768xf32, #tpu.memory_space<vmem>>, vector<1x768xf32>
    %37 = vector.broadcast %36 : vector<1x768xf32> to vector<8x768xf32>
    %38 = arith.addf %35, %37 : vector<8x768xf32>
    %c0_30 = arith.constant 0 : index
    %c0_31 = arith.constant 0 : index
    %39 = vector.load %arg10[%c0_30, %c0_31] : memref<8x768xf32, #tpu.memory_space<vmem>>, vector<8x768xf32>
    tpu.vector_store %arg10[%c0_30, %c0_31], %38 {strides = array<i32>} : memref<8x768xf32, #tpu.memory_space<vmem>>, vector<8x768xf32>,
    %c0_32 = arith.constant 0 : index
    %c0_33 = arith.constant 0 : index
    %40 = vector.load %arg7[%c0_32, %c0_33] : memref<1x256xf32, #tpu.memory_space<vmem>>, vector<1x256xf32>
    %c0_34 = arith.constant 0 : index
    %c0_35 = arith.constant 0 : index
    %41 = vector.load %arg10[%c0_34, %c0_35] : memref<8x768xf32, #tpu.memory_space<vmem>>, vector<1x768xf32>
    %42 = arith.truncf %40 : vector<1x256xf32> to vector<1x256xbf16>
    %c0_36 = arith.constant 0 : index
    %c0_37 = arith.constant 0 : index
    %43 = vector.load %arg4[%c0_36, %c0_37] : memref<256x768xbf16, #tpu.memory_space<vmem>>, vector<256x768xbf16>
    %cst_38 = arith.constant dense<0.000000e+00> : vector<1x768xf32>
    %44 = tpu.matmul %42, %43, %cst_38 {dimension_numbers = #tpu.dot_dimension_numbers<[1], [0], [0], [1], [0, 0, 1, 1], [], []>} : vector<1x256xbf16>, vector<256x768xbf16>, vector<1x768xf32> -> vector<1x768xf32>
    %45 = vector.extract_strided_slice %41 {offsets = [0, 0], sizes = [1, 256], strides = [1, 1]} : vector<1x768xf32> to vector<1x256xf32>
    %46 = vector.extract_strided_slice %44 {offsets = [0, 0], sizes = [1, 256], strides = [1, 1]} : vector<1x768xf32> to vector<1x256xf32>
    %47 = arith.addf %45, %46 : vector<1x256xf32>
    %48 = arith.negf %47 : vector<1x256xf32>
    %49 = math.exp %48 : vector<1x256xf32>
    %cst_39 = arith.constant 1.000000e+00 : f32
    %50 = vector.broadcast %cst_39 : f32 to vector<1x256xf32>
    %51 = arith.addf %50, %49 : vector<1x256xf32>
    %52 = arith.divf %50, %51 : vector<1x256xf32>
    %53 = vector.extract_strided_slice %41 {offsets = [0, 256], sizes = [1, 256], strides = [1, 1]} : vector<1x768xf32> to vector<1x256xf32>
    %54 = vector.extract_strided_slice %44 {offsets = [0, 256], sizes = [1, 256], strides = [1, 1]} : vector<1x768xf32> to vector<1x256xf32>
    %55 = arith.addf %53, %54 : vector<1x256xf32>
    %56 = arith.negf %55 : vector<1x256xf32>
    %57 = math.exp %56 : vector<1x256xf32>
    %cst_40 = arith.constant 1.000000e+00 : f32
    %58 = vector.broadcast %cst_40 : f32 to vector<1x256xf32>
    %59 = arith.addf %58, %57 : vector<1x256xf32>
    %60 = arith.divf %58, %59 : vector<1x256xf32>
    %61 = vector.extract_strided_slice %41 {offsets = [0, 512], sizes = [1, 256], strides = [1, 1]} : vector<1x768xf32> to vector<1x256xf32>
    %62 = vector.extract_strided_slice %44 {offsets = [0, 512], sizes = [1, 256], strides = [1, 1]} : vector<1x768xf32> to vector<1x256xf32>
    %c0_41 = arith.constant 0 : index
    %c0_42 = arith.constant 0 : index
    %63 = vector.load %arg6[%c0_41, %c0_42] : memref<1x256xf32, #tpu.memory_space<vmem>>, vector<1x256xf32>
    %64 = arith.addf %62, %63 : vector<1x256xf32>
    %65 = arith.mulf %52, %64 : vector<1x256xf32>
    %66 = arith.addf %61, %65 : vector<1x256xf32>
    %67 = math.tanh %66 : vector<1x256xf32>
    %cst_43 = arith.constant 1.000000e+00 : f32
    %68 = vector.broadcast %cst_43 : f32 to vector<1x256xf32>
    %69 = arith.subf %68, %60 : vector<1x256xf32>
    %70 = arith.mulf %69, %67 : vector<1x256xf32>
    %71 = arith.mulf %60, %40 : vector<1x256xf32>
    %72 = arith.addf %70, %71 : vector<1x256xf32>
    %c0_44 = arith.constant 0 : index
    %c0_45 = arith.constant 0 : index
    %73 = vector.load %arg8[%c0_44, %c0_45] : memref<8x256xf32, #tpu.memory_space<vmem>>, vector<1x256xf32>
    tpu.vector_store %arg8[%c0_44, %c0_45], %72 {strides = array<i32>} : memref<8x256xf32, #tpu.memory_space<vmem>>, vector<1x256xf32>,
    %c1_46 = arith.constant 1 : index
    %c0_47 = arith.constant 0 : index
    %74 = vector.load %arg10[%c1_46, %c0_47] : memref<8x768xf32, #tpu.memory_space<vmem>>, vector<1x768xf32>
    %75 = arith.truncf %72 : vector<1x256xf32> to vector<1x256xbf16>
    %c0_48 = arith.constant 0 : index
    %c0_49 = arith.constant 0 : index
    %76 = vector.load %arg4[%c0_48, %c0_49] : memref<256x768xbf16, #tpu.memory_space<vmem>>, vector<256x768xbf16>
    %cst_50 = arith.constant dense<0.000000e+00> : vector<1x768xf32>
    %77 = tpu.matmul %75, %76, %cst_50 {dimension_numbers = #tpu.dot_dimension_numbers<[1], [0], [0], [1], [0, 0, 1, 1], [], []>} : vector<1x256xbf16>, vector<256x768xbf16>, vector<1x768xf32> -> vector<1x768xf32>
    %78 = vector.extract_strided_slice %74 {offsets = [0, 0], sizes = [1, 256], strides = [1, 1]} : vector<1x768xf32> to vector<1x256xf32>
    %79 = vector.extract_strided_slice %77 {offsets = [0, 0], sizes = [1, 256], strides = [1, 1]} : vector<1x768xf32> to vector<1x256xf32>
    %80 = arith.addf %78, %79 : vector<1x256xf32>
    %81 = arith.negf %80 : vector<1x256xf32>
    %82 = math.exp %81 : vector<1x256xf32>
    %cst_51 = arith.constant 1.000000e+00 : f32
    %83 = vector.broadcast %cst_51 : f32 to vector<1x256xf32>
    %84 = arith.addf %83, %82 : vector<1x256xf32>
    %85 = arith.divf %83, %84 : vector<1x256xf32>
    %86 = vector.extract_strided_slice %74 {offsets = [0, 256], sizes = [1, 256], strides = [1, 1]} : vector<1x768xf32> to vector<1x256xf32>
    %87 = vector.extract_strided_slice %77 {offsets = [0, 256], sizes = [1, 256], strides = [1, 1]} : vector<1x768xf32> to vector<1x256xf32>
    %88 = arith.addf %86, %87 : vector<1x256xf32>
    %89 = arith.negf %88 : vector<1x256xf32>
    %90 = math.exp %89 : vector<1x256xf32>
    %cst_52 = arith.constant 1.000000e+00 : f32
    %91 = vector.broadcast %cst_52 : f32 to vector<1x256xf32>
    %92 = arith.addf %91, %90 : vector<1x256xf32>
    %93 = arith.divf %91, %92 : vector<1x256xf32>
    %94 = vector.extract_strided_slice %74 {offsets = [0, 512], sizes = [1, 256], strides = [1, 1]} : vector<1x768xf32> to vector<1x256xf32>
    %95 = vector.extract_strided_slice %77 {offsets = [0, 512], sizes = [1, 256], strides = [1, 1]} : vector<1x768xf32> to vector<1x256xf32>
    %c0_53 = arith.constant 0 : index
    %c0_54 = arith.constant 0 : index
    %96 = vector.load %arg6[%c0_53, %c0_54] : memref<1x256xf32, #tpu.memory_space<vmem>>, vector<1x256xf32>
    %97 = arith.addf %95, %96 : vector<1x256xf32>
    %98 = arith.mulf %85, %97 : vector<1x256xf32>
    %99 = arith.addf %94, %98 : vector<1x256xf32>
    %100 = math.tanh %99 : vector<1x256xf32>
    %cst_55 = arith.constant 1.000000e+00 : f32
    %101 = vector.broadcast %cst_55 : f32 to vector<1x256xf32>
    %102 = arith.subf %101, %93 : vector<1x256xf32>
    %103 = arith.mulf %102, %100 : vector<1x256xf32>
    %104 = arith.mulf %93, %72 : vector<1x256xf32>
    %105 = arith.addf %103, %104 : vector<1x256xf32>
    %c1_56 = arith.constant 1 : index
    %c0_57 = arith.constant 0 : index
    %106 = vector.load %arg8[%c1_56, %c0_57] : memref<8x256xf32, #tpu.memory_space<vmem>>, vector<1x256xf32>
    tpu.vector_store %arg8[%c1_56, %c0_57], %105 {strides = array<i32>} : memref<8x256xf32, #tpu.memory_space<vmem>>, vector<1x256xf32>,
    %c2_58 = arith.constant 2 : index
    %c0_59 = arith.constant 0 : index
    %107 = vector.load %arg10[%c2_58, %c0_59] : memref<8x768xf32, #tpu.memory_space<vmem>>, vector<1x768xf32>
    %108 = arith.truncf %105 : vector<1x256xf32> to vector<1x256xbf16>
    %c0_60 = arith.constant 0 : index
    %c0_61 = arith.constant 0 : index
    %109 = vector.load %arg4[%c0_60, %c0_61] : memref<256x768xbf16, #tpu.memory_space<vmem>>, vector<256x768xbf16>
    %cst_62 = arith.constant dense<0.000000e+00> : vector<1x768xf32>
    %110 = tpu.matmul %108, %109, %cst_62 {dimension_numbers = #tpu.dot_dimension_numbers<[1], [0], [0], [1], [0, 0, 1, 1], [], []>} : vector<1x256xbf16>, vector<256x768xbf16>, vector<1x768xf32> -> vector<1x768xf32>
    %111 = vector.extract_strided_slice %107 {offsets = [0, 0], sizes = [1, 256], strides = [1, 1]} : vector<1x768xf32> to vector<1x256xf32>
    %112 = vector.extract_strided_slice %110 {offsets = [0, 0], sizes = [1, 256], strides = [1, 1]} : vector<1x768xf32> to vector<1x256xf32>
    %113 = arith.addf %111, %112 : vector<1x256xf32>
    %114 = arith.negf %113 : vector<1x256xf32>
    %115 = math.exp %114 : vector<1x256xf32>
    %cst_63 = arith.constant 1.000000e+00 : f32
    %116 = vector.broadcast %cst_63 : f32 to vector<1x256xf32>
    %117 = arith.addf %116, %115 : vector<1x256xf32>
    %118 = arith.divf %116, %117 : vector<1x256xf32>
    %119 = vector.extract_strided_slice %107 {offsets = [0, 256], sizes = [1, 256], strides = [1, 1]} : vector<1x768xf32> to vector<1x256xf32>
    %120 = vector.extract_strided_slice %110 {offsets = [0, 256], sizes = [1, 256], strides = [1, 1]} : vector<1x768xf32> to vector<1x256xf32>
    %121 = arith.addf %119, %120 : vector<1x256xf32>
    %122 = arith.negf %121 : vector<1x256xf32>
    %123 = math.exp %122 : vector<1x256xf32>
    %cst_64 = arith.constant 1.000000e+00 : f32
    %124 = vector.broadcast %cst_64 : f32 to vector<1x256xf32>
    %125 = arith.addf %124, %123 : vector<1x256xf32>
    %126 = arith.divf %124, %125 : vector<1x256xf32>
    %127 = vector.extract_strided_slice %107 {offsets = [0, 512], sizes = [1, 256], strides = [1, 1]} : vector<1x768xf32> to vector<1x256xf32>
    %128 = vector.extract_strided_slice %110 {offsets = [0, 512], sizes = [1, 256], strides = [1, 1]} : vector<1x768xf32> to vector<1x256xf32>
    %c0_65 = arith.constant 0 : index
    %c0_66 = arith.constant 0 : index
    %129 = vector.load %arg6[%c0_65, %c0_66] : memref<1x256xf32, #tpu.memory_space<vmem>>, vector<1x256xf32>
    %130 = arith.addf %128, %129 : vector<1x256xf32>
    %131 = arith.mulf %118, %130 : vector<1x256xf32>
    %132 = arith.addf %127, %131 : vector<1x256xf32>
    %133 = math.tanh %132 : vector<1x256xf32>
    %cst_67 = arith.constant 1.000000e+00 : f32
    %134 = vector.broadcast %cst_67 : f32 to vector<1x256xf32>
    %135 = arith.subf %134, %126 : vector<1x256xf32>
    %136 = arith.mulf %135, %133 : vector<1x256xf32>
    %137 = arith.mulf %126, %105 : vector<1x256xf32>
    %138 = arith.addf %136, %137 : vector<1x256xf32>
    %c2_68 = arith.constant 2 : index
    %c0_69 = arith.constant 0 : index
    %139 = vector.load %arg8[%c2_68, %c0_69] : memref<8x256xf32, #tpu.memory_space<vmem>>, vector<1x256xf32>
    tpu.vector_store %arg8[%c2_68, %c0_69], %138 {strides = array<i32>} : memref<8x256xf32, #tpu.memory_space<vmem>>, vector<1x256xf32>,
    %c3_70 = arith.constant 3 : index
    %c0_71 = arith.constant 0 : index
    %140 = vector.load %arg10[%c3_70, %c0_71] : memref<8x768xf32, #tpu.memory_space<vmem>>, vector<1x768xf32>
    %141 = arith.truncf %138 : vector<1x256xf32> to vector<1x256xbf16>
    %c0_72 = arith.constant 0 : index
    %c0_73 = arith.constant 0 : index
    %142 = vector.load %arg4[%c0_72, %c0_73] : memref<256x768xbf16, #tpu.memory_space<vmem>>, vector<256x768xbf16>
    %cst_74 = arith.constant dense<0.000000e+00> : vector<1x768xf32>
    %143 = tpu.matmul %141, %142, %cst_74 {dimension_numbers = #tpu.dot_dimension_numbers<[1], [0], [0], [1], [0, 0, 1, 1], [], []>} : vector<1x256xbf16>, vector<256x768xbf16>, vector<1x768xf32> -> vector<1x768xf32>
    %144 = vector.extract_strided_slice %140 {offsets = [0, 0], sizes = [1, 256], strides = [1, 1]} : vector<1x768xf32> to vector<1x256xf32>
    %145 = vector.extract_strided_slice %143 {offsets = [0, 0], sizes = [1, 256], strides = [1, 1]} : vector<1x768xf32> to vector<1x256xf32>
    %146 = arith.addf %144, %145 : vector<1x256xf32>
    %147 = arith.negf %146 : vector<1x256xf32>
    %148 = math.exp %147 : vector<1x256xf32>
    %cst_75 = arith.constant 1.000000e+00 : f32
    %149 = vector.broadcast %cst_75 : f32 to vector<1x256xf32>
    %150 = arith.addf %149, %148 : vector<1x256xf32>
    %151 = arith.divf %149, %150 : vector<1x256xf32>
    %152 = vector.extract_strided_slice %140 {offsets = [0, 256], sizes = [1, 256], strides = [1, 1]} : vector<1x768xf32> to vector<1x256xf32>
    %153 = vector.extract_strided_slice %143 {offsets = [0, 256], sizes = [1, 256], strides = [1, 1]} : vector<1x768xf32> to vector<1x256xf32>
    %154 = arith.addf %152, %153 : vector<1x256xf32>
    %155 = arith.negf %154 : vector<1x256xf32>
    %156 = math.exp %155 : vector<1x256xf32>
    %cst_76 = arith.constant 1.000000e+00 : f32
    %157 = vector.broadcast %cst_76 : f32 to vector<1x256xf32>
    %158 = arith.addf %157, %156 : vector<1x256xf32>
    %159 = arith.divf %157, %158 : vector<1x256xf32>
    %160 = vector.extract_strided_slice %140 {offsets = [0, 512], sizes = [1, 256], strides = [1, 1]} : vector<1x768xf32> to vector<1x256xf32>
    %161 = vector.extract_strided_slice %143 {offsets = [0, 512], sizes = [1, 256], strides = [1, 1]} : vector<1x768xf32> to vector<1x256xf32>
    %c0_77 = arith.constant 0 : index
    %c0_78 = arith.constant 0 : index
    %162 = vector.load %arg6[%c0_77, %c0_78] : memref<1x256xf32, #tpu.memory_space<vmem>>, vector<1x256xf32>
    %163 = arith.addf %161, %162 : vector<1x256xf32>
    %164 = arith.mulf %151, %163 : vector<1x256xf32>
    %165 = arith.addf %160, %164 : vector<1x256xf32>
    %166 = math.tanh %165 : vector<1x256xf32>
    %cst_79 = arith.constant 1.000000e+00 : f32
    %167 = vector.broadcast %cst_79 : f32 to vector<1x256xf32>
    %168 = arith.subf %167, %159 : vector<1x256xf32>
    %169 = arith.mulf %168, %166 : vector<1x256xf32>
    %170 = arith.mulf %159, %138 : vector<1x256xf32>
    %171 = arith.addf %169, %170 : vector<1x256xf32>
    %c3_80 = arith.constant 3 : index
    %c0_81 = arith.constant 0 : index
    %172 = vector.load %arg8[%c3_80, %c0_81] : memref<8x256xf32, #tpu.memory_space<vmem>>, vector<1x256xf32>
    tpu.vector_store %arg8[%c3_80, %c0_81], %171 {strides = array<i32>} : memref<8x256xf32, #tpu.memory_space<vmem>>, vector<1x256xf32>,
    %c4_82 = arith.constant 4 : index
    %c0_83 = arith.constant 0 : index
    %173 = vector.load %arg10[%c4_82, %c0_83] : memref<8x768xf32, #tpu.memory_space<vmem>>, vector<1x768xf32>
    %174 = arith.truncf %171 : vector<1x256xf32> to vector<1x256xbf16>
    %c0_84 = arith.constant 0 : index
    %c0_85 = arith.constant 0 : index
    %175 = vector.load %arg4[%c0_84, %c0_85] : memref<256x768xbf16, #tpu.memory_space<vmem>>, vector<256x768xbf16>
    %cst_86 = arith.constant dense<0.000000e+00> : vector<1x768xf32>
    %176 = tpu.matmul %174, %175, %cst_86 {dimension_numbers = #tpu.dot_dimension_numbers<[1], [0], [0], [1], [0, 0, 1, 1], [], []>} : vector<1x256xbf16>, vector<256x768xbf16>, vector<1x768xf32> -> vector<1x768xf32>
    %177 = vector.extract_strided_slice %173 {offsets = [0, 0], sizes = [1, 256], strides = [1, 1]} : vector<1x768xf32> to vector<1x256xf32>
    %178 = vector.extract_strided_slice %176 {offsets = [0, 0], sizes = [1, 256], strides = [1, 1]} : vector<1x768xf32> to vector<1x256xf32>
    %179 = arith.addf %177, %178 : vector<1x256xf32>
    %180 = arith.negf %179 : vector<1x256xf32>
    %181 = math.exp %180 : vector<1x256xf32>
    %cst_87 = arith.constant 1.000000e+00 : f32
    %182 = vector.broadcast %cst_87 : f32 to vector<1x256xf32>
    %183 = arith.addf %182, %181 : vector<1x256xf32>
    %184 = arith.divf %182, %183 : vector<1x256xf32>
    %185 = vector.extract_strided_slice %173 {offsets = [0, 256], sizes = [1, 256], strides = [1, 1]} : vector<1x768xf32> to vector<1x256xf32>
    %186 = vector.extract_strided_slice %176 {offsets = [0, 256], sizes = [1, 256], strides = [1, 1]} : vector<1x768xf32> to vector<1x256xf32>
    %187 = arith.addf %185, %186 : vector<1x256xf32>
    %188 = arith.negf %187 : vector<1x256xf32>
    %189 = math.exp %188 : vector<1x256xf32>
    %cst_88 = arith.constant 1.000000e+00 : f32
    %190 = vector.broadcast %cst_88 : f32 to vector<1x256xf32>
    %191 = arith.addf %190, %189 : vector<1x256xf32>
    %192 = arith.divf %190, %191 : vector<1x256xf32>
    %193 = vector.extract_strided_slice %173 {offsets = [0, 512], sizes = [1, 256], strides = [1, 1]} : vector<1x768xf32> to vector<1x256xf32>
    %194 = vector.extract_strided_slice %176 {offsets = [0, 512], sizes = [1, 256], strides = [1, 1]} : vector<1x768xf32> to vector<1x256xf32>
    %c0_89 = arith.constant 0 : index
    %c0_90 = arith.constant 0 : index
    %195 = vector.load %arg6[%c0_89, %c0_90] : memref<1x256xf32, #tpu.memory_space<vmem>>, vector<1x256xf32>
    %196 = arith.addf %194, %195 : vector<1x256xf32>
    %197 = arith.mulf %184, %196 : vector<1x256xf32>
    %198 = arith.addf %193, %197 : vector<1x256xf32>
    %199 = math.tanh %198 : vector<1x256xf32>
    %cst_91 = arith.constant 1.000000e+00 : f32
    %200 = vector.broadcast %cst_91 : f32 to vector<1x256xf32>
    %201 = arith.subf %200, %192 : vector<1x256xf32>
    %202 = arith.mulf %201, %199 : vector<1x256xf32>
    %203 = arith.mulf %192, %171 : vector<1x256xf32>
    %204 = arith.addf %202, %203 : vector<1x256xf32>
    %c4_92 = arith.constant 4 : index
    %c0_93 = arith.constant 0 : index
    %205 = vector.load %arg8[%c4_92, %c0_93] : memref<8x256xf32, #tpu.memory_space<vmem>>, vector<1x256xf32>
    tpu.vector_store %arg8[%c4_92, %c0_93], %204 {strides = array<i32>} : memref<8x256xf32, #tpu.memory_space<vmem>>, vector<1x256xf32>,
    %c5_94 = arith.constant 5 : index
    %c0_95 = arith.constant 0 : index
    %206 = vector.load %arg10[%c5_94, %c0_95] : memref<8x768xf32, #tpu.memory_space<vmem>>, vector<1x768xf32>
    %207 = arith.truncf %204 : vector<1x256xf32> to vector<1x256xbf16>
    %c0_96 = arith.constant 0 : index
    %c0_97 = arith.constant 0 : index
    %208 = vector.load %arg4[%c0_96, %c0_97] : memref<256x768xbf16, #tpu.memory_space<vmem>>, vector<256x768xbf16>
    %cst_98 = arith.constant dense<0.000000e+00> : vector<1x768xf32>
    %209 = tpu.matmul %207, %208, %cst_98 {dimension_numbers = #tpu.dot_dimension_numbers<[1], [0], [0], [1], [0, 0, 1, 1], [], []>} : vector<1x256xbf16>, vector<256x768xbf16>, vector<1x768xf32> -> vector<1x768xf32>
    %210 = vector.extract_strided_slice %206 {offsets = [0, 0], sizes = [1, 256], strides = [1, 1]} : vector<1x768xf32> to vector<1x256xf32>
    %211 = vector.extract_strided_slice %209 {offsets = [0, 0], sizes = [1, 256], strides = [1, 1]} : vector<1x768xf32> to vector<1x256xf32>
    %212 = arith.addf %210, %211 : vector<1x256xf32>
    %213 = arith.negf %212 : vector<1x256xf32>
    %214 = math.exp %213 : vector<1x256xf32>
    %cst_99 = arith.constant 1.000000e+00 : f32
    %215 = vector.broadcast %cst_99 : f32 to vector<1x256xf32>
    %216 = arith.addf %215, %214 : vector<1x256xf32>
    %217 = arith.divf %215, %216 : vector<1x256xf32>
    %218 = vector.extract_strided_slice %206 {offsets = [0, 256], sizes = [1, 256], strides = [1, 1]} : vector<1x768xf32> to vector<1x256xf32>
    %219 = vector.extract_strided_slice %209 {offsets = [0, 256], sizes = [1, 256], strides = [1, 1]} : vector<1x768xf32> to vector<1x256xf32>
    %220 = arith.addf %218, %219 : vector<1x256xf32>
    %221 = arith.negf %220 : vector<1x256xf32>
    %222 = math.exp %221 : vector<1x256xf32>
    %cst_100 = arith.constant 1.000000e+00 : f32
    %223 = vector.broadcast %cst_100 : f32 to vector<1x256xf32>
    %224 = arith.addf %223, %222 : vector<1x256xf32>
    %225 = arith.divf %223, %224 : vector<1x256xf32>
    %226 = vector.extract_strided_slice %206 {offsets = [0, 512], sizes = [1, 256], strides = [1, 1]} : vector<1x768xf32> to vector<1x256xf32>
    %227 = vector.extract_strided_slice %209 {offsets = [0, 512], sizes = [1, 256], strides = [1, 1]} : vector<1x768xf32> to vector<1x256xf32>
    %c0_101 = arith.constant 0 : index
    %c0_102 = arith.constant 0 : index
    %228 = vector.load %arg6[%c0_101, %c0_102] : memref<1x256xf32, #tpu.memory_space<vmem>>, vector<1x256xf32>
    %229 = arith.addf %227, %228 : vector<1x256xf32>
    %230 = arith.mulf %217, %229 : vector<1x256xf32>
    %231 = arith.addf %226, %230 : vector<1x256xf32>
    %232 = math.tanh %231 : vector<1x256xf32>
    %cst_103 = arith.constant 1.000000e+00 : f32
    %233 = vector.broadcast %cst_103 : f32 to vector<1x256xf32>
    %234 = arith.subf %233, %225 : vector<1x256xf32>
    %235 = arith.mulf %234, %232 : vector<1x256xf32>
    %236 = arith.mulf %225, %204 : vector<1x256xf32>
    %237 = arith.addf %235, %236 : vector<1x256xf32>
    %c5_104 = arith.constant 5 : index
    %c0_105 = arith.constant 0 : index
    %238 = vector.load %arg8[%c5_104, %c0_105] : memref<8x256xf32, #tpu.memory_space<vmem>>, vector<1x256xf32>
    tpu.vector_store %arg8[%c5_104, %c0_105], %237 {strides = array<i32>} : memref<8x256xf32, #tpu.memory_space<vmem>>, vector<1x256xf32>,
    %c6_106 = arith.constant 6 : index
    %c0_107 = arith.constant 0 : index
    %239 = vector.load %arg10[%c6_106, %c0_107] : memref<8x768xf32, #tpu.memory_space<vmem>>, vector<1x768xf32>
    %240 = arith.truncf %237 : vector<1x256xf32> to vector<1x256xbf16>
    %c0_108 = arith.constant 0 : index
    %c0_109 = arith.constant 0 : index
    %241 = vector.load %arg4[%c0_108, %c0_109] : memref<256x768xbf16, #tpu.memory_space<vmem>>, vector<256x768xbf16>
    %cst_110 = arith.constant dense<0.000000e+00> : vector<1x768xf32>
    %242 = tpu.matmul %240, %241, %cst_110 {dimension_numbers = #tpu.dot_dimension_numbers<[1], [0], [0], [1], [0, 0, 1, 1], [], []>} : vector<1x256xbf16>, vector<256x768xbf16>, vector<1x768xf32> -> vector<1x768xf32>
    %243 = vector.extract_strided_slice %239 {offsets = [0, 0], sizes = [1, 256], strides = [1, 1]} : vector<1x768xf32> to vector<1x256xf32>
    %244 = vector.extract_strided_slice %242 {offsets = [0, 0], sizes = [1, 256], strides = [1, 1]} : vector<1x768xf32> to vector<1x256xf32>
    %245 = arith.addf %243, %244 : vector<1x256xf32>
    %246 = arith.negf %245 : vector<1x256xf32>
    %247 = math.exp %246 : vector<1x256xf32>
    %cst_111 = arith.constant 1.000000e+00 : f32
    %248 = vector.broadcast %cst_111 : f32 to vector<1x256xf32>
    %249 = arith.addf %248, %247 : vector<1x256xf32>
    %250 = arith.divf %248, %249 : vector<1x256xf32>
    %251 = vector.extract_strided_slice %239 {offsets = [0, 256], sizes = [1, 256], strides = [1, 1]} : vector<1x768xf32> to vector<1x256xf32>
    %252 = vector.extract_strided_slice %242 {offsets = [0, 256], sizes = [1, 256], strides = [1, 1]} : vector<1x768xf32> to vector<1x256xf32>
    %253 = arith.addf %251, %252 : vector<1x256xf32>
    %254 = arith.negf %253 : vector<1x256xf32>
    %255 = math.exp %254 : vector<1x256xf32>
    %cst_112 = arith.constant 1.000000e+00 : f32
    %256 = vector.broadcast %cst_112 : f32 to vector<1x256xf32>
    %257 = arith.addf %256, %255 : vector<1x256xf32>
    %258 = arith.divf %256, %257 : vector<1x256xf32>
    %259 = vector.extract_strided_slice %239 {offsets = [0, 512], sizes = [1, 256], strides = [1, 1]} : vector<1x768xf32> to vector<1x256xf32>
    %260 = vector.extract_strided_slice %242 {offsets = [0, 512], sizes = [1, 256], strides = [1, 1]} : vector<1x768xf32> to vector<1x256xf32>
    %c0_113 = arith.constant 0 : index
    %c0_114 = arith.constant 0 : index
    %261 = vector.load %arg6[%c0_113, %c0_114] : memref<1x256xf32, #tpu.memory_space<vmem>>, vector<1x256xf32>
    %262 = arith.addf %260, %261 : vector<1x256xf32>
    %263 = arith.mulf %250, %262 : vector<1x256xf32>
    %264 = arith.addf %259, %263 : vector<1x256xf32>
    %265 = math.tanh %264 : vector<1x256xf32>
    %cst_115 = arith.constant 1.000000e+00 : f32
    %266 = vector.broadcast %cst_115 : f32 to vector<1x256xf32>
    %267 = arith.subf %266, %258 : vector<1x256xf32>
    %268 = arith.mulf %267, %265 : vector<1x256xf32>
    %269 = arith.mulf %258, %237 : vector<1x256xf32>
    %270 = arith.addf %268, %269 : vector<1x256xf32>
    %c6_116 = arith.constant 6 : index
    %c0_117 = arith.constant 0 : index
    %271 = vector.load %arg8[%c6_116, %c0_117] : memref<8x256xf32, #tpu.memory_space<vmem>>, vector<1x256xf32>
    tpu.vector_store %arg8[%c6_116, %c0_117], %270 {strides = array<i32>} : memref<8x256xf32, #tpu.memory_space<vmem>>, vector<1x256xf32>,
    %c7_118 = arith.constant 7 : index
    %c0_119 = arith.constant 0 : index
    %272 = vector.load %arg10[%c7_118, %c0_119] : memref<8x768xf32, #tpu.memory_space<vmem>>, vector<1x768xf32>
    %273 = arith.truncf %270 : vector<1x256xf32> to vector<1x256xbf16>
    %c0_120 = arith.constant 0 : index
    %c0_121 = arith.constant 0 : index
    %274 = vector.load %arg4[%c0_120, %c0_121] : memref<256x768xbf16, #tpu.memory_space<vmem>>, vector<256x768xbf16>
    %cst_122 = arith.constant dense<0.000000e+00> : vector<1x768xf32>
    %275 = tpu.matmul %273, %274, %cst_122 {dimension_numbers = #tpu.dot_dimension_numbers<[1], [0], [0], [1], [0, 0, 1, 1], [], []>} : vector<1x256xbf16>, vector<256x768xbf16>, vector<1x768xf32> -> vector<1x768xf32>
    %276 = vector.extract_strided_slice %272 {offsets = [0, 0], sizes = [1, 256], strides = [1, 1]} : vector<1x768xf32> to vector<1x256xf32>
    %277 = vector.extract_strided_slice %275 {offsets = [0, 0], sizes = [1, 256], strides = [1, 1]} : vector<1x768xf32> to vector<1x256xf32>
    %278 = arith.addf %276, %277 : vector<1x256xf32>
    %279 = arith.negf %278 : vector<1x256xf32>
    %280 = math.exp %279 : vector<1x256xf32>
    %cst_123 = arith.constant 1.000000e+00 : f32
    %281 = vector.broadcast %cst_123 : f32 to vector<1x256xf32>
    %282 = arith.addf %281, %280 : vector<1x256xf32>
    %283 = arith.divf %281, %282 : vector<1x256xf32>
    %284 = vector.extract_strided_slice %272 {offsets = [0, 256], sizes = [1, 256], strides = [1, 1]} : vector<1x768xf32> to vector<1x256xf32>
    %285 = vector.extract_strided_slice %275 {offsets = [0, 256], sizes = [1, 256], strides = [1, 1]} : vector<1x768xf32> to vector<1x256xf32>
    %286 = arith.addf %284, %285 : vector<1x256xf32>
    %287 = arith.negf %286 : vector<1x256xf32>
    %288 = math.exp %287 : vector<1x256xf32>
    %cst_124 = arith.constant 1.000000e+00 : f32
    %289 = vector.broadcast %cst_124 : f32 to vector<1x256xf32>
    %290 = arith.addf %289, %288 : vector<1x256xf32>
    %291 = arith.divf %289, %290 : vector<1x256xf32>
    %292 = vector.extract_strided_slice %272 {offsets = [0, 512], sizes = [1, 256], strides = [1, 1]} : vector<1x768xf32> to vector<1x256xf32>
    %293 = vector.extract_strided_slice %275 {offsets = [0, 512], sizes = [1, 256], strides = [1, 1]} : vector<1x768xf32> to vector<1x256xf32>
    %c0_125 = arith.constant 0 : index
    %c0_126 = arith.constant 0 : index
    %294 = vector.load %arg6[%c0_125, %c0_126] : memref<1x256xf32, #tpu.memory_space<vmem>>, vector<1x256xf32>
    %295 = arith.addf %293, %294 : vector<1x256xf32>
    %296 = arith.mulf %283, %295 : vector<1x256xf32>
    %297 = arith.addf %292, %296 : vector<1x256xf32>
    %298 = math.tanh %297 : vector<1x256xf32>
    %cst_127 = arith.constant 1.000000e+00 : f32
    %299 = vector.broadcast %cst_127 : f32 to vector<1x256xf32>
    %300 = arith.subf %299, %291 : vector<1x256xf32>
    %301 = arith.mulf %300, %298 : vector<1x256xf32>
    %302 = arith.mulf %291, %270 : vector<1x256xf32>
    %303 = arith.addf %301, %302 : vector<1x256xf32>
    %c7_128 = arith.constant 7 : index
    %c0_129 = arith.constant 0 : index
    %304 = vector.load %arg8[%c7_128, %c0_129] : memref<8x256xf32, #tpu.memory_space<vmem>>, vector<1x256xf32>
    tpu.vector_store %arg8[%c7_128, %c0_129], %303 {strides = array<i32>} : memref<8x256xf32, #tpu.memory_space<vmem>>, vector<1x256xf32>,
    return
  }
  func.func @transform_0(%arg0: i32, %arg1: memref<8xi32, #tpu.memory_space<smem>>) -> (i32, i32) {
    %c0_i32 = arith.constant 0 : i32
    %c0_i32_0 = arith.constant 0 : i32
    %c0_i32_1 = arith.constant 0 : i32
    return %c0_i32, %c0_i32_0 : i32, i32
  }
  func.func @transform_1(%arg0: i32, %arg1: memref<8xi32, #tpu.memory_space<smem>>) -> (i32, i32) {
    %c0_i32 = arith.constant 0 : i32
    %c0_i32_0 = arith.constant 0 : i32
    %c0_i32_1 = arith.constant 0 : i32
    return %c0_i32, %c0_i32_0 : i32, i32
  }
  func.func @transform_2(%arg0: i32, %arg1: memref<8xi32, #tpu.memory_space<smem>>) -> (i32, i32) {
    %c0_i32 = arith.constant 0 : i32
    %c0_i32_0 = arith.constant 0 : i32
    %c0_i32_1 = arith.constant 0 : i32
    return %c0_i32, %c0_i32_0 : i32, i32
  }
  func.func @transform_3(%arg0: i32, %arg1: memref<8xi32, #tpu.memory_space<smem>>) -> (i32, i32) {
    %c0_i32 = arith.constant 0 : i32
    %c0_i32_0 = arith.constant 0 : i32
    %c0_i32_1 = arith.constant 0 : i32
    return %c0_i32, %c0_i32_0 : i32, i32
  }
  func.func @transform_4(%arg0: i32, %arg1: memref<8xi32, #tpu.memory_space<smem>>) -> (i32, i32) {
    %c0_i32 = arith.constant 0 : i32
    %c0_i32_0 = arith.constant 0 : i32
    %c0_i32_1 = arith.constant 0 : i32
    return %c0_i32, %c0_i32_0 : i32, i32
  }
  func.func @transform_5(%arg0: i32, %arg1: memref<8xi32, #tpu.memory_space<smem>>) -> (i32, i32) {
    %c0_i32 = arith.constant 0 : i32
    %c0_i32_0 = arith.constant 0 : i32
    %c0_i32_1 = arith.constant 0 : i32
    return %c0_i32, %c0_i32_0 : i32, i32
  }
  func.func @transform_6(%arg0: i32, %arg1: memref<8xi32, #tpu.memory_space<smem>>) -> (i32, i32) {
    %c0_i32 = arith.constant 0 : i32
    %c0_i32_0 = arith.constant 0 : i32
    %c0_i32_1 = arith.constant 0 : i32
    return %c0_i32, %c0_i32_0 : i32, i32
  }
}

</mosaic_0001>

<llo_original>
// kernel: gru_sequence_pallas.1
$region0: #{gru_sequence_pallas.1}
  #allocation0 [shape = 'u32[]', space=smem, size = 0x4, offset = 0x4, fixed_abs, tag = 'smem constant byte address 0x4 - core index']
  #allocation1 [shape = 'u32[144,128]{1,0:T(1,128)}', space=vmem, size = 0x12000, scoped, tag = 'internal scratch']
  #allocation2 [shape = 'f32[8,256]{1,0:T(8,128)}', space=vmem, size = 0x2000, scoped, tag = 'scratch operand']
  #allocation3 [shape = 'f32[8,768]{1,0:T(8,128)}', space=vmem, size = 0x6000, scoped, tag = 'scratch operand']
  #allocation4 [shape = 's32[1]{0}', space=sflag, size = 0x4, scoped, tag = 'scoped memory for gru_sequence_pallas.1']
  #allocation5 [shape = 'u8[512]{0}', space=smem, size = 0x200, scoped, tag = 'prefetched SMEM operand 0']
  %s0 = inlined_call_operand.hbm [shape: s32[8], index: 0, kind: input, shape index: {}]
  %s1 = inlined_call_operand.hbm [shape: f32[16,256], index: 1, kind: input, shape index: {}]
  %s2 = inlined_call_operand.hbm [shape: bf16[256,768], index: 2, kind: input, shape index: {}]
  %s3 = inlined_call_operand.hbm [shape: bf16[256,768], index: 3, kind: input, shape index: {}]
  %s4 = inlined_call_operand.vmem [shape: f32[1,768], index: 4, kind: input, shape index: {}]
  %s5 = inlined_call_operand.vmem [shape: f32[1,256], index: 5, kind: input, shape index: {}]
  %s6 = inlined_call_operand.vmem [shape: f32[1,256], index: 6, kind: input, shape index: {}]
  %s7 = inlined_call_operand.hbm [shape: f32[8,256], index: 7, kind: output, shape index: {}]
  %s8 = sld [smem:[#allocation0]]
  $region46: #{gru_sequence_pallas.1} parent=0
    _
  %s10 = ssub.s32 1, %s8
  %s11 = scalar_select 0, %s10, %s8
  %13 = dma.hbm_to_smem %s0, 16, [#allocation5], [#allocation4]
  %14 = dma.done [#allocation4], 16
  %15 = sfence
  $region1: #{gru_sequence_pallas.1} parent=0
    #allocation6 [shape = 'u8[16384]{0}', space=vmem, size = 0x4000, scoped, tag = 'input window, operand 1, single buffered']
    #allocation7 [shape = 's32[1]{0}', space=sflag, size = 0x4, scoped, tag = 'scoped memory for gru_sequence_pallas.1']
    #allocation8 [shape = 's32[1]{0}', space=sflag, size = 0x4, scoped, tag = 'scoped memory for gru_sequence_pallas.1']
    #allocation9 [shape = 'u8[393216]{0}', space=vmem, size = 0x60000, scoped, tag = 'input window, operand 2, single buffered']
    #allocation10 [shape = 's32[1]{0}', space=sflag, size = 0x4, scoped, tag = 'scoped memory for gru_sequence_pallas.1']
    #allocation11 [shape = 'u8[393216]{0}', space=vmem, size = 0x60000, scoped, tag = 'input window, operand 3, single buffered']
    #allocation12 [shape = 'u8[8192]{0}', space=vmem, size = 0x2000, scoped, tag = 'output window, operand 0, single buffered']
    %16 = vsyncpa [#allocation7], 0
    %17 = vsyncpa [#allocation10], 0
    %18 = vsyncpa [#allocation8], 0
    // Predicated region
    $region2: #{gru_sequence_pallas.1} parent=1 // pred_check
      _
    $region3: #{gru_sequence_pallas.1} parent=1 // pred_check_branch
      %20 = sbr.rel (0) target = $region5
    $region4: #{gru_sequence_pallas.1} parent=1 // pred_region
      %s22 = ssub.s32 512, 512
      %23 = vsyncadd [#allocation7], %s22
      %s24 = sshll.u32 [#allocation6], 4
      %s25 = int_to_ptr.vmem [resolvable:$true] %s24
      %30 = dma.hbm_to_vmem [thread:$0]  %s1, 512, %s25, [#allocation7], 256, 256, 16
    $region5: #{gru_sequence_pallas.1} parent=1 // pred_fallthru
      _
    // Predicated region
    $region6: #{gru_sequence_pallas.1} parent=1 // pred_check
      _
    $region7: #{gru_sequence_pallas.1} parent=1 // pred_check_branch
      %32 = sbr.rel (0) target = $region9
    $region8: #{gru_sequence_pallas.1} parent=1 // pred_region
      %s34 = ssub.s32 12288, 12288
      %35 = vsyncadd [#allocation10], %s34
      %s36 = sshll.u32 [#allocation9], 4
      %s37 = int_to_ptr.vmem [resolvable:$true] %s36
      %42 = dma.hbm_to_vmem [thread:$0]  %s2, 12288, %s37, [#allocation10], 384, 384, 24
    $region9: #{gru_sequence_pallas.1} parent=1 // pred_fallthru
      _
    // Predicated region
    $region10: #{gru_sequence_pallas.1} parent=1 // pred_check
      _
    $region11: #{gru_sequence_pallas.1} parent=1 // pred_check_branch
      %44 = sbr.rel (0) target = $region13
    $region12: #{gru_sequence_pallas.1} parent=1 // pred_region
      %s46 = ssub.s32 12288, 12288
      %47 = vsyncadd [#allocation10], %s46
      %s48 = sshll.u32 [#allocation11], 4
      %s49 = int_to_ptr.vmem [resolvable:$true] %s48
      %54 = dma.hbm_to_vmem [thread:$0]  %s3, 12288, %s49, [#allocation10], 384, 384, 24
    $region13: #{gru_sequence_pallas.1} parent=1 // pred_fallthru
      _
    // Predicated region
    $region14: #{gru_sequence_pallas.1} parent=1 // pred_check
      _
    $region15: #{gru_sequence_pallas.1} parent=1 // pred_check_branch
      %56 = sbr.rel (0) target = $region17
    $region16: #{gru_sequence_pallas.1} parent=1 // pred_region
      _
    $region17: #{gru_sequence_pallas.1} parent=1 // pred_fallthru
      _
    // Predicated region
    $region18: #{gru_sequence_pallas.1} parent=1 // pred_check
      _
    $region19: #{gru_sequence_pallas.1} parent=1 // pred_check_branch
      %58 = sbr.rel (0) target = $region21
    $region20: #{gru_sequence_pallas.1} parent=1 // pred_region
      _
    $region21: #{gru_sequence_pallas.1} parent=1 // pred_fallthru
      _
    // Predicated region
    $region22: #{gru_sequence_pallas.1} parent=1 // pred_check
      _
    $region23: #{gru_sequence_pallas.1} parent=1 // pred_check_branch
      %60 = sbr.rel (0) target = $region25
    $region24: #{gru_sequence_pallas.1} parent=1 // pred_region
      _
    $region25: #{gru_sequence_pallas.1} parent=1 // pred_fallthru
      _
    // Predicated region
    $region26: #{gru_sequence_pallas.1} parent=1 // pred_check
      _
    $region27: #{gru_sequence_pallas.1} parent=1 // pred_check_branch
      %62 = sbr.rel (0) target = $region29
    $region28: #{gru_sequence_pallas.1} parent=1 // pred_region
      %63 = dma.done [#allocation7], 512
    $region29: #{gru_sequence_pallas.1} parent=1 // pred_fallthru
      _
    // Predicated region
    $region30: #{gru_sequence_pallas.1} parent=1 // pred_check
      _
    $region31: #{gru_sequence_pallas.1} parent=1 // pred_check_branch
      %65 = sbr.rel (0) target = $region33
    $region32: #{gru_sequence_pallas.1} parent=1 // pred_region
      %66 = dma.done [#allocation10], 12288
    $region33: #{gru_sequence_pallas.1} parent=1 // pred_fallthru
      _
    // Predicated region
    $region34: #{gru_sequence_pallas.1} parent=1 // pred_check
      _
    $region35: #{gru_sequence_pallas.1} parent=1 // pred_check_branch
      %68 = sbr.rel (0) target = $region37
    $region36: #{gru_sequence_pallas.1} parent=1 // pred_region
      %69 = dma.done [#allocation10], 12288
    $region37: #{gru_sequence_pallas.1} parent=1 // pred_fallthru
      _
    %s70 = sld [smem:[#allocation5]]
    %s71 = sshra.s32 %s70, 3
    %s72 = sand.u32 %s70, 7
    %s73 = sshra.s32 %s70, 3
    %s74 = sand.u32 %s70, 7
    %s75 = smul.u32 %s71, 2
    %s76 = smul.u32 %s75, 8
    %s77 = sadd.s32 %s76, %s74
    %s78 = scalar_lea.vmem [#allocation6], %s77
    %v79 = vld [vmem:[%s78] ss:$8 sm:$0x3]
    %v80 = vlaneseq
    %vm81 = vcmp.ge.s32.totalorder %v80, 0
    %vm82 = vcmp.lt.s32.totalorder %v80, 256
    %vm83 = vmand %vm81, %vm82
    %84 = vst.msk [vmem:[#allocation2] ss:$8 sm:$0x3] %vm83, %v79
    %85 = vst.msk [vmem:[#allocation2] ss:$8 sm:$0x0] %vm83, %v79
    %s86 = sld [smem:[#allocation5 + $0x1]]
    %s87 = sshra.s32 %s86, 3
    %s88 = sand.u32 %s86, 7
    %s89 = sshra.s32 %s86, 3
    %s90 = sand.u32 %s86, 7
    %s91 = smul.u32 %s87, 2
    %s92 = smul.u32 %s91, 8
    %s93 = sadd.s32 %s92, %s90
    %s94 = scalar_lea.vmem [#allocation6], %s93
    %v95 = vld [vmem:[%s94] ss:$8 sm:$0x3]
    %s96 = scalar_lea.vmem [#allocation2], 1
    %97 = vst.msk [vmem:[%s96] ss:$8 sm:$0x3] %vm83, %v95
    %98 = vst.msk [vmem:[%s96] ss:$8 sm:$0x0] %vm83, %v95
    %s99 = sld [smem:[#allocation5 + $0x2]]
    %s100 = sshra.s32 %s99, 3
    %s101 = sand.u32 %s99, 7
    %s102 = sshra.s32 %s99, 3
    %s103 = sand.u32 %s99, 7
    %s104 = smul.u32 %s100, 2
    %s105 = smul.u32 %s104, 8
    %s106 = sadd.s32 %s105, %s103
    %s107 = scalar_lea.vmem [#allocation6], %s106
    %v108 = vld [vmem:[%s107] ss:$8 sm:$0x3]
    %s109 = scalar_lea.vmem [#allocation2], 2
    %110 = vst.msk [vmem:[%s109] ss:$8 sm:$0x3] %vm83, %v108
    %111 = vst.msk [vmem:[%s109] ss:$8 sm:$0x0] %vm83, %v108
    %s112 = sld [smem:[#allocation5 + $0x3]]
    %s113 = sshra.s32 %s112, 3
    %s114 = sand.u32 %s112, 7
    %s115 = sshra.s32 %s112, 3
    %s116 = sand.u32 %s112, 7
    %s117 = smul.u32 %s113, 2
    %s118 = smul.u32 %s117, 8
    %s119 = sadd.s32 %s118, %s116
    %s120 = scalar_lea.vmem [#allocation6], %s119
    %v121 = vld [vmem:[%s120] ss:$8 sm:$0x3]
    %s122 = scalar_lea.vmem [#allocation2], 3
    %123 = vst.msk [vmem:[%s122] ss:$8 sm:$0x3] %vm83, %v121
    %124 = vst.msk [vmem:[%s122] ss:$8 sm:$0x0] %vm83, %v121
    %s125 = sld [smem:[#allocation5 + $0x4]]
    %s126 = sshra.s32 %s125, 3
    %s127 = sand.u32 %s125, 7
    %s128 = sshra.s32 %s125, 3
    %s129 = sand.u32 %s125, 7
    %s130 = smul.u32 %s126, 2
    %s131 = smul.u32 %s130, 8
    %s132 = sadd.s32 %s131, %s129
    %s133 = scalar_lea.vmem [#allocation6], %s132
    %v134 = vld [vmem:[%s133] ss:$8 sm:$0x3]
    %s135 = scalar_lea.vmem [#allocation2], 4
    %136 = vst.msk [vmem:[%s135] ss:$8 sm:$0x3] %vm83, %v134
    %137 = vst.msk [vmem:[%s135] ss:$8 sm:$0x0] %vm83, %v134
    %s138 = sld [smem:[#allocation5 + $0x5]]
    %s139 = sshra.s32 %s138, 3
    %s140 = sand.u32 %s138, 7
    %s141 = sshra.s32 %s138, 3
    %s142 = sand.u32 %s138, 7
    %s143 = smul.u32 %s139, 2
    %s144 = smul.u32 %s143, 8
    %s145 = sadd.s32 %s144, %s142
    %s146 = scalar_lea.vmem [#allocation6], %s145
    %v147 = vld [vmem:[%s146] ss:$8 sm:$0x3]
    %s148 = scalar_lea.vmem [#allocation2], 5
    %149 = vst.msk [vmem:[%s148] ss:$8 sm:$0x3] %vm83, %v147
    %150 = vst.msk [vmem:[%s148] ss:$8 sm:$0x0] %vm83, %v147
    %s151 = sld [smem:[#allocation5 + $0x6]]
    %s152 = sshra.s32 %s151, 3
    %s153 = sand.u32 %s151, 7
    %s154 = sshra.s32 %s151, 3
    %s155 = sand.u32 %s151, 7
    %s156 = smul.u32 %s152, 2
    %s157 = smul.u32 %s156, 8
    %s158 = sadd.s32 %s157, %s155
    %s159 = scalar_lea.vmem [#allocation6], %s158
    %v160 = vld [vmem:[%s159] ss:$8 sm:$0x3]
    %s161 = scalar_lea.vmem [#allocation2], 6
    %162 = vst.msk [vmem:[%s161] ss:$8 sm:$0x3] %vm83, %v160
    %163 = vst.msk [vmem:[%s161] ss:$8 sm:$0x0] %vm83, %v160
    %s164 = sld [smem:[#allocation5 + $0x7]]
    %s165 = sshra.s32 %s164, 3
    %s166 = sand.u32 %s164, 7
    %s167 = sshra.s32 %s164, 3
    %s168 = sand.u32 %s164, 7
    %s169 = smul.u32 %s165, 2
    %s170 = smul.u32 %s169, 8
    %s171 = sadd.s32 %s170, %s168
    %s172 = scalar_lea.vmem [#allocation6], %s171
    %v173 = vld [vmem:[%s172] ss:$8 sm:$0x3]
    %s174 = scalar_lea.vmem [#allocation2], 7
    %175 = vst.msk [vmem:[%s174] ss:$8 sm:$0x3] %vm83, %v173
    %176 = vst.msk [vmem:[%s174] ss:$8 sm:$0x0] %vm83, %v173
    %v177 = vld [vmem:[#allocation2] sm:$0xff]
    %v178 = vld [vmem:[#allocation2 + $0x8] sm:$0xff]
    %v179 = vpack.c.bf16 %v177, %v177
    %v180 = vpack.c.bf16 %v178, %v178
    %v181 = vld [vmem:[#allocation9] sm:$0xff]
    %v182 = vld [vmem:[#allocation9 + $0x8] sm:$0xff]
    %v183 = vld [vmem:[#allocation9 + $0x10] sm:$0xff]
    %v184 = vld [vmem:[#allocation9 + $0x18] sm:$0xff]
    %v185 = vld [vmem:[#allocation9 + $0x20] sm:$0xff]
    %v186 = vld [vmem:[#allocation9 + $0x28] sm:$0xff]
    %v187 = vld [vmem:[#allocation9 + $0x30] sm:$0xff]
    %v188 = vld [vmem:[#allocation9 + $0x38] sm:$0xff]
    %v189 = vld [vmem:[#allocation9 + $0x40] sm:$0xff]
    %v190 = vld [vmem:[#allocation9 + $0x48] sm:$0xff]
    %v191 = vld [vmem:[#allocation9 + $0x50] sm:$0xff]
    %v192 = vld [vmem:[#allocation9 + $0x58] sm:$0xff]
    %v193 = vld [vmem:[#allocation9 + $0x60] sm:$0xff]
    %v194 = vld [vmem:[#allocation9 + $0x68] sm:$0xff]
    %v195 = vld [vmem:[#allocation9 + $0x70] sm:$0xff]
    %v196 = vld [vmem:[#allocation9 + $0x78] sm:$0xff]
    %v197 = vld [vmem:[#allocation9 + $0x80] sm:$0xff]
    %v198 = vld [vmem:[#allocation9 + $0x88] sm:$0xff]
    %v199 = vld [vmem:[#allocation9 + $0x90] sm:$0xff]
    %v200 = vld [vmem:[#allocation9 + $0x98] sm:$0xff]
    %v201 = vld [vmem:[#allocation9 + $0xa0] sm:$0xff]
    %v202 = vld [vmem:[#allocation9 + $0xa8] sm:$0xff]
    %v203 = vld [vmem:[#allocation9 + $0xb0] sm:$0xff]
    %v204 = vld [vmem:[#allocation9 + $0xb8] sm:$0xff]
    %v205 = vld [vmem:[#allocation9 + $0xc0] sm:$0xff]
    %v206 = vld [vmem:[#allocation9 + $0xc8] sm:$0xff]
    %v207 = vld [vmem:[#allocation9 + $0xd0] sm:$0xff]
    %v208 = vld [vmem:[#allocation9 + $0xd8] sm:$0xff]
    %v209 = vld [vmem:[#allocation9 + $0xe0] sm:$0xff]
    %v210 = vld [vmem:[#allocation9 + $0xe8] sm:$0xff]
    %v211 = vld [vmem:[#allocation9 + $0xf0] sm:$0xff]
    %v212 = vld [vmem:[#allocation9 + $0xf8] sm:$0xff]
    %v213 = vld [vmem:[#allocation9 + $0x100] sm:$0xff]
    %v214 = vld [vmem:[#allocation9 + $0x108] sm:$0xff]
    %v215 = vld [vmem:[#allocation9 + $0x110] sm:$0xff]
    %v216 = vld [vmem:[#allocation9 + $0x118] sm:$0xff]
    %v217 = vld [vmem:[#allocation9 + $0x120] sm:$0xff]
    %v218 = vld [vmem:[#allocation9 + $0x128] sm:$0xff]
    %v219 = vld [vmem:[#allocation9 + $0x130] sm:$0xff]
    %v220 = vld [vmem:[#allocation9 + $0x138] sm:$0xff]
    %v221 = vld [vmem:[#allocation9 + $0x140] sm:$0xff]
    %v222 = vld [vmem:[#allocation9 + $0x148] sm:$0xff]
    %v223 = vld [vmem:[#allocation9 + $0x150] sm:$0xff]
    %v224 = vld [vmem:[#allocation9 + $0x158] sm:$0xff]
    %v225 = vld [vmem:[#allocation9 + $0x160] sm:$0xff]
    %v226 = vld [vmem:[#allocation9 + $0x168] sm:$0xff]
    %v227 = vld [vmem:[#allocation9 + $0x170] sm:$0xff]
    %v228 = vld [vmem:[#allocation9 + $0x178] sm:$0xff]
    %v229 = vld [vmem:[#allocation9 + $0x180] sm:$0xff]
    %v230 = vld [vmem:[#allocation9 + $0x188] sm:$0xff]
    %v231 = vld [vmem:[#allocation9 + $0x190] sm:$0xff]
    %v232 = vld [vmem:[#allocation9 + $0x198] sm:$0xff]
    %v233 = vld [vmem:[#allocation9 + $0x1a0] sm:$0xff]
    %v234 = vld [vmem:[#allocation9 + $0x1a8] sm:$0xff]
    %v235 = vld [vmem:[#allocation9 + $0x1b0] sm:$0xff]
    %v236 = vld [vmem:[#allocation9 + $0x1b8] sm:$0xff]
    %v237 = vld [vmem:[#allocation9 + $0x1c0] sm:$0xff]
    %v238 = vld [vmem:[#allocation9 + $0x1c8] sm:$0xff]
    %v239 = vld [vmem:[#allocation9 + $0x1d0] sm:$0xff]
    %v240 = vld [vmem:[#allocation9 + $0x1d8] sm:$0xff]
    %v241 = vld [vmem:[#allocation9 + $0x1e0] sm:$0xff]
    %v242 = vld [vmem:[#allocation9 + $0x1e8] sm:$0xff]
    %v243 = vld [vmem:[#allocation9 + $0x1f0] sm:$0xff]
    %v244 = vld [vmem:[#allocation9 + $0x1f8] sm:$0xff]
    %v245 = vld [vmem:[#allocation9 + $0x200] sm:$0xff]
    %v246 = vld [vmem:[#allocation9 + $0x208] sm:$0xff]
    %v247 = vld [vmem:[#allocation9 + $0x210] sm:$0xff]
    %v248 = vld [vmem:[#allocation9 + $0x218] sm:$0xff]
    %v249 = vld [vmem:[#allocation9 + $0x220] sm:$0xff]
    %v250 = vld [vmem:[#allocation9 + $0x228] sm:$0xff]
    %v251 = vld [vmem:[#allocation9 + $0x230] sm:$0xff]
    %v252 = vld [vmem:[#allocation9 + $0x238] sm:$0xff]
    %v253 = vld [vmem:[#allocation9 + $0x240] sm:$0xff]
    %v254 = vld [vmem:[#allocation9 + $0x248] sm:$0xff]
    %v255 = vld [vmem:[#allocation9 + $0x250] sm:$0xff]
    %v256 = vld [vmem:[#allocation9 + $0x258] sm:$0xff]
    %v257 = vld [vmem:[#allocation9 + $0x260] sm:$0xff]
    %v258 = vld [vmem:[#allocation9 + $0x268] sm:$0xff]
    %v259 = vld [vmem:[#allocation9 + $0x270] sm:$0xff]
    %v260 = vld [vmem:[#allocation9 + $0x278] sm:$0xff]
    %v261 = vld [vmem:[#allocation9 + $0x280] sm:$0xff]
    %v262 = vld [vmem:[#allocation9 + $0x288] sm:$0xff]
    %v263 = vld [vmem:[#allocation9 + $0x290] sm:$0xff]
    %v264 = vld [vmem:[#allocation9 + $0x298] sm:$0xff]
    %v265 = vld [vmem:[#allocation9 + $0x2a0] sm:$0xff]
    %v266 = vld [vmem:[#allocation9 + $0x2a8] sm:$0xff]
    %v267 = vld [vmem:[#allocation9 + $0x2b0] sm:$0xff]
    %v268 = vld [vmem:[#allocation9 + $0x2b8] sm:$0xff]
    %v269 = vld [vmem:[#allocation9 + $0x2c0] sm:$0xff]
    %v270 = vld [vmem:[#allocation9 + $0x2c8] sm:$0xff]
    %v271 = vld [vmem:[#allocation9 + $0x2d0] sm:$0xff]
    %v272 = vld [vmem:[#allocation9 + $0x2d8] sm:$0xff]
    %v273 = vld [vmem:[#allocation9 + $0x2e0] sm:$0xff]
    %v274 = vld [vmem:[#allocation9 + $0x2e8] sm:$0xff]
    %v275 = vld [vmem:[#allocation9 + $0x2f0] sm:$0xff]
    %v276 = vld [vmem:[#allocation9 + $0x2f8] sm:$0xff]
    %v277 = vld [vmem:[%s4] sm:$0x3f]
    %v279 = vlaneseq
    %v280 = vshrl.u32 %v279, 7
    %v281 = vsub.s32 0, %v280
    %v282 = vrot.slane %v277, %v281
    %v283 = vlaneseq
    %v284 = vshrl.u32 %v283, 7
    %v285 = vsub.s32 1, %v284
    %v286 = vrot.slane %v277, %v285
    %v287 = vlaneseq
    %v288 = vshrl.u32 %v287, 7
    %v289 = vsub.s32 2, %v288
    %v290 = vrot.slane %v277, %v289
    %v291 = vlaneseq
    %v292 = vshrl.u32 %v291, 7
    %v293 = vsub.s32 3, %v292
    %v294 = vrot.slane %v277, %v293
    %v295 = vlaneseq
    %v296 = vshrl.u32 %v295, 7
    %v297 = vsub.s32 4, %v296
    %v298 = vrot.slane %v277, %v297
    %v299 = vlaneseq
    %v300 = vshrl.u32 %v299, 7
    %v301 = vsub.s32 5, %v300
    %v302 = vrot.slane %v277, %v301
    %v405 = vunpack.c.l.b16 %v181
    %v406 = vunpack.c.h.b16 %v181
    %v407 = vunpack.c.l.b16 %v182
    %v408 = vunpack.c.h.b16 %v182
    %v409 = vunpack.c.l.b16 %v183
    %v410 = vunpack.c.h.b16 %v183
    %v411 = vunpack.c.l.b16 %v184
    %v412 = vunpack.c.h.b16 %v184
    %v413 = vunpack.c.l.b16 %v185
    %v414 = vunpack.c.h.b16 %v185
    %v415 = vunpack.c.l.b16 %v186
    %v416 = vunpack.c.h.b16 %v186
    %v417 = vunpack.c.l.b16 %v187
    %v418 = vunpack.c.h.b16 %v187
    %v419 = vunpack.c.l.b16 %v188
    %v420 = vunpack.c.h.b16 %v188
    %v421 = vunpack.c.l.b16 %v189
    %v422 = vunpack.c.h.b16 %v189
    %v423 = vunpack.c.l.b16 %v190
    %v424 = vunpack.c.h.b16 %v190
    %v425 = vunpack.c.l.b16 %v191
    %v426 = vunpack.c.h.b16 %v191
    %v427 = vunpack.c.l.b16 %v192
    %v428 = vunpack.c.h.b16 %v192
    %v429 = vunpack.c.l.b16 %v193
    %v430 = vunpack.c.h.b16 %v193
    %v431 = vunpack.c.l.b16 %v194
    %v432 = vunpack.c.h.b16 %v194
    %v433 = vunpack.c.l.b16 %v195
    %v434 = vunpack.c.h.b16 %v195
    %v435 = vunpack.c.l.b16 %v196
    %v436 = vunpack.c.h.b16 %v196
    %v437 = vunpack.c.l.b16 %v197
    %v438 = vunpack.c.h.b16 %v197
    %v439 = vunpack.c.l.b16 %v198
    %v440 = vunpack.c.h.b16 %v198
    %v441 = vunpack.c.l.b16 %v199
    %v442 = vunpack.c.h.b16 %v199
    %v443 = vunpack.c.l.b16 %v200
    %v444 = vunpack.c.h.b16 %v200
    %v445 = vunpack.c.l.b16 %v201
    %v446 = vunpack.c.h.b16 %v201
    %v447 = vunpack.c.l.b16 %v202
    %v448 = vunpack.c.h.b16 %v202
    %v449 = vunpack.c.l.b16 %v203
    %v450 = vunpack.c.h.b16 %v203
    %v451 = vunpack.c.l.b16 %v204
    %v452 = vunpack.c.h.b16 %v204
    %v453 = vunpack.c.l.b16 %v205
    %v454 = vunpack.c.h.b16 %v205
    %v455 = vunpack.c.l.b16 %v206
    %v456 = vunpack.c.h.b16 %v206
    %v457 = vunpack.c.l.b16 %v207
    %v458 = vunpack.c.h.b16 %v207
    %v459 = vunpack.c.l.b16 %v208
    %v460 = vunpack.c.h.b16 %v208
    %v461 = vunpack.c.l.b16 %v209
    %v462 = vunpack.c.h.b16 %v209
    %v463 = vunpack.c.l.b16 %v210
    %v464 = vunpack.c.h.b16 %v210
    %v465 = vunpack.c.l.b16 %v211
    %v466 = vunpack.c.h.b16 %v211
    %v467 = vunpack.c.l.b16 %v212
    %v468 = vunpack.c.h.b16 %v212
    %v469 = vunpack.c.l.b16 %v213
    %v470 = vunpack.c.h.b16 %v213
    %v471 = vunpack.c.l.b16 %v214
    %v472 = vunpack.c.h.b16 %v214
    %v473 = vunpack.c.l.b16 %v215
    %v474 = vunpack.c.h.b16 %v215
    %v475 = vunpack.c.l.b16 %v216
    %v476 = vunpack.c.h.b16 %v216
    %v477 = vunpack.c.l.b16 %v217
    %v478 = vunpack.c.h.b16 %v217
    %v479 = vunpack.c.l.b16 %v218
    %v480 = vunpack.c.h.b16 %v218
    %v481 = vunpack.c.l.b16 %v219
    %v482 = vunpack.c.h.b16 %v219
    %v483 = vunpack.c.l.b16 %v220
    %v484 = vunpack.c.h.b16 %v220
    %v485 = vunpack.c.l.b16 %v221
    %v486 = vunpack.c.h.b16 %v221
    %v487 = vunpack.c.l.b16 %v222
    %v488 = vunpack.c.h.b16 %v222
    %v489 = vunpack.c.l.b16 %v223
    %v490 = vunpack.c.h.b16 %v223
    %v491 = vunpack.c.l.b16 %v224
    %v492 = vunpack.c.h.b16 %v224
    %v493 = vunpack.c.l.b16 %v225
    %v494 = vunpack.c.h.b16 %v225
    %v495 = vunpack.c.l.b16 %v226
    %v496 = vunpack.c.h.b16 %v226
    %v497 = vunpack.c.l.b16 %v227
    %v498 = vunpack.c.h.b16 %v227
    %v499 = vunpack.c.l.b16 %v228
    %v500 = vunpack.c.h.b16 %v228
    %v501 = vunpack.c.l.b16 %v229
    %v502 = vunpack.c.h.b16 %v229
    %v503 = vunpack.c.l.b16 %v230
    %v504 = vunpack.c.h.b16 %v230
    %v505 = vunpack.c.l.b16 %v231
    %v506 = vunpack.c.h.b16 %v231
    %v507 = vunpack.c.l.b16 %v232
    %v508 = vunpack.c.h.b16 %v232
    %v509 = vunpack.c.l.b16 %v233
    %v510 = vunpack.c.h.b16 %v233
    %v511 = vunpack.c.l.b16 %v234
    %v512 = vunpack.c.h.b16 %v234
    %v513 = vunpack.c.l.b16 %v235
    %v514 = vunpack.c.h.b16 %v235
    %v515 = vunpack.c.l.b16 %v236
    %v516 = vunpack.c.h.b16 %v236
    %v517 = vunpack.c.l.b16 %v237
    %v518 = vunpack.c.h.b16 %v237
    %v519 = vunpack.c.l.b16 %v238
    %v520 = vunpack.c.h.b16 %v238
    %v521 = vunpack.c.l.b16 %v239
    %v522 = vunpack.c.h.b16 %v239
    %v523 = vunpack.c.l.b16 %v240
    %v524 = vunpack.c.h.b16 %v240
    %v525 = vunpack.c.l.b16 %v241
    %v526 = vunpack.c.h.b16 %v241
    %v527 = vunpack.c.l.b16 %v242
    %v528 = vunpack.c.h.b16 %v242
    %v529 = vunpack.c.l.b16 %v243
    %v530 = vunpack.c.h.b16 %v243
    %v531 = vunpack.c.l.b16 %v244
    %v532 = vunpack.c.h.b16 %v244
    %v533 = vunpack.c.l.b16 %v245
    %v534 = vunpack.c.h.b16 %v245
    %v535 = vunpack.c.l.b16 %v246
    %v536 = vunpack.c.h.b16 %v246
    %v537 = vunpack.c.l.b16 %v247
    %v538 = vunpack.c.h.b16 %v247
    %v539 = vunpack.c.l.b16 %v248
    %v540 = vunpack.c.h.b16 %v248
    %v541 = vunpack.c.l.b16 %v249
    %v542 = vunpack.c.h.b16 %v249
    %v543 = vunpack.c.l.b16 %v250
    %v544 = vunpack.c.h.b16 %v250
    %v545 = vunpack.c.l.b16 %v251
    %v546 = vunpack.c.h.b16 %v251
    %v547 = vunpack.c.l.b16 %v252
    %v548 = vunpack.c.h.b16 %v252
    %v549 = vunpack.c.l.b16 %v253
    %v550 = vunpack.c.h.b16 %v253
    %v551 = vunpack.c.l.b16 %v254
    %v552 = vunpack.c.h.b16 %v254
    %v553 = vunpack.c.l.b16 %v255
    %v554 = vunpack.c.h.b16 %v255
    %v555 = vunpack.c.l.b16 %v256
    %v556 = vunpack.c.h.b16 %v256
    %v557 = vunpack.c.l.b16 %v257
    %v558 = vunpack.c.h.b16 %v257
    %v559 = vunpack.c.l.b16 %v258
    %v560 = vunpack.c.h.b16 %v258
    %v561 = vunpack.c.l.b16 %v259
    %v562 = vunpack.c.h.b16 %v259
    %v563 = vunpack.c.l.b16 %v260
    %v564 = vunpack.c.h.b16 %v260
    %v565 = vunpack.c.l.b16 %v261
    %v566 = vunpack.c.h.b16 %v261
    %v567 = vunpack.c.l.b16 %v262
    %v568 = vunpack.c.h.b16 %v262
    %v569 = vunpack.c.l.b16 %v263
    %v570 = vunpack.c.h.b16 %v263
    %v571 = vunpack.c.l.b16 %v264
    %v572 = vunpack.c.h.b16 %v264
    %v573 = vunpack.c.l.b16 %v265
    %v574 = vunpack.c.h.b16 %v265
    %v575 = vunpack.c.l.b16 %v266
    %v576 = vunpack.c.h.b16 %v266
    %v577 = vunpack.c.l.b16 %v267
    %v578 = vunpack.c.h.b16 %v267
    %v579 = vunpack.c.l.b16 %v268
    %v580 = vunpack.c.h.b16 %v268
    %v581 = vunpack.c.l.b16 %v269
    %v582 = vunpack.c.h.b16 %v269
    %v583 = vunpack.c.l.b16 %v270
    %v584 = vunpack.c.h.b16 %v270
    %v585 = vunpack.c.l.b16 %v271
    %v586 = vunpack.c.h.b16 %v271
    %v587 = vunpack.c.l.b16 %v272
    %v588 = vunpack.c.h.b16 %v272
    %v589 = vunpack.c.l.b16 %v273
    %v590 = vunpack.c.h.b16 %v273
    %v591 = vunpack.c.l.b16 %v274
    %v592 = vunpack.c.h.b16 %v274
    %v593 = vunpack.c.l.b16 %v275
    %v594 = vunpack.c.h.b16 %v275
    %v595 = vunpack.c.l.b16 %v276
    %v596 = vunpack.c.h.b16 %v276
    %v597 = vpack.c.b16 %v411, %v405
    %v598 = vpack.c.b16 %v412, %v406
    %v599 = vpack.c.b16 %v413, %v407
    %v600 = vpack.c.b16 %v414, %v408
    %v601 = vpack.c.b16 %v415, %v409
    %v602 = vpack.c.b16 %v416, %v410
    %v603 = vpack.c.b16 %v423, %v417
    %v604 = vpack.c.b16 %v424, %v418
    %v605 = vpack.c.b16 %v425, %v419
    %v606 = vpack.c.b16 %v426, %v420
    %v607 = vpack.c.b16 %v427, %v421
    %v608 = vpack.c.b16 %v428, %v422
    %v609 = vpack.c.b16 %v435, %v429
    %v610 = vpack.c.b16 %v436, %v430
    %v611 = vpack.c.b16 %v437, %v431
    %v612 = vpack.c.b16 %v438, %v432
    %v613 = vpack.c.b16 %v439, %v433
    %v614 = vpack.c.b16 %v440, %v434
    %v615 = vpack.c.b16 %v447, %v441
    %v616 = vpack.c.b16 %v448, %v442
    %v617 = vpack.c.b16 %v449, %v443
    %v618 = vpack.c.b16 %v450, %v444
    %v619 = vpack.c.b16 %v451, %v445
    %v620 = vpack.c.b16 %v452, %v446
    %v621 = vpack.c.b16 %v459, %v453
    %v622 = vpack.c.b16 %v460, %v454
    %v623 = vpack.c.b16 %v461, %v455
    %v624 = vpack.c.b16 %v462, %v456
    %v625 = vpack.c.b16 %v463, %v457
    %v626 = vpack.c.b16 %v464, %v458
    %v627 = vpack.c.b16 %v471, %v465
    %v628 = vpack.c.b16 %v472, %v466
    %v629 = vpack.c.b16 %v473, %v467
    %v630 = vpack.c.b16 %v474, %v468
    %v631 = vpack.c.b16 %v475, %v469
    %v632 = vpack.c.b16 %v476, %v470
    %v633 = vpack.c.b16 %v483, %v477
    %v634 = vpack.c.b16 %v484, %v478
    %v635 = vpack.c.b16 %v485, %v479
    %v636 = vpack.c.b16 %v486, %v480
    %v637 = vpack.c.b16 %v487, %v481
    %v638 = vpack.c.b16 %v488, %v482
    %v639 = vpack.c.b16 %v495, %v489
    %v640 = vpack.c.b16 %v496, %v490
    %v641 = vpack.c.b16 %v497, %v491
    %v642 = vpack.c.b16 %v498, %v492
    %v643 = vpack.c.b16 %v499, %v493
    %v644 = vpack.c.b16 %v500, %v494
    %v645 = vpack.c.b16 %v507, %v501
    %v646 = vpack.c.b16 %v508, %v502
    %v647 = vpack.c.b16 %v509, %v503
    %v648 = vpack.c.b16 %v510, %v504
    %v649 = vpack.c.b16 %v511, %v505
    %v650 = vpack.c.b16 %v512, %v506
    %v651 = vpack.c.b16 %v519, %v513
    %v652 = vpack.c.b16 %v520, %v514
    %v653 = vpack.c.b16 %v521, %v515
    %v654 = vpack.c.b16 %v522, %v516
    %v655 = vpack.c.b16 %v523, %v517
    %v656 = vpack.c.b16 %v524, %v518
    %v657 = vpack.c.b16 %v531, %v525
    %v658 = vpack.c.b16 %v532, %v526
    %v659 = vpack.c.b16 %v533, %v527
    %v660 = vpack.c.b16 %v534, %v528
    %v661 = vpack.c.b16 %v535, %v529
    %v662 = vpack.c.b16 %v536, %v530
    %v663 = vpack.c.b16 %v543, %v537
    %v664 = vpack.c.b16 %v544, %v538
    %v665 = vpack.c.b16 %v545, %v539
    %v666 = vpack.c.b16 %v546, %v540
    %v667 = vpack.c.b16 %v547, %v541
    %v668 = vpack.c.b16 %v548, %v542
    %v669 = vpack.c.b16 %v555, %v549
    %v670 = vpack.c.b16 %v556, %v550
    %v671 = vpack.c.b16 %v557, %v551
    %v672 = vpack.c.b16 %v558, %v552
    %v673 = vpack.c.b16 %v559, %v553
    %v674 = vpack.c.b16 %v560, %v554
    %v675 = vpack.c.b16 %v567, %v561
    %v676 = vpack.c.b16 %v568, %v562
    %v677 = vpack.c.b16 %v569, %v563
    %v678 = vpack.c.b16 %v570, %v564
    %v679 = vpack.c.b16 %v571, %v565
    %v680 = vpack.c.b16 %v572, %v566
    %v681 = vpack.c.b16 %v579, %v573
    %v682 = vpack.c.b16 %v580, %v574
    %v683 = vpack.c.b16 %v581, %v575
    %v684 = vpack.c.b16 %v582, %v576
    %v685 = vpack.c.b16 %v583, %v577
    %v686 = vpack.c.b16 %v584, %v578
    %v687 = vpack.c.b16 %v591, %v585
    %v688 = vpack.c.b16 %v592, %v586
    %v689 = vpack.c.b16 %v593, %v587
    %v690 = vpack.c.b16 %v594, %v588
    %v691 = vpack.c.b16 %v595, %v589
    %v692 = vpack.c.b16 %v596, %v590
    %789 = vmatprep.subr.bf16.mxu0 %v640
    %790 = vmatpush1.bf16.msra.mxu0 %v639
    %791 = vmatprep.subr.bf16.mxu0 %v634
    %792 = vmatpush1.bf16.msra.mxu0 %v633
    %793 = vmatprep.subr.bf16.mxu0 %v628
    %794 = vmatpush1.bf16.msra.mxu0 %v627
    %795 = vmatprep.subr.bf16.mxu0 %v622
    %796 = vmatpush1.bf16.msra.mxu0 %v621
    %797 = vmatprep.subr.bf16.mxu0 %v616
    %798 = vmatpush1.bf16.msra.mxu0 %v615
    %799 = vmatprep.subr.bf16.mxu0 %v610
    %800 = vmatpush1.bf16.msra.mxu0 %v609
    %801 = vmatprep.subr.bf16.mxu0 %v604
    %802 = vmatpush1.bf16.msra.mxu0 %v603
    %803 = vmatprep.subr.bf16.mxu0 %v598
    %804 = vmatpush1.bf16.msra.mxu0 %v597
    %805 = vmatprep.subr.bf16.mxu0 %v688
    %806 = vmatpush2.bf16.msra.mxu0 %v687
    %807 = vmatprep.subr.bf16.mxu0 %v682
    %808 = vmatpush2.bf16.msra.mxu0 %v681
    %809 = vmatprep.subr.bf16.mxu0 %v676
    %810 = vmatpush2.bf16.msra.mxu0 %v675
    %811 = vmatprep.subr.bf16.mxu0 %v670
    %812 = vmatpush2.bf16.msra.mxu0 %v669
    %813 = vmatprep.subr.bf16.mxu0 %v664
    %814 = vmatpush2.bf16.msra.mxu0 %v663
    %815 = vmatprep.subr.bf16.mxu0 %v658
    %816 = vmatpush2.bf16.msra.mxu0 %v657
    %817 = vmatprep.subr.bf16.mxu0 %v652
    %818 = vmatpush2.bf16.msra.mxu0 %v651
    %819 = vmatprep.subr.bf16.mxu0 %v646
    %820 = vmatpush2.bf16.msra.mxu0 %v645
    %821 = vmatprep.mubr.bf16.mxu0 %v180
    %822 = vmatmul.mubr.bf16.gmra.mxu0 %v179
    %v823 = vpop.f32.mrf.mxu0
    %v824 = vadd.f32 %v282, %v823
    %v825 = vpop.f32.mrf.mxu0
    %v826 = vadd.f32 %v286, %v825
    %v827 = vpop.f32.mrf.mxu0
    %v828 = vpop.f32.mrf.mxu0
    %829 = vdwg.mxu0
    %830 = vmatprep.subr.bf16.mxu0 %v642
    %831 = vmatpush1.bf16.msra.mxu0 %v641
    %832 = vmatprep.subr.bf16.mxu0 %v636
    %833 = vmatpush1.bf16.msra.mxu0 %v635
    %834 = vmatprep.subr.bf16.mxu0 %v630
    %835 = vmatpush1.bf16.msra.mxu0 %v629
    %836 = vmatprep.subr.bf16.mxu0 %v624
    %837 = vmatpush1.bf16.msra.mxu0 %v623
    %838 = vmatprep.subr.bf16.mxu0 %v618
    %839 = vmatpush1.bf16.msra.mxu0 %v617
    %840 = vmatprep.subr.bf16.mxu0 %v612
    %841 = vmatpush1.bf16.msra.mxu0 %v611
    %842 = vmatprep.subr.bf16.mxu0 %v606
    %843 = vmatpush1.bf16.msra.mxu0 %v605
    %844 = vmatprep.subr.bf16.mxu0 %v600
    %845 = vmatpush1.bf16.msra.mxu0 %v599
    %846 = vmatprep.subr.bf16.mxu0 %v690
    %847 = vmatpush2.bf16.msra.mxu0 %v689
    %848 = vmatprep.subr.bf16.mxu0 %v684
    %849 = vmatpush2.bf16.msra.mxu0 %v683
    %850 = vmatprep.subr.bf16.mxu0 %v678
    %851 = vmatpush2.bf16.msra.mxu0 %v677
    %852 = vmatprep.subr.bf16.mxu0 %v672
    %853 = vmatpush2.bf16.msra.mxu0 %v671
    %854 = vmatprep.subr.bf16.mxu0 %v666
    %855 = vmatpush2.bf16.msra.mxu0 %v665
    %856 = vmatprep.subr.bf16.mxu0 %v660
    %857 = vmatpush2.bf16.msra.mxu0 %v659
    %858 = vmatprep.subr.bf16.mxu0 %v654
    %859 = vmatpush2.bf16.msra.mxu0 %v653
    %860 = vmatprep.subr.bf16.mxu0 %v648
    %861 = vmatpush2.bf16.msra.mxu0 %v647
    %862 = vmatprep.mubr.bf16.mxu0 %v180
    %863 = vmatmul.mubr.bf16.gmra.mxu0 %v179
    %v864 = vpop.f32.mrf.mxu0
    %v865 = vadd.f32 %v290, %v864
    %v866 = vpop.f32.mrf.mxu0
    %v867 = vadd.f32 %v294, %v866
    %v868 = vpop.f32.mrf.mxu0
    %v869 = vpop.f32.mrf.mxu0
    %870 = vdwg.mxu0
    %871 = vmatprep.subr.bf16.mxu0 %v644
    %872 = vmatpush1.bf16.msra.mxu0 %v643
    %873 = vmatprep.subr.bf16.mxu0 %v638
    %874 = vmatpush1.bf16.msra.mxu0 %v637
    %875 = vmatprep.subr.bf16.mxu0 %v632
    %876 = vmatpush1.bf16.msra.mxu0 %v631
    %877 = vmatprep.subr.bf16.mxu0 %v626
    %878 = vmatpush1.bf16.msra.mxu0 %v625
    %879 = vmatprep.subr.bf16.mxu0 %v620
    %880 = vmatpush1.bf16.msra.mxu0 %v619
    %881 = vmatprep.subr.bf16.mxu0 %v614
    %882 = vmatpush1.bf16.msra.mxu0 %v613
    %883 = vmatprep.subr.bf16.mxu0 %v608
    %884 = vmatpush1.bf16.msra.mxu0 %v607
    %885 = vmatprep.subr.bf16.mxu0 %v602
    %886 = vmatpush1.bf16.msra.mxu0 %v601
    %887 = vmatprep.subr.bf16.mxu0 %v692
    %888 = vmatpush2.bf16.msra.mxu0 %v691
    %889 = vmatprep.subr.bf16.mxu0 %v686
    %890 = vmatpush2.bf16.msra.mxu0 %v685
    %891 = vmatprep.subr.bf16.mxu0 %v680
    %892 = vmatpush2.bf16.msra.mxu0 %v679
    %893 = vmatprep.subr.bf16.mxu0 %v674
    %894 = vmatpush2.bf16.msra.mxu0 %v673
    %895 = vmatprep.subr.bf16.mxu0 %v668
    %896 = vmatpush2.bf16.msra.mxu0 %v667
    %897 = vmatprep.subr.bf16.mxu0 %v662
    %898 = vmatpush2.bf16.msra.mxu0 %v661
    %899 = vmatprep.subr.bf16.mxu0 %v656
    %900 = vmatpush2.bf16.msra.mxu0 %v655
    %901 = vmatprep.subr.bf16.mxu0 %v650
    %902 = vmatpush2.bf16.msra.mxu0 %v649
    %903 = vmatprep.mubr.bf16.mxu0 %v180
    %904 = vmatmul.mubr.bf16.gmra.mxu0 %v179
    %v905 = vpop.f32.mrf.mxu0
    %v906 = vadd.f32 %v298, %v905
    %v907 = vpop.f32.mrf.mxu0
    %v908 = vadd.f32 %v302, %v907
    %v909 = vpop.f32.mrf.mxu0
    %v910 = vpop.f32.mrf.mxu0
    %911 = vdwg.mxu0
    %912 = vst [vmem:[#allocation3] sm:$0xff] %v824
    %913 = vst [vmem:[#allocation3 + $0x8] sm:$0xff] %v826
    %914 = vst [vmem:[#allocation3 + $0x10] sm:$0xff] %v865
    %915 = vst [vmem:[#allocation3 + $0x18] sm:$0xff] %v867
    %916 = vst [vmem:[#allocation3 + $0x20] sm:$0xff] %v906
    %917 = vst [vmem:[#allocation3 + $0x28] sm:$0xff] %v908
    %v918 = vld [vmem:[%s6] sm:$0x3]
    %v919 = vld [vmem:[#allocation3] ss:$8 sm:$0xf]
    %v920 = vld [vmem:[#allocation3] ss:$8 sm:$0x30]
    %v921 = vor.u32 %v919, %v920
    %v923 = vlaneseq
    %v924 = vshrl.u32 %v923, 7
    %v925 = vsub.s32 0, %v924
    %v926 = vrot.slane %v918, %v925
    %v927 = vlaneseq
    %v928 = vshrl.u32 %v927, 7
    %v929 = vsub.s32 1, %v928
    %v930 = vrot.slane %v918, %v929
    %v933 = vpack.c.bf16 %v926, %v926
    %v934 = vpack.c.bf16 %v930, %v930
    %v935 = vld [vmem:[#allocation11] sm:$0xff]
    %v936 = vld [vmem:[#allocation11 + $0x8] sm:$0xff]
    %v937 = vld [vmem:[#allocation11 + $0x10] sm:$0xff]
    %v938 = vld [vmem:[#allocation11 + $0x18] sm:$0xff]
    %v939 = vld [vmem:[#allocation11 + $0x20] sm:$0xff]
    %v940 = vld [vmem:[#allocation11 + $0x28] sm:$0xff]
    %v941 = vld [vmem:[#allocation11 + $0x30] sm:$0xff]
    %v942 = vld [vmem:[#allocation11 + $0x38] sm:$0xff]
    %v943 = vld [vmem:[#allocation11 + $0x40] sm:$0xff]
    %v944 = vld [vmem:[#allocation11 + $0x48] sm:$0xff]
    %v945 = vld [vmem:[#allocation11 + $0x50] sm:$0xff]
    %v946 = vld [vmem:[#allocation11 + $0x58] sm:$0xff]
    %v947 = vld [vmem:[#allocation11 + $0x60] sm:$0xff]
    %v948 = vld [vmem:[#allocation11 + $0x68] sm:$0xff]
    %v949 = vld [vmem:[#allocation11 + $0x70] sm:$0xff]
    %v950 = vld [vmem:[#allocation11 + $0x78] sm:$0xff]
    %v951 = vld [vmem:[#allocation11 + $0x80] sm:$0xff]
    %v952 = vld [vmem:[#allocation11 + $0x88] sm:$0xff]
    %v953 = vld [vmem:[#allocation11 + $0x90] sm:$0xff]
    %v954 = vld [vmem:[#allocation11 + $0x98] sm:$0xff]
    %v955 = vld [vmem:[#allocation11 + $0xa0] sm:$0xff]
    %v956 = vld [vmem:[#allocation11 + $0xa8] sm:$0xff]
    %v957 = vld [vmem:[#allocation11 + $0xb0] sm:$0xff]
    %v958 = vld [vmem:[#allocation11 + $0xb8] sm:$0xff]
    %v959 = vld [vmem:[#allocation11 + $0xc0] sm:$0xff]
    %v960 = vld [vmem:[#allocation11 + $0xc8] sm:$0xff]
    %v961 = vld [vmem:[#allocation11 + $0xd0] sm:$0xff]
    %v962 = vld [vmem:[#allocation11 + $0xd8] sm:$0xff]
    %v963 = vld [vmem:[#allocation11 + $0xe0] sm:$0xff]
    %v964 = vld [vmem:[#allocation11 + $0xe8] sm:$0xff]
    %v965 = vld [vmem:[#allocation11 + $0xf0] sm:$0xff]
    %v966 = vld [vmem:[#allocation11 + $0xf8] sm:$0xff]
    %v967 = vld [vmem:[#allocation11 + $0x100] sm:$0xff]
    %v968 = vld [vmem:[#allocation11 + $0x108] sm:$0xff]
    %v969 = vld [vmem:[#allocation11 + $0x110] sm:$0xff]
    %v970 = vld [vmem:[#allocation11 + $0x118] sm:$0xff]
    %v971 = vld [vmem:[#allocation11 + $0x120] sm:$0xff]
    %v972 = vld [vmem:[#allocation11 + $0x128] sm:$0xff]
    %v973 = vld [vmem:[#allocation11 + $0x130] sm:$0xff]
    %v974 = vld [vmem:[#allocation11 + $0x138] sm:$0xff]
    %v975 = vld [vmem:[#allocation11 + $0x140] sm:$0xff]
    %v976 = vld [vmem:[#allocation11 + $0x148] sm:$0xff]
    %v977 = vld [vmem:[#allocation11 + $0x150] sm:$0xff]
    %v978 = vld [vmem:[#allocation11 + $0x158] sm:$0xff]
    %v979 = vld [vmem:[#allocation11 + $0x160] sm:$0xff]
    %v980 = vld [vmem:[#allocation11 + $0x168] sm:$0xff]
    %v981 = vld [vmem:[#allocation11 + $0x170] sm:$0xff]
    %v982 = vld [vmem:[#allocation11 + $0x178] sm:$0xff]
    %v983 = vld [vmem:[#allocation11 + $0x180] sm:$0xff]
    %v984 = vld [vmem:[#allocation11 + $0x188] sm:$0xff]
    %v985 = vld [vmem:[#allocation11 + $0x190] sm:$0xff]
    %v986 = vld [vmem:[#allocation11 + $0x198] sm:$0xff]
    %v987 = vld [vmem:[#allocation11 + $0x1a0] sm:$0xff]
    %v988 = vld [vmem:[#allocation11 + $0x1a8] sm:$0xff]
    %v989 = vld [vmem:[#allocation11 + $0x1b0] sm:$0xff]
    %v990 = vld [vmem:[#allocation11 + $0x1b8] sm:$0xff]
    %v991 = vld [vmem:[#allocation11 + $0x1c0] sm:$0xff]
    %v992 = vld [vmem:[#allocation11 + $0x1c8] sm:$0xff]
    %v993 = vld [vmem:[#allocation11 + $0x1d0] sm:$0xff]
    %v994 = vld [vmem:[#allocation11 + $0x1d8] sm:$0xff]
    %v995 = vld [vmem:[#allocation11 + $0x1e0] sm:$0xff]
    %v996 = vld [vmem:[#allocation11 + $0x1e8] sm:$0xff]
    %v997 = vld [vmem:[#allocation11 + $0x1f0] sm:$0xff]
    %v998 = vld [vmem:[#allocation11 + $0x1f8] sm:$0xff]
    %v999 = vld [vmem:[#allocation11 + $0x200] sm:$0xff]
    %v1000 = vld [vmem:[#allocation11 + $0x208] sm:$0xff]
    %v1001 = vld [vmem:[#allocation11 + $0x210] sm:$0xff]
    %v1002 = vld [vmem:[#allocation11 + $0x218] sm:$0xff]
    %v1003 = vld [vmem:[#allocation11 + $0x220] sm:$0xff]
    %v1004 = vld [vmem:[#allocation11 + $0x228] sm:$0xff]
    %v1005 = vld [vmem:[#allocation11 + $0x230] sm:$0xff]
    %v1006 = vld [vmem:[#allocation11 + $0x238] sm:$0xff]
    %v1007 = vld [vmem:[#allocation11 + $0x240] sm:$0xff]
    %v1008 = vld [vmem:[#allocation11 + $0x248] sm:$0xff]
    %v1009 = vld [vmem:[#allocation11 + $0x250] sm:$0xff]
    %v1010 = vld [vmem:[#allocation11 + $0x258] sm:$0xff]
    %v1011 = vld [vmem:[#allocation11 + $0x260] sm:$0xff]
    %v1012 = vld [vmem:[#allocation11 + $0x268] sm:$0xff]
    %v1013 = vld [vmem:[#allocation11 + $0x270] sm:$0xff]
    %v1014 = vld [vmem:[#allocation11 + $0x278] sm:$0xff]
    %v1015 = vld [vmem:[#allocation11 + $0x280] sm:$0xff]
    %v1016 = vld [vmem:[#allocation11 + $0x288] sm:$0xff]
    %v1017 = vld [vmem:[#allocation11 + $0x290] sm:$0xff]
    %v1018 = vld [vmem:[#allocation11 + $0x298] sm:$0xff]
    %v1019 = vld [vmem:[#allocation11 + $0x2a0] sm:$0xff]
    %v1020 = vld [vmem:[#allocation11 + $0x2a8] sm:$0xff]
    %v1021 = vld [vmem:[#allocation11 + $0x2b0] sm:$0xff]
    %v1022 = vld [vmem:[#allocation11 + $0x2b8] sm:$0xff]
    %v1023 = vld [vmem:[#allocation11 + $0x2c0] sm:$0xff]
    %v1024 = vld [vmem:[#allocation11 + $0x2c8] sm:$0xff]
    %v1025 = vld [vmem:[#allocation11 + $0x2d0] sm:$0xff]
    %v1026 = vld [vmem:[#allocation11 + $0x2d8] sm:$0xff]
    %v1027 = vld [vmem:[#allocation11 + $0x2e0] sm:$0xff]
    %v1028 = vld [vmem:[#allocation11 + $0x2e8] sm:$0xff]
    %v1029 = vld [vmem:[#allocation11 + $0x2f0] sm:$0xff]
    %v1030 = vld [vmem:[#allocation11 + $0x2f8] sm:$0xff]
    %v1127 = vunpack.c.l.b16 %v935
    %v1128 = vunpack.c.h.b16 %v935
    %v1129 = vunpack.c.l.b16 %v936
    %v1130 = vunpack.c.h.b16 %v936
    %v1131 = vunpack.c.l.b16 %v937
    %v1132 = vunpack.c.h.b16 %v937
    %v1133 = vunpack.c.l.b16 %v938
    %v1134 = vunpack.c.h.b16 %v938
    %v1135 = vunpack.c.l.b16 %v939
    %v1136 = vunpack.c.h.b16 %v939
    %v1137 = vunpack.c.l.b16 %v940
    %v1138 = vunpack.c.h.b16 %v940
    %v1139 = vunpack.c.l.b16 %v941
    %v1140 = vunpack.c.h.b16 %v941
    %v1141 = vunpack.c.l.b16 %v942
    %v1142 = vunpack.c.h.b16 %v942
    %v1143 = vunpack.c.l.b16 %v943
    %v1144 = vunpack.c.h.b16 %v943
    %v1145 = vunpack.c.l.b16 %v944
    %v1146 = vunpack.c.h.b16 %v944
    %v1147 = vunpack.c.l.b16 %v945
    %v1148 = vunpack.c.h.b16 %v945
    %v1149 = vunpack.c.l.b16 %v946
    %v1150 = vunpack.c.h.b16 %v946
    %v1151 = vunpack.c.l.b16 %v947
    %v1152 = vunpack.c.h.b16 %v947
    %v1153 = vunpack.c.l.b16 %v948
    %v1154 = vunpack.c.h.b16 %v948
    %v1155 = vunpack.c.l.b16 %v949
    %v1156 = vunpack.c.h.b16 %v949
    %v1157 = vunpack.c.l.b16 %v950
    %v1158 = vunpack.c.h.b16 %v950
    %v1159 = vunpack.c.l.b16 %v951
    %v1160 = vunpack.c.h.b16 %v951
    %v1161 = vunpack.c.l.b16 %v952
    %v1162 = vunpack.c.h.b16 %v952
    %v1163 = vunpack.c.l.b16 %v953
    %v1164 = vunpack.c.h.b16 %v953
    %v1165 = vunpack.c.l.b16 %v954
    %v1166 = vunpack.c.h.b16 %v954
    %v1167 = vunpack.c.l.b16 %v955
    %v1168 = vunpack.c.h.b16 %v955
    %v1169 = vunpack.c.l.b16 %v956
    %v1170 = vunpack.c.h.b16 %v956
    %v1171 = vunpack.c.l.b16 %v957
    %v1172 = vunpack.c.h.b16 %v957
    %v1173 = vunpack.c.l.b16 %v958
    %v1174 = vunpack.c.h.b16 %v958
    %v1175 = vunpack.c.l.b16 %v959
    %v1176 = vunpack.c.h.b16 %v959
    %v1177 = vunpack.c.l.b16 %v960
    %v1178 = vunpack.c.h.b16 %v960
    %v1179 = vunpack.c.l.b16 %v961
    %v1180 = vunpack.c.h.b16 %v961
    %v1181 = vunpack.c.l.b16 %v962
    %v1182 = vunpack.c.h.b16 %v962
    %v1183 = vunpack.c.l.b16 %v963
    %v1184 = vunpack.c.h.b16 %v963
    %v1185 = vunpack.c.l.b16 %v964
    %v1186 = vunpack.c.h.b16 %v964
    %v1187 = vunpack.c.l.b16 %v965
    %v1188 = vunpack.c.h.b16 %v965
    %v1189 = vunpack.c.l.b16 %v966
    %v1190 = vunpack.c.h.b16 %v966
    %v1191 = vunpack.c.l.b16 %v967
    %v1192 = vunpack.c.h.b16 %v967
    %v1193 = vunpack.c.l.b16 %v968
    %v1194 = vunpack.c.h.b16 %v968
    %v1195 = vunpack.c.l.b16 %v969
    %v1196 = vunpack.c.h.b16 %v969
    %v1197 = vunpack.c.l.b16 %v970
    %v1198 = vunpack.c.h.b16 %v970
    %v1199 = vunpack.c.l.b16 %v971
    %v1200 = vunpack.c.h.b16 %v971
    %v1201 = vunpack.c.l.b16 %v972
    %v1202 = vunpack.c.h.b16 %v972
    %v1203 = vunpack.c.l.b16 %v973
    %v1204 = vunpack.c.h.b16 %v973
    %v1205 = vunpack.c.l.b16 %v974
    %v1206 = vunpack.c.h.b16 %v974
    %v1207 = vunpack.c.l.b16 %v975
    %v1208 = vunpack.c.h.b16 %v975
    %v1209 = vunpack.c.l.b16 %v976
    %v1210 = vunpack.c.h.b16 %v976
    %v1211 = vunpack.c.l.b16 %v977
    %v1212 = vunpack.c.h.b16 %v977
    %v1213 = vunpack.c.l.b16 %v978
    %v1214 = vunpack.c.h.b16 %v978
    %v1215 = vunpack.c.l.b16 %v979
    %v1216 = vunpack.c.h.b16 %v979
    %v1217 = vunpack.c.l.b16 %v980
    %v1218 = vunpack.c.h.b16 %v980
    %v1219 = vunpack.c.l.b16 %v981
    %v1220 = vunpack.c.h.b16 %v981
    %v1221 = vunpack.c.l.b16 %v982
    %v1222 = vunpack.c.h.b16 %v982
    %v1223 = vunpack.c.l.b16 %v983
    %v1224 = vunpack.c.h.b16 %v983
    %v1225 = vunpack.c.l.b16 %v984
    %v1226 = vunpack.c.h.b16 %v984
    %v1227 = vunpack.c.l.b16 %v985
    %v1228 = vunpack.c.h.b16 %v985
    %v1229 = vunpack.c.l.b16 %v986
    %v1230 = vunpack.c.h.b16 %v986
    %v1231 = vunpack.c.l.b16 %v987
    %v1232 = vunpack.c.h.b16 %v987
    %v1233 = vunpack.c.l.b16 %v988
    %v1234 = vunpack.c.h.b16 %v988
    %v1235 = vunpack.c.l.b16 %v989
    %v1236 = vunpack.c.h.b16 %v989
    %v1237 = vunpack.c.l.b16 %v990
    %v1238 = vunpack.c.h.b16 %v990
    %v1239 = vunpack.c.l.b16 %v991
    %v1240 = vunpack.c.h.b16 %v991
    %v1241 = vunpack.c.l.b16 %v992
    %v1242 = vunpack.c.h.b16 %v992
    %v1243 = vunpack.c.l.b16 %v993
    %v1244 = vunpack.c.h.b16 %v993
    %v1245 = vunpack.c.l.b16 %v994
    %v1246 = vunpack.c.h.b16 %v994
    %v1247 = vunpack.c.l.b16 %v995
    %v1248 = vunpack.c.h.b16 %v995
    %v1249 = vunpack.c.l.b16 %v996
    %v1250 = vunpack.c.h.b16 %v996
    %v1251 = vunpack.c.l.b16 %v997
    %v1252 = vunpack.c.h.b16 %v997
    %v1253 = vunpack.c.l.b16 %v998
    %v1254 = vunpack.c.h.b16 %v998
    %v1255 = vunpack.c.l.b16 %v999
    %v1256 = vunpack.c.h.b16 %v999
    %v1257 = vunpack.c.l.b16 %v1000
    %v1258 = vunpack.c.h.b16 %v1000
    %v1259 = vunpack.c.l.b16 %v1001
    %v1260 = vunpack.c.h.b16 %v1001
    %v1261 = vunpack.c.l.b16 %v1002
    %v1262 = vunpack.c.h.b16 %v1002
    %v1263 = vunpack.c.l.b16 %v1003
    %v1264 = vunpack.c.h.b16 %v1003
    %v1265 = vunpack.c.l.b16 %v1004
    %v1266 = vunpack.c.h.b16 %v1004
    %v1267 = vunpack.c.l.b16 %v1005
    %v1268 = vunpack.c.h.b16 %v1005
    %v1269 = vunpack.c.l.b16 %v1006
    %v1270 = vunpack.c.h.b16 %v1006
    %v1271 = vunpack.c.l.b16 %v1007
    %v1272 = vunpack.c.h.b16 %v1007
    %v1273 = vunpack.c.l.b16 %v1008
    %v1274 = vunpack.c.h.b16 %v1008
    %v1275 = vunpack.c.l.b16 %v1009
    %v1276 = vunpack.c.h.b16 %v1009
    %v1277 = vunpack.c.l.b16 %v1010
    %v1278 = vunpack.c.h.b16 %v1010
    %v1279 = vunpack.c.l.b16 %v1011
    %v1280 = vunpack.c.h.b16 %v1011
    %v1281 = vunpack.c.l.b16 %v1012
    %v1282 = vunpack.c.h.b16 %v1012
    %v1283 = vunpack.c.l.b16 %v1013
    %v1284 = vunpack.c.h.b16 %v1013
    %v1285 = vunpack.c.l.b16 %v1014
    %v1286 = vunpack.c.h.b16 %v1014
    %v1287 = vunpack.c.l.b16 %v1015
    %v1288 = vunpack.c.h.b16 %v1015
    %v1289 = vunpack.c.l.b16 %v1016
    %v1290 = vunpack.c.h.b16 %v1016
    %v1291 = vunpack.c.l.b16 %v1017
    %v1292 = vunpack.c.h.b16 %v1017
    %v1293 = vunpack.c.l.b16 %v1018
    %v1294 = vunpack.c.h.b16 %v1018
    %v1295 = vunpack.c.l.b16 %v1019
    %v1296 = vunpack.c.h.b16 %v1019
    %v1297 = vunpack.c.l.b16 %v1020
    %v1298 = vunpack.c.h.b16 %v1020
    %v1299 = vunpack.c.l.b16 %v1021
    %v1300 = vunpack.c.h.b16 %v1021
    %v1301 = vunpack.c.l.b16 %v1022
    %v1302 = vunpack.c.h.b16 %v1022
    %v1303 = vunpack.c.l.b16 %v1023
    %v1304 = vunpack.c.h.b16 %v1023
    %v1305 = vunpack.c.l.b16 %v1024
    %v1306 = vunpack.c.h.b16 %v1024
    %v1307 = vunpack.c.l.b16 %v1025
    %v1308 = vunpack.c.h.b16 %v1025
    %v1309 = vunpack.c.l.b16 %v1026
    %v1310 = vunpack.c.h.b16 %v1026
    %v1311 = vunpack.c.l.b16 %v1027
    %v1312 = vunpack.c.h.b16 %v1027
    %v1313 = vunpack.c.l.b16 %v1028
    %v1314 = vunpack.c.h.b16 %v1028
    %v1315 = vunpack.c.l.b16 %v1029
    %v1316 = vunpack.c.h.b16 %v1029
    %v1317 = vunpack.c.l.b16 %v1030
    %v1318 = vunpack.c.h.b16 %v1030
    %v1319 = vpack.c.b16 %v1133, %v1127
    %v1320 = vpack.c.b16 %v1134, %v1128
    %v1321 = vpack.c.b16 %v1135, %v1129
    %v1322 = vpack.c.b16 %v1136, %v1130
    %v1323 = vpack.c.b16 %v1137, %v1131
    %v1324 = vpack.c.b16 %v1138, %v1132
    %v1325 = vpack.c.b16 %v1145, %v1139
    %v1326 = vpack.c.b16 %v1146, %v1140
    %v1327 = vpack.c.b16 %v1147, %v1141
    %v1328 = vpack.c.b16 %v1148, %v1142
    %v1329 = vpack.c.b16 %v1149, %v1143
    %v1330 = vpack.c.b16 %v1150, %v1144
    %v1331 = vpack.c.b16 %v1157, %v1151
    %v1332 = vpack.c.b16 %v1158, %v1152
    %v1333 = vpack.c.b16 %v1159, %v1153
    %v1334 = vpack.c.b16 %v1160, %v1154
    %v1335 = vpack.c.b16 %v1161, %v1155
    %v1336 = vpack.c.b16 %v1162, %v1156
    %v1337 = vpack.c.b16 %v1169, %v1163
    %v1338 = vpack.c.b16 %v1170, %v1164
    %v1339 = vpack.c.b16 %v1171, %v1165
    %v1340 = vpack.c.b16 %v1172, %v1166
    %v1341 = vpack.c.b16 %v1173, %v1167
    %v1342 = vpack.c.b16 %v1174, %v1168
    %v1343 = vpack.c.b16 %v1181, %v1175
    %v1344 = vpack.c.b16 %v1182, %v1176
    %v1345 = vpack.c.b16 %v1183, %v1177
    %v1346 = vpack.c.b16 %v1184, %v1178
    %v1347 = vpack.c.b16 %v1185, %v1179
    %v1348 = vpack.c.b16 %v1186, %v1180
    %v1349 = vpack.c.b16 %v1193, %v1187
    %v1350 = vpack.c.b16 %v1194, %v1188
    %v1351 = vpack.c.b16 %v1195, %v1189
    %v1352 = vpack.c.b16 %v1196, %v1190
    %v1353 = vpack.c.b16 %v1197, %v1191
    %v1354 = vpack.c.b16 %v1198, %v1192
    %v1355 = vpack.c.b16 %v1205, %v1199
    %v1356 = vpack.c.b16 %v1206, %v1200
    %v1357 = vpack.c.b16 %v1207, %v1201
    %v1358 = vpack.c.b16 %v1208, %v1202
    %v1359 = vpack.c.b16 %v1209, %v1203
    %v1360 = vpack.c.b16 %v1210, %v1204
    %v1361 = vpack.c.b16 %v1217, %v1211
    %v1362 = vpack.c.b16 %v1218, %v1212
    %v1363 = vpack.c.b16 %v1219, %v1213
    %v1364 = vpack.c.b16 %v1220, %v1214
    %v1365 = vpack.c.b16 %v1221, %v1215
    %v1366 = vpack.c.b16 %v1222, %v1216
    %v1367 = vpack.c.b16 %v1229, %v1223
    %v1368 = vpack.c.b16 %v1230, %v1224
    %v1369 = vpack.c.b16 %v1231, %v1225
    %v1370 = vpack.c.b16 %v1232, %v1226
    %v1371 = vpack.c.b16 %v1233, %v1227
    %v1372 = vpack.c.b16 %v1234, %v1228
    %v1373 = vpack.c.b16 %v1241, %v1235
    %v1374 = vpack.c.b16 %v1242, %v1236
    %v1375 = vpack.c.b16 %v1243, %v1237
    %v1376 = vpack.c.b16 %v1244, %v1238
    %v1377 = vpack.c.b16 %v1245, %v1239
    %v1378 = vpack.c.b16 %v1246, %v1240
    %v1379 = vpack.c.b16 %v1253, %v1247
    %v1380 = vpack.c.b16 %v1254, %v1248
    %v1381 = vpack.c.b16 %v1255, %v1249
    %v1382 = vpack.c.b16 %v1256, %v1250
    %v1383 = vpack.c.b16 %v1257, %v1251
    %v1384 = vpack.c.b16 %v1258, %v1252
    %v1385 = vpack.c.b16 %v1265, %v1259
    %v1386 = vpack.c.b16 %v1266, %v1260
    %v1387 = vpack.c.b16 %v1267, %v1261
    %v1388 = vpack.c.b16 %v1268, %v1262
    %v1389 = vpack.c.b16 %v1269, %v1263
    %v1390 = vpack.c.b16 %v1270, %v1264
    %v1391 = vpack.c.b16 %v1277, %v1271
    %v1392 = vpack.c.b16 %v1278, %v1272
    %v1393 = vpack.c.b16 %v1279, %v1273
    %v1394 = vpack.c.b16 %v1280, %v1274
    %v1395 = vpack.c.b16 %v1281, %v1275
    %v1396 = vpack.c.b16 %v1282, %v1276
    %v1397 = vpack.c.b16 %v1289, %v1283
    %v1398 = vpack.c.b16 %v1290, %v1284
    %v1399 = vpack.c.b16 %v1291, %v1285
    %v1400 = vpack.c.b16 %v1292, %v1286
    %v1401 = vpack.c.b16 %v1293, %v1287
    %v1402 = vpack.c.b16 %v1294, %v1288
    %v1403 = vpack.c.b16 %v1301, %v1295
    %v1404 = vpack.c.b16 %v1302, %v1296
    %v1405 = vpack.c.b16 %v1303, %v1297
    %v1406 = vpack.c.b16 %v1304, %v1298
    %v1407 = vpack.c.b16 %v1305, %v1299
    %v1408 = vpack.c.b16 %v1306, %v1300
    %v1409 = vpack.c.b16 %v1313, %v1307
    %v1410 = vpack.c.b16 %v1314, %v1308
    %v1411 = vpack.c.b16 %v1315, %v1309
    %v1412 = vpack.c.b16 %v1316, %v1310
    %v1413 = vpack.c.b16 %v1317, %v1311
    %v1414 = vpack.c.b16 %v1318, %v1312
    %1511 = vmatprep.subr.bf16.mxu0 %v1362
    %1512 = vmatpush1.bf16.msra.mxu0 %v1361
    %1513 = vmatprep.subr.bf16.mxu0 %v1356
    %1514 = vmatpush1.bf16.msra.mxu0 %v1355
    %1515 = vmatprep.subr.bf16.mxu0 %v1350
    %1516 = vmatpush1.bf16.msra.mxu0 %v1349
    %1517 = vmatprep.subr.bf16.mxu0 %v1344
    %1518 = vmatpush1.bf16.msra.mxu0 %v1343
    %1519 = vmatprep.subr.bf16.mxu0 %v1338
    %1520 = vmatpush1.bf16.msra.mxu0 %v1337
    %1521 = vmatprep.subr.bf16.mxu0 %v1332
    %1522 = vmatpush1.bf16.msra.mxu0 %v1331
    %1523 = vmatprep.subr.bf16.mxu0 %v1326
    %1524 = vmatpush1.bf16.msra.mxu0 %v1325
    %1525 = vmatprep.subr.bf16.mxu0 %v1320
    %1526 = vmatpush1.bf16.msra.mxu0 %v1319
    %1527 = vmatprep.subr.bf16.mxu0 %v1410
    %1528 = vmatpush2.bf16.msra.mxu0 %v1409
    %1529 = vmatprep.subr.bf16.mxu0 %v1404
    %1530 = vmatpush2.bf16.msra.mxu0 %v1403
    %1531 = vmatprep.subr.bf16.mxu0 %v1398
    %1532 = vmatpush2.bf16.msra.mxu0 %v1397
    %1533 = vmatprep.subr.bf16.mxu0 %v1392
    %1534 = vmatpush2.bf16.msra.mxu0 %v1391
    %1535 = vmatprep.subr.bf16.mxu0 %v1386
    %1536 = vmatpush2.bf16.msra.mxu0 %v1385
    %1537 = vmatprep.subr.bf16.mxu0 %v1380
    %1538 = vmatpush2.bf16.msra.mxu0 %v1379
    %1539 = vmatprep.subr.bf16.mxu0 %v1374
    %1540 = vmatpush2.bf16.msra.mxu0 %v1373
    %1541 = vmatprep.subr.bf16.mxu0 %v1368
    %1542 = vmatpush2.bf16.msra.mxu0 %v1367
    %1543 = vmatprep.mubr.bf16.mxu0 %v934
    %1544 = vmatmul.mubr.bf16.gmra.mxu0 %v933
    %v1545 = vpop.f32.mrf.mxu0
    %v1546 = vadd.f32 0.0, %v1545
    %v1547 = vpop.f32.mrf.mxu0
    %v1548 = vadd.f32 0.0, %v1547
    %v1549 = vpop.f32.mrf.mxu0
    %v1550 = vpop.f32.mrf.mxu0
    %1551 = vdwg.mxu0
    %1552 = vmatprep.subr.bf16.mxu0 %v1364
    %1553 = vmatpush1.bf16.msra.mxu0 %v1363
    %1554 = vmatprep.subr.bf16.mxu0 %v1358
    %1555 = vmatpush1.bf16.msra.mxu0 %v1357
    %1556 = vmatprep.subr.bf16.mxu0 %v1352
    %1557 = vmatpush1.bf16.msra.mxu0 %v1351
    %1558 = vmatprep.subr.bf16.mxu0 %v1346
    %1559 = vmatpush1.bf16.msra.mxu0 %v1345
    %1560 = vmatprep.subr.bf16.mxu0 %v1340
    %1561 = vmatpush1.bf16.msra.mxu0 %v1339
    %1562 = vmatprep.subr.bf16.mxu0 %v1334
    %1563 = vmatpush1.bf16.msra.mxu0 %v1333
    %1564 = vmatprep.subr.bf16.mxu0 %v1328
    %1565 = vmatpush1.bf16.msra.mxu0 %v1327
    %1566 = vmatprep.subr.bf16.mxu0 %v1322
    %1567 = vmatpush1.bf16.msra.mxu0 %v1321
    %1568 = vmatprep.subr.bf16.mxu0 %v1412
    %1569 = vmatpush2.bf16.msra.mxu0 %v1411
    %1570 = vmatprep.subr.bf16.mxu0 %v1406
    %1571 = vmatpush2.bf16.msra.mxu0 %v1405
    %1572 = vmatprep.subr.bf16.mxu0 %v1400
    %1573 = vmatpush2.bf16.msra.mxu0 %v1399
    %1574 = vmatprep.subr.bf16.mxu0 %v1394
    %1575 = vmatpush2.bf16.msra.mxu0 %v1393
    %1576 = vmatprep.subr.bf16.mxu0 %v1388
    %1577 = vmatpush2.bf16.msra.mxu0 %v1387
    %1578 = vmatprep.subr.bf16.mxu0 %v1382
    %1579 = vmatpush2.bf16.msra.mxu0 %v1381
    %1580 = vmatprep.subr.bf16.mxu0 %v1376
    %1581 = vmatpush2.bf16.msra.mxu0 %v1375
    %1582 = vmatprep.subr.bf16.mxu0 %v1370
    %1583 = vmatpush2.bf16.msra.mxu0 %v1369
    %1584 = vmatprep.mubr.bf16.mxu0 %v934
    %1585 = vmatmul.mubr.bf16.gmra.mxu0 %v933
    %v1586 = vpop.f32.mrf.mxu0
    %v1587 = vadd.f32 0.0, %v1586
    %v1588 = vpop.f32.mrf.mxu0
    %v1589 = vadd.f32 0.0, %v1588
    %v1590 = vpop.f32.mrf.mxu0
    %v1591 = vpop.f32.mrf.mxu0
    %1592 = vdwg.mxu0
    %1593 = vmatprep.subr.bf16.mxu0 %v1366
    %1594 = vmatpush1.bf16.msra.mxu0 %v1365
    %1595 = vmatprep.subr.bf16.mxu0 %v1360
    %1596 = vmatpush1.bf16.msra.mxu0 %v1359
    %1597 = vmatprep.subr.bf16.mxu0 %v1354
    %1598 = vmatpush1.bf16.msra.mxu0 %v1353
    %1599 = vmatprep.subr.bf16.mxu0 %v1348
    %1600 = vmatpush1.bf16.msra.mxu0 %v1347
    %1601 = vmatprep.subr.bf16.mxu0 %v1342
    %1602 = vmatpush1.bf16.msra.mxu0 %v1341
    %1603 = vmatprep.subr.bf16.mxu0 %v1336
    %1604 = vmatpush1.bf16.msra.mxu0 %v1335
    %1605 = vmatprep.subr.bf16.mxu0 %v1330
    %1606 = vmatpush1.bf16.msra.mxu0 %v1329
    %1607 = vmatprep.subr.bf16.mxu0 %v1324
    %1608 = vmatpush1.bf16.msra.mxu0 %v1323
    %1609 = vmatprep.subr.bf16.mxu0 %v1414
    %1610 = vmatpush2.bf16.msra.mxu0 %v1413
    %1611 = vmatprep.subr.bf16.mxu0 %v1408
    %1612 = vmatpush2.bf16.msra.mxu0 %v1407
    %1613 = vmatprep.subr.bf16.mxu0 %v1402
    %1614 = vmatpush2.bf16.msra.mxu0 %v1401
    %1615 = vmatprep.subr.bf16.mxu0 %v1396
    %1616 = vmatpush2.bf16.msra.mxu0 %v1395
    %1617 = vmatprep.subr.bf16.mxu0 %v1390
    %1618 = vmatpush2.bf16.msra.mxu0 %v1389
    %1619 = vmatprep.subr.bf16.mxu0 %v1384
    %1620 = vmatpush2.bf16.msra.mxu0 %v1383
    %1621 = vmatprep.subr.bf16.mxu0 %v1378
    %1622 = vmatpush2.bf16.msra.mxu0 %v1377
    %1623 = vmatprep.subr.bf16.mxu0 %v1372
    %1624 = vmatpush2.bf16.msra.mxu0 %v1371
    %1625 = vmatprep.mubr.bf16.mxu0 %v934
    %1626 = vmatmul.mubr.bf16.gmra.mxu0 %v933
    %v1627 = vpop.f32.mrf.mxu0
    %v1628 = vadd.f32 0.0, %v1627
    %v1629 = vpop.f32.mrf.mxu0
    %v1630 = vadd.f32 0.0, %v1629
    %v1631 = vpop.f32.mrf.mxu0
    %v1632 = vpop.f32.mrf.mxu0
    %1633 = vdwg.mxu0
    %v1636 = vcombine.low %v1546, %v1548
    %v1638 = vunpack.c.l.s4 1966171168
    %v1639 = vunpack.c.0.s8 %v1638
    %v1640 = vlaneseq
    %v1641 = vshrl.u32 %v1640, 7
    %v1642 = vsub.s32 %v1639, %v1641
    %v1643 = vrot.slane %v1636, %v1642
    %v1645 = vunpack.c.l.s4 1966171168
    %v1646 = vunpack.c.0.s8 %v1645
    %v1647 = vlaneseq
    %v1648 = vshrl.u32 %v1647, 7
    %v1649 = vsub.s32 %v1646, %v1648
    %v1650 = vrot.slane %v1643, %v1649
    %v1652 = vadd.f32 %v921, %v1650
    %v1653 = vxor.u32 %v1652, 2147483648
    %v1654 = vmul.f32 %v1653, 1.442695
    %v1655 = vpow.pop %v1654
    %v1656 = vadd.f32 %v1655, 1.0
    %v1657 = vrcp.pop %v1656
    %v1658 = vmul.f32 1.0, %v1657
    %v1660 = vrot.slane %v921, 2
    %v1664 = vcombine.low %v1587, %v1589
    %v1666 = vunpack.c.l.s4 1966171168
    %v1667 = vunpack.c.0.s8 %v1666
    %v1668 = vlaneseq
    %v1669 = vshrl.u32 %v1668, 7
    %v1670 = vsub.s32 %v1667, %v1669
    %v1671 = vrot.slane %v1664, %v1670
    %v1673 = vunpack.c.l.s4 1966171168
    %v1674 = vunpack.c.0.s8 %v1673
    %v1675 = vlaneseq
    %v1676 = vshrl.u32 %v1675, 7
    %v1677 = vsub.s32 %v1674, %v1676
    %v1678 = vrot.slane %v1671, %v1677
    %v1680 = vadd.f32 %v1660, %v1678
    %v1681 = vxor.u32 %v1680, 2147483648
    %v1682 = vmul.f32 %v1681, 1.442695
    %v1683 = vpow.pop %v1682
    %v1684 = vadd.f32 %v1683, 1.0
    %v1685 = vrcp.pop %v1684
    %v1686 = vmul.f32 1.0, %v1685
    %v1687 = vld [vmem:[%s5] sm:$0x3]
    %v1689 = vlaneseq
    %v1690 = vshrl.u32 %v1689, 7
    %v1691 = vsub.s32 0, %v1690
    %v1692 = vrot.slane %v1687, %v1691
    %v1693 = vlaneseq
    %v1694 = vshrl.u32 %v1693, 7
    %v1695 = vsub.s32 1, %v1694
    %v1696 = vrot.slane %v1687, %v1695
    %v1699 = vadd.f32 %v1628, %v1692
    %v1700 = vadd.f32 %v1630, %v1696
    %v1703 = vcombine.low %v1699, %v1700
    %v1705 = vunpack.c.l.s4 1966171168
    %v1706 = vunpack.c.0.s8 %v1705
    %v1707 = vlaneseq
    %v1708 = vshrl.u32 %v1707, 7
    %v1709 = vsub.s32 %v1706, %v1708
    %v1710 = vrot.slane %v1703, %v1709
    %v1712 = vunpack.c.l.s4 1966171168
    %v1713 = vunpack.c.0.s8 %v1712
    %v1714 = vlaneseq
    %v1715 = vshrl.u32 %v1714, 7
    %v1716 = vsub.s32 %v1713, %v1715
    %v1717 = vrot.slane %v1710, %v1716
    %v1719 = vmul.f32 %v1658, %v1717
    %v1720 = vrot.slane %v921, 4
    %v1722 = vadd.f32 %v1720, %v1719
    %v1723 = vtanh.pop %v1722
    %v1724 = vsub.f32 1.0, %v1686
    %v1725 = vmul.f32 %v1724, %v1723
    %v1726 = vmul.f32 %v1686, %v918
    %v1727 = vadd.f32 %v1725, %v1726
    %1728 = vst.msk [vmem:[#allocation12] ss:$8 sm:$0x3] %vm83, %v1727
    %1729 = vst.msk [vmem:[#allocation12] ss:$8 sm:$0x0] %vm83, %v1727
    %s1730 = scalar_lea.vmem [#allocation3], 1
    %v1731 = vld [vmem:[%s1730] ss:$8 sm:$0xf]
    %v1732 = vld [vmem:[%s1730] ss:$8 sm:$0x30]
    %v1733 = vor.u32 %v1731, %v1732
    %v1735 = vlaneseq
    %v1736 = vshrl.u32 %v1735, 7
    %v1737 = vsub.s32 0, %v1736
    %v1738 = vrot.slane %v1727, %v1737
    %v1739 = vlaneseq
    %v1740 = vshrl.u32 %v1739, 7
    %v1741 = vsub.s32 1, %v1740
    %v1742 = vrot.slane %v1727, %v1741
    %v1745 = vpack.c.bf16 %v1738, %v1738
    %v1746 = vpack.c.bf16 %v1742, %v1742
    %v1747 = vld [vmem:[#allocation11] sm:$0xff]
    %v1748 = vld [vmem:[#allocation11 + $0x8] sm:$0xff]
    %v1749 = vld [vmem:[#allocation11 + $0x10] sm:$0xff]
    %v1750 = vld [vmem:[#allocation11 + $0x18] sm:$0xff]
    %v1751 = vld [vmem:[#allocation11 + $0x20] sm:$0xff]
    %v1752 = vld [vmem:[#allocation11 + $0x28] sm:$0xff]
    %v1753 = vld [vmem:[#allocation11 + $0x30] sm:$0xff]
    %v1754 = vld [vmem:[#allocation11 + $0x38] sm:$0xff]
    %v1755 = vld [vmem:[#allocation11 + $0x40] sm:$0xff]
    %v1756 = vld [vmem:[#allocation11 + $0x48] sm:$0xff]
    %v1757 = vld [vmem:[#allocation11 + $0x50] sm:$0xff]
    %v1758 = vld [vmem:[#allocation11 + $0x58] sm:$0xff]
    %v1759 = vld [vmem:[#allocation11 + $0x60] sm:$0xff]
    %v1760 = vld [vmem:[#allocation11 + $0x68] sm:$0xff]
    %v1761 = vld [vmem:[#allocation11 + $0x70] sm:$0xff]
    %v1762 = vld [vmem:[#allocation11 + $0x78] sm:$0xff]
    %v1763 = vld [vmem:[#allocation11 + $0x80] sm:$0xff]
    %v1764 = vld [vmem:[#allocation11 + $0x88] sm:$0xff]
    %v1765 = vld [vmem:[#allocation11 + $0x90] sm:$0xff]
    %v1766 = vld [vmem:[#allocation11 + $0x98] sm:$0xff]
    %v1767 = vld [vmem:[#allocation11 + $0xa0] sm:$0xff]
    %v1768 = vld [vmem:[#allocation11 + $0xa8] sm:$0xff]
    %v1769 = vld [vmem:[#allocation11 + $0xb0] sm:$0xff]
    %v1770 = vld [vmem:[#allocation11 + $0xb8] sm:$0xff]
    %v1771 = vld [vmem:[#allocation11 + $0xc0] sm:$0xff]
    %v1772 = vld [vmem:[#allocation11 + $0xc8] sm:$0xff]
    %v1773 = vld [vmem:[#allocation11 + $0xd0] sm:$0xff]
    %v1774 = vld [vmem:[#allocation11 + $0xd8] sm:$0xff]
    %v1775 = vld [vmem:[#allocation11 + $0xe0] sm:$0xff]
    %v1776 = vld [vmem:[#allocation11 + $0xe8] sm:$0xff]
    %v1777 = vld [vmem:[#allocation11 + $0xf0] sm:$0xff]
    %v1778 = vld [vmem:[#allocation11 + $0xf8] sm:$0xff]
    %v1779 = vld [vmem:[#allocation11 + $0x100] sm:$0xff]
    %v1780 = vld [vmem:[#allocation11 + $0x108] sm:$0xff]
    %v1781 = vld [vmem:[#allocation11 + $0x110] sm:$0xff]
    %v1782 = vld [vmem:[#allocation11 + $0x118] sm:$0xff]
    %v1783 = vld [vmem:[#allocation11 + $0x120] sm:$0xff]
    %v1784 = vld [vmem:[#allocation11 + $0x128] sm:$0xff]
    %v1785 = vld [vmem:[#allocation11 + $0x130] sm:$0xff]
    %v1786 = vld [vmem:[#allocation11 + $0x138] sm:$0xff]
    %v1787 = vld [vmem:[#allocation11 + $0x140] sm:$0xff]
    %v1788 = vld [vmem:[#allocation11 + $0x148] sm:$0xff]
    %v1789 = vld [vmem:[#allocation11 + $0x150] sm:$0xff]
    %v1790 = vld [vmem:[#allocation11 + $0x158] sm:$0xff]
    %v1791 = vld [vmem:[#allocation11 + $0x160] sm:$0xff]
    %v1792 = vld [vmem:[#allocation11 + $0x168] sm:$0xff]
    %v1793 = vld [vmem:[#allocation11 + $0x170] sm:$0xff]
    %v1794 = vld [vmem:[#allocation11 + $0x178] sm:$0xff]
    %v1795 = vld [vmem:[#allocation11 + $0x180] sm:$0xff]
    %v1796 = vld [vmem:[#allocation11 + $0x188] sm:$0xff]
    %v1797 = vld [vmem:[#allocation11 + $0x190] sm:$0xff]
    %v1798 = vld [vmem:[#allocation11 + $0x198] sm:$0xff]
    %v1799 = vld [vmem:[#allocation11 + $0x1a0] sm:$0xff]
    %v1800 = vld [vmem:[#allocation11 + $0x1a8] sm:$0xff]
    %v1801 = vld [vmem:[#allocation11 + $0x1b0] sm:$0xff]
    %v1802 = vld [vmem:[#allocation11 + $0x1b8] sm:$0xff]
    %v1803 = vld [vmem:[#allocation11 + $0x1c0] sm:$0xff]
    %v1804 = vld [vmem:[#allocation11 + $0x1c8] sm:$0xff]
    %v1805 = vld [vmem:[#allocation11 + $0x1d0] sm:$0xff]
    %v1806 = vld [vmem:[#allocation11 + $0x1d8] sm:$0xff]
    %v1807 = vld [vmem:[#allocation11 + $0x1e0] sm:$0xff]
    %v1808 = vld [vmem:[#allocation11 + $0x1e8] sm:$0xff]
    %v1809 = vld [vmem:[#allocation11 + $0x1f0] sm:$0xff]
    %v1810 = vld [vmem:[#allocation11 + $0x1f8] sm:$0xff]
    %v1811 = vld [vmem:[#allocation11 + $0x200] sm:$0xff]
    %v1812 = vld [vmem:[#allocation11 + $0x208] sm:$0xff]
    %v1813 = vld [vmem:[#allocation11 + $0x210] sm:$0xff]
    %v1814 = vld [vmem:[#allocation11 + $0x218] sm:$0xff]
    %v1815 = vld [vmem:[#allocation11 + $0x220] sm:$0xff]
    %v1816 = vld [vmem:[#allocation11 + $0x228] sm:$0xff]
    %v1817 = vld [vmem:[#allocation11 + $0x230] sm:$0xff]
    %v1818 = vld [vmem:[#allocation11 + $0x238] sm:$0xff]
    %v1819 = vld [vmem:[#allocation11 + $0x240] sm:$0xff]
    %v1820 = vld [vmem:[#allocation11 + $0x248] sm:$0xff]
    %v1821 = vld [vmem:[#allocation11 + $0x250] sm:$0xff]
    %v1822 = vld [vmem:[#allocation11 + $0x258] sm:$0xff]
    %v1823 = vld [vmem:[#allocation11 + $0x260] sm:$0xff]
    %v1824 = vld [vmem:[#allocation11 + $0x268] sm:$0xff]
    %v1825 = vld [vmem:[#allocation11 + $0x270] sm:$0xff]
    %v1826 = vld [vmem:[#allocation11 + $0x278] sm:$0xff]
    %v1827 = vld [vmem:[#allocation11 + $0x280] sm:$0xff]
    %v1828 = vld [vmem:[#allocation11 + $0x288] sm:$0xff]
    %v1829 = vld [vmem:[#allocation11 + $0x290] sm:$0xff]
    %v1830 = vld [vmem:[#allocation11 + $0x298] sm:$0xff]
    %v1831 = vld [vmem:[#allocation11 + $0x2a0] sm:$0xff]
    %v1832 = vld [vmem:[#allocation11 + $0x2a8] sm:$0xff]
    %v1833 = vld [vmem:[#allocation11 + $0x2b0] sm:$0xff]
    %v1834 = vld [vmem:[#allocation11 + $0x2b8] sm:$0xff]
    %v1835 = vld [vmem:[#allocation11 + $0x2c0] sm:$0xff]
    %v1836 = vld [vmem:[#allocation11 + $0x2c8] sm:$0xff]
    %v1837 = vld [vmem:[#allocation11 + $0x2d0] sm:$0xff]
    %v1838 = vld [vmem:[#allocation11 + $0x2d8] sm:$0xff]
    %v1839 = vld [vmem:[#allocation11 + $0x2e0] sm:$0xff]
    %v1840 = vld [vmem:[#allocation11 + $0x2e8] sm:$0xff]
    %v1841 = vld [vmem:[#allocation11 + $0x2f0] sm:$0xff]
    %v1842 = vld [vmem:[#allocation11 + $0x2f8] sm:$0xff]
    %v1939 = vunpack.c.l.b16 %v1747
    %v1940 = vunpack.c.h.b16 %v1747
    %v1941 = vunpack.c.l.b16 %v1748
    %v1942 = vunpack.c.h.b16 %v1748
    %v1943 = vunpack.c.l.b16 %v1749
    %v1944 = vunpack.c.h.b16 %v1749
    %v1945 = vunpack.c.l.b16 %v1750
    %v1946 = vunpack.c.h.b16 %v1750
    %v1947 = vunpack.c.l.b16 %v1751
    %v1948 = vunpack.c.h.b16 %v1751
    %v1949 = vunpack.c.l.b16 %v1752
    %v1950 = vunpack.c.h.b16 %v1752
    %v1951 = vunpack.c.l.b16 %v1753
    %v1952 = vunpack.c.h.b16 %v1753
    %v1953 = vunpack.c.l.b16 %v1754
    %v1954 = vunpack.c.h.b16 %v1754
    %v1955 = vunpack.c.l.b16 %v1755
    %v1956 = vunpack.c.h.b16 %v1755
    %v1957 = vunpack.c.l.b16 %v1756
    %v1958 = vunpack.c.h.b16 %v1756
    %v1959 = vunpack.c.l.b16 %v1757
    %v1960 = vunpack.c.h.b16 %v1757
    %v1961 = vunpack.c.l.b16 %v1758
    %v1962 = vunpack.c.h.b16 %v1758
    %v1963 = vunpack.c.l.b16 %v1759
    %v1964 = vunpack.c.h.b16 %v1759
    %v1965 = vunpack.c.l.b16 %v1760
    %v1966 = vunpack.c.h.b16 %v1760
    %v1967 = vunpack.c.l.b16 %v1761
    %v1968 = vunpack.c.h.b16 %v1761
    %v1969 = vunpack.c.l.b16 %v1762
    %v1970 = vunpack.c.h.b16 %v1762
    %v1971 = vunpack.c.l.b16 %v1763
    %v1972 = vunpack.c.h.b16 %v1763
    %v1973 = vunpack.c.l.b16 %v1764
    %v1974 = vunpack.c.h.b16 %v1764
    %v1975 = vunpack.c.l.b16 %v1765
    %v1976 = vunpack.c.h.b16 %v1765
    %v1977 = vunpack.c.l.b16 %v1766
    %v1978 = vunpack.c.h.b16 %v1766
    %v1979 = vunpack.c.l.b16 %v1767
    %v1980 = vunpack.c.h.b16 %v1767
    %v1981 = vunpack.c.l.b16 %v1768
    %v1982 = vunpack.c.h.b16 %v1768
    %v1983 = vunpack.c.l.b16 %v1769
    %v1984 = vunpack.c.h.b16 %v1769
    %v1985 = vunpack.c.l.b16 %v1770
    %v1986 = vunpack.c.h.b16 %v1770
    %v1987 = vunpack.c.l.b16 %v1771
    %v1988 = vunpack.c.h.b16 %v1771
    %v1989 = vunpack.c.l.b16 %v1772
    %v1990 = vunpack.c.h.b16 %v1772
    %v1991 = vunpack.c.l.b16 %v1773
    %v1992 = vunpack.c.h.b16 %v1773
    %v1993 = vunpack.c.l.b16 %v1774
    %v1994 = vunpack.c.h.b16 %v1774
    %v1995 = vunpack.c.l.b16 %v1775
    %v1996 = vunpack.c.h.b16 %v1775
    %v1997 = vunpack.c.l.b16 %v1776
    %v1998 = vunpack.c.h.b16 %v1776
    %v1999 = vunpack.c.l.b16 %v1777
    %v2000 = vunpack.c.h.b16 %v1777
    %v2001 = vunpack.c.l.b16 %v1778
    %v2002 = vunpack.c.h.b16 %v1778
    %v2003 = vunpack.c.l.b16 %v1779
    %v2004 = vunpack.c.h.b16 %v1779
    %v2005 = vunpack.c.l.b16 %v1780
    %v2006 = vunpack.c.h.b16 %v1780
    %v2007 = vunpack.c.l.b16 %v1781
    %v2008 = vunpack.c.h.b16 %v1781
    %v2009 = vunpack.c.l.b16 %v1782
    %v2010 = vunpack.c.h.b16 %v1782
    %v2011 = vunpack.c.l.b16 %v1783
    %v2012 = vunpack.c.h.b16 %v1783
    %v2013 = vunpack.c.l.b16 %v1784
    %v2014 = vunpack.c.h.b16 %v1784
    %v2015 = vunpack.c.l.b16 %v1785
    %v2016 = vunpack.c.h.b16 %v1785
    %v2017 = vunpack.c.l.b16 %v1786
    %v2018 = vunpack.c.h.b16 %v1786
    %v2019 = vunpack.c.l.b16 %v1787
    %v2020 = vunpack.c.h.b16 %v1787
    %v2021 = vunpack.c.l.b16 %v1788
    %v2022 = vunpack.c.h.b16 %v1788
    %v2023 = vunpack.c.l.b16 %v1789
    %v2024 = vunpack.c.h.b16 %v1789
    %v2025 = vunpack.c.l.b16 %v1790
    %v2026 = vunpack.c.h.b16 %v1790
    %v2027 = vunpack.c.l.b16 %v1791
    %v2028 = vunpack.c.h.b16 %v1791
    %v2029 = vunpack.c.l.b16 %v1792
    %v2030 = vunpack.c.h.b16 %v1792
    %v2031 = vunpack.c.l.b16 %v1793
    %v2032 = vunpack.c.h.b16 %v1793
    %v2033 = vunpack.c.l.b16 %v1794
    %v2034 = vunpack.c.h.b16 %v1794
    %v2035 = vunpack.c.l.b16 %v1795
    %v2036 = vunpack.c.h.b16 %v1795
    %v2037 = vunpack.c.l.b16 %v1796
    %v2038 = vunpack.c.h.b16 %v1796
    %v2039 = vunpack.c.l.b16 %v1797
    %v2040 = vunpack.c.h.b16 %v1797
    %v2041 = vunpack.c.l.b16 %v1798
    %v2042 = vunpack.c.h.b16 %v1798
    %v2043 = vunpack.c.l.b16 %v1799
    %v2044 = vunpack.c.h.b16 %v1799
    %v2045 = vunpack.c.l.b16 %v1800
    %v2046 = vunpack.c.h.b16 %v1800
    %v2047 = vunpack.c.l.b16 %v1801
    %v2048 = vunpack.c.h.b16 %v1801
    %v2049 = vunpack.c.l.b16 %v1802
    %v2050 = vunpack.c.h.b16 %v1802
    %v2051 = vunpack.c.l.b16 %v1803
    %v2052 = vunpack.c.h.b16 %v1803
    %v2053 = vunpack.c.l.b16 %v1804
    %v2054 = vunpack.c.h.b16 %v1804
    %v2055 = vunpack.c.l.b16 %v1805
    %v2056 = vunpack.c.h.b16 %v1805
    %v2057 = vunpack.c.l.b16 %v1806
    %v2058 = vunpack.c.h.b16 %v1806
    %v2059 = vunpack.c.l.b16 %v1807
    %v2060 = vunpack.c.h.b16 %v1807
    %v2061 = vunpack.c.l.b16 %v1808
    %v2062 = vunpack.c.h.b16 %v1808
    %v2063 = vunpack.c.l.b16 %v1809
    %v2064 = vunpack.c.h.b16 %v1809
    %v2065 = vunpack.c.l.b16 %v1810
    %v2066 = vunpack.c.h.b16 %v1810
    %v2067 = vunpack.c.l.b16 %v1811
    %v2068 = vunpack.c.h.b16 %v1811
    %v2069 = vunpack.c.l.b16 %v1812
    %v2070 = vunpack.c.h.b16 %v1812
    %v2071 = vunpack.c.l.b16 %v1813
    %v2072 = vunpack.c.h.b16 %v1813
    %v2073 = vunpack.c.l.b16 %v1814
    %v2074 = vunpack.c.h.b16 %v1814
    %v2075 = vunpack.c.l.b16 %v1815
    %v2076 = vunpack.c.h.b16 %v1815
    %v2077 = vunpack.c.l.b16 %v1816
    %v2078 = vunpack.c.h.b16 %v1816
    %v2079 = vunpack.c.l.b16 %v1817
    %v2080 = vunpack.c.h.b16 %v1817
    %v2081 = vunpack.c.l.b16 %v1818
    %v2082 = vunpack.c.h.b16 %v1818
    %v2083 = vunpack.c.l.b16 %v1819
    %v2084 = vunpack.c.h.b16 %v1819
    %v2085 = vunpack.c.l.b16 %v1820
    %v2086 = vunpack.c.h.b16 %v1820
    %v2087 = vunpack.c.l.b16 %v1821
    %v2088 = vunpack.c.h.b16 %v1821
    %v2089 = vunpack.c.l.b16 %v1822
    %v2090 = vunpack.c.h.b16 %v1822
    %v2091 = vunpack.c.l.b16 %v1823
    %v2092 = vunpack.c.h.b16 %v1823
    %v2093 = vunpack.c.l.b16 %v1824
    %v2094 = vunpack.c.h.b16 %v1824
    %v2095 = vunpack.c.l.b16 %v1825
    %v2096 = vunpack.c.h.b16 %v1825
    %v2097 = vunpack.c.l.b16 %v1826
    %v2098 = vunpack.c.h.b16 %v1826
    %v2099 = vunpack.c.l.b16 %v1827
    %v2100 = vunpack.c.h.b16 %v1827
    %v2101 = vunpack.c.l.b16 %v1828
    %v2102 = vunpack.c.h.b16 %v1828
    %v2103 = vunpack.c.l.b16 %v1829
    %v2104 = vunpack.c.h.b16 %v1829
    %v2105 = vunpack.c.l.b16 %v1830
    %v2106 = vunpack.c.h.b16 %v1830
    %v2107 = vunpack.c.l.b16 %v1831
    %v2108 = vunpack.c.h.b16 %v1831
    %v2109 = vunpack.c.l.b16 %v1832
    %v2110 = vunpack.c.h.b16 %v1832
    %v2111 = vunpack.c.l.b16 %v1833
    %v2112 = vunpack.c.h.b16 %v1833
    %v2113 = vunpack.c.l.b16 %v1834
    %v2114 = vunpack.c.h.b16 %v1834
    %v2115 = vunpack.c.l.b16 %v1835
    %v2116 = vunpack.c.h.b16 %v1835
    %v2117 = vunpack.c.l.b16 %v1836
    %v2118 = vunpack.c.h.b16 %v1836
    %v2119 = vunpack.c.l.b16 %v1837
    %v2120 = vunpack.c.h.b16 %v1837
    %v2121 = vunpack.c.l.b16 %v1838
    %v2122 = vunpack.c.h.b16 %v1838
    %v2123 = vunpack.c.l.b16 %v1839
    %v2124 = vunpack.c.h.b16 %v1839
    %v2125 = vunpack.c.l.b16 %v1840
    %v2126 = vunpack.c.h.b16 %v1840
    %v2127 = vunpack.c.l.b16 %v1841
    %v2128 = vunpack.c.h.b16 %v1841
    %v2129 = vunpack.c.l.b16 %v1842
    %v2130 = vunpack.c.h.b16 %v1842
    %v2131 = vpack.c.b16 %v1945, %v1939
    %v2132 = vpack.c.b16 %v1946, %v1940
    %v2133 = vpack.c.b16 %v1947, %v1941
    %v2134 = vpack.c.b16 %v1948, %v1942
    %v2135 = vpack.c.b16 %v1949, %v1943
    %v2136 = vpack.c.b16 %v1950, %v1944
    %v2137 = vpack.c.b16 %v1957, %v1951
    %v2138 = vpack.c.b16 %v1958, %v1952
    %v2139 = vpack.c.b16 %v1959, %v1953
    %v2140 = vpack.c.b16 %v1960, %v1954
    %v2141 = vpack.c.b16 %v1961, %v1955
    %v2142 = vpack.c.b16 %v1962, %v1956
    %v2143 = vpack.c.b16 %v1969, %v1963
    %v2144 = vpack.c.b16 %v1970, %v1964
    %v2145 = vpack.c.b16 %v1971, %v1965
    %v2146 = vpack.c.b16 %v1972, %v1966
    %v2147 = vpack.c.b16 %v1973, %v1967
    %v2148 = vpack.c.b16 %v1974, %v1968
    %v2149 = vpack.c.b16 %v1981, %v1975
    %v2150 = vpack.c.b16 %v1982, %v1976
    %v2151 = vpack.c.b16 %v1983, %v1977
    %v2152 = vpack.c.b16 %v1984, %v1978
    %v2153 = vpack.c.b16 %v1985, %v1979
    %v2154 = vpack.c.b16 %v1986, %v1980
    %v2155 = vpack.c.b16 %v1993, %v1987
    %v2156 = vpack.c.b16 %v1994, %v1988
    %v2157 = vpack.c.b16 %v1995, %v1989
    %v2158 = vpack.c.b16 %v1996, %v1990
    %v2159 = vpack.c.b16 %v1997, %v1991
    %v2160 = vpack.c.b16 %v1998, %v1992
    %v2161 = vpack.c.b16 %v2005, %v1999
    %v2162 = vpack.c.b16 %v2006, %v2000
    %v2163 = vpack.c.b16 %v2007, %v2001
    %v2164 = vpack.c.b16 %v2008, %v2002
    %v2165 = vpack.c.b16 %v2009, %v2003
    %v2166 = vpack.c.b16 %v2010, %v2004
    %v2167 = vpack.c.b16 %v2017, %v2011
    %v2168 = vpack.c.b16 %v2018, %v2012
    %v2169 = vpack.c.b16 %v2019, %v2013
    %v2170 = vpack.c.b16 %v2020, %v2014
    %v2171 = vpack.c.b16 %v2021, %v2015
    %v2172 = vpack.c.b16 %v2022, %v2016
    %v2173 = vpack.c.b16 %v2029, %v2023
    %v2174 = vpack.c.b16 %v2030, %v2024
    %v2175 = vpack.c.b16 %v2031, %v2025
    %v2176 = vpack.c.b16 %v2032, %v2026
    %v2177 = vpack.c.b16 %v2033, %v2027
    %v2178 = vpack.c.b16 %v2034, %v2028
    %v2179 = vpack.c.b16 %v2041, %v2035
    %v2180 = vpack.c.b16 %v2042, %v2036
    %v2181 = vpack.c.b16 %v2043, %v2037
    %v2182 = vpack.c.b16 %v2044, %v2038
    %v2183 = vpack.c.b16 %v2045, %v2039
    %v2184 = vpack.c.b16 %v2046, %v2040
    %v2185 = vpack.c.b16 %v2053, %v2047
    %v2186 = vpack.c.b16 %v2054, %v2048
    %v2187 = vpack.c.b16 %v2055, %v2049
    %v2188 = vpack.c.b16 %v2056, %v2050
    %v2189 = vpack.c.b16 %v2057, %v2051
    %v2190 = vpack.c.b16 %v2058, %v2052
    %v2191 = vpack.c.b16 %v2065, %v2059
    %v2192 = vpack.c.b16 %v2066, %v2060
    %v2193 = vpack.c.b16 %v2067, %v2061
    %v2194 = vpack.c.b16 %v2068, %v2062
    %v2195 = vpack.c.b16 %v2069, %v2063
    %v2196 = vpack.c.b16 %v2070, %v2064
    %v2197 = vpack.c.b16 %v2077, %v2071
    %v2198 = vpack.c.b16 %v2078, %v2072
    %v2199 = vpack.c.b16 %v2079, %v2073
    %v2200 = vpack.c.b16 %v2080, %v2074
    %v2201 = vpack.c.b16 %v2081, %v2075
    %v2202 = vpack.c.b16 %v2082, %v2076
    %v2203 = vpack.c.b16 %v2089, %v2083
    %v2204 = vpack.c.b16 %v2090, %v2084
    %v2205 = vpack.c.b16 %v2091, %v2085
    %v2206 = vpack.c.b16 %v2092, %v2086
    %v2207 = vpack.c.b16 %v2093, %v2087
    %v2208 = vpack.c.b16 %v2094, %v2088
    %v2209 = vpack.c.b16 %v2101, %v2095
    %v2210 = vpack.c.b16 %v2102, %v2096
    %v2211 = vpack.c.b16 %v2103, %v2097
    %v2212 = vpack.c.b16 %v2104, %v2098
    %v2213 = vpack.c.b16 %v2105, %v2099
    %v2214 = vpack.c.b16 %v2106, %v2100
    %v2215 = vpack.c.b16 %v2113, %v2107
    %v2216 = vpack.c.b16 %v2114, %v2108
    %v2217 = vpack.c.b16 %v2115, %v2109
    %v2218 = vpack.c.b16 %v2116, %v2110
    %v2219 = vpack.c.b16 %v2117, %v2111
    %v2220 = vpack.c.b16 %v2118, %v2112
    %v2221 = vpack.c.b16 %v2125, %v2119
    %v2222 = vpack.c.b16 %v2126, %v2120
    %v2223 = vpack.c.b16 %v2127, %v2121
    %v2224 = vpack.c.b16 %v2128, %v2122
    %v2225 = vpack.c.b16 %v2129, %v2123
    %v2226 = vpack.c.b16 %v2130, %v2124
    %2323 = vmatprep.subr.bf16.mxu0 %v2174
    %2324 = vmatpush1.bf16.msra.mxu0 %v2173
    %2325 = vmatprep.subr.bf16.mxu0 %v2168
    %2326 = vmatpush1.bf16.msra.mxu0 %v2167
    %2327 = vmatprep.subr.bf16.mxu0 %v2162
    %2328 = vmatpush1.bf16.msra.mxu0 %v2161
    %2329 = vmatprep.subr.bf16.mxu0 %v2156
    %2330 = vmatpush1.bf16.msra.mxu0 %v2155
    %2331 = vmatprep.subr.bf16.mxu0 %v2150
    %2332 = vmatpush1.bf16.msra.mxu0 %v2149
    %2333 = vmatprep.subr.bf16.mxu0 %v2144
    %2334 = vmatpush1.bf16.msra.mxu0 %v2143
    %2335 = vmatprep.subr.bf16.mxu0 %v2138
    %2336 = vmatpush1.bf16.msra.mxu0 %v2137
    %2337 = vmatprep.subr.bf16.mxu0 %v2132
    %2338 = vmatpush1.bf16.msra.mxu0 %v2131
    %2339 = vmatprep.subr.bf16.mxu0 %v2222
    %2340 = vmatpush2.bf16.msra.mxu0 %v2221
    %2341 = vmatprep.subr.bf16.mxu0 %v2216
    %2342 = vmatpush2.bf16.msra.mxu0 %v2215
    %2343 = vmatprep.subr.bf16.mxu0 %v2210
    %2344 = vmatpush2.bf16.msra.mxu0 %v2209
    %2345 = vmatprep.subr.bf16.mxu0 %v2204
    %2346 = vmatpush2.bf16.msra.mxu0 %v2203
    %2347 = vmatprep.subr.bf16.mxu0 %v2198
    %2348 = vmatpush2.bf16.msra.mxu0 %v2197
    %2349 = vmatprep.subr.bf16.mxu0 %v2192
    %2350 = vmatpush2.bf16.msra.mxu0 %v2191
    %2351 = vmatprep.subr.bf16.mxu0 %v2186
    %2352 = vmatpush2.bf16.msra.mxu0 %v2185
    %2353 = vmatprep.subr.bf16.mxu0 %v2180
    %2354 = vmatpush2.bf16.msra.mxu0 %v2179
    %2355 = vmatprep.mubr.bf16.mxu0 %v1746
    %2356 = vmatmul.mubr.bf16.gmra.mxu0 %v1745
    %v2357 = vpop.f32.mrf.mxu0
    %v2358 = vadd.f32 0.0, %v2357
    %v2359 = vpop.f32.mrf.mxu0
    %v2360 = vadd.f32 0.0, %v2359
    %v2361 = vpop.f32.mrf.mxu0
    %v2362 = vpop.f32.mrf.mxu0
    %2363 = vdwg.mxu0
    %2364 = vmatprep.subr.bf16.mxu0 %v2176
    %2365 = vmatpush1.bf16.msra.mxu0 %v2175
    %2366 = vmatprep.subr.bf16.mxu0 %v2170
    %2367 = vmatpush1.bf16.msra.mxu0 %v2169
    %2368 = vmatprep.subr.bf16.mxu0 %v2164
    %2369 = vmatpush1.bf16.msra.mxu0 %v2163
    %2370 = vmatprep.subr.bf16.mxu0 %v2158
    %2371 = vmatpush1.bf16.msra.mxu0 %v2157
    %2372 = vmatprep.subr.bf16.mxu0 %v2152
    %2373 = vmatpush1.bf16.msra.mxu0 %v2151
    %2374 = vmatprep.subr.bf16.mxu0 %v2146
    %2375 = vmatpush1.bf16.msra.mxu0 %v2145
    %2376 = vmatprep.subr.bf16.mxu0 %v2140
    %2377 = vmatpush1.bf16.msra.mxu0 %v2139
    %2378 = vmatprep.subr.bf16.mxu0 %v2134
    %2379 = vmatpush1.bf16.msra.mxu0 %v2133
    %2380 = vmatprep.subr.bf16.mxu0 %v2224
    %2381 = vmatpush2.bf16.msra.mxu0 %v2223
    %2382 = vmatprep.subr.bf16.mxu0 %v2218
    %2383 = vmatpush2.bf16.msra.mxu0 %v2217
    %2384 = vmatprep.subr.bf16.mxu0 %v2212
    %2385 = vmatpush2.bf16.msra.mxu0 %v2211
    %2386 = vmatprep.subr.bf16.mxu0 %v2206
    %2387 = vmatpush2.bf16.msra.mxu0 %v2205
    %2388 = vmatprep.subr.bf16.mxu0 %v2200
    %2389 = vmatpush2.bf16.msra.mxu0 %v2199
    %2390 = vmatprep.subr.bf16.mxu0 %v2194
    %2391 = vmatpush2.bf16.msra.mxu0 %v2193
    %2392 = vmatprep.subr.bf16.mxu0 %v2188
    %2393 = vmatpush2.bf16.msra.mxu0 %v2187
    %2394 = vmatprep.subr.bf16.mxu0 %v2182
    %2395 = vmatpush2.bf16.msra.mxu0 %v2181
    %2396 = vmatprep.mubr.bf16.mxu0 %v1746
    %2397 = vmatmul.mubr.bf16.gmra.mxu0 %v1745
    %v2398 = vpop.f32.mrf.mxu0
    %v2399 = vadd.f32 0.0, %v2398
    %v2400 = vpop.f32.mrf.mxu0
    %v2401 = vadd.f32 0.0, %v2400
    %v2402 = vpop.f32.mrf.mxu0
    %v2403 = vpop.f32.mrf.mxu0
    %2404 = vdwg.mxu0
    %2405 = vmatprep.subr.bf16.mxu0 %v2178
    %2406 = vmatpush1.bf16.msra.mxu0 %v2177
    %2407 = vmatprep.subr.bf16.mxu0 %v2172
    %2408 = vmatpush1.bf16.msra.mxu0 %v2171
    %2409 = vmatprep.subr.bf16.mxu0 %v2166
    %2410 = vmatpush1.bf16.msra.mxu0 %v2165
    %2411 = vmatprep.subr.bf16.mxu0 %v2160
    %2412 = vmatpush1.bf16.msra.mxu0 %v2159
    %2413 = vmatprep.subr.bf16.mxu0 %v2154
    %2414 = vmatpush1.bf16.msra.mxu0 %v2153
    %2415 = vmatprep.subr.bf16.mxu0 %v2148
    %2416 = vmatpush1.bf16.msra.mxu0 %v2147
    %2417 = vmatprep.subr.bf16.mxu0 %v2142
    %2418 = vmatpush1.bf16.msra.mxu0 %v2141
    %2419 = vmatprep.subr.bf16.mxu0 %v2136
    %2420 = vmatpush1.bf16.msra.mxu0 %v2135
    %2421 = vmatprep.subr.bf16.mxu0 %v2226
    %2422 = vmatpush2.bf16.msra.mxu0 %v2225
    %2423 = vmatprep.subr.bf16.mxu0 %v2220
    %2424 = vmatpush2.bf16.msra.mxu0 %v2219
    %2425 = vmatprep.subr.bf16.mxu0 %v2214
    %2426 = vmatpush2.bf16.msra.mxu0 %v2213
    %2427 = vmatprep.subr.bf16.mxu0 %v2208
    %2428 = vmatpush2.bf16.msra.mxu0 %v2207
    %2429 = vmatprep.subr.bf16.mxu0 %v2202
    %2430 = vmatpush2.bf16.msra.mxu0 %v2201
    %2431 = vmatprep.subr.bf16.mxu0 %v2196
    %2432 = vmatpush2.bf16.msra.mxu0 %v2195
    %2433 = vmatprep.subr.bf16.mxu0 %v2190
    %2434 = vmatpush2.bf16.msra.mxu0 %v2189
    %2435 = vmatprep.subr.bf16.mxu0 %v2184
    %2436 = vmatpush2.bf16.msra.mxu0 %v2183
    %2437 = vmatprep.mubr.bf16.mxu0 %v1746
    %2438 = vmatmul.mubr.bf16.gmra.mxu0 %v1745
    %v2439 = vpop.f32.mrf.mxu0
    %v2440 = vadd.f32 0.0, %v2439
    %v2441 = vpop.f32.mrf.mxu0
    %v2442 = vadd.f32 0.0, %v2441
    %v2443 = vpop.f32.mrf.mxu0
    %v2444 = vpop.f32.mrf.mxu0
    %2445 = vdwg.mxu0
    %v2448 = vcombine.low %v2358, %v2360
    %v2450 = vunpack.c.l.s4 1966171168
    %v2451 = vunpack.c.0.s8 %v2450
    %v2452 = vlaneseq
    %v2453 = vshrl.u32 %v2452, 7
    %v2454 = vsub.s32 %v2451, %v2453
    %v2455 = vrot.slane %v2448, %v2454
    %v2457 = vunpack.c.l.s4 1966171168
    %v2458 = vunpack.c.0.s8 %v2457
    %v2459 = vlaneseq
    %v2460 = vshrl.u32 %v2459, 7
    %v2461 = vsub.s32 %v2458, %v2460
    %v2462 = vrot.slane %v2455, %v2461
    %v2464 = vadd.f32 %v1733, %v2462
    %v2465 = vxor.u32 %v2464, 2147483648
    %v2466 = vmul.f32 %v2465, 1.442695
    %v2467 = vpow.pop %v2466
    %v2468 = vadd.f32 %v2467, 1.0
    %v2469 = vrcp.pop %v2468
    %v2470 = vmul.f32 1.0, %v2469
    %v2472 = vrot.slane %v1733, 2
    %v2476 = vcombine.low %v2399, %v2401
    %v2478 = vunpack.c.l.s4 1966171168
    %v2479 = vunpack.c.0.s8 %v2478
    %v2480 = vlaneseq
    %v2481 = vshrl.u32 %v2480, 7
    %v2482 = vsub.s32 %v2479, %v2481
    %v2483 = vrot.slane %v2476, %v2482
    %v2485 = vunpack.c.l.s4 1966171168
    %v2486 = vunpack.c.0.s8 %v2485
    %v2487 = vlaneseq
    %v2488 = vshrl.u32 %v2487, 7
    %v2489 = vsub.s32 %v2486, %v2488
    %v2490 = vrot.slane %v2483, %v2489
    %v2492 = vadd.f32 %v2472, %v2490
    %v2493 = vxor.u32 %v2492, 2147483648
    %v2494 = vmul.f32 %v2493, 1.442695
    %v2495 = vpow.pop %v2494
    %v2496 = vadd.f32 %v2495, 1.0
    %v2497 = vrcp.pop %v2496
    %v2498 = vmul.f32 1.0, %v2497
    %v2499 = vld [vmem:[%s5] sm:$0x3]
    %v2501 = vlaneseq
    %v2502 = vshrl.u32 %v2501, 7
    %v2503 = vsub.s32 0, %v2502
    %v2504 = vrot.slane %v2499, %v2503
    %v2505 = vlaneseq
    %v2506 = vshrl.u32 %v2505, 7
    %v2507 = vsub.s32 1, %v2506
    %v2508 = vrot.slane %v2499, %v2507
    %v2511 = vadd.f32 %v2440, %v2504
    %v2512 = vadd.f32 %v2442, %v2508
    %v2515 = vcombine.low %v2511, %v2512
    %v2517 = vunpack.c.l.s4 1966171168
    %v2518 = vunpack.c.0.s8 %v2517
    %v2519 = vlaneseq
    %v2520 = vshrl.u32 %v2519, 7
    %v2521 = vsub.s32 %v2518, %v2520
    %v2522 = vrot.slane %v2515, %v2521
    %v2524 = vunpack.c.l.s4 1966171168
    %v2525 = vunpack.c.0.s8 %v2524
    %v2526 = vlaneseq
    %v2527 = vshrl.u32 %v2526, 7
    %v2528 = vsub.s32 %v2525, %v2527
    %v2529 = vrot.slane %v2522, %v2528
    %v2531 = vmul.f32 %v2470, %v2529
    %v2532 = vrot.slane %v1733, 4
    %v2534 = vadd.f32 %v2532, %v2531
    %v2535 = vtanh.pop %v2534
    %v2536 = vsub.f32 1.0, %v2498
    %v2537 = vmul.f32 %v2536, %v2535
    %v2538 = vmul.f32 %v2498, %v1727
    %v2539 = vadd.f32 %v2537, %v2538
    %s2540 = scalar_lea.vmem [#allocation12], 1
    %2541 = vst.msk [vmem:[%s2540] ss:$8 sm:$0x3] %vm83, %v2539
    %2542 = vst.msk [vmem:[%s2540] ss:$8 sm:$0x0] %vm83, %v2539
    %s2543 = scalar_lea.vmem [#allocation3], 2
    %v2544 = vld [vmem:[%s2543] ss:$8 sm:$0xf]
    %v2545 = vld [vmem:[%s2543] ss:$8 sm:$0x30]
    %v2546 = vor.u32 %v2544, %v2545
    %v2548 = vlaneseq
    %v2549 = vshrl.u32 %v2548, 7
    %v2550 = vsub.s32 0, %v2549
    %v2551 = vrot.slane %v2539, %v2550
    %v2552 = vlaneseq
    %v2553 = vshrl.u32 %v2552, 7
    %v2554 = vsub.s32 1, %v2553
    %v2555 = vrot.slane %v2539, %v2554
    %v2558 = vpack.c.bf16 %v2551, %v2551
    %v2559 = vpack.c.bf16 %v2555, %v2555
    %v2560 = vld [vmem:[#allocation11] sm:$0xff]
    %v2561 = vld [vmem:[#allocation11 + $0x8] sm:$0xff]
    %v2562 = vld [vmem:[#allocation11 + $0x10] sm:$0xff]
    %v2563 = vld [vmem:[#allocation11 + $0x18] sm:$0xff]
    %v2564 = vld [vmem:[#allocation11 + $0x20] sm:$0xff]
    %v2565 = vld [vmem:[#allocation11 + $0x28] sm:$0xff]
    %v2566 = vld [vmem:[#allocation11 + $0x30] sm:$0xff]
    %v2567 = vld [vmem:[#allocation11 + $0x38] sm:$0xff]
    %v2568 = vld [vmem:[#allocation11 + $0x40] sm:$0xff]
    %v2569 = vld [vmem:[#allocation11 + $0x48] sm:$0xff]
    %v2570 = vld [vmem:[#allocation11 + $0x50] sm:$0xff]
    %v2571 = vld [vmem:[#allocation11 + $0x58] sm:$0xff]
    %v2572 = vld [vmem:[#allocation11 + $0x60] sm:$0xff]
    %v2573 = vld [vmem:[#allocation11 + $0x68] sm:$0xff]
    %v2574 = vld [vmem:[#allocation11 + $0x70] sm:$0xff]
    %v2575 = vld [vmem:[#allocation11 + $0x78] sm:$0xff]
    %v2576 = vld [vmem:[#allocation11 + $0x80] sm:$0xff]
    %v2577 = vld [vmem:[#allocation11 + $0x88] sm:$0xff]
    %v2578 = vld [vmem:[#allocation11 + $0x90] sm:$0xff]
    %v2579 = vld [vmem:[#allocation11 + $0x98] sm:$0xff]
    %v2580 = vld [vmem:[#allocation11 + $0xa0] sm:$0xff]
    %v2581 = vld [vmem:[#allocation11 + $0xa8] sm:$0xff]
    %v2582 = vld [vmem:[#allocation11 + $0xb0] sm:$0xff]
    %v2583 = vld [vmem:[#allocation11 + $0xb8] sm:$0xff]
    %v2584 = vld [vmem:[#allocation11 + $0xc0] sm:$0xff]
    %v2585 = vld [vmem:[#allocation11 + $0xc8] sm:$0xff]
    %v2586 = vld [vmem:[#allocation11 + $0xd0] sm:$0xff]
    %v2587 = vld [vmem:[#allocation11 + $0xd8] sm:$0xff]
    %v2588 = vld [vmem:[#allocation11 + $0xe0] sm:$0xff]
    %v2589 = vld [vmem:[#allocation11 + $0xe8] sm:$0xff]
    %v2590 = vld [vmem:[#allocation11 + $0xf0] sm:$0xff]
    %v2591 = vld [vmem:[#allocation11 + $0xf8] sm:$0xff]
    %v2592 = vld [vmem:[#allocation11 + $0x100] sm:$0xff]
    %v2593 = vld [vmem:[#allocation11 + $0x108] sm:$0xff]
    %v2594 = vld [vmem:[#allocation11 + $0x110] sm:$0xff]
    %v2595 = vld [vmem:[#allocation11 + $0x118] sm:$0xff]
    %v2596 = vld [vmem:[#allocation11 + $0x120] sm:$0xff]
    %v2597 = vld [vmem:[#allocation11 + $0x128] sm:$0xff]
    %v2598 = vld [vmem:[#allocation11 + $0x130] sm:$0xff]
    %v2599 = vld [vmem:[#allocation11 + $0x138] sm:$0xff]
    %v2600 = vld [vmem:[#allocation11 + $0x140] sm:$0xff]
    %v2601 = vld [vmem:[#allocation11 + $0x148] sm:$0xff]
    %v2602 = vld [vmem:[#allocation11 + $0x150] sm:$0xff]
    %v2603 = vld [vmem:[#allocation11 + $0x158] sm:$0xff]
    %v2604 = vld [vmem:[#allocation11 + $0x160] sm:$0xff]
    %v2605 = vld [vmem:[#allocation11 + $0x168] sm:$0xff]
    %v2606 = vld [vmem:[#allocation11 + $0x170] sm:$0xff]
    %v2607 = vld [vmem:[#allocation11 + $0x178] sm:$0xff]
    %v2608 = vld [vmem:[#allocation11 + $0x180] sm:$0xff]
    %v2609 = vld [vmem:[#allocation11 + $0x188] sm:$0xff]
    %v2610 = vld [vmem:[#allocation11 + $0x190] sm:$0xff]
    %v2611 = vld [vmem:[#allocation11 + $0x198] sm:$0xff]
    %v2612 = vld [vmem:[#allocation11 + $0x1a0] sm:$0xff]
    %v2613 = vld [vmem:[#allocation11 + $0x1a8] sm:$0xff]
    %v2614 = vld [vmem:[#allocation11 + $0x1b0] sm:$0xff]
    %v2615 = vld [vmem:[#allocation11 + $0x1b8] sm:$0xff]
    %v2616 = vld [vmem:[#allocation11 + $0x1c0] sm:$0xff]
    %v2617 = vld [vmem:[#allocation11 + $0x1c8] sm:$0xff]
    %v2618 = vld [vmem:[#allocation11 + $0x1d0] sm:$0xff]
    %v2619 = vld [vmem:[#allocation11 + $0x1d8] sm:$0xff]
    %v2620 = vld [vmem:[#allocation11 + $0x1e0] sm:$0xff]
    %v2621 = vld [vmem:[#allocation11 + $0x1e8] sm:$0xff]
    %v2622 = vld [vmem:[#allocation11 + $0x1f0] sm:$0xff]
    %v2623 = vld [vmem:[#allocation11 + $0x1f8] sm:$0xff]
    %v2624 = vld [vmem:[#allocation11 + $0x200] sm:$0xff]
    %v2625 = vld [vmem:[#allocation11 + $0x208] sm:$0xff]
    %v2626 = vld [vmem:[#allocation11 + $0x210] sm:$0xff]
    %v2627 = vld [vmem:[#allocation11 + $0x218] sm:$0xff]
    %v2628 = vld [vmem:[#allocation11 + $0x220] sm:$0xff]
    %v2629 = vld [vmem:[#allocation11 + $0x228] sm:$0xff]
    %v2630 = vld [vmem:[#allocation11 + $0x230] sm:$0xff]
    %v2631 = vld [vmem:[#allocation11 + $0x238] sm:$0xff]
    %v2632 = vld [vmem:[#allocation11 + $0x240] sm:$0xff]
    %v2633 = vld [vmem:[#allocation11 + $0x248] sm:$0xff]
    %v2634 = vld [vmem:[#allocation11 + $0x250] sm:$0xff]
    %v2635 = vld [vmem:[#allocation11 + $0x258] sm:$0xff]
    %v2636 = vld [vmem:[#allocation11 + $0x260] sm:$0xff]
    %v2637 = vld [vmem:[#allocation11 + $0x268] sm:$0xff]
    %v2638 = vld [vmem:[#allocation11 + $0x270] sm:$0xff]
    %v2639 = vld [vmem:[#allocation11 + $0x278] sm:$0xff]
    %v2640 = vld [vmem:[#allocation11 + $0x280] sm:$0xff]
    %v2641 = vld [vmem:[#allocation11 + $0x288] sm:$0xff]
    %v2642 = vld [vmem:[#allocation11 + $0x290] sm:$0xff]
    %v2643 = vld [vmem:[#allocation11 + $0x298] sm:$0xff]
    %v2644 = vld [vmem:[#allocation11 + $0x2a0] sm:$0xff]
    %v2645 = vld [vmem:[#allocation11 + $0x2a8] sm:$0xff]
    %v2646 = vld [vmem:[#allocation11 + $0x2b0] sm:$0xff]
    %v2647 = vld [vmem:[#allocation11 + $0x2b8] sm:$0xff]
    %v2648 = vld [vmem:[#allocation11 + $0x2c0] sm:$0xff]
    %v2649 = vld [vmem:[#allocation11 + $0x2c8] sm:$0xff]
    %v2650 = vld [vmem:[#allocation11 + $0x2d0] sm:$0xff]
    %v2651 = vld [vmem:[#allocation11 + $0x2d8] sm:$0xff]
    %v2652 = vld [vmem:[#allocation11 + $0x2e0] sm:$0xff]
    %v2653 = vld [vmem:[#allocation11 + $0x2e8] sm:$0xff]
    %v2654 = vld [vmem:[#allocation11 + $0x2f0] sm:$0xff]
    %v2655 = vld [vmem:[#allocation11 + $0x2f8] sm:$0xff]
    %v2752 = vunpack.c.l.b16 %v2560
    %v2753 = vunpack.c.h.b16 %v2560
    %v2754 = vunpack.c.l.b16 %v2561
    %v2755 = vunpack.c.h.b16 %v2561
    %v2756 = vunpack.c.l.b16 %v2562
    %v2757 = vunpack.c.h.b16 %v2562
    %v2758 = vunpack.c.l.b16 %v2563
    %v2759 = vunpack.c.h.b16 %v2563
    %v2760 = vunpack.c.l.b16 %v2564
    %v2761 = vunpack.c.h.b16 %v2564
    %v2762 = vunpack.c.l.b16 %v2565
    %v2763 = vunpack.c.h.b16 %v2565
    %v2764 = vunpack.c.l.b16 %v2566
    %v2765 = vunpack.c.h.b16 %v2566
    %v2766 = vunpack.c.l.b16 %v2567
    %v2767 = vunpack.c.h.b16 %v2567
    %v2768 = vunpack.c.l.b16 %v2568
    %v2769 = vunpack.c.h.b16 %v2568
    %v2770 = vunpack.c.l.b16 %v2569
    %v2771 = vunpack.c.h.b16 %v2569
    %v2772 = vunpack.c.l.b16 %v2570
    %v2773 = vunpack.c.h.b16 %v2570
    %v2774 = vunpack.c.l.b16 %v2571
    %v2775 = vunpack.c.h.b16 %v2571
    %v2776 = vunpack.c.l.b16 %v2572
    %v2777 = vunpack.c.h.b16 %v2572
    %v2778 = vunpack.c.l.b16 %v2573
    %v2779 = vunpack.c.h.b16 %v2573
    %v2780 = vunpack.c.l.b16 %v2574
    %v2781 = vunpack.c.h.b16 %v2574
    %v2782 = vunpack.c.l.b16 %v2575
    %v2783 = vunpack.c.h.b16 %v2575
    %v2784 = vunpack.c.l.b16 %v2576
    %v2785 = vunpack.c.h.b16 %v2576
    %v2786 = vunpack.c.l.b16 %v2577
    %v2787 = vunpack.c.h.b16 %v2577
    %v2788 = vunpack.c.l.b16 %v2578
    %v2789 = vunpack.c.h.b16 %v2578
    %v2790 = vunpack.c.l.b16 %v2579
    %v2791 = vunpack.c.h.b16 %v2579
    %v2792 = vunpack.c.l.b16 %v2580
    %v2793 = vunpack.c.h.b16 %v2580
    %v2794 = vunpack.c.l.b16 %v2581
    %v2795 = vunpack.c.h.b16 %v2581
    %v2796 = vunpack.c.l.b16 %v2582
    %v2797 = vunpack.c.h.b16 %v2582
    %v2798 = vunpack.c.l.b16 %v2583
    %v2799 = vunpack.c.h.b16 %v2583
    %v2800 = vunpack.c.l.b16 %v2584
    %v2801 = vunpack.c.h.b16 %v2584
    %v2802 = vunpack.c.l.b16 %v2585
    %v2803 = vunpack.c.h.b16 %v2585
    %v2804 = vunpack.c.l.b16 %v2586
    %v2805 = vunpack.c.h.b16 %v2586
    %v2806 = vunpack.c.l.b16 %v2587
    %v2807 = vunpack.c.h.b16 %v2587
    %v2808 = vunpack.c.l.b16 %v2588
    %v2809 = vunpack.c.h.b16 %v2588
    %v2810 = vunpack.c.l.b16 %v2589
    %v2811 = vunpack.c.h.b16 %v2589
    %v2812 = vunpack.c.l.b16 %v2590
    %v2813 = vunpack.c.h.b16 %v2590
    %v2814 = vunpack.c.l.b16 %v2591
    %v2815 = vunpack.c.h.b16 %v2591
    %v2816 = vunpack.c.l.b16 %v2592
    %v2817 = vunpack.c.h.b16 %v2592
    %v2818 = vunpack.c.l.b16 %v2593
    %v2819 = vunpack.c.h.b16 %v2593
    %v2820 = vunpack.c.l.b16 %v2594
    %v2821 = vunpack.c.h.b16 %v2594
    %v2822 = vunpack.c.l.b16 %v2595
    %v2823 = vunpack.c.h.b16 %v2595
    %v2824 = vunpack.c.l.b16 %v2596
    %v2825 = vunpack.c.h.b16 %v2596
    %v2826 = vunpack.c.l.b16 %v2597
    %v2827 = vunpack.c.h.b16 %v2597
    %v2828 = vunpack.c.l.b16 %v2598
    %v2829 = vunpack.c.h.b16 %v2598
    %v2830 = vunpack.c.l.b16 %v2599
    %v2831 = vunpack.c.h.b16 %v2599
    %v2832 = vunpack.c.l.b16 %v2600
    %v2833 = vunpack.c.h.b16 %v2600
    %v2834 = vunpack.c.l.b16 %v2601
    %v2835 = vunpack.c.h.b16 %v2601
    %v2836 = vunpack.c.l.b16 %v2602
    %v2837 = vunpack.c.h.b16 %v2602
    %v2838 = vunpack.c.l.b16 %v2603
    %v2839 = vunpack.c.h.b16 %v2603
    %v2840 = vunpack.c.l.b16 %v2604
    %v2841 = vunpack.c.h.b16 %v2604
    %v2842 = vunpack.c.l.b16 %v2605
    %v2843 = vunpack.c.h.b16 %v2605
    %v2844 = vunpack.c.l.b16 %v2606
    %v2845 = vunpack.c.h.b16 %v2606
    %v2846 = vunpack.c.l.b16 %v2607
    %v2847 = vunpack.c.h.b16 %v2607
    %v2848 = vunpack.c.l.b16 %v2608
    %v2849 = vunpack.c.h.b16 %v2608
    %v2850 = vunpack.c.l.b16 %v2609
    %v2851 = vunpack.c.h.b16 %v2609
    %v2852 = vunpack.c.l.b16 %v2610
    %v2853 = vunpack.c.h.b16 %v2610
    %v2854 = vunpack.c.l.b16 %v2611
    %v2855 = vunpack.c.h.b16 %v2611
    %v2856 = vunpack.c.l.b16 %v2612
    %v2857 = vunpack.c.h.b16 %v2612
    %v2858 = vunpack.c.l.b16 %v2613
    %v2859 = vunpack.c.h.b16 %v2613
    %v2860 = vunpack.c.l.b16 %v2614
    %v2861 = vunpack.c.h.b16 %v2614
    %v2862 = vunpack.c.l.b16 %v2615
    %v2863 = vunpack.c.h.b16 %v2615
    %v2864 = vunpack.c.l.b16 %v2616
    %v2865 = vunpack.c.h.b16 %v2616
    %v2866 = vunpack.c.l.b16 %v2617
    %v2867 = vunpack.c.h.b16 %v2617
    %v2868 = vunpack.c.l.b16 %v2618
    %v2869 = vunpack.c.h.b16 %v2618
    %v2870 = vunpack.c.l.b16 %v2619
    %v2871 = vunpack.c.h.b16 %v2619
    %v2872 = vunpack.c.l.b16 %v2620
    %v2873 = vunpack.c.h.b16 %v2620
    %v2874 = vunpack.c.l.b16 %v2621
    %v2875 = vunpack.c.h.b16 %v2621
    %v2876 = vunpack.c.l.b16 %v2622
    %v2877 = vunpack.c.h.b16 %v2622
    %v2878 = vunpack.c.l.b16 %v2623
    %v2879 = vunpack.c.h.b16 %v2623
    %v2880 = vunpack.c.l.b16 %v2624
    %v2881 = vunpack.c.h.b16 %v2624
    %v2882 = vunpack.c.l.b16 %v2625
    %v2883 = vunpack.c.h.b16 %v2625
    %v2884 = vunpack.c.l.b16 %v2626
    %v2885 = vunpack.c.h.b16 %v2626
    %v2886 = vunpack.c.l.b16 %v2627
    %v2887 = vunpack.c.h.b16 %v2627
    %v2888 = vunpack.c.l.b16 %v2628
    %v2889 = vunpack.c.h.b16 %v2628
    %v2890 = vunpack.c.l.b16 %v2629
    %v2891 = vunpack.c.h.b16 %v2629
    %v2892 = vunpack.c.l.b16 %v2630
    %v2893 = vunpack.c.h.b16 %v2630
    %v2894 = vunpack.c.l.b16 %v2631
    %v2895 = vunpack.c.h.b16 %v2631
    %v2896 = vunpack.c.l.b16 %v2632
    %v2897 = vunpack.c.h.b16 %v2632
    %v2898 = vunpack.c.l.b16 %v2633
    %v2899 = vunpack.c.h.b16 %v2633
    %v2900 = vunpack.c.l.b16 %v2634
    %v2901 = vunpack.c.h.b16 %v2634
    %v2902 = vunpack.c.l.b16 %v2635
    %v2903 = vunpack.c.h.b16 %v2635
    %v2904 = vunpack.c.l.b16 %v2636
    %v2905 = vunpack.c.h.b16 %v2636
    %v2906 = vunpack.c.l.b16 %v2637
    %v2907 = vunpack.c.h.b16 %v2637
    %v2908 = vunpack.c.l.b16 %v2638
    %v2909 = vunpack.c.h.b16 %v2638
    %v2910 = vunpack.c.l.b16 %v2639
    %v2911 = vunpack.c.h.b16 %v2639
    %v2912 = vunpack.c.l.b16 %v2640
    %v2913 = vunpack.c.h.b16 %v2640
    %v2914 = vunpack.c.l.b16 %v2641
    %v2915 = vunpack.c.h.b16 %v2641
    %v2916 = vunpack.c.l.b16 %v2642
    %v2917 = vunpack.c.h.b16 %v2642
    %v2918 = vunpack.c.l.b16 %v2643
    %v2919 = vunpack.c.h.b16 %v2643
    %v2920 = vunpack.c.l.b16 %v2644
    %v2921 = vunpack.c.h.b16 %v2644
    %v2922 = vunpack.c.l.b16 %v2645
    %v2923 = vunpack.c.h.b16 %v2645
    %v2924 = vunpack.c.l.b16 %v2646
    %v2925 = vunpack.c.h.b16 %v2646
    %v2926 = vunpack.c.l.b16 %v2647
    %v2927 = vunpack.c.h.b16 %v2647
    %v2928 = vunpack.c.l.b16 %v2648
    %v2929 = vunpack.c.h.b16 %v2648
    %v2930 = vunpack.c.l.b16 %v2649
    %v2931 = vunpack.c.h.b16 %v2649
    %v2932 = vunpack.c.l.b16 %v2650
    %v2933 = vunpack.c.h.b16 %v2650
    %v2934 = vunpack.c.l.b16 %v2651
    %v2935 = vunpack.c.h.b16 %v2651
    %v2936 = vunpack.c.l.b16 %v2652
    %v2937 = vunpack.c.h.b16 %v2652
    %v2938 = vunpack.c.l.b16 %v2653
    %v2939 = vunpack.c.h.b16 %v2653
    %v2940 = vunpack.c.l.b16 %v2654
    %v2941 = vunpack.c.h.b16 %v2654
    %v2942 = vunpack.c.l.b16 %v2655
    %v2943 = vunpack.c.h.b16 %v2655
    %v2944 = vpack.c.b16 %v2758, %v2752
    %v2945 = vpack.c.b16 %v2759, %v2753
    %v2946 = vpack.c.b16 %v2760, %v2754
    %v2947 = vpack.c.b16 %v2761, %v2755
    %v2948 = vpack.c.b16 %v2762, %v2756
    %v2949 = vpack.c.b16 %v2763, %v2757
    %v2950 = vpack.c.b16 %v2770, %v2764
    %v2951 = vpack.c.b16 %v2771, %v2765
    %v2952 = vpack.c.b16 %v2772, %v2766
    %v2953 = vpack.c.b16 %v2773, %v2767
    %v2954 = vpack.c.b16 %v2774, %v2768
    %v2955 = vpack.c.b16 %v2775, %v2769
    %v2956 = vpack.c.b16 %v2782, %v2776
    %v2957 = vpack.c.b16 %v2783, %v2777
    %v2958 = vpack.c.b16 %v2784, %v2778
    %v2959 = vpack.c.b16 %v2785, %v2779
    %v2960 = vpack.c.b16 %v2786, %v2780
    %v2961 = vpack.c.b16 %v2787, %v2781
    %v2962 = vpack.c.b16 %v2794, %v2788
    %v2963 = vpack.c.b16 %v2795, %v2789
    %v2964 = vpack.c.b16 %v2796, %v2790
    %v2965 = vpack.c.b16 %v2797, %v2791
    %v2966 = vpack.c.b16 %v2798, %v2792
    %v2967 = vpack.c.b16 %v2799, %v2793
    %v2968 = vpack.c.b16 %v2806, %v2800
    %v2969 = vpack.c.b16 %v2807, %v2801
    %v2970 = vpack.c.b16 %v2808, %v2802
    %v2971 = vpack.c.b16 %v2809, %v2803
    %v2972 = vpack.c.b16 %v2810, %v2804
    %v2973 = vpack.c.b16 %v2811, %v2805
    %v2974 = vpack.c.b16 %v2818, %v2812
    %v2975 = vpack.c.b16 %v2819, %v2813
    %v2976 = vpack.c.b16 %v2820, %v2814
    %v2977 = vpack.c.b16 %v2821, %v2815
    %v2978 = vpack.c.b16 %v2822, %v2816
    %v2979 = vpack.c.b16 %v2823, %v2817
    %v2980 = vpack.c.b16 %v2830, %v2824
    %v2981 = vpack.c.b16 %v2831, %v2825
    %v2982 = vpack.c.b16 %v2832, %v2826
    %v2983 = vpack.c.b16 %v2833, %v2827
    %v2984 = vpack.c.b16 %v2834, %v2828
    %v2985 = vpack.c.b16 %v2835, %v2829
    %v2986 = vpack.c.b16 %v2842, %v2836
    %v2987 = vpack.c.b16 %v2843, %v2837
    %v2988 = vpack.c.b16 %v2844, %v2838
    %v2989 = vpack.c.b16 %v2845, %v2839
    %v2990 = vpack.c.b16 %v2846, %v2840
    %v2991 = vpack.c.b16 %v2847, %v2841
    %v2992 = vpack.c.b16 %v2854, %v2848
    %v2993 = vpack.c.b16 %v2855, %v2849
    %v2994 = vpack.c.b16 %v2856, %v2850
    %v2995 = vpack.c.b16 %v2857, %v2851
    %v2996 = vpack.c.b16 %v2858, %v2852
    %v2997 = vpack.c.b16 %v2859, %v2853
    %v2998 = vpack.c.b16 %v2866, %v2860
    %v2999 = vpack.c.b16 %v2867, %v2861
    %v3000 = vpack.c.b16 %v2868, %v2862
    %v3001 = vpack.c.b16 %v2869, %v2863
    %v3002 = vpack.c.b16 %v2870, %v2864
    %v3003 = vpack.c.b16 %v2871, %v2865
    %v3004 = vpack.c.b16 %v2878, %v2872
    %v3005 = vpack.c.b16 %v2879, %v2873
    %v3006 = vpack.c.b16 %v2880, %v2874
    %v3007 = vpack.c.b16 %v2881, %v2875
    %v3008 = vpack.c.b16 %v2882, %v2876
    %v3009 = vpack.c.b16 %v2883, %v2877
    %v3010 = vpack.c.b16 %v2890, %v2884
    %v3011 = vpack.c.b16 %v2891, %v2885
    %v3012 = vpack.c.b16 %v2892, %v2886
    %v3013 = vpack.c.b16 %v2893, %v2887
    %v3014 = vpack.c.b16 %v2894, %v2888
    %v3015 = vpack.c.b16 %v2895, %v2889
    %v3016 = vpack.c.b16 %v2902, %v2896
    %v3017 = vpack.c.b16 %v2903, %v2897
    %v3018 = vpack.c.b16 %v2904, %v2898
    %v3019 = vpack.c.b16 %v2905, %v2899
    %v3020 = vpack.c.b16 %v2906, %v2900
    %v3021 = vpack.c.b16 %v2907, %v2901
    %v3022 = vpack.c.b16 %v2914, %v2908
    %v3023 = vpack.c.b16 %v2915, %v2909
    %v3024 = vpack.c.b16 %v2916, %v2910
    %v3025 = vpack.c.b16 %v2917, %v2911
    %v3026 = vpack.c.b16 %v2918, %v2912
    %v3027 = vpack.c.b16 %v2919, %v2913
    %v3028 = vpack.c.b16 %v2926, %v2920
    %v3029 = vpack.c.b16 %v2927, %v2921
    %v3030 = vpack.c.b16 %v2928, %v2922
    %v3031 = vpack.c.b16 %v2929, %v2923
    %v3032 = vpack.c.b16 %v2930, %v2924
    %v3033 = vpack.c.b16 %v2931, %v2925
    %v3034 = vpack.c.b16 %v2938, %v2932
    %v3035 = vpack.c.b16 %v2939, %v2933
    %v3036 = vpack.c.b16 %v2940, %v2934
    %v3037 = vpack.c.b16 %v2941, %v2935
    %v3038 = vpack.c.b16 %v2942, %v2936
    %v3039 = vpack.c.b16 %v2943, %v2937
    %3136 = vmatprep.subr.bf16.mxu0 %v2987
    %3137 = vmatpush1.bf16.msra.mxu0 %v2986
    %3138 = vmatprep.subr.bf16.mxu0 %v2981
    %3139 = vmatpush1.bf16.msra.mxu0 %v2980
    %3140 = vmatprep.subr.bf16.mxu0 %v2975
    %3141 = vmatpush1.bf16.msra.mxu0 %v2974
    %3142 = vmatprep.subr.bf16.mxu0 %v2969
    %3143 = vmatpush1.bf16.msra.mxu0 %v2968
    %3144 = vmatprep.subr.bf16.mxu0 %v2963
    %3145 = vmatpush1.bf16.msra.mxu0 %v2962
    %3146 = vmatprep.subr.bf16.mxu0 %v2957
    %3147 = vmatpush1.bf16.msra.mxu0 %v2956
    %3148 = vmatprep.subr.bf16.mxu0 %v2951
    %3149 = vmatpush1.bf16.msra.mxu0 %v2950
    %3150 = vmatprep.subr.bf16.mxu0 %v2945
    %3151 = vmatpush1.bf16.msra.mxu0 %v2944
    %3152 = vmatprep.subr.bf16.mxu0 %v3035
    %3153 = vmatpush2.bf16.msra.mxu0 %v3034
    %3154 = vmatprep.subr.bf16.mxu0 %v3029
    %3155 = vmatpush2.bf16.msra.mxu0 %v3028
    %3156 = vmatprep.subr.bf16.mxu0 %v3023
    %3157 = vmatpush2.bf16.msra.mxu0 %v3022
    %3158 = vmatprep.subr.bf16.mxu0 %v3017
    %3159 = vmatpush2.bf16.msra.mxu0 %v3016
    %3160 = vmatprep.subr.bf16.mxu0 %v3011
    %3161 = vmatpush2.bf16.msra.mxu0 %v3010
    %3162 = vmatprep.subr.bf16.mxu0 %v3005
    %3163 = vmatpush2.bf16.msra.mxu0 %v3004
    %3164 = vmatprep.subr.bf16.mxu0 %v2999
    %3165 = vmatpush2.bf16.msra.mxu0 %v2998
    %3166 = vmatprep.subr.bf16.mxu0 %v2993
    %3167 = vmatpush2.bf16.msra.mxu0 %v2992
    %3168 = vmatprep.mubr.bf16.mxu0 %v2559
    %3169 = vmatmul.mubr.bf16.gmra.mxu0 %v2558
    %v3170 = vpop.f32.mrf.mxu0
    %v3171 = vadd.f32 0.0, %v3170
    %v3172 = vpop.f32.mrf.mxu0
    %v3173 = vadd.f32 0.0, %v3172
    %v3174 = vpop.f32.mrf.mxu0
    %v3175 = vpop.f32.mrf.mxu0
    %3176 = vdwg.mxu0
    %3177 = vmatprep.subr.bf16.mxu0 %v2989
    %3178 = vmatpush1.bf16.msra.mxu0 %v2988
    %3179 = vmatprep.subr.bf16.mxu0 %v2983
    %3180 = vmatpush1.bf16.msra.mxu0 %v2982
    %3181 = vmatprep.subr.bf16.mxu0 %v2977
    %3182 = vmatpush1.bf16.msra.mxu0 %v2976
    %3183 = vmatprep.subr.bf16.mxu0 %v2971
    %3184 = vmatpush1.bf16.msra.mxu0 %v2970
    %3185 = vmatprep.subr.bf16.mxu0 %v2965
    %3186 = vmatpush1.bf16.msra.mxu0 %v2964
    %3187 = vmatprep.subr.bf16.mxu0 %v2959
    %3188 = vmatpush1.bf16.msra.mxu0 %v2958
    %3189 = vmatprep.subr.bf16.mxu0 %v2953
    %3190 = vmatpush1.bf16.msra.mxu0 %v2952
    %3191 = vmatprep.subr.bf16.mxu0 %v2947
    %3192 = vmatpush1.bf16.msra.mxu0 %v2946
    %3193 = vmatprep.subr.bf16.mxu0 %v3037
    %3194 = vmatpush2.bf16.msra.mxu0 %v3036
    %3195 = vmatprep.subr.bf16.mxu0 %v3031
    %3196 = vmatpush2.bf16.msra.mxu0 %v3030
    %3197 = vmatprep.subr.bf16.mxu0 %v3025
    %3198 = vmatpush2.bf16.msra.mxu0 %v3024
    %3199 = vmatprep.subr.bf16.mxu0 %v3019
    %3200 = vmatpush2.bf16.msra.mxu0 %v3018
    %3201 = vmatprep.subr.bf16.mxu0 %v3013
    %3202 = vmatpush2.bf16.msra.mxu0 %v3012
    %3203 = vmatprep.subr.bf16.mxu0 %v3007
    %3204 = vmatpush2.bf16.msra.mxu0 %v3006
    %3205 = vmatprep.subr.bf16.mxu0 %v3001
    %3206 = vmatpush2.bf16.msra.mxu0 %v3000
    %3207 = vmatprep.subr.bf16.mxu0 %v2995
    %3208 = vmatpush2.bf16.msra.mxu0 %v2994
    %3209 = vmatprep.mubr.bf16.mxu0 %v2559
    %3210 = vmatmul.mubr.bf16.gmra.mxu0 %v2558
    %v3211 = vpop.f32.mrf.mxu0
    %v3212 = vadd.f32 0.0, %v3211
    %v3213 = vpop.f32.mrf.mxu0
    %v3214 = vadd.f32 0.0, %v3213
    %v3215 = vpop.f32.mrf.mxu0
    %v3216 = vpop.f32.mrf.mxu0
    %3217 = vdwg.mxu0
    %3218 = vmatprep.subr.bf16.mxu0 %v2991
    %3219 = vmatpush1.bf16.msra.mxu0 %v2990
    %3220 = vmatprep.subr.bf16.mxu0 %v2985
    %3221 = vmatpush1.bf16.msra.mxu0 %v2984
    %3222 = vmatprep.subr.bf16.mxu0 %v2979
    %3223 = vmatpush1.bf16.msra.mxu0 %v2978
    %3224 = vmatprep.subr.bf16.mxu0 %v2973
    %3225 = vmatpush1.bf16.msra.mxu0 %v2972
    %3226 = vmatprep.subr.bf16.mxu0 %v2967
    %3227 = vmatpush1.bf16.msra.mxu0 %v2966
    %3228 = vmatprep.subr.bf16.mxu0 %v2961
    %3229 = vmatpush1.bf16.msra.mxu0 %v2960
    %3230 = vmatprep.subr.bf16.mxu0 %v2955
    %3231 = vmatpush1.bf16.msra.mxu0 %v2954
    %3232 = vmatprep.subr.bf16.mxu0 %v2949
    %3233 = vmatpush1.bf16.msra.mxu0 %v2948
    %3234 = vmatprep.subr.bf16.mxu0 %v3039
    %3235 = vmatpush2.bf16.msra.mxu0 %v3038
    %3236 = vmatprep.subr.bf16.mxu0 %v3033
    %3237 = vmatpush2.bf16.msra.mxu0 %v3032
    %3238 = vmatprep.subr.bf16.mxu0 %v3027
    %3239 = vmatpush2.bf16.msra.mxu0 %v3026
    %3240 = vmatprep.subr.bf16.mxu0 %v3021
    %3241 = vmatpush2.bf16.msra.mxu0 %v3020
    %3242 = vmatprep.subr.bf16.mxu0 %v3015
    %3243 = vmatpush2.bf16.msra.mxu0 %v3014
    %3244 = vmatprep.subr.bf16.mxu0 %v3009
    %3245 = vmatpush2.bf16.msra.mxu0 %v3008
    %3246 = vmatprep.subr.bf16.mxu0 %v3003
    %3247 = vmatpush2.bf16.msra.mxu0 %v3002
    %3248 = vmatprep.subr.bf16.mxu0 %v2997
    %3249 = vmatpush2.bf16.msra.mxu0 %v2996
    %3250 = vmatprep.mubr.bf16.mxu0 %v2559
    %3251 = vmatmul.mubr.bf16.gmra.mxu0 %v2558
    %v3252 = vpop.f32.mrf.mxu0
    %v3253 = vadd.f32 0.0, %v3252
    %v3254 = vpop.f32.mrf.mxu0
    %v3255 = vadd.f32 0.0, %v3254
    %v3256 = vpop.f32.mrf.mxu0
    %v3257 = vpop.f32.mrf.mxu0
    %3258 = vdwg.mxu0
    %v3261 = vcombine.low %v3171, %v3173
    %v3263 = vunpack.c.l.s4 1966171168
    %v3264 = vunpack.c.0.s8 %v3263
    %v3265 = vlaneseq
    %v3266 = vshrl.u32 %v3265, 7
    %v3267 = vsub.s32 %v3264, %v3266
    %v3268 = vrot.slane %v3261, %v3267
    %v3270 = vunpack.c.l.s4 1966171168
    %v3271 = vunpack.c.0.s8 %v3270
    %v3272 = vlaneseq
    %v3273 = vshrl.u32 %v3272, 7
    %v3274 = vsub.s32 %v3271, %v3273
    %v3275 = vrot.slane %v3268, %v3274
    %v3277 = vadd.f32 %v2546, %v3275
    %v3278 = vxor.u32 %v3277, 2147483648
    %v3279 = vmul.f32 %v3278, 1.442695
    %v3280 = vpow.pop %v3279
    %v3281 = vadd.f32 %v3280, 1.0
    %v3282 = vrcp.pop %v3281
    %v3283 = vmul.f32 1.0, %v3282
    %v3285 = vrot.slane %v2546, 2
    %v3289 = vcombine.low %v3212, %v3214
    %v3291 = vunpack.c.l.s4 1966171168
    %v3292 = vunpack.c.0.s8 %v3291
    %v3293 = vlaneseq
    %v3294 = vshrl.u32 %v3293, 7
    %v3295 = vsub.s32 %v3292, %v3294
    %v3296 = vrot.slane %v3289, %v3295
    %v3298 = vunpack.c.l.s4 1966171168
    %v3299 = vunpack.c.0.s8 %v3298
    %v3300 = vlaneseq
    %v3301 = vshrl.u32 %v3300, 7
    %v3302 = vsub.s32 %v3299, %v3301
    %v3303 = vrot.slane %v3296, %v3302
    %v3305 = vadd.f32 %v3285, %v3303
    %v3306 = vxor.u32 %v3305, 2147483648
    %v3307 = vmul.f32 %v3306, 1.442695
    %v3308 = vpow.pop %v3307
    %v3309 = vadd.f32 %v3308, 1.0
    %v3310 = vrcp.pop %v3309
    %v3311 = vmul.f32 1.0, %v3310
    %v3312 = vld [vmem:[%s5] sm:$0x3]
    %v3314 = vlaneseq
    %v3315 = vshrl.u32 %v3314, 7
    %v3316 = vsub.s32 0, %v3315
    %v3317 = vrot.slane %v3312, %v3316
    %v3318 = vlaneseq
    %v3319 = vshrl.u32 %v3318, 7
    %v3320 = vsub.s32 1, %v3319
    %v3321 = vrot.slane %v3312, %v3320
    %v3324 = vadd.f32 %v3253, %v3317
    %v3325 = vadd.f32 %v3255, %v3321
    %v3328 = vcombine.low %v3324, %v3325
    %v3330 = vunpack.c.l.s4 1966171168
    %v3331 = vunpack.c.0.s8 %v3330
    %v3332 = vlaneseq
    %v3333 = vshrl.u32 %v3332, 7
    %v3334 = vsub.s32 %v3331, %v3333
    %v3335 = vrot.slane %v3328, %v3334
    %v3337 = vunpack.c.l.s4 1966171168
    %v3338 = vunpack.c.0.s8 %v3337
    %v3339 = vlaneseq
    %v3340 = vshrl.u32 %v3339, 7
    %v3341 = vsub.s32 %v3338, %v3340
    %v3342 = vrot.slane %v3335, %v3341
    %v3344 = vmul.f32 %v3283, %v3342
    %v3345 = vrot.slane %v2546, 4
    %v3347 = vadd.f32 %v3345, %v3344
    %v3348 = vtanh.pop %v3347
    %v3349 = vsub.f32 1.0, %v3311
    %v3350 = vmul.f32 %v3349, %v3348
    %v3351 = vmul.f32 %v3311, %v2539
    %v3352 = vadd.f32 %v3350, %v3351
    %s3353 = scalar_lea.vmem [#allocation12], 2
    %3354 = vst.msk [vmem:[%s3353] ss:$8 sm:$0x3] %vm83, %v3352
    %3355 = vst.msk [vmem:[%s3353] ss:$8 sm:$0x0] %vm83, %v3352
    %s3356 = scalar_lea.vmem [#allocation3], 3
    %v3357 = vld [vmem:[%s3356] ss:$8 sm:$0xf]
    %v3358 = vld [vmem:[%s3356] ss:$8 sm:$0x30]
    %v3359 = vor.u32 %v3357, %v3358
    %v3361 = vlaneseq
    %v3362 = vshrl.u32 %v3361, 7
    %v3363 = vsub.s32 0, %v3362
    %v3364 = vrot.slane %v3352, %v3363
    %v3365 = vlaneseq
    %v3366 = vshrl.u32 %v3365, 7
    %v3367 = vsub.s32 1, %v3366
    %v3368 = vrot.slane %v3352, %v3367
    %v3371 = vpack.c.bf16 %v3364, %v3364
    %v3372 = vpack.c.bf16 %v3368, %v3368
    %v3373 = vld [vmem:[#allocation11] sm:$0xff]
    %v3374 = vld [vmem:[#allocation11 + $0x8] sm:$0xff]
    %v3375 = vld [vmem:[#allocation11 + $0x10] sm:$0xff]
    %v3376 = vld [vmem:[#allocation11 + $0x18] sm:$0xff]
    %v3377 = vld [vmem:[#allocation11 + $0x20] sm:$0xff]
    %v3378 = vld [vmem:[#allocation11 + $0x28] sm:$0xff]
    %v3379 = vld [vmem:[#allocation11 + $0x30] sm:$0xff]
    %v3380 = vld [vmem:[#allocation11 + $0x38] sm:$0xff]
    %v3381 = vld [vmem:[#allocation11 + $0x40] sm:$0xff]
    %v3382 = vld [vmem:[#allocation11 + $0x48] sm:$0xff]
    %v3383 = vld [vmem:[#allocation11 + $0x50] sm:$0xff]
    %v3384 = vld [vmem:[#allocation11 + $0x58] sm:$0xff]
    %v3385 = vld [vmem:[#allocation11 + $0x60] sm:$0xff]
    %v3386 = vld [vmem:[#allocation11 + $0x68] sm:$0xff]
    %v3387 = vld [vmem:[#allocation11 + $0x70] sm:$0xff]
    %v3388 = vld [vmem:[#allocation11 + $0x78] sm:$0xff]
    %v3389 = vld [vmem:[#allocation11 + $0x80] sm:$0xff]
    %v3390 = vld [vmem:[#allocation11 + $0x88] sm:$0xff]
    %v3391 = vld [vmem:[#allocation11 + $0x90] sm:$0xff]
    %v3392 = vld [vmem:[#allocation11 + $0x98] sm:$0xff]
    %v3393 = vld [vmem:[#allocation11 + $0xa0] sm:$0xff]
    %v3394 = vld [vmem:[#allocation11 + $0xa8] sm:$0xff]
    %v3395 = vld [vmem:[#allocation11 + $0xb0] sm:$0xff]
    %v3396 = vld [vmem:[#allocation11 + $0xb8] sm:$0xff]
    %v3397 = vld [vmem:[#allocation11 + $0xc0] sm:$0xff]
    %v3398 = vld [vmem:[#allocation11 + $0xc8] sm:$0xff]
    %v3399 = vld [vmem:[#allocation11 + $0xd0] sm:$0xff]
    %v3400 = vld [vmem:[#allocation11 + $0xd8] sm:$0xff]
    %v3401 = vld [vmem:[#allocation11 + $0xe0] sm:$0xff]
    %v3402 = vld [vmem:[#allocation11 + $0xe8] sm:$0xff]
    %v3403 = vld [vmem:[#allocation11 + $0xf0] sm:$0xff]
    %v3404 = vld [vmem:[#allocation11 + $0xf8] sm:$0xff]
    %v3405 = vld [vmem:[#allocation11 + $0x100] sm:$0xff]
    %v3406 = vld [vmem:[#allocation11 + $0x108] sm:$0xff]
    %v3407 = vld [vmem:[#allocation11 + $0x110] sm:$0xff]
    %v3408 = vld [vmem:[#allocation11 + $0x118] sm:$0xff]
    %v3409 = vld [vmem:[#allocation11 + $0x120] sm:$0xff]
    %v3410 = vld [vmem:[#allocation11 + $0x128] sm:$0xff]
    %v3411 = vld [vmem:[#allocation11 + $0x130] sm:$0xff]
    %v3412 = vld [vmem:[#allocation11 + $0x138] sm:$0xff]
    %v3413 = vld [vmem:[#allocation11 + $0x140] sm:$0xff]
    %v3414 = vld [vmem:[#allocation11 + $0x148] sm:$0xff]
    %v3415 = vld [vmem:[#allocation11 + $0x150] sm:$0xff]
    %v3416 = vld [vmem:[#allocation11 + $0x158] sm:$0xff]
    %v3417 = vld [vmem:[#allocation11 + $0x160] sm:$0xff]
    %v3418 = vld [vmem:[#allocation11 + $0x168] sm:$0xff]
    %v3419 = vld [vmem:[#allocation11 + $0x170] sm:$0xff]
    %v3420 = vld [vmem:[#allocation11 + $0x178] sm:$0xff]
    %v3421 = vld [vmem:[#allocation11 + $0x180] sm:$0xff]
    %v3422 = vld [vmem:[#allocation11 + $0x188] sm:$0xff]
    %v3423 = vld [vmem:[#allocation11 + $0x190] sm:$0xff]
    %v3424 = vld [vmem:[#allocation11 + $0x198] sm:$0xff]
    %v3425 = vld [vmem:[#allocation11 + $0x1a0] sm:$0xff]
    %v3426 = vld [vmem:[#allocation11 + $0x1a8] sm:$0xff]
    %v3427 = vld [vmem:[#allocation11 + $0x1b0] sm:$0xff]
    %v3428 = vld [vmem:[#allocation11 + $0x1b8] sm:$0xff]
    %v3429 = vld [vmem:[#allocation11 + $0x1c0] sm:$0xff]
    %v3430 = vld [vmem:[#allocation11 + $0x1c8] sm:$0xff]
    %v3431 = vld [vmem:[#allocation11 + $0x1d0] sm:$0xff]
    %v3432 = vld [vmem:[#allocation11 + $0x1d8] sm:$0xff]
    %v3433 = vld [vmem:[#allocation11 + $0x1e0] sm:$0xff]
    %v3434 = vld [vmem:[#allocation11 + $0x1e8] sm:$0xff]
    %v3435 = vld [vmem:[#allocation11 + $0x1f0] sm:$0xff]
    %v3436 = vld [vmem:[#allocation11 + $0x1f8] sm:$0xff]
    %v3437 = vld [vmem:[#allocation11 + $0x200] sm:$0xff]
    %v3438 = vld [vmem:[#allocation11 + $0x208] sm:$0xff]
    %v3439 = vld [vmem:[#allocation11 + $0x210] sm:$0xff]
    %v3440 = vld [vmem:[#allocation11 + $0x218] sm:$0xff]
    %v3441 = vld [vmem:[#allocation11 + $0x220] sm:$0xff]
    %v3442 = vld [vmem:[#allocation11 + $0x228] sm:$0xff]
    %v3443 = vld [vmem:[#allocation11 + $0x230] sm:$0xff]
    %v3444 = vld [vmem:[#allocation11 + $0x238] sm:$0xff]
    %v3445 = vld [vmem:[#allocation11 + $0x240] sm:$0xff]
    %v3446 = vld [vmem:[#allocation11 + $0x248] sm:$0xff]
    %v3447 = vld [vmem:[#allocation11 + $0x250] sm:$0xff]
    %v3448 = vld [vmem:[#allocation11 + $0x258] sm:$0xff]
    %v3449 = vld [vmem:[#allocation11 + $0x260] sm:$0xff]
    %v3450 = vld [vmem:[#allocation11 + $0x268] sm:$0xff]
    %v3451 = vld [vmem:[#allocation11 + $0x270] sm:$0xff]
    %v3452 = vld [vmem:[#allocation11 + $0x278] sm:$0xff]
    %v3453 = vld [vmem:[#allocation11 + $0x280] sm:$0xff]
    %v3454 = vld [vmem:[#allocation11 + $0x288] sm:$0xff]
    %v3455 = vld [vmem:[#allocation11 + $0x290] sm:$0xff]
    %v3456 = vld [vmem:[#allocation11 + $0x298] sm:$0xff]
    %v3457 = vld [vmem:[#allocation11 + $0x2a0] sm:$0xff]
    %v3458 = vld [vmem:[#allocation11 + $0x2a8] sm:$0xff]
    %v3459 = vld [vmem:[#allocation11 + $0x2b0] sm:$0xff]
    %v3460 = vld [vmem:[#allocation11 + $0x2b8] sm:$0xff]
    %v3461 = vld [vmem:[#allocation11 + $0x2c0] sm:$0xff]
    %v3462 = vld [vmem:[#allocation11 + $0x2c8] sm:$0xff]
    %v3463 = vld [vmem:[#allocation11 + $0x2d0] sm:$0xff]
    %v3464 = vld [vmem:[#allocation11 + $0x2d8] sm:$0xff]
    %v3465 = vld [vmem:[#allocation11 + $0x2e0] sm:$0xff]
    %v3466 = vld [vmem:[#allocation11 + $0x2e8] sm:$0xff]
    %v3467 = vld [vmem:[#allocation11 + $0x2f0] sm:$0xff]
    %v3468 = vld [vmem:[#allocation11 + $0x2f8] sm:$0xff]
    %v3565 = vunpack.c.l.b16 %v3373
    %v3566 = vunpack.c.h.b16 %v3373
    %v3567 = vunpack.c.l.b16 %v3374
    %v3568 = vunpack.c.h.b16 %v3374
    %v3569 = vunpack.c.l.b16 %v3375
    %v3570 = vunpack.c.h.b16 %v3375
    %v3571 = vunpack.c.l.b16 %v3376
    %v3572 = vunpack.c.h.b16 %v3376
    %v3573 = vunpack.c.l.b16 %v3377
    %v3574 = vunpack.c.h.b16 %v3377
    %v3575 = vunpack.c.l.b16 %v3378
    %v3576 = vunpack.c.h.b16 %v3378
    %v3577 = vunpack.c.l.b16 %v3379
    %v3578 = vunpack.c.h.b16 %v3379
    %v3579 = vunpack.c.l.b16 %v3380
    %v3580 = vunpack.c.h.b16 %v3380
    %v3581 = vunpack.c.l.b16 %v3381
    %v3582 = vunpack.c.h.b16 %v3381
    %v3583 = vunpack.c.l.b16 %v3382
    %v3584 = vunpack.c.h.b16 %v3382
    %v3585 = vunpack.c.l.b16 %v3383
    %v3586 = vunpack.c.h.b16 %v3383
    %v3587 = vunpack.c.l.b16 %v3384
    %v3588 = vunpack.c.h.b16 %v3384
    %v3589 = vunpack.c.l.b16 %v3385
    %v3590 = vunpack.c.h.b16 %v3385
    %v3591 = vunpack.c.l.b16 %v3386
    %v3592 = vunpack.c.h.b16 %v3386
    %v3593 = vunpack.c.l.b16 %v3387
    %v3594 = vunpack.c.h.b16 %v3387
    %v3595 = vunpack.c.l.b16 %v3388
    %v3596 = vunpack.c.h.b16 %v3388
    %v3597 = vunpack.c.l.b16 %v3389
    %v3598 = vunpack.c.h.b16 %v3389
    %v3599 = vunpack.c.l.b16 %v3390
    %v3600 = vunpack.c.h.b16 %v3390
    %v3601 = vunpack.c.l.b16 %v3391
    %v3602 = vunpack.c.h.b16 %v3391
    %v3603 = vunpack.c.l.b16 %v3392
    %v3604 = vunpack.c.h.b16 %v3392
    %v3605 = vunpack.c.l.b16 %v3393
    %v3606 = vunpack.c.h.b16 %v3393
    %v3607 = vunpack.c.l.b16 %v3394
    %v3608 = vunpack.c.h.b16 %v3394
    %v3609 = vunpack.c.l.b16 %v3395
    %v3610 = vunpack.c.h.b16 %v3395
    %v3611 = vunpack.c.l.b16 %v3396
    %v3612 = vunpack.c.h.b16 %v3396
    %v3613 = vunpack.c.l.b16 %v3397
    %v3614 = vunpack.c.h.b16 %v3397
    %v3615 = vunpack.c.l.b16 %v3398
    %v3616 = vunpack.c.h.b16 %v3398
    %v3617 = vunpack.c.l.b16 %v3399
    %v3618 = vunpack.c.h.b16 %v3399
    %v3619 = vunpack.c.l.b16 %v3400
    %v3620 = vunpack.c.h.b16 %v3400
    %v3621 = vunpack.c.l.b16 %v3401
    %v3622 = vunpack.c.h.b16 %v3401
    %v3623 = vunpack.c.l.b16 %v3402
    %v3624 = vunpack.c.h.b16 %v3402
    %v3625 = vunpack.c.l.b16 %v3403
    %v3626 = vunpack.c.h.b16 %v3403
    %v3627 = vunpack.c.l.b16 %v3404
    %v3628 = vunpack.c.h.b16 %v3404
    %v3629 = vunpack.c.l.b16 %v3405
    %v3630 = vunpack.c.h.b16 %v3405
    %v3631 = vunpack.c.l.b16 %v3406
    %v3632 = vunpack.c.h.b16 %v3406
    %v3633 = vunpack.c.l.b16 %v3407
    %v3634 = vunpack.c.h.b16 %v3407
    %v3635 = vunpack.c.l.b16 %v3408
    %v3636 = vunpack.c.h.b16 %v3408
    %v3637 = vunpack.c.l.b16 %v3409
    %v3638 = vunpack.c.h.b16 %v3409
    %v3639 = vunpack.c.l.b16 %v3410
    %v3640 = vunpack.c.h.b16 %v3410
    %v3641 = vunpack.c.l.b16 %v3411
    %v3642 = vunpack.c.h.b16 %v3411
    %v3643 = vunpack.c.l.b16 %v3412
    %v3644 = vunpack.c.h.b16 %v3412
    %v3645 = vunpack.c.l.b16 %v3413
    %v3646 = vunpack.c.h.b16 %v3413
    %v3647 = vunpack.c.l.b16 %v3414
    %v3648 = vunpack.c.h.b16 %v3414
    %v3649 = vunpack.c.l.b16 %v3415
    %v3650 = vunpack.c.h.b16 %v3415
    %v3651 = vunpack.c.l.b16 %v3416
    %v3652 = vunpack.c.h.b16 %v3416
    %v3653 = vunpack.c.l.b16 %v3417
    %v3654 = vunpack.c.h.b16 %v3417
    %v3655 = vunpack.c.l.b16 %v3418
    %v3656 = vunpack.c.h.b16 %v3418
    %v3657 = vunpack.c.l.b16 %v3419
    %v3658 = vunpack.c.h.b16 %v3419
    %v3659 = vunpack.c.l.b16 %v3420
    %v3660 = vunpack.c.h.b16 %v3420
    %v3661 = vunpack.c.l.b16 %v3421
    %v3662 = vunpack.c.h.b16 %v3421
    %v3663 = vunpack.c.l.b16 %v3422
    %v3664 = vunpack.c.h.b16 %v3422
    %v3665 = vunpack.c.l.b16 %v3423
    %v3666 = vunpack.c.h.b16 %v3423
    %v3667 = vunpack.c.l.b16 %v3424
    %v3668 = vunpack.c.h.b16 %v3424
    %v3669 = vunpack.c.l.b16 %v3425
    %v3670 = vunpack.c.h.b16 %v3425
    %v3671 = vunpack.c.l.b16 %v3426
    %v3672 = vunpack.c.h.b16 %v3426
    %v3673 = vunpack.c.l.b16 %v3427
    %v3674 = vunpack.c.h.b16 %v3427
    %v3675 = vunpack.c.l.b16 %v3428
    %v3676 = vunpack.c.h.b16 %v3428
    %v3677 = vunpack.c.l.b16 %v3429
    %v3678 = vunpack.c.h.b16 %v3429
    %v3679 = vunpack.c.l.b16 %v3430
    %v3680 = vunpack.c.h.b16 %v3430
    %v3681 = vunpack.c.l.b16 %v3431
    %v3682 = vunpack.c.h.b16 %v3431
    %v3683 = vunpack.c.l.b16 %v3432
    %v3684 = vunpack.c.h.b16 %v3432
    %v3685 = vunpack.c.l.b16 %v3433
    %v3686 = vunpack.c.h.b16 %v3433
    %v3687 = vunpack.c.l.b16 %v3434
    %v3688 = vunpack.c.h.b16 %v3434
    %v3689 = vunpack.c.l.b16 %v3435
    %v3690 = vunpack.c.h.b16 %v3435
    %v3691 = vunpack.c.l.b16 %v3436
    %v3692 = vunpack.c.h.b16 %v3436
    %v3693 = vunpack.c.l.b16 %v3437
    %v3694 = vunpack.c.h.b16 %v3437
    %v3695 = vunpack.c.l.b16 %v3438
    %v3696 = vunpack.c.h.b16 %v3438
    %v3697 = vunpack.c.l.b16 %v3439
    %v3698 = vunpack.c.h.b16 %v3439
    %v3699 = vunpack.c.l.b16 %v3440
    %v3700 = vunpack.c.h.b16 %v3440
    %v3701 = vunpack.c.l.b16 %v3441
    %v3702 = vunpack.c.h.b16 %v3441
    %v3703 = vunpack.c.l.b16 %v3442
    %v3704 = vunpack.c.h.b16 %v3442
    %v3705 = vunpack.c.l.b16 %v3443
    %v3706 = vunpack.c.h.b16 %v3443
    %v3707 = vunpack.c.l.b16 %v3444
    %v3708 = vunpack.c.h.b16 %v3444
    %v3709 = vunpack.c.l.b16 %v3445
    %v3710 = vunpack.c.h.b16 %v3445
    %v3711 = vunpack.c.l.b16 %v3446
    %v3712 = vunpack.c.h.b16 %v3446
    %v3713 = vunpack.c.l.b16 %v3447
    %v3714 = vunpack.c.h.b16 %v3447
    %v3715 = vunpack.c.l.b16 %v3448
    %v3716 = vunpack.c.h.b16 %v3448
    %v3717 = vunpack.c.l.b16 %v3449
    %v3718 = vunpack.c.h.b16 %v3449
    %v3719 = vunpack.c.l.b16 %v3450
    %v3720 = vunpack.c.h.b16 %v3450
    %v3721 = vunpack.c.l.b16 %v3451
    %v3722 = vunpack.c.h.b16 %v3451
    %v3723 = vunpack.c.l.b16 %v3452
    %v3724 = vunpack.c.h.b16 %v3452
    %v3725 = vunpack.c.l.b16 %v3453
    %v3726 = vunpack.c.h.b16 %v3453
    %v3727 = vunpack.c.l.b16 %v3454
    %v3728 = vunpack.c.h.b16 %v3454
    %v3729 = vunpack.c.l.b16 %v3455
    %v3730 = vunpack.c.h.b16 %v3455
    %v3731 = vunpack.c.l.b16 %v3456
    %v3732 = vunpack.c.h.b16 %v3456
    %v3733 = vunpack.c.l.b16 %v3457
    %v3734 = vunpack.c.h.b16 %v3457
    %v3735 = vunpack.c.l.b16 %v3458
    %v3736 = vunpack.c.h.b16 %v3458
    %v3737 = vunpack.c.l.b16 %v3459
    %v3738 = vunpack.c.h.b16 %v3459
    %v3739 = vunpack.c.l.b16 %v3460
    %v3740 = vunpack.c.h.b16 %v3460
    %v3741 = vunpack.c.l.b16 %v3461
    %v3742 = vunpack.c.h.b16 %v3461
    %v3743 = vunpack.c.l.b16 %v3462
    %v3744 = vunpack.c.h.b16 %v3462
    %v3745 = vunpack.c.l.b16 %v3463
    %v3746 = vunpack.c.h.b16 %v3463
    %v3747 = vunpack.c.l.b16 %v3464
    %v3748 = vunpack.c.h.b16 %v3464
    %v3749 = vunpack.c.l.b16 %v3465
    %v3750 = vunpack.c.h.b16 %v3465
    %v3751 = vunpack.c.l.b16 %v3466
    %v3752 = vunpack.c.h.b16 %v3466
    %v3753 = vunpack.c.l.b16 %v3467
    %v3754 = vunpack.c.h.b16 %v3467
    %v3755 = vunpack.c.l.b16 %v3468
    %v3756 = vunpack.c.h.b16 %v3468
    %v3757 = vpack.c.b16 %v3571, %v3565
    %v3758 = vpack.c.b16 %v3572, %v3566
    %v3759 = vpack.c.b16 %v3573, %v3567
    %v3760 = vpack.c.b16 %v3574, %v3568
    %v3761 = vpack.c.b16 %v3575, %v3569
    %v3762 = vpack.c.b16 %v3576, %v3570
    %v3763 = vpack.c.b16 %v3583, %v3577
    %v3764 = vpack.c.b16 %v3584, %v3578
    %v3765 = vpack.c.b16 %v3585, %v3579
    %v3766 = vpack.c.b16 %v3586, %v3580
    %v3767 = vpack.c.b16 %v3587, %v3581
    %v3768 = vpack.c.b16 %v3588, %v3582
    %v3769 = vpack.c.b16 %v3595, %v3589
    %v3770 = vpack.c.b16 %v3596, %v3590
    %v3771 = vpack.c.b16 %v3597, %v3591
    %v3772 = vpack.c.b16 %v3598, %v3592
    %v3773 = vpack.c.b16 %v3599, %v3593
    %v3774 = vpack.c.b16 %v3600, %v3594
    %v3775 = vpack.c.b16 %v3607, %v3601
    %v3776 = vpack.c.b16 %v3608, %v3602
    %v3777 = vpack.c.b16 %v3609, %v3603
    %v3778 = vpack.c.b16 %v3610, %v3604
    %v3779 = vpack.c.b16 %v3611, %v3605
    %v3780 = vpack.c.b16 %v3612, %v3606
    %v3781 = vpack.c.b16 %v3619, %v3613
    %v3782 = vpack.c.b16 %v3620, %v3614
    %v3783 = vpack.c.b16 %v3621, %v3615
    %v3784 = vpack.c.b16 %v3622, %v3616
    %v3785 = vpack.c.b16 %v3623, %v3617
    %v3786 = vpack.c.b16 %v3624, %v3618
    %v3787 = vpack.c.b16 %v3631, %v3625
    %v3788 = vpack.c.b16 %v3632, %v3626
    %v3789 = vpack.c.b16 %v3633, %v3627
    %v3790 = vpack.c.b16 %v3634, %v3628
    %v3791 = vpack.c.b16 %v3635, %v3629
    %v3792 = vpack.c.b16 %v3636, %v3630
    %v3793 = vpack.c.b16 %v3643, %v3637
    %v3794 = vpack.c.b16 %v3644, %v3638
    %v3795 = vpack.c.b16 %v3645, %v3639
    %v3796 = vpack.c.b16 %v3646, %v3640
    %v3797 = vpack.c.b16 %v3647, %v3641
    %v3798 = vpack.c.b16 %v3648, %v3642
    %v3799 = vpack.c.b16 %v3655, %v3649
    %v3800 = vpack.c.b16 %v3656, %v3650
    %v3801 = vpack.c.b16 %v3657, %v3651
    %v3802 = vpack.c.b16 %v3658, %v3652
    %v3803 = vpack.c.b16 %v3659, %v3653
    %v3804 = vpack.c.b16 %v3660, %v3654
    %v3805 = vpack.c.b16 %v3667, %v3661
    %v3806 = vpack.c.b16 %v3668, %v3662
    %v3807 = vpack.c.b16 %v3669, %v3663
    %v3808 = vpack.c.b16 %v3670, %v3664
    %v3809 = vpack.c.b16 %v3671, %v3665
    %v3810 = vpack.c.b16 %v3672, %v3666
    %v3811 = vpack.c.b16 %v3679, %v3673
    %v3812 = vpack.c.b16 %v3680, %v3674
    %v3813 = vpack.c.b16 %v3681, %v3675
    %v3814 = vpack.c.b16 %v3682, %v3676
    %v3815 = vpack.c.b16 %v3683, %v3677
    %v3816 = vpack.c.b16 %v3684, %v3678
    %v3817 = vpack.c.b16 %v3691, %v3685
    %v3818 = vpack.c.b16 %v3692, %v3686
    %v3819 = vpack.c.b16 %v3693, %v3687
    %v3820 = vpack.c.b16 %v3694, %v3688
    %v3821 = vpack.c.b16 %v3695, %v3689
    %v3822 = vpack.c.b16 %v3696, %v3690
    %v3823 = vpack.c.b16 %v3703, %v3697
    %v3824 = vpack.c.b16 %v3704, %v3698
    %v3825 = vpack.c.b16 %v3705, %v3699
    %v3826 = vpack.c.b16 %v3706, %v3700
    %v3827 = vpack.c.b16 %v3707, %v3701
    %v3828 = vpack.c.b16 %v3708, %v3702
    %v3829 = vpack.c.b16 %v3715, %v3709
    %v3830 = vpack.c.b16 %v3716, %v3710
    %v3831 = vpack.c.b16 %v3717, %v3711
    %v3832 = vpack.c.b16 %v3718, %v3712
    %v3833 = vpack.c.b16 %v3719, %v3713
    %v3834 = vpack.c.b16 %v3720, %v3714
    %v3835 = vpack.c.b16 %v3727, %v3721
    %v3836 = vpack.c.b16 %v3728, %v3722
    %v3837 = vpack.c.b16 %v3729, %v3723
    %v3838 = vpack.c.b16 %v3730, %v3724
    %v3839 = vpack.c.b16 %v3731, %v3725
    %v3840 = vpack.c.b16 %v3732, %v3726
    %v3841 = vpack.c.b16 %v3739, %v3733
    %v3842 = vpack.c.b16 %v3740, %v3734
    %v3843 = vpack.c.b16 %v3741, %v3735
    %v3844 = vpack.c.b16 %v3742, %v3736
    %v3845 = vpack.c.b16 %v3743, %v3737
    %v3846 = vpack.c.b16 %v3744, %v3738
    %v3847 = vpack.c.b16 %v3751, %v3745
    %v3848 = vpack.c.b16 %v3752, %v3746
    %v3849 = vpack.c.b16 %v3753, %v3747
    %v3850 = vpack.c.b16 %v3754, %v3748
    %v3851 = vpack.c.b16 %v3755, %v3749
    %v3852 = vpack.c.b16 %v3756, %v3750
    %3949 = vmatprep.subr.bf16.mxu0 %v3800
    %3950 = vmatpush1.bf16.msra.mxu0 %v3799
    %3951 = vmatprep.subr.bf16.mxu0 %v3794
    %3952 = vmatpush1.bf16.msra.mxu0 %v3793
    %3953 = vmatprep.subr.bf16.mxu0 %v3788
    %3954 = vmatpush1.bf16.msra.mxu0 %v3787
    %3955 = vmatprep.subr.bf16.mxu0 %v3782
    %3956 = vmatpush1.bf16.msra.mxu0 %v3781
    %3957 = vmatprep.subr.bf16.mxu0 %v3776
    %3958 = vmatpush1.bf16.msra.mxu0 %v3775
    %3959 = vmatprep.subr.bf16.mxu0 %v3770
    %3960 = vmatpush1.bf16.msra.mxu0 %v3769
    %3961 = vmatprep.subr.bf16.mxu0 %v3764
    %3962 = vmatpush1.bf16.msra.mxu0 %v3763
    %3963 = vmatprep.subr.bf16.mxu0 %v3758
    %3964 = vmatpush1.bf16.msra.mxu0 %v3757
    %3965 = vmatprep.subr.bf16.mxu0 %v3848
    %3966 = vmatpush2.bf16.msra.mxu0 %v3847
    %3967 = vmatprep.subr.bf16.mxu0 %v3842
    %3968 = vmatpush2.bf16.msra.mxu0 %v3841
    %3969 = vmatprep.subr.bf16.mxu0 %v3836
    %3970 = vmatpush2.bf16.msra.mxu0 %v3835
    %3971 = vmatprep.subr.bf16.mxu0 %v3830
    %3972 = vmatpush2.bf16.msra.mxu0 %v3829
    %3973 = vmatprep.subr.bf16.mxu0 %v3824
    %3974 = vmatpush2.bf16.msra.mxu0 %v3823
    %3975 = vmatprep.subr.bf16.mxu0 %v3818
    %3976 = vmatpush2.bf16.msra.mxu0 %v3817
    %3977 = vmatprep.subr.bf16.mxu0 %v3812
    %3978 = vmatpush2.bf16.msra.mxu0 %v3811
    %3979 = vmatprep.subr.bf16.mxu0 %v3806
    %3980 = vmatpush2.bf16.msra.mxu0 %v3805
    %3981 = vmatprep.mubr.bf16.mxu0 %v3372
    %3982 = vmatmul.mubr.bf16.gmra.mxu0 %v3371
    %v3983 = vpop.f32.mrf.mxu0
    %v3984 = vadd.f32 0.0, %v3983
    %v3985 = vpop.f32.mrf.mxu0
    %v3986 = vadd.f32 0.0, %v3985
    %v3987 = vpop.f32.mrf.mxu0
    %v3988 = vpop.f32.mrf.mxu0
    %3989 = vdwg.mxu0
    %3990 = vmatprep.subr.bf16.mxu0 %v3802
    %3991 = vmatpush1.bf16.msra.mxu0 %v3801
    %3992 = vmatprep.subr.bf16.mxu0 %v3796
    %3993 = vmatpush1.bf16.msra.mxu0 %v3795
    %3994 = vmatprep.subr.bf16.mxu0 %v3790
    %3995 = vmatpush1.bf16.msra.mxu0 %v3789
    %3996 = vmatprep.subr.bf16.mxu0 %v3784
    %3997 = vmatpush1.bf16.msra.mxu0 %v3783
    %3998 = vmatprep.subr.bf16.mxu0 %v3778
    %3999 = vmatpush1.bf16.msra.mxu0 %v3777
    %4000 = vmatprep.subr.bf16.mxu0 %v3772
    %4001 = vmatpush1.bf16.msra.mxu0 %v3771
    %4002 = vmatprep.subr.bf16.mxu0 %v3766
    %4003 = vmatpush1.bf16.msra.mxu0 %v3765
    %4004 = vmatprep.subr.bf16.mxu0 %v3760
    %4005 = vmatpush1.bf16.msra.mxu0 %v3759
    %4006 = vmatprep.subr.bf16.mxu0 %v3850
    %4007 = vmatpush2.bf16.msra.mxu0 %v3849
    %4008 = vmatprep.subr.bf16.mxu0 %v3844
    %4009 = vmatpush2.bf16.msra.mxu0 %v3843
    %4010 = vmatprep.subr.bf16.mxu0 %v3838
    %4011 = vmatpush2.bf16.msra.mxu0 %v3837
    %4012 = vmatprep.subr.bf16.mxu0 %v3832
    %4013 = vmatpush2.bf16.msra.mxu0 %v3831
    %4014 = vmatprep.subr.bf16.mxu0 %v3826
    %4015 = vmatpush2.bf16.msra.mxu0 %v3825
    %4016 = vmatprep.subr.bf16.mxu0 %v3820
    %4017 = vmatpush2.bf16.msra.mxu0 %v3819
    %4018 = vmatprep.subr.bf16.mxu0 %v3814
    %4019 = vmatpush2.bf16.msra.mxu0 %v3813
    %4020 = vmatprep.subr.bf16.mxu0 %v3808
    %4021 = vmatpush2.bf16.msra.mxu0 %v3807
    %4022 = vmatprep.mubr.bf16.mxu0 %v3372
    %4023 = vmatmul.mubr.bf16.gmra.mxu0 %v3371
    %v4024 = vpop.f32.mrf.mxu0
    %v4025 = vadd.f32 0.0, %v4024
    %v4026 = vpop.f32.mrf.mxu0
    %v4027 = vadd.f32 0.0, %v4026
    %v4028 = vpop.f32.mrf.mxu0
    %v4029 = vpop.f32.mrf.mxu0
    %4030 = vdwg.mxu0
    %4031 = vmatprep.subr.bf16.mxu0 %v3804
    %4032 = vmatpush1.bf16.msra.mxu0 %v3803
    %4033 = vmatprep.subr.bf16.mxu0 %v3798
    %4034 = vmatpush1.bf16.msra.mxu0 %v3797
    %4035 = vmatprep.subr.bf16.mxu0 %v3792
    %4036 = vmatpush1.bf16.msra.mxu0 %v3791
    %4037 = vmatprep.subr.bf16.mxu0 %v3786
    %4038 = vmatpush1.bf16.msra.mxu0 %v3785
    %4039 = vmatprep.subr.bf16.mxu0 %v3780
    %4040 = vmatpush1.bf16.msra.mxu0 %v3779
    %4041 = vmatprep.subr.bf16.mxu0 %v3774
    %4042 = vmatpush1.bf16.msra.mxu0 %v3773
    %4043 = vmatprep.subr.bf16.mxu0 %v3768
    %4044 = vmatpush1.bf16.msra.mxu0 %v3767
    %4045 = vmatprep.subr.bf16.mxu0 %v3762
    %4046 = vmatpush1.bf16.msra.mxu0 %v3761
    %4047 = vmatprep.subr.bf16.mxu0 %v3852
    %4048 = vmatpush2.bf16.msra.mxu0 %v3851
    %4049 = vmatprep.subr.bf16.mxu0 %v3846
    %4050 = vmatpush2.bf16.msra.mxu0 %v3845
    %4051 = vmatprep.subr.bf16.mxu0 %v3840
    %4052 = vmatpush2.bf16.msra.mxu0 %v3839
    %4053 = vmatprep.subr.bf16.mxu0 %v3834
    %4054 = vmatpush2.bf16.msra.mxu0 %v3833
    %4055 = vmatprep.subr.bf16.mxu0 %v3828
    %4056 = vmatpush2.bf16.msra.mxu0 %v3827
    %4057 = vmatprep.subr.bf16.mxu0 %v3822
    %4058 = vmatpush2.bf16.msra.mxu0 %v3821
    %4059 = vmatprep.subr.bf16.mxu0 %v3816
    %4060 = vmatpush2.bf16.msra.mxu0 %v3815
    %4061 = vmatprep.subr.bf16.mxu0 %v3810
    %4062 = vmatpush2.bf16.msra.mxu0 %v3809
    %4063 = vmatprep.mubr.bf16.mxu0 %v3372
    %4064 = vmatmul.mubr.bf16.gmra.mxu0 %v3371
    %v4065 = vpop.f32.mrf.mxu0
    %v4066 = vadd.f32 0.0, %v4065
    %v4067 = vpop.f32.mrf.mxu0
    %v4068 = vadd.f32 0.0, %v4067
    %v4069 = vpop.f32.mrf.mxu0
    %v4070 = vpop.f32.mrf.mxu0
    %4071 = vdwg.mxu0
    %v4074 = vcombine.low %v3984, %v3986
    %v4076 = vunpack.c.l.s4 1966171168
    %v4077 = vunpack.c.0.s8 %v4076
    %v4078 = vlaneseq
    %v4079 = vshrl.u32 %v4078, 7
    %v4080 = vsub.s32 %v4077, %v4079
    %v4081 = vrot.slane %v4074, %v4080
    %v4083 = vunpack.c.l.s4 1966171168
    %v4084 = vunpack.c.0.s8 %v4083
    %v4085 = vlaneseq
    %v4086 = vshrl.u32 %v4085, 7
    %v4087 = vsub.s32 %v4084, %v4086
    %v4088 = vrot.slane %v4081, %v4087
    %v4090 = vadd.f32 %v3359, %v4088
    %v4091 = vxor.u32 %v4090, 2147483648
    %v4092 = vmul.f32 %v4091, 1.442695
    %v4093 = vpow.pop %v4092
    %v4094 = vadd.f32 %v4093, 1.0
    %v4095 = vrcp.pop %v4094
    %v4096 = vmul.f32 1.0, %v4095
    %v4098 = vrot.slane %v3359, 2
    %v4102 = vcombine.low %v4025, %v4027
    %v4104 = vunpack.c.l.s4 1966171168
    %v4105 = vunpack.c.0.s8 %v4104
    %v4106 = vlaneseq
    %v4107 = vshrl.u32 %v4106, 7
    %v4108 = vsub.s32 %v4105, %v4107
    %v4109 = vrot.slane %v4102, %v4108
    %v4111 = vunpack.c.l.s4 1966171168
    %v4112 = vunpack.c.0.s8 %v4111
    %v4113 = vlaneseq
    %v4114 = vshrl.u32 %v4113, 7
    %v4115 = vsub.s32 %v4112, %v4114
    %v4116 = vrot.slane %v4109, %v4115
    %v4118 = vadd.f32 %v4098, %v4116
    %v4119 = vxor.u32 %v4118, 2147483648
    %v4120 = vmul.f32 %v4119, 1.442695
    %v4121 = vpow.pop %v4120
    %v4122 = vadd.f32 %v4121, 1.0
    %v4123 = vrcp.pop %v4122
    %v4124 = vmul.f32 1.0, %v4123
    %v4125 = vld [vmem:[%s5] sm:$0x3]
    %v4127 = vlaneseq
    %v4128 = vshrl.u32 %v4127, 7
    %v4129 = vsub.s32 0, %v4128
    %v4130 = vrot.slane %v4125, %v4129
    %v4131 = vlaneseq
    %v4132 = vshrl.u32 %v4131, 7
    %v4133 = vsub.s32 1, %v4132
    %v4134 = vrot.slane %v4125, %v4133
    %v4137 = vadd.f32 %v4066, %v4130
    %v4138 = vadd.f32 %v4068, %v4134
    %v4141 = vcombine.low %v4137, %v4138
    %v4143 = vunpack.c.l.s4 1966171168
    %v4144 = vunpack.c.0.s8 %v4143
    %v4145 = vlaneseq
    %v4146 = vshrl.u32 %v4145, 7
    %v4147 = vsub.s32 %v4144, %v4146
    %v4148 = vrot.slane %v4141, %v4147
    %v4150 = vunpack.c.l.s4 1966171168
    %v4151 = vunpack.c.0.s8 %v4150
    %v4152 = vlaneseq
    %v4153 = vshrl.u32 %v4152, 7
    %v4154 = vsub.s32 %v4151, %v4153
    %v4155 = vrot.slane %v4148, %v4154
    %v4157 = vmul.f32 %v4096, %v4155
    %v4158 = vrot.slane %v3359, 4
    %v4160 = vadd.f32 %v4158, %v4157
    %v4161 = vtanh.pop %v4160
    %v4162 = vsub.f32 1.0, %v4124
    %v4163 = vmul.f32 %v4162, %v4161
    %v4164 = vmul.f32 %v4124, %v3352
    %v4165 = vadd.f32 %v4163, %v4164
    %s4166 = scalar_lea.vmem [#allocation12], 3
    %4167 = vst.msk [vmem:[%s4166] ss:$8 sm:$0x3] %vm83, %v4165
    %4168 = vst.msk [vmem:[%s4166] ss:$8 sm:$0x0] %vm83, %v4165
    %s4169 = scalar_lea.vmem [#allocation3], 4
    %v4170 = vld [vmem:[%s4169] ss:$8 sm:$0xf]
    %v4171 = vld [vmem:[%s4169] ss:$8 sm:$0x30]
    %v4172 = vor.u32 %v4170, %v4171
    %v4174 = vlaneseq
    %v4175 = vshrl.u32 %v4174, 7
    %v4176 = vsub.s32 0, %v4175
    %v4177 = vrot.slane %v4165, %v4176
    %v4178 = vlaneseq
    %v4179 = vshrl.u32 %v4178, 7
    %v4180 = vsub.s32 1, %v4179
    %v4181 = vrot.slane %v4165, %v4180
    %v4184 = vpack.c.bf16 %v4177, %v4177
    %v4185 = vpack.c.bf16 %v4181, %v4181
    %v4186 = vld [vmem:[#allocation11] sm:$0xff]
    %v4187 = vld [vmem:[#allocation11 + $0x8] sm:$0xff]
    %v4188 = vld [vmem:[#allocation11 + $0x10] sm:$0xff]
    %v4189 = vld [vmem:[#allocation11 + $0x18] sm:$0xff]
    %v4190 = vld [vmem:[#allocation11 + $0x20] sm:$0xff]
    %v4191 = vld [vmem:[#allocation11 + $0x28] sm:$0xff]
    %v4192 = vld [vmem:[#allocation11 + $0x30] sm:$0xff]
    %v4193 = vld [vmem:[#allocation11 + $0x38] sm:$0xff]
    %v4194 = vld [vmem:[#allocation11 + $0x40] sm:$0xff]
    %v4195 = vld [vmem:[#allocation11 + $0x48] sm:$0xff]
    %v4196 = vld [vmem:[#allocation11 + $0x50] sm:$0xff]
    %v4197 = vld [vmem:[#allocation11 + $0x58] sm:$0xff]
    %v4198 = vld [vmem:[#allocation11 + $0x60] sm:$0xff]
    %v4199 = vld [vmem:[#allocation11 + $0x68] sm:$0xff]
    %v4200 = vld [vmem:[#allocation11 + $0x70] sm:$0xff]
    %v4201 = vld [vmem:[#allocation11 + $0x78] sm:$0xff]
    %v4202 = vld [vmem:[#allocation11 + $0x80] sm:$0xff]
    %v4203 = vld [vmem:[#allocation11 + $0x88] sm:$0xff]
    %v4204 = vld [vmem:[#allocation11 + $0x90] sm:$0xff]
    %v4205 = vld [vmem:[#allocation11 + $0x98] sm:$0xff]
    %v4206 = vld [vmem:[#allocation11 + $0xa0] sm:$0xff]
    %v4207 = vld [vmem:[#allocation11 + $0xa8] sm:$0xff]
    %v4208 = vld [vmem:[#allocation11 + $0xb0] sm:$0xff]
    %v4209 = vld [vmem:[#allocation11 + $0xb8] sm:$0xff]
    %v4210 = vld [vmem:[#allocation11 + $0xc0] sm:$0xff]
    %v4211 = vld [vmem:[#allocation11 + $0xc8] sm:$0xff]
    %v4212 = vld [vmem:[#allocation11 + $0xd0] sm:$0xff]
    %v4213 = vld [vmem:[#allocation11 + $0xd8] sm:$0xff]
    %v4214 = vld [vmem:[#allocation11 + $0xe0] sm:$0xff]
    %v4215 = vld [vmem:[#allocation11 + $0xe8] sm:$0xff]
    %v4216 = vld [vmem:[#allocation11 + $0xf0] sm:$0xff]
    %v4217 = vld [vmem:[#allocation11 + $0xf8] sm:$0xff]
    %v4218 = vld [vmem:[#allocation11 + $0x100] sm:$0xff]
    %v4219 = vld [vmem:[#allocation11 + $0x108] sm:$0xff]
    %v4220 = vld [vmem:[#allocation11 + $0x110] sm:$0xff]
    %v4221 = vld [vmem:[#allocation11 + $0x118] sm:$0xff]
    %v4222 = vld [vmem:[#allocation11 + $0x120] sm:$0xff]
    %v4223 = vld [vmem:[#allocation11 + $0x128] sm:$0xff]
    %v4224 = vld [vmem:[#allocation11 + $0x130] sm:$0xff]
    %v4225 = vld [vmem:[#allocation11 + $0x138] sm:$0xff]
    %v4226 = vld [vmem:[#allocation11 + $0x140] sm:$0xff]
    %v4227 = vld [vmem:[#allocation11 + $0x148] sm:$0xff]
    %v4228 = vld [vmem:[#allocation11 + $0x150] sm:$0xff]
    %v4229 = vld [vmem:[#allocation11 + $0x158] sm:$0xff]
    %v4230 = vld [vmem:[#allocation11 + $0x160] sm:$0xff]
    %v4231 = vld [vmem:[#allocation11 + $0x168] sm:$0xff]
    %v4232 = vld [vmem:[#allocation11 + $0x170] sm:$0xff]
    %v4233 = vld [vmem:[#allocation11 + $0x178] sm:$0xff]
    %v4234 = vld [vmem:[#allocation11 + $0x180] sm:$0xff]
    %v4235 = vld [vmem:[#allocation11 + $0x188] sm:$0xff]
    %v4236 = vld [vmem:[#allocation11 + $0x190] sm:$0xff]
    %v4237 = vld [vmem:[#allocation11 + $0x198] sm:$0xff]
    %v4238 = vld [vmem:[#allocation11 + $0x1a0] sm:$0xff]
    %v4239 = vld [vmem:[#allocation11 + $0x1a8] sm:$0xff]
    %v4240 = vld [vmem:[#allocation11 + $0x1b0] sm:$0xff]
    %v4241 = vld [vmem:[#allocation11 + $0x1b8] sm:$0xff]
    %v4242 = vld [vmem:[#allocation11 + $0x1c0] sm:$0xff]
    %v4243 = vld [vmem:[#allocation11 + $0x1c8] sm:$0xff]
    %v4244 = vld [vmem:[#allocation11 + $0x1d0] sm:$0xff]
    %v4245 = vld [vmem:[#allocation11 + $0x1d8] sm:$0xff]
    %v4246 = vld [vmem:[#allocation11 + $0x1e0] sm:$0xff]
    %v4247 = vld [vmem:[#allocation11 + $0x1e8] sm:$0xff]
    %v4248 = vld [vmem:[#allocation11 + $0x1f0] sm:$0xff]
    %v4249 = vld [vmem:[#allocation11 + $0x1f8] sm:$0xff]
    %v4250 = vld [vmem:[#allocation11 + $0x200] sm:$0xff]
    %v4251 = vld [vmem:[#allocation11 + $0x208] sm:$0xff]
    %v4252 = vld [vmem:[#allocation11 + $0x210] sm:$0xff]
    %v4253 = vld [vmem:[#allocation11 + $0x218] sm:$0xff]
    %v4254 = vld [vmem:[#allocation11 + $0x220] sm:$0xff]
    %v4255 = vld [vmem:[#allocation11 + $0x228] sm:$0xff]
    %v4256 = vld [vmem:[#allocation11 + $0x230] sm:$0xff]
    %v4257 = vld [vmem:[#allocation11 + $0x238] sm:$0xff]
    %v4258 = vld [vmem:[#allocation11 + $0x240] sm:$0xff]
    %v4259 = vld [vmem:[#allocation11 + $0x248] sm:$0xff]
    %v4260 = vld [vmem:[#allocation11 + $0x250] sm:$0xff]
    %v4261 = vld [vmem:[#allocation11 + $0x258] sm:$0xff]
    %v4262 = vld [vmem:[#allocation11 + $0x260] sm:$0xff]
    %v4263 = vld [vmem:[#allocation11 + $0x268] sm:$0xff]
    %v4264 = vld [vmem:[#allocation11 + $0x270] sm:$0xff]
    %v4265 = vld [vmem:[#allocation11 + $0x278] sm:$0xff]
    %v4266 = vld [vmem:[#allocation11 + $0x280] sm:$0xff]
    %v4267 = vld [vmem:[#allocation11 + $0x288] sm:$0xff]
    %v4268 = vld [vmem:[#allocation11 + $0x290] sm:$0xff]
    %v4269 = vld [vmem:[#allocation11 + $0x298] sm:$0xff]
    %v4270 = vld [vmem:[#allocation11 + $0x2a0] sm:$0xff]
    %v4271 = vld [vmem:[#allocation11 + $0x2a8] sm:$0xff]
    %v4272 = vld [vmem:[#allocation11 + $0x2b0] sm:$0xff]
    %v4273 = vld [vmem:[#allocation11 + $0x2b8] sm:$0xff]
    %v4274 = vld [vmem:[#allocation11 + $0x2c0] sm:$0xff]
    %v4275 = vld [vmem:[#allocation11 + $0x2c8] sm:$0xff]
    %v4276 = vld [vmem:[#allocation11 + $0x2d0] sm:$0xff]
    %v4277 = vld [vmem:[#allocation11 + $0x2d8] sm:$0xff]
    %v4278 = vld [vmem:[#allocation11 + $0x2e0] sm:$0xff]
    %v4279 = vld [vmem:[#allocation11 + $0x2e8] sm:$0xff]
    %v4280 = vld [vmem:[#allocation11 + $0x2f0] sm:$0xff]
    %v4281 = vld [vmem:[#allocation11 + $0x2f8] sm:$0xff]
    %v4378 = vunpack.c.l.b16 %v4186
    %v4379 = vunpack.c.h.b16 %v4186
    %v4380 = vunpack.c.l.b16 %v4187
    %v4381 = vunpack.c.h.b16 %v4187
    %v4382 = vunpack.c.l.b16 %v4188
    %v4383 = vunpack.c.h.b16 %v4188
    %v4384 = vunpack.c.l.b16 %v4189
    %v4385 = vunpack.c.h.b16 %v4189
    %v4386 = vunpack.c.l.b16 %v4190
    %v4387 = vunpack.c.h.b16 %v4190
    %v4388 = vunpack.c.l.b16 %v4191
    %v4389 = vunpack.c.h.b16 %v4191
    %v4390 = vunpack.c.l.b16 %v4192
    %v4391 = vunpack.c.h.b16 %v4192
    %v4392 = vunpack.c.l.b16 %v4193
    %v4393 = vunpack.c.h.b16 %v4193
    %v4394 = vunpack.c.l.b16 %v4194
    %v4395 = vunpack.c.h.b16 %v4194
    %v4396 = vunpack.c.l.b16 %v4195
    %v4397 = vunpack.c.h.b16 %v4195
    %v4398 = vunpack.c.l.b16 %v4196
    %v4399 = vunpack.c.h.b16 %v4196
    %v4400 = vunpack.c.l.b16 %v4197
    %v4401 = vunpack.c.h.b16 %v4197
    %v4402 = vunpack.c.l.b16 %v4198
    %v4403 = vunpack.c.h.b16 %v4198
    %v4404 = vunpack.c.l.b16 %v4199
    %v4405 = vunpack.c.h.b16 %v4199
    %v4406 = vunpack.c.l.b16 %v4200
    %v4407 = vunpack.c.h.b16 %v4200
    %v4408 = vunpack.c.l.b16 %v4201
    %v4409 = vunpack.c.h.b16 %v4201
    %v4410 = vunpack.c.l.b16 %v4202
    %v4411 = vunpack.c.h.b16 %v4202
    %v4412 = vunpack.c.l.b16 %v4203
    %v4413 = vunpack.c.h.b16 %v4203
    %v4414 = vunpack.c.l.b16 %v4204
    %v4415 = vunpack.c.h.b16 %v4204
    %v4416 = vunpack.c.l.b16 %v4205
    %v4417 = vunpack.c.h.b16 %v4205
    %v4418 = vunpack.c.l.b16 %v4206
    %v4419 = vunpack.c.h.b16 %v4206
    %v4420 = vunpack.c.l.b16 %v4207
    %v4421 = vunpack.c.h.b16 %v4207
    %v4422 = vunpack.c.l.b16 %v4208
    %v4423 = vunpack.c.h.b16 %v4208
    %v4424 = vunpack.c.l.b16 %v4209
    %v4425 = vunpack.c.h.b16 %v4209
    %v4426 = vunpack.c.l.b16 %v4210
    %v4427 = vunpack.c.h.b16 %v4210
    %v4428 = vunpack.c.l.b16 %v4211
    %v4429 = vunpack.c.h.b16 %v4211
    %v4430 = vunpack.c.l.b16 %v4212
    %v4431 = vunpack.c.h.b16 %v4212
    %v4432 = vunpack.c.l.b16 %v4213
    %v4433 = vunpack.c.h.b16 %v4213
    %v4434 = vunpack.c.l.b16 %v4214
    %v4435 = vunpack.c.h.b16 %v4214
    %v4436 = vunpack.c.l.b16 %v4215
    %v4437 = vunpack.c.h.b16 %v4215
    %v4438 = vunpack.c.l.b16 %v4216
    %v4439 = vunpack.c.h.b16 %v4216
    %v4440 = vunpack.c.l.b16 %v4217
    %v4441 = vunpack.c.h.b16 %v4217
    %v4442 = vunpack.c.l.b16 %v4218
    %v4443 = vunpack.c.h.b16 %v4218
    %v4444 = vunpack.c.l.b16 %v4219
    %v4445 = vunpack.c.h.b16 %v4219
    %v4446 = vunpack.c.l.b16 %v4220
    %v4447 = vunpack.c.h.b16 %v4220
    %v4448 = vunpack.c.l.b16 %v4221
    %v4449 = vunpack.c.h.b16 %v4221
    %v4450 = vunpack.c.l.b16 %v4222
    %v4451 = vunpack.c.h.b16 %v4222
    %v4452 = vunpack.c.l.b16 %v4223
    %v4453 = vunpack.c.h.b16 %v4223
    %v4454 = vunpack.c.l.b16 %v4224
    %v4455 = vunpack.c.h.b16 %v4224
    %v4456 = vunpack.c.l.b16 %v4225
    %v4457 = vunpack.c.h.b16 %v4225
    %v4458 = vunpack.c.l.b16 %v4226
    %v4459 = vunpack.c.h.b16 %v4226
    %v4460 = vunpack.c.l.b16 %v4227
    %v4461 = vunpack.c.h.b16 %v4227
    %v4462 = vunpack.c.l.b16 %v4228
    %v4463 = vunpack.c.h.b16 %v4228
    %v4464 = vunpack.c.l.b16 %v4229
    %v4465 = vunpack.c.h.b16 %v4229
    %v4466 = vunpack.c.l.b16 %v4230
    %v4467 = vunpack.c.h.b16 %v4230
    %v4468 = vunpack.c.l.b16 %v4231
    %v4469 = vunpack.c.h.b16 %v4231
    %v4470 = vunpack.c.l.b16 %v4232
    %v4471 = vunpack.c.h.b16 %v4232
    %v4472 = vunpack.c.l.b16 %v4233
    %v4473 = vunpack.c.h.b16 %v4233
    %v4474 = vunpack.c.l.b16 %v4234
    %v4475 = vunpack.c.h.b16 %v4234
    %v4476 = vunpack.c.l.b16 %v4235
    %v4477 = vunpack.c.h.b16 %v4235
    %v4478 = vunpack.c.l.b16 %v4236
    %v4479 = vunpack.c.h.b16 %v4236
    %v4480 = vunpack.c.l.b16 %v4237
    %v4481 = vunpack.c.h.b16 %v4237
    %v4482 = vunpack.c.l.b16 %v4238
    %v4483 = vunpack.c.h.b16 %v4238
    %v4484 = vunpack.c.l.b16 %v4239
    %v4485 = vunpack.c.h.b16 %v4239
    %v4486 = vunpack.c.l.b16 %v4240
    %v4487 = vunpack.c.h.b16 %v4240
    %v4488 = vunpack.c.l.b16 %v4241
    %v4489 = vunpack.c.h.b16 %v4241
    %v4490 = vunpack.c.l.b16 %v4242
    %v4491 = vunpack.c.h.b16 %v4242
    %v4492 = vunpack.c.l.b16 %v4243
    %v4493 = vunpack.c.h.b16 %v4243
    %v4494 = vunpack.c.l.b16 %v4244
    %v4495 = vunpack.c.h.b16 %v4244
    %v4496 = vunpack.c.l.b16 %v4245
    %v4497 = vunpack.c.h.b16 %v4245
    %v4498 = vunpack.c.l.b16 %v4246
    %v4499 = vunpack.c.h.b16 %v4246
    %v4500 = vunpack.c.l.b16 %v4247
    %v4501 = vunpack.c.h.b16 %v4247
    %v4502 = vunpack.c.l.b16 %v4248
    %v4503 = vunpack.c.h.b16 %v4248
    %v4504 = vunpack.c.l.b16 %v4249
    %v4505 = vunpack.c.h.b16 %v4249
    %v4506 = vunpack.c.l.b16 %v4250
    %v4507 = vunpack.c.h.b16 %v4250
    %v4508 = vunpack.c.l.b16 %v4251
    %v4509 = vunpack.c.h.b16 %v4251
    %v4510 = vunpack.c.l.b16 %v4252
    %v4511 = vunpack.c.h.b16 %v4252
    %v4512 = vunpack.c.l.b16 %v4253
    %v4513 = vunpack.c.h.b16 %v4253
    %v4514 = vunpack.c.l.b16 %v4254
    %v4515 = vunpack.c.h.b16 %v4254
    %v4516 = vunpack.c.l.b16 %v4255
    %v4517 = vunpack.c.h.b16 %v4255
    %v4518 = vunpack.c.l.b16 %v4256
    %v4519 = vunpack.c.h.b16 %v4256
    %v4520 = vunpack.c.l.b16 %v4257
    %v4521 = vunpack.c.h.b16 %v4257
    %v4522 = vunpack.c.l.b16 %v4258
    %v4523 = vunpack.c.h.b16 %v4258
    %v4524 = vunpack.c.l.b16 %v4259
    %v4525 = vunpack.c.h.b16 %v4259
    %v4526 = vunpack.c.l.b16 %v4260
    %v4527 = vunpack.c.h.b16 %v4260
    %v4528 = vunpack.c.l.b16 %v4261
    %v4529 = vunpack.c.h.b16 %v4261
    %v4530 = vunpack.c.l.b16 %v4262
    %v4531 = vunpack.c.h.b16 %v4262
    %v4532 = vunpack.c.l.b16 %v4263
    %v4533 = vunpack.c.h.b16 %v4263
    %v4534 = vunpack.c.l.b16 %v4264
    %v4535 = vunpack.c.h.b16 %v4264
    %v4536 = vunpack.c.l.b16 %v4265
    %v4537 = vunpack.c.h.b16 %v4265
    %v4538 = vunpack.c.l.b16 %v4266
    %v4539 = vunpack.c.h.b16 %v4266
    %v4540 = vunpack.c.l.b16 %v4267
    %v4541 = vunpack.c.h.b16 %v4267
    %v4542 = vunpack.c.l.b16 %v4268
    %v4543 = vunpack.c.h.b16 %v4268
    %v4544 = vunpack.c.l.b16 %v4269
    %v4545 = vunpack.c.h.b16 %v4269
    %v4546 = vunpack.c.l.b16 %v4270
    %v4547 = vunpack.c.h.b16 %v4270
    %v4548 = vunpack.c.l.b16 %v4271
    %v4549 = vunpack.c.h.b16 %v4271
    %v4550 = vunpack.c.l.b16 %v4272
    %v4551 = vunpack.c.h.b16 %v4272
    %v4552 = vunpack.c.l.b16 %v4273
    %v4553 = vunpack.c.h.b16 %v4273
    %v4554 = vunpack.c.l.b16 %v4274
    %v4555 = vunpack.c.h.b16 %v4274
    %v4556 = vunpack.c.l.b16 %v4275
    %v4557 = vunpack.c.h.b16 %v4275
    %v4558 = vunpack.c.l.b16 %v4276
    %v4559 = vunpack.c.h.b16 %v4276
    %v4560 = vunpack.c.l.b16 %v4277
    %v4561 = vunpack.c.h.b16 %v4277
    %v4562 = vunpack.c.l.b16 %v4278
    %v4563 = vunpack.c.h.b16 %v4278
    %v4564 = vunpack.c.l.b16 %v4279
    %v4565 = vunpack.c.h.b16 %v4279
    %v4566 = vunpack.c.l.b16 %v4280
    %v4567 = vunpack.c.h.b16 %v4280
    %v4568 = vunpack.c.l.b16 %v4281
    %v4569 = vunpack.c.h.b16 %v4281
    %v4570 = vpack.c.b16 %v4384, %v4378
    %v4571 = vpack.c.b16 %v4385, %v4379
    %v4572 = vpack.c.b16 %v4386, %v4380
    %v4573 = vpack.c.b16 %v4387, %v4381
    %v4574 = vpack.c.b16 %v4388, %v4382
    %v4575 = vpack.c.b16 %v4389, %v4383
    %v4576 = vpack.c.b16 %v4396, %v4390
    %v4577 = vpack.c.b16 %v4397, %v4391
    %v4578 = vpack.c.b16 %v4398, %v4392
    %v4579 = vpack.c.b16 %v4399, %v4393
    %v4580 = vpack.c.b16 %v4400, %v4394
    %v4581 = vpack.c.b16 %v4401, %v4395
    %v4582 = vpack.c.b16 %v4408, %v4402
    %v4583 = vpack.c.b16 %v4409, %v4403
    %v4584 = vpack.c.b16 %v4410, %v4404
    %v4585 = vpack.c.b16 %v4411, %v4405
    %v4586 = vpack.c.b16 %v4412, %v4406
    %v4587 = vpack.c.b16 %v4413, %v4407
    %v4588 = vpack.c.b16 %v4420, %v4414
    %v4589 = vpack.c.b16 %v4421, %v4415
    %v4590 = vpack.c.b16 %v4422, %v4416
    %v4591 = vpack.c.b16 %v4423, %v4417
    %v4592 = vpack.c.b16 %v4424, %v4418
    %v4593 = vpack.c.b16 %v4425, %v4419
    %v4594 = vpack.c.b16 %v4432, %v4426
    %v4595 = vpack.c.b16 %v4433, %v4427
    %v4596 = vpack.c.b16 %v4434, %v4428
    %v4597 = vpack.c.b16 %v4435, %v4429
    %v4598 = vpack.c.b16 %v4436, %v4430
    %v4599 = vpack.c.b16 %v4437, %v4431
    %v4600 = vpack.c.b16 %v4444, %v4438
    %v4601 = vpack.c.b16 %v4445, %v4439
    %v4602 = vpack.c.b16 %v4446, %v4440
    %v4603 = vpack.c.b16 %v4447, %v4441
    %v4604 = vpack.c.b16 %v4448, %v4442
    %v4605 = vpack.c.b16 %v4449, %v4443
    %v4606 = vpack.c.b16 %v4456, %v4450
    %v4607 = vpack.c.b16 %v4457, %v4451
    %v4608 = vpack.c.b16 %v4458, %v4452
    %v4609 = vpack.c.b16 %v4459, %v4453
    %v4610 = vpack.c.b16 %v4460, %v4454
    %v4611 = vpack.c.b16 %v4461, %v4455
    %v4612 = vpack.c.b16 %v4468, %v4462
    %v4613 = vpack.c.b16 %v4469, %v4463
    %v4614 = vpack.c.b16 %v4470, %v4464
    %v4615 = vpack.c.b16 %v4471, %v4465
    %v4616 = vpack.c.b16 %v4472, %v4466
    %v4617 = vpack.c.b16 %v4473, %v4467
    %v4618 = vpack.c.b16 %v4480, %v4474
    %v4619 = vpack.c.b16 %v4481, %v4475
    %v4620 = vpack.c.b16 %v4482, %v4476
    %v4621 = vpack.c.b16 %v4483, %v4477
    %v4622 = vpack.c.b16 %v4484, %v4478
    %v4623 = vpack.c.b16 %v4485, %v4479
    %v4624 = vpack.c.b16 %v4492, %v4486
    %v4625 = vpack.c.b16 %v4493, %v4487
    %v4626 = vpack.c.b16 %v4494, %v4488
    %v4627 = vpack.c.b16 %v4495, %v4489
    %v4628 = vpack.c.b16 %v4496, %v4490
    %v4629 = vpack.c.b16 %v4497, %v4491
    %v4630 = vpack.c.b16 %v4504, %v4498
    %v4631 = vpack.c.b16 %v4505, %v4499
    %v4632 = vpack.c.b16 %v4506, %v4500
    %v4633 = vpack.c.b16 %v4507, %v4501
    %v4634 = vpack.c.b16 %v4508, %v4502
    %v4635 = vpack.c.b16 %v4509, %v4503
    %v4636 = vpack.c.b16 %v4516, %v4510
    %v4637 = vpack.c.b16 %v4517, %v4511
    %v4638 = vpack.c.b16 %v4518, %v4512
    %v4639 = vpack.c.b16 %v4519, %v4513
    %v4640 = vpack.c.b16 %v4520, %v4514
    %v4641 = vpack.c.b16 %v4521, %v4515
    %v4642 = vpack.c.b16 %v4528, %v4522
    %v4643 = vpack.c.b16 %v4529, %v4523
    %v4644 = vpack.c.b16 %v4530, %v4524
    %v4645 = vpack.c.b16 %v4531, %v4525
    %v4646 = vpack.c.b16 %v4532, %v4526
    %v4647 = vpack.c.b16 %v4533, %v4527
    %v4648 = vpack.c.b16 %v4540, %v4534
    %v4649 = vpack.c.b16 %v4541, %v4535
    %v4650 = vpack.c.b16 %v4542, %v4536
    %v4651 = vpack.c.b16 %v4543, %v4537
    %v4652 = vpack.c.b16 %v4544, %v4538
    %v4653 = vpack.c.b16 %v4545, %v4539
    %v4654 = vpack.c.b16 %v4552, %v4546
    %v4655 = vpack.c.b16 %v4553, %v4547
    %v4656 = vpack.c.b16 %v4554, %v4548
    %v4657 = vpack.c.b16 %v4555, %v4549
    %v4658 = vpack.c.b16 %v4556, %v4550
    %v4659 = vpack.c.b16 %v4557, %v4551
    %v4660 = vpack.c.b16 %v4564, %v4558
    %v4661 = vpack.c.b16 %v4565, %v4559
    %v4662 = vpack.c.b16 %v4566, %v4560
    %v4663 = vpack.c.b16 %v4567, %v4561
    %v4664 = vpack.c.b16 %v4568, %v4562
    %v4665 = vpack.c.b16 %v4569, %v4563
    %4762 = vmatprep.subr.bf16.mxu0 %v4613
    %4763 = vmatpush1.bf16.msra.mxu0 %v4612
    %4764 = vmatprep.subr.bf16.mxu0 %v4607
    %4765 = vmatpush1.bf16.msra.mxu0 %v4606
    %4766 = vmatprep.subr.bf16.mxu0 %v4601
    %4767 = vmatpush1.bf16.msra.mxu0 %v4600
    %4768 = vmatprep.subr.bf16.mxu0 %v4595
    %4769 = vmatpush1.bf16.msra.mxu0 %v4594
    %4770 = vmatprep.subr.bf16.mxu0 %v4589
    %4771 = vmatpush1.bf16.msra.mxu0 %v4588
    %4772 = vmatprep.subr.bf16.mxu0 %v4583
    %4773 = vmatpush1.bf16.msra.mxu0 %v4582
    %4774 = vmatprep.subr.bf16.mxu0 %v4577
    %4775 = vmatpush1.bf16.msra.mxu0 %v4576
    %4776 = vmatprep.subr.bf16.mxu0 %v4571
    %4777 = vmatpush1.bf16.msra.mxu0 %v4570
    %4778 = vmatprep.subr.bf16.mxu0 %v4661
    %4779 = vmatpush2.bf16.msra.mxu0 %v4660
    %4780 = vmatprep.subr.bf16.mxu0 %v4655
    %4781 = vmatpush2.bf16.msra.mxu0 %v4654
    %4782 = vmatprep.subr.bf16.mxu0 %v4649
    %4783 = vmatpush2.bf16.msra.mxu0 %v4648
    %4784 = vmatprep.subr.bf16.mxu0 %v4643
    %4785 = vmatpush2.bf16.msra.mxu0 %v4642
    %4786 = vmatprep.subr.bf16.mxu0 %v4637
    %4787 = vmatpush2.bf16.msra.mxu0 %v4636
    %4788 = vmatprep.subr.bf16.mxu0 %v4631
    %4789 = vmatpush2.bf16.msra.mxu0 %v4630
    %4790 = vmatprep.subr.bf16.mxu0 %v4625
    %4791 = vmatpush2.bf16.msra.mxu0 %v4624
    %4792 = vmatprep.subr.bf16.mxu0 %v4619
    %4793 = vmatpush2.bf16.msra.mxu0 %v4618
    %4794 = vmatprep.mubr.bf16.mxu0 %v4185
    %4795 = vmatmul.mubr.bf16.gmra.mxu0 %v4184
    %v4796 = vpop.f32.mrf.mxu0
    %v4797 = vadd.f32 0.0, %v4796
    %v4798 = vpop.f32.mrf.mxu0
    %v4799 = vadd.f32 0.0, %v4798
    %v4800 = vpop.f32.mrf.mxu0
    %v4801 = vpop.f32.mrf.mxu0
    %4802 = vdwg.mxu0
    %4803 = vmatprep.subr.bf16.mxu0 %v4615
    %4804 = vmatpush1.bf16.msra.mxu0 %v4614
    %4805 = vmatprep.subr.bf16.mxu0 %v4609
    %4806 = vmatpush1.bf16.msra.mxu0 %v4608
    %4807 = vmatprep.subr.bf16.mxu0 %v4603
    %4808 = vmatpush1.bf16.msra.mxu0 %v4602
    %4809 = vmatprep.subr.bf16.mxu0 %v4597
    %4810 = vmatpush1.bf16.msra.mxu0 %v4596
    %4811 = vmatprep.subr.bf16.mxu0 %v4591
    %4812 = vmatpush1.bf16.msra.mxu0 %v4590
    %4813 = vmatprep.subr.bf16.mxu0 %v4585
    %4814 = vmatpush1.bf16.msra.mxu0 %v4584
    %4815 = vmatprep.subr.bf16.mxu0 %v4579
    %4816 = vmatpush1.bf16.msra.mxu0 %v4578
    %4817 = vmatprep.subr.bf16.mxu0 %v4573
    %4818 = vmatpush1.bf16.msra.mxu0 %v4572
    %4819 = vmatprep.subr.bf16.mxu0 %v4663
    %4820 = vmatpush2.bf16.msra.mxu0 %v4662
    %4821 = vmatprep.subr.bf16.mxu0 %v4657
    %4822 = vmatpush2.bf16.msra.mxu0 %v4656
    %4823 = vmatprep.subr.bf16.mxu0 %v4651
    %4824 = vmatpush2.bf16.msra.mxu0 %v4650
    %4825 = vmatprep.subr.bf16.mxu0 %v4645
    %4826 = vmatpush2.bf16.msra.mxu0 %v4644
    %4827 = vmatprep.subr.bf16.mxu0 %v4639
    %4828 = vmatpush2.bf16.msra.mxu0 %v4638
    %4829 = vmatprep.subr.bf16.mxu0 %v4633
    %4830 = vmatpush2.bf16.msra.mxu0 %v4632
    %4831 = vmatprep.subr.bf16.mxu0 %v4627
    %4832 = vmatpush2.bf16.msra.mxu0 %v4626
    %4833 = vmatprep.subr.bf16.mxu0 %v4621
    %4834 = vmatpush2.bf16.msra.mxu0 %v4620
    %4835 = vmatprep.mubr.bf16.mxu0 %v4185
    %4836 = vmatmul.mubr.bf16.gmra.mxu0 %v4184
    %v4837 = vpop.f32.mrf.mxu0
    %v4838 = vadd.f32 0.0, %v4837
    %v4839 = vpop.f32.mrf.mxu0
    %v4840 = vadd.f32 0.0, %v4839
    %v4841 = vpop.f32.mrf.mxu0
    %v4842 = vpop.f32.mrf.mxu0
    %4843 = vdwg.mxu0
    %4844 = vmatprep.subr.bf16.mxu0 %v4617
    %4845 = vmatpush1.bf16.msra.mxu0 %v4616
    %4846 = vmatprep.subr.bf16.mxu0 %v4611
    %4847 = vmatpush1.bf16.msra.mxu0 %v4610
    %4848 = vmatprep.subr.bf16.mxu0 %v4605
    %4849 = vmatpush1.bf16.msra.mxu0 %v4604
    %4850 = vmatprep.subr.bf16.mxu0 %v4599
    %4851 = vmatpush1.bf16.msra.mxu0 %v4598
    %4852 = vmatprep.subr.bf16.mxu0 %v4593
    %4853 = vmatpush1.bf16.msra.mxu0 %v4592
    %4854 = vmatprep.subr.bf16.mxu0 %v4587
    %4855 = vmatpush1.bf16.msra.mxu0 %v4586
    %4856 = vmatprep.subr.bf16.mxu0 %v4581
    %4857 = vmatpush1.bf16.msra.mxu0 %v4580
    %4858 = vmatprep.subr.bf16.mxu0 %v4575
    %4859 = vmatpush1.bf16.msra.mxu0 %v4574
    %4860 = vmatprep.subr.bf16.mxu0 %v4665
    %4861 = vmatpush2.bf16.msra.mxu0 %v4664
    %4862 = vmatprep.subr.bf16.mxu0 %v4659
    %4863 = vmatpush2.bf16.msra.mxu0 %v4658
    %4864 = vmatprep.subr.bf16.mxu0 %v4653
    %4865 = vmatpush2.bf16.msra.mxu0 %v4652
    %4866 = vmatprep.subr.bf16.mxu0 %v4647
    %4867 = vmatpush2.bf16.msra.mxu0 %v4646
    %4868 = vmatprep.subr.bf16.mxu0 %v4641
    %4869 = vmatpush2.bf16.msra.mxu0 %v4640
    %4870 = vmatprep.subr.bf16.mxu0 %v4635
    %4871 = vmatpush2.bf16.msra.mxu0 %v4634
    %4872 = vmatprep.subr.bf16.mxu0 %v4629
    %4873 = vmatpush2.bf16.msra.mxu0 %v4628
    %4874 = vmatprep.subr.bf16.mxu0 %v4623
    %4875 = vmatpush2.bf16.msra.mxu0 %v4622
    %4876 = vmatprep.mubr.bf16.mxu0 %v4185
    %4877 = vmatmul.mubr.bf16.gmra.mxu0 %v4184
    %v4878 = vpop.f32.mrf.mxu0
    %v4879 = vadd.f32 0.0, %v4878
    %v4880 = vpop.f32.mrf.mxu0
    %v4881 = vadd.f32 0.0, %v4880
    %v4882 = vpop.f32.mrf.mxu0
    %v4883 = vpop.f32.mrf.mxu0
    %4884 = vdwg.mxu0
    %v4887 = vcombine.low %v4797, %v4799
    %v4889 = vunpack.c.l.s4 1966171168
    %v4890 = vunpack.c.0.s8 %v4889
    %v4891 = vlaneseq
    %v4892 = vshrl.u32 %v4891, 7
    %v4893 = vsub.s32 %v4890, %v4892
    %v4894 = vrot.slane %v4887, %v4893
    %v4896 = vunpack.c.l.s4 1966171168
    %v4897 = vunpack.c.0.s8 %v4896
    %v4898 = vlaneseq
    %v4899 = vshrl.u32 %v4898, 7
    %v4900 = vsub.s32 %v4897, %v4899
    %v4901 = vrot.slane %v4894, %v4900
    %v4903 = vadd.f32 %v4172, %v4901
    %v4904 = vxor.u32 %v4903, 2147483648
    %v4905 = vmul.f32 %v4904, 1.442695
    %v4906 = vpow.pop %v4905
    %v4907 = vadd.f32 %v4906, 1.0
    %v4908 = vrcp.pop %v4907
    %v4909 = vmul.f32 1.0, %v4908
    %v4911 = vrot.slane %v4172, 2
    %v4915 = vcombine.low %v4838, %v4840
    %v4917 = vunpack.c.l.s4 1966171168
    %v4918 = vunpack.c.0.s8 %v4917
    %v4919 = vlaneseq
    %v4920 = vshrl.u32 %v4919, 7
    %v4921 = vsub.s32 %v4918, %v4920
    %v4922 = vrot.slane %v4915, %v4921
    %v4924 = vunpack.c.l.s4 1966171168
    %v4925 = vunpack.c.0.s8 %v4924
    %v4926 = vlaneseq
    %v4927 = vshrl.u32 %v4926, 7
    %v4928 = vsub.s32 %v4925, %v4927
    %v4929 = vrot.slane %v4922, %v4928
    %v4931 = vadd.f32 %v4911, %v4929
    %v4932 = vxor.u32 %v4931, 2147483648
    %v4933 = vmul.f32 %v4932, 1.442695
    %v4934 = vpow.pop %v4933
    %v4935 = vadd.f32 %v4934, 1.0
    %v4936 = vrcp.pop %v4935
    %v4937 = vmul.f32 1.0, %v4936
    %v4938 = vld [vmem:[%s5] sm:$0x3]
    %v4940 = vlaneseq
    %v4941 = vshrl.u32 %v4940, 7
    %v4942 = vsub.s32 0, %v4941
    %v4943 = vrot.slane %v4938, %v4942
    %v4944 = vlaneseq
    %v4945 = vshrl.u32 %v4944, 7
    %v4946 = vsub.s32 1, %v4945
    %v4947 = vrot.slane %v4938, %v4946
    %v4950 = vadd.f32 %v4879, %v4943
    %v4951 = vadd.f32 %v4881, %v4947
    %v4954 = vcombine.low %v4950, %v4951
    %v4956 = vunpack.c.l.s4 1966171168
    %v4957 = vunpack.c.0.s8 %v4956
    %v4958 = vlaneseq
    %v4959 = vshrl.u32 %v4958, 7
    %v4960 = vsub.s32 %v4957, %v4959
    %v4961 = vrot.slane %v4954, %v4960
    %v4963 = vunpack.c.l.s4 1966171168
    %v4964 = vunpack.c.0.s8 %v4963
    %v4965 = vlaneseq
    %v4966 = vshrl.u32 %v4965, 7
    %v4967 = vsub.s32 %v4964, %v4966
    %v4968 = vrot.slane %v4961, %v4967
    %v4970 = vmul.f32 %v4909, %v4968
    %v4971 = vrot.slane %v4172, 4
    %v4973 = vadd.f32 %v4971, %v4970
    %v4974 = vtanh.pop %v4973
    %v4975 = vsub.f32 1.0, %v4937
    %v4976 = vmul.f32 %v4975, %v4974
    %v4977 = vmul.f32 %v4937, %v4165
    %v4978 = vadd.f32 %v4976, %v4977
    %s4979 = scalar_lea.vmem [#allocation12], 4
    %4980 = vst.msk [vmem:[%s4979] ss:$8 sm:$0x3] %vm83, %v4978
    %4981 = vst.msk [vmem:[%s4979] ss:$8 sm:$0x0] %vm83, %v4978
    %s4982 = scalar_lea.vmem [#allocation3], 5
    %v4983 = vld [vmem:[%s4982] ss:$8 sm:$0xf]
    %v4984 = vld [vmem:[%s4982] ss:$8 sm:$0x30]
    %v4985 = vor.u32 %v4983, %v4984
    %v4987 = vlaneseq
    %v4988 = vshrl.u32 %v4987, 7
    %v4989 = vsub.s32 0, %v4988
    %v4990 = vrot.slane %v4978, %v4989
    %v4991 = vlaneseq
    %v4992 = vshrl.u32 %v4991, 7
    %v4993 = vsub.s32 1, %v4992
    %v4994 = vrot.slane %v4978, %v4993
    %v4997 = vpack.c.bf16 %v4990, %v4990
    %v4998 = vpack.c.bf16 %v4994, %v4994
    %v4999 = vld [vmem:[#allocation11] sm:$0xff]
    %v5000 = vld [vmem:[#allocation11 + $0x8] sm:$0xff]
    %v5001 = vld [vmem:[#allocation11 + $0x10] sm:$0xff]
    %v5002 = vld [vmem:[#allocation11 + $0x18] sm:$0xff]
    %v5003 = vld [vmem:[#allocation11 + $0x20] sm:$0xff]
    %v5004 = vld [vmem:[#allocation11 + $0x28] sm:$0xff]
    %v5005 = vld [vmem:[#allocation11 + $0x30] sm:$0xff]
    %v5006 = vld [vmem:[#allocation11 + $0x38] sm:$0xff]
    %v5007 = vld [vmem:[#allocation11 + $0x40] sm:$0xff]
    %v5008 = vld [vmem:[#allocation11 + $0x48] sm:$0xff]
    %v5009 = vld [vmem:[#allocation11 + $0x50] sm:$0xff]
    %v5010 = vld [vmem:[#allocation11 + $0x58] sm:$0xff]
    %v5011 = vld [vmem:[#allocation11 + $0x60] sm:$0xff]
    %v5012 = vld [vmem:[#allocation11 + $0x68] sm:$0xff]
    %v5013 = vld [vmem:[#allocation11 + $0x70] sm:$0xff]
    %v5014 = vld [vmem:[#allocation11 + $0x78] sm:$0xff]
    %v5015 = vld [vmem:[#allocation11 + $0x80] sm:$0xff]
    %v5016 = vld [vmem:[#allocation11 + $0x88] sm:$0xff]
    %v5017 = vld [vmem:[#allocation11 + $0x90] sm:$0xff]
    %v5018 = vld [vmem:[#allocation11 + $0x98] sm:$0xff]
    %v5019 = vld [vmem:[#allocation11 + $0xa0] sm:$0xff]
    %v5020 = vld [vmem:[#allocation11 + $0xa8] sm:$0xff]
    %v5021 = vld [vmem:[#allocation11 + $0xb0] sm:$0xff]
    %v5022 = vld [vmem:[#allocation11 + $0xb8] sm:$0xff]
    %v5023 = vld [vmem:[#allocation11 + $0xc0] sm:$0xff]
    %v5024 = vld [vmem:[#allocation11 + $0xc8] sm:$0xff]
    %v5025 = vld [vmem:[#allocation11 + $0xd0] sm:$0xff]
    %v5026 = vld [vmem:[#allocation11 + $0xd8] sm:$0xff]
    %v5027 = vld [vmem:[#allocation11 + $0xe0] sm:$0xff]
    %v5028 = vld [vmem:[#allocation11 + $0xe8] sm:$0xff]
    %v5029 = vld [vmem:[#allocation11 + $0xf0] sm:$0xff]
    %v5030 = vld [vmem:[#allocation11 + $0xf8] sm:$0xff]
    %v5031 = vld [vmem:[#allocation11 + $0x100] sm:$0xff]
    %v5032 = vld [vmem:[#allocation11 + $0x108] sm:$0xff]
    %v5033 = vld [vmem:[#allocation11 + $0x110] sm:$0xff]
    %v5034 = vld [vmem:[#allocation11 + $0x118] sm:$0xff]
    %v5035 = vld [vmem:[#allocation11 + $0x120] sm:$0xff]
    %v5036 = vld [vmem:[#allocation11 + $0x128] sm:$0xff]
    %v5037 = vld [vmem:[#allocation11 + $0x130] sm:$0xff]
    %v5038 = vld [vmem:[#allocation11 + $0x138] sm:$0xff]
    %v5039 = vld [vmem:[#allocation11 + $0x140] sm:$0xff]
    %v5040 = vld [vmem:[#allocation11 + $0x148] sm:$0xff]
    %v5041 = vld [vmem:[#allocation11 + $0x150] sm:$0xff]
    %v5042 = vld [vmem:[#allocation11 + $0x158] sm:$0xff]
    %v5043 = vld [vmem:[#allocation11 + $0x160] sm:$0xff]
    %v5044 = vld [vmem:[#allocation11 + $0x168] sm:$0xff]
    %v5045 = vld [vmem:[#allocation11 + $0x170] sm:$0xff]
    %v5046 = vld [vmem:[#allocation11 + $0x178] sm:$0xff]
    %v5047 = vld [vmem:[#allocation11 + $0x180] sm:$0xff]
    %v5048 = vld [vmem:[#allocation11 + $0x188] sm:$0xff]
    %v5049 = vld [vmem:[#allocation11 + $0x190] sm:$0xff]
    %v5050 = vld [vmem:[#allocation11 + $0x198] sm:$0xff]
    %v5051 = vld [vmem:[#allocation11 + $0x1a0] sm:$0xff]
    %v5052 = vld [vmem:[#allocation11 + $0x1a8] sm:$0xff]
    %v5053 = vld [vmem:[#allocation11 + $0x1b0] sm:$0xff]
    %v5054 = vld [vmem:[#allocation11 + $0x1b8] sm:$0xff]
    %v5055 = vld [vmem:[#allocation11 + $0x1c0] sm:$0xff]
    %v5056 = vld [vmem:[#allocation11 + $0x1c8] sm:$0xff]
    %v5057 = vld [vmem:[#allocation11 + $0x1d0] sm:$0xff]
    %v5058 = vld [vmem:[#allocation11 + $0x1d8] sm:$0xff]
    %v5059 = vld [vmem:[#allocation11 + $0x1e0] sm:$0xff]
    %v5060 = vld [vmem:[#allocation11 + $0x1e8] sm:$0xff]
    %v5061 = vld [vmem:[#allocation11 + $0x1f0] sm:$0xff]
    %v5062 = vld [vmem:[#allocation11 + $0x1f8] sm:$0xff]
    %v5063 = vld [vmem:[#allocation11 + $0x200] sm:$0xff]
    %v5064 = vld [vmem:[#allocation11 + $0x208] sm:$0xff]
    %v5065 = vld [vmem:[#allocation11 + $0x210] sm:$0xff]
    %v5066 = vld [vmem:[#allocation11 + $0x218] sm:$0xff]
    %v5067 = vld [vmem:[#allocation11 + $0x220] sm:$0xff]
    %v5068 = vld [vmem:[#allocation11 + $0x228] sm:$0xff]
    %v5069 = vld [vmem:[#allocation11 + $0x230] sm:$0xff]
    %v5070 = vld [vmem:[#allocation11 + $0x238] sm:$0xff]
    %v5071 = vld [vmem:[#allocation11 + $0x240] sm:$0xff]
    %v5072 = vld [vmem:[#allocation11 + $0x248] sm:$0xff]
    %v5073 = vld [vmem:[#allocation11 + $0x250] sm:$0xff]
    %v5074 = vld [vmem:[#allocation11 + $0x258] sm:$0xff]
    %v5075 = vld [vmem:[#allocation11 + $0x260] sm:$0xff]
    %v5076 = vld [vmem:[#allocation11 + $0x268] sm:$0xff]
    %v5077 = vld [vmem:[#allocation11 + $0x270] sm:$0xff]
    %v5078 = vld [vmem:[#allocation11 + $0x278] sm:$0xff]
    %v5079 = vld [vmem:[#allocation11 + $0x280] sm:$0xff]
    %v5080 = vld [vmem:[#allocation11 + $0x288] sm:$0xff]
    %v5081 = vld [vmem:[#allocation11 + $0x290] sm:$0xff]
    %v5082 = vld [vmem:[#allocation11 + $0x298] sm:$0xff]
    %v5083 = vld [vmem:[#allocation11 + $0x2a0] sm:$0xff]
    %v5084 = vld [vmem:[#allocation11 + $0x2a8] sm:$0xff]
    %v5085 = vld [vmem:[#allocation11 + $0x2b0] sm:$0xff]
    %v5086 = vld [vmem:[#allocation11 + $0x2b8] sm:$0xff]
    %v5087 = vld [vmem:[#allocation11 + $0x2c0] sm:$0xff]
    %v5088 = vld [vmem:[#allocation11 + $0x2c8] sm:$0xff]
    %v5089 = vld [vmem:[#allocation11 + $0x2d0] sm:$0xff]
    %v5090 = vld [vmem:[#allocation11 + $0x2d8] sm:$0xff]
    %v5091 = vld [vmem:[#allocation11 + $0x2e0] sm:$0xff]
    %v5092 = vld [vmem:[#allocation11 + $0x2e8] sm:$0xff]
    %v5093 = vld [vmem:[#allocation11 + $0x2f0] sm:$0xff]
    %v5094 = vld [vmem:[#allocation11 + $0x2f8] sm:$0xff]
    %v5191 = vunpack.c.l.b16 %v4999
    %v5192 = vunpack.c.h.b16 %v4999
    %v5193 = vunpack.c.l.b16 %v5000
    %v5194 = vunpack.c.h.b16 %v5000
    %v5195 = vunpack.c.l.b16 %v5001
    %v5196 = vunpack.c.h.b16 %v5001
    %v5197 = vunpack.c.l.b16 %v5002
    %v5198 = vunpack.c.h.b16 %v5002
    %v5199 = vunpack.c.l.b16 %v5003
    %v5200 = vunpack.c.h.b16 %v5003
    %v5201 = vunpack.c.l.b16 %v5004
    %v5202 = vunpack.c.h.b16 %v5004
    %v5203 = vunpack.c.l.b16 %v5005
    %v5204 = vunpack.c.h.b16 %v5005
    %v5205 = vunpack.c.l.b16 %v5006
    %v5206 = vunpack.c.h.b16 %v5006
    %v5207 = vunpack.c.l.b16 %v5007
    %v5208 = vunpack.c.h.b16 %v5007
    %v5209 = vunpack.c.l.b16 %v5008
    %v5210 = vunpack.c.h.b16 %v5008
    %v5211 = vunpack.c.l.b16 %v5009
    %v5212 = vunpack.c.h.b16 %v5009
    %v5213 = vunpack.c.l.b16 %v5010
    %v5214 = vunpack.c.h.b16 %v5010
    %v5215 = vunpack.c.l.b16 %v5011
    %v5216 = vunpack.c.h.b16 %v5011
    %v5217 = vunpack.c.l.b16 %v5012
    %v5218 = vunpack.c.h.b16 %v5012
    %v5219 = vunpack.c.l.b16 %v5013
    %v5220 = vunpack.c.h.b16 %v5013
    %v5221 = vunpack.c.l.b16 %v5014
    %v5222 = vunpack.c.h.b16 %v5014
    %v5223 = vunpack.c.l.b16 %v5015
    %v5224 = vunpack.c.h.b16 %v5015
    %v5225 = vunpack.c.l.b16 %v5016
    %v5226 = vunpack.c.h.b16 %v5016
    %v5227 = vunpack.c.l.b16 %v5017
    %v5228 = vunpack.c.h.b16 %v5017
    %v5229 = vunpack.c.l.b16 %v5018
    %v5230 = vunpack.c.h.b16 %v5018
    %v5231 = vunpack.c.l.b16 %v5019
    %v5232 = vunpack.c.h.b16 %v5019
    %v5233 = vunpack.c.l.b16 %v5020
    %v5234 = vunpack.c.h.b16 %v5020
    %v5235 = vunpack.c.l.b16 %v5021
    %v5236 = vunpack.c.h.b16 %v5021
    %v5237 = vunpack.c.l.b16 %v5022
    %v5238 = vunpack.c.h.b16 %v5022
    %v5239 = vunpack.c.l.b16 %v5023
    %v5240 = vunpack.c.h.b16 %v5023
    %v5241 = vunpack.c.l.b16 %v5024
    %v5242 = vunpack.c.h.b16 %v5024
    %v5243 = vunpack.c.l.b16 %v5025
    %v5244 = vunpack.c.h.b16 %v5025
    %v5245 = vunpack.c.l.b16 %v5026
    %v5246 = vunpack.c.h.b16 %v5026
    %v5247 = vunpack.c.l.b16 %v5027
    %v5248 = vunpack.c.h.b16 %v5027
    %v5249 = vunpack.c.l.b16 %v5028
    %v5250 = vunpack.c.h.b16 %v5028
    %v5251 = vunpack.c.l.b16 %v5029
    %v5252 = vunpack.c.h.b16 %v5029
    %v5253 = vunpack.c.l.b16 %v5030
    %v5254 = vunpack.c.h.b16 %v5030
    %v5255 = vunpack.c.l.b16 %v5031
    %v5256 = vunpack.c.h.b16 %v5031
    %v5257 = vunpack.c.l.b16 %v5032
    %v5258 = vunpack.c.h.b16 %v5032
    %v5259 = vunpack.c.l.b16 %v5033
    %v5260 = vunpack.c.h.b16 %v5033
    %v5261 = vunpack.c.l.b16 %v5034
    %v5262 = vunpack.c.h.b16 %v5034
    %v5263 = vunpack.c.l.b16 %v5035
    %v5264 = vunpack.c.h.b16 %v5035
    %v5265 = vunpack.c.l.b16 %v5036
    %v5266 = vunpack.c.h.b16 %v5036
    %v5267 = vunpack.c.l.b16 %v5037
    %v5268 = vunpack.c.h.b16 %v5037
    %v5269 = vunpack.c.l.b16 %v5038
    %v5270 = vunpack.c.h.b16 %v5038
    %v5271 = vunpack.c.l.b16 %v5039
    %v5272 = vunpack.c.h.b16 %v5039
    %v5273 = vunpack.c.l.b16 %v5040
    %v5274 = vunpack.c.h.b16 %v5040
    %v5275 = vunpack.c.l.b16 %v5041
    %v5276 = vunpack.c.h.b16 %v5041
    %v5277 = vunpack.c.l.b16 %v5042
    %v5278 = vunpack.c.h.b16 %v5042
    %v5279 = vunpack.c.l.b16 %v5043
    %v5280 = vunpack.c.h.b16 %v5043
    %v5281 = vunpack.c.l.b16 %v5044
    %v5282 = vunpack.c.h.b16 %v5044
    %v5283 = vunpack.c.l.b16 %v5045
    %v5284 = vunpack.c.h.b16 %v5045
    %v5285 = vunpack.c.l.b16 %v5046
    %v5286 = vunpack.c.h.b16 %v5046
    %v5287 = vunpack.c.l.b16 %v5047
    %v5288 = vunpack.c.h.b16 %v5047
    %v5289 = vunpack.c.l.b16 %v5048
    %v5290 = vunpack.c.h.b16 %v5048
    %v5291 = vunpack.c.l.b16 %v5049
    %v5292 = vunpack.c.h.b16 %v5049
    %v5293 = vunpack.c.l.b16 %v5050
    %v5294 = vunpack.c.h.b16 %v5050
    %v5295 = vunpack.c.l.b16 %v5051
    %v5296 = vunpack.c.h.b16 %v5051
    %v5297 = vunpack.c.l.b16 %v5052
    %v5298 = vunpack.c.h.b16 %v5052
    %v5299 = vunpack.c.l.b16 %v5053
    %v5300 = vunpack.c.h.b16 %v5053
    %v5301 = vunpack.c.l.b16 %v5054
    %v5302 = vunpack.c.h.b16 %v5054
    %v5303 = vunpack.c.l.b16 %v5055
    %v5304 = vunpack.c.h.b16 %v5055
    %v5305 = vunpack.c.l.b16 %v5056
    %v5306 = vunpack.c.h.b16 %v5056
    %v5307 = vunpack.c.l.b16 %v5057
    %v5308 = vunpack.c.h.b16 %v5057
    %v5309 = vunpack.c.l.b16 %v5058
    %v5310 = vunpack.c.h.b16 %v5058
    %v5311 = vunpack.c.l.b16 %v5059
    %v5312 = vunpack.c.h.b16 %v5059
    %v5313 = vunpack.c.l.b16 %v5060
    %v5314 = vunpack.c.h.b16 %v5060
    %v5315 = vunpack.c.l.b16 %v5061
    %v5316 = vunpack.c.h.b16 %v5061
    %v5317 = vunpack.c.l.b16 %v5062
    %v5318 = vunpack.c.h.b16 %v5062
    %v5319 = vunpack.c.l.b16 %v5063
    %v5320 = vunpack.c.h.b16 %v5063
    %v5321 = vunpack.c.l.b16 %v5064
    %v5322 = vunpack.c.h.b16 %v5064
    %v5323 = vunpack.c.l.b16 %v5065
    %v5324 = vunpack.c.h.b16 %v5065
    %v5325 = vunpack.c.l.b16 %v5066
    %v5326 = vunpack.c.h.b16 %v5066
    %v5327 = vunpack.c.l.b16 %v5067
    %v5328 = vunpack.c.h.b16 %v5067
    %v5329 = vunpack.c.l.b16 %v5068
    %v5330 = vunpack.c.h.b16 %v5068
    %v5331 = vunpack.c.l.b16 %v5069
    %v5332 = vunpack.c.h.b16 %v5069
    %v5333 = vunpack.c.l.b16 %v5070
    %v5334 = vunpack.c.h.b16 %v5070
    %v5335 = vunpack.c.l.b16 %v5071
    %v5336 = vunpack.c.h.b16 %v5071
    %v5337 = vunpack.c.l.b16 %v5072
    %v5338 = vunpack.c.h.b16 %v5072
    %v5339 = vunpack.c.l.b16 %v5073
    %v5340 = vunpack.c.h.b16 %v5073
    %v5341 = vunpack.c.l.b16 %v5074
    %v5342 = vunpack.c.h.b16 %v5074
    %v5343 = vunpack.c.l.b16 %v5075
    %v5344 = vunpack.c.h.b16 %v5075
    %v5345 = vunpack.c.l.b16 %v5076
    %v5346 = vunpack.c.h.b16 %v5076
    %v5347 = vunpack.c.l.b16 %v5077
    %v5348 = vunpack.c.h.b16 %v5077
    %v5349 = vunpack.c.l.b16 %v5078
    %v5350 = vunpack.c.h.b16 %v5078
    %v5351 = vunpack.c.l.b16 %v5079
    %v5352 = vunpack.c.h.b16 %v5079
    %v5353 = vunpack.c.l.b16 %v5080
    %v5354 = vunpack.c.h.b16 %v5080
    %v5355 = vunpack.c.l.b16 %v5081
    %v5356 = vunpack.c.h.b16 %v5081
    %v5357 = vunpack.c.l.b16 %v5082
    %v5358 = vunpack.c.h.b16 %v5082
    %v5359 = vunpack.c.l.b16 %v5083
    %v5360 = vunpack.c.h.b16 %v5083
    %v5361 = vunpack.c.l.b16 %v5084
    %v5362 = vunpack.c.h.b16 %v5084
    %v5363 = vunpack.c.l.b16 %v5085
    %v5364 = vunpack.c.h.b16 %v5085
    %v5365 = vunpack.c.l.b16 %v5086
    %v5366 = vunpack.c.h.b16 %v5086
    %v5367 = vunpack.c.l.b16 %v5087
    %v5368 = vunpack.c.h.b16 %v5087
    %v5369 = vunpack.c.l.b16 %v5088
    %v5370 = vunpack.c.h.b16 %v5088
    %v5371 = vunpack.c.l.b16 %v5089
    %v5372 = vunpack.c.h.b16 %v5089
    %v5373 = vunpack.c.l.b16 %v5090
    %v5374 = vunpack.c.h.b16 %v5090
    %v5375 = vunpack.c.l.b16 %v5091
    %v5376 = vunpack.c.h.b16 %v5091
    %v5377 = vunpack.c.l.b16 %v5092
    %v5378 = vunpack.c.h.b16 %v5092
    %v5379 = vunpack.c.l.b16 %v5093
    %v5380 = vunpack.c.h.b16 %v5093
    %v5381 = vunpack.c.l.b16 %v5094
    %v5382 = vunpack.c.h.b16 %v5094
    %v5383 = vpack.c.b16 %v5197, %v5191
    %v5384 = vpack.c.b16 %v5198, %v5192
    %v5385 = vpack.c.b16 %v5199, %v5193
    %v5386 = vpack.c.b16 %v5200, %v5194
    %v5387 = vpack.c.b16 %v5201, %v5195
    %v5388 = vpack.c.b16 %v5202, %v5196
    %v5389 = vpack.c.b16 %v5209, %v5203
    %v5390 = vpack.c.b16 %v5210, %v5204
    %v5391 = vpack.c.b16 %v5211, %v5205
    %v5392 = vpack.c.b16 %v5212, %v5206
    %v5393 = vpack.c.b16 %v5213, %v5207
    %v5394 = vpack.c.b16 %v5214, %v5208
    %v5395 = vpack.c.b16 %v5221, %v5215
    %v5396 = vpack.c.b16 %v5222, %v5216
    %v5397 = vpack.c.b16 %v5223, %v5217
    %v5398 = vpack.c.b16 %v5224, %v5218
    %v5399 = vpack.c.b16 %v5225, %v5219
    %v5400 = vpack.c.b16 %v5226, %v5220
    %v5401 = vpack.c.b16 %v5233, %v5227
    %v5402 = vpack.c.b16 %v5234, %v5228
    %v5403 = vpack.c.b16 %v5235, %v5229
    %v5404 = vpack.c.b16 %v5236, %v5230
    %v5405 = vpack.c.b16 %v5237, %v5231
    %v5406 = vpack.c.b16 %v5238, %v5232
    %v5407 = vpack.c.b16 %v5245, %v5239
    %v5408 = vpack.c.b16 %v5246, %v5240
    %v5409 = vpack.c.b16 %v5247, %v5241
    %v5410 = vpack.c.b16 %v5248, %v5242
    %v5411 = vpack.c.b16 %v5249, %v5243
    %v5412 = vpack.c.b16 %v5250, %v5244
    %v5413 = vpack.c.b16 %v5257, %v5251
    %v5414 = vpack.c.b16 %v5258, %v5252
    %v5415 = vpack.c.b16 %v5259, %v5253
    %v5416 = vpack.c.b16 %v5260, %v5254
    %v5417 = vpack.c.b16 %v5261, %v5255
    %v5418 = vpack.c.b16 %v5262, %v5256
    %v5419 = vpack.c.b16 %v5269, %v5263
    %v5420 = vpack.c.b16 %v5270, %v5264
    %v5421 = vpack.c.b16 %v5271, %v5265
    %v5422 = vpack.c.b16 %v5272, %v5266
    %v5423 = vpack.c.b16 %v5273, %v5267
    %v5424 = vpack.c.b16 %v5274, %v5268
    %v5425 = vpack.c.b16 %v5281, %v5275
    %v5426 = vpack.c.b16 %v5282, %v5276
    %v5427 = vpack.c.b16 %v5283, %v5277
    %v5428 = vpack.c.b16 %v5284, %v5278
    %v5429 = vpack.c.b16 %v5285, %v5279
    %v5430 = vpack.c.b16 %v5286, %v5280
    %v5431 = vpack.c.b16 %v5293, %v5287
    %v5432 = vpack.c.b16 %v5294, %v5288
    %v5433 = vpack.c.b16 %v5295, %v5289
    %v5434 = vpack.c.b16 %v5296, %v5290
    %v5435 = vpack.c.b16 %v5297, %v5291
    %v5436 = vpack.c.b16 %v5298, %v5292
    %v5437 = vpack.c.b16 %v5305, %v5299
    %v5438 = vpack.c.b16 %v5306, %v5300
    %v5439 = vpack.c.b16 %v5307, %v5301
    %v5440 = vpack.c.b16 %v5308, %v5302
    %v5441 = vpack.c.b16 %v5309, %v5303
    %v5442 = vpack.c.b16 %v5310, %v5304
    %v5443 = vpack.c.b16 %v5317, %v5311
    %v5444 = vpack.c.b16 %v5318, %v5312
    %v5445 = vpack.c.b16 %v5319, %v5313
    %v5446 = vpack.c.b16 %v5320, %v5314
    %v5447 = vpack.c.b16 %v5321, %v5315
    %v5448 = vpack.c.b16 %v5322, %v5316
    %v5449 = vpack.c.b16 %v5329, %v5323
    %v5450 = vpack.c.b16 %v5330, %v5324
    %v5451 = vpack.c.b16 %v5331, %v5325
    %v5452 = vpack.c.b16 %v5332, %v5326
    %v5453 = vpack.c.b16 %v5333, %v5327
    %v5454 = vpack.c.b16 %v5334, %v5328
    %v5455 = vpack.c.b16 %v5341, %v5335
    %v5456 = vpack.c.b16 %v5342, %v5336
    %v5457 = vpack.c.b16 %v5343, %v5337
    %v5458 = vpack.c.b16 %v5344, %v5338
    %v5459 = vpack.c.b16 %v5345, %v5339
    %v5460 = vpack.c.b16 %v5346, %v5340
    %v5461 = vpack.c.b16 %v5353, %v5347
    %v5462 = vpack.c.b16 %v5354, %v5348
    %v5463 = vpack.c.b16 %v5355, %v5349
    %v5464 = vpack.c.b16 %v5356, %v5350
    %v5465 = vpack.c.b16 %v5357, %v5351
    %v5466 = vpack.c.b16 %v5358, %v5352
    %v5467 = vpack.c.b16 %v5365, %v5359
    %v5468 = vpack.c.b16 %v5366, %v5360
    %v5469 = vpack.c.b16 %v5367, %v5361
    %v5470 = vpack.c.b16 %v5368, %v5362
    %v5471 = vpack.c.b16 %v5369, %v5363
    %v5472 = vpack.c.b16 %v5370, %v5364
    %v5473 = vpack.c.b16 %v5377, %v5371
    %v5474 = vpack.c.b16 %v5378, %v5372
    %v5475 = vpack.c.b16 %v5379, %v5373
    %v5476 = vpack.c.b16 %v5380, %v5374
    %v5477 = vpack.c.b16 %v5381, %v5375
    %v5478 = vpack.c.b16 %v5382, %v5376
    %5575 = vmatprep.subr.bf16.mxu0 %v5426
    %5576 = vmatpush1.bf16.msra.mxu0 %v5425
    %5577 = vmatprep.subr.bf16.mxu0 %v5420
    %5578 = vmatpush1.bf16.msra.mxu0 %v5419
    %5579 = vmatprep.subr.bf16.mxu0 %v5414
    %5580 = vmatpush1.bf16.msra.mxu0 %v5413
    %5581 = vmatprep.subr.bf16.mxu0 %v5408
    %5582 = vmatpush1.bf16.msra.mxu0 %v5407
    %5583 = vmatprep.subr.bf16.mxu0 %v5402
    %5584 = vmatpush1.bf16.msra.mxu0 %v5401
    %5585 = vmatprep.subr.bf16.mxu0 %v5396
    %5586 = vmatpush1.bf16.msra.mxu0 %v5395
    %5587 = vmatprep.subr.bf16.mxu0 %v5390
    %5588 = vmatpush1.bf16.msra.mxu0 %v5389
    %5589 = vmatprep.subr.bf16.mxu0 %v5384
    %5590 = vmatpush1.bf16.msra.mxu0 %v5383
    %5591 = vmatprep.subr.bf16.mxu0 %v5474
    %5592 = vmatpush2.bf16.msra.mxu0 %v5473
    %5593 = vmatprep.subr.bf16.mxu0 %v5468
    %5594 = vmatpush2.bf16.msra.mxu0 %v5467
    %5595 = vmatprep.subr.bf16.mxu0 %v5462
    %5596 = vmatpush2.bf16.msra.mxu0 %v5461
    %5597 = vmatprep.subr.bf16.mxu0 %v5456
    %5598 = vmatpush2.bf16.msra.mxu0 %v5455
    %5599 = vmatprep.subr.bf16.mxu0 %v5450
    %5600 = vmatpush2.bf16.msra.mxu0 %v5449
    %5601 = vmatprep.subr.bf16.mxu0 %v5444
    %5602 = vmatpush2.bf16.msra.mxu0 %v5443
    %5603 = vmatprep.subr.bf16.mxu0 %v5438
    %5604 = vmatpush2.bf16.msra.mxu0 %v5437
    %5605 = vmatprep.subr.bf16.mxu0 %v5432
    %5606 = vmatpush2.bf16.msra.mxu0 %v5431
    %5607 = vmatprep.mubr.bf16.mxu0 %v4998
    %5608 = vmatmul.mubr.bf16.gmra.mxu0 %v4997
    %v5609 = vpop.f32.mrf.mxu0
    %v5610 = vadd.f32 0.0, %v5609
    %v5611 = vpop.f32.mrf.mxu0
    %v5612 = vadd.f32 0.0, %v5611
    %v5613 = vpop.f32.mrf.mxu0
    %v5614 = vpop.f32.mrf.mxu0
    %5615 = vdwg.mxu0
    %5616 = vmatprep.subr.bf16.mxu0 %v5428
    %5617 = vmatpush1.bf16.msra.mxu0 %v5427
    %5618 = vmatprep.subr.bf16.mxu0 %v5422
    %5619 = vmatpush1.bf16.msra.mxu0 %v5421
    %5620 = vmatprep.subr.bf16.mxu0 %v5416
    %5621 = vmatpush1.bf16.msra.mxu0 %v5415
    %5622 = vmatprep.subr.bf16.mxu0 %v5410
    %5623 = vmatpush1.bf16.msra.mxu0 %v5409
    %5624 = vmatprep.subr.bf16.mxu0 %v5404
    %5625 = vmatpush1.bf16.msra.mxu0 %v5403
    %5626 = vmatprep.subr.bf16.mxu0 %v5398
    %5627 = vmatpush1.bf16.msra.mxu0 %v5397
    %5628 = vmatprep.subr.bf16.mxu0 %v5392
    %5629 = vmatpush1.bf16.msra.mxu0 %v5391
    %5630 = vmatprep.subr.bf16.mxu0 %v5386
    %5631 = vmatpush1.bf16.msra.mxu0 %v5385
    %5632 = vmatprep.subr.bf16.mxu0 %v5476
    %5633 = vmatpush2.bf16.msra.mxu0 %v5475
    %5634 = vmatprep.subr.bf16.mxu0 %v5470
    %5635 = vmatpush2.bf16.msra.mxu0 %v5469
    %5636 = vmatprep.subr.bf16.mxu0 %v5464
    %5637 = vmatpush2.bf16.msra.mxu0 %v5463
    %5638 = vmatprep.subr.bf16.mxu0 %v5458
    %5639 = vmatpush2.bf16.msra.mxu0 %v5457
    %5640 = vmatprep.subr.bf16.mxu0 %v5452
    %5641 = vmatpush2.bf16.msra.mxu0 %v5451
    %5642 = vmatprep.subr.bf16.mxu0 %v5446
    %5643 = vmatpush2.bf16.msra.mxu0 %v5445
    %5644 = vmatprep.subr.bf16.mxu0 %v5440
    %5645 = vmatpush2.bf16.msra.mxu0 %v5439
    %5646 = vmatprep.subr.bf16.mxu0 %v5434
    %5647 = vmatpush2.bf16.msra.mxu0 %v5433
    %5648 = vmatprep.mubr.bf16.mxu0 %v4998
    %5649 = vmatmul.mubr.bf16.gmra.mxu0 %v4997
    %v5650 = vpop.f32.mrf.mxu0
    %v5651 = vadd.f32 0.0, %v5650
    %v5652 = vpop.f32.mrf.mxu0
    %v5653 = vadd.f32 0.0, %v5652
    %v5654 = vpop.f32.mrf.mxu0
    %v5655 = vpop.f32.mrf.mxu0
    %5656 = vdwg.mxu0
    %5657 = vmatprep.subr.bf16.mxu0 %v5430
    %5658 = vmatpush1.bf16.msra.mxu0 %v5429
    %5659 = vmatprep.subr.bf16.mxu0 %v5424
    %5660 = vmatpush1.bf16.msra.mxu0 %v5423
    %5661 = vmatprep.subr.bf16.mxu0 %v5418
    %5662 = vmatpush1.bf16.msra.mxu0 %v5417
    %5663 = vmatprep.subr.bf16.mxu0 %v5412
    %5664 = vmatpush1.bf16.msra.mxu0 %v5411
    %5665 = vmatprep.subr.bf16.mxu0 %v5406
    %5666 = vmatpush1.bf16.msra.mxu0 %v5405
    %5667 = vmatprep.subr.bf16.mxu0 %v5400
    %5668 = vmatpush1.bf16.msra.mxu0 %v5399
    %5669 = vmatprep.subr.bf16.mxu0 %v5394
    %5670 = vmatpush1.bf16.msra.mxu0 %v5393
    %5671 = vmatprep.subr.bf16.mxu0 %v5388
    %5672 = vmatpush1.bf16.msra.mxu0 %v5387
    %5673 = vmatprep.subr.bf16.mxu0 %v5478
    %5674 = vmatpush2.bf16.msra.mxu0 %v5477
    %5675 = vmatprep.subr.bf16.mxu0 %v5472
    %5676 = vmatpush2.bf16.msra.mxu0 %v5471
    %5677 = vmatprep.subr.bf16.mxu0 %v5466
    %5678 = vmatpush2.bf16.msra.mxu0 %v5465
    %5679 = vmatprep.subr.bf16.mxu0 %v5460
    %5680 = vmatpush2.bf16.msra.mxu0 %v5459
    %5681 = vmatprep.subr.bf16.mxu0 %v5454
    %5682 = vmatpush2.bf16.msra.mxu0 %v5453
    %5683 = vmatprep.subr.bf16.mxu0 %v5448
    %5684 = vmatpush2.bf16.msra.mxu0 %v5447
    %5685 = vmatprep.subr.bf16.mxu0 %v5442
    %5686 = vmatpush2.bf16.msra.mxu0 %v5441
    %5687 = vmatprep.subr.bf16.mxu0 %v5436
    %5688 = vmatpush2.bf16.msra.mxu0 %v5435
    %5689 = vmatprep.mubr.bf16.mxu0 %v4998
    %5690 = vmatmul.mubr.bf16.gmra.mxu0 %v4997
    %v5691 = vpop.f32.mrf.mxu0
    %v5692 = vadd.f32 0.0, %v5691
    %v5693 = vpop.f32.mrf.mxu0
    %v5694 = vadd.f32 0.0, %v5693
    %v5695 = vpop.f32.mrf.mxu0
    %v5696 = vpop.f32.mrf.mxu0
    %5697 = vdwg.mxu0
    %v5700 = vcombine.low %v5610, %v5612
    %v5702 = vunpack.c.l.s4 1966171168
    %v5703 = vunpack.c.0.s8 %v5702
    %v5704 = vlaneseq
    %v5705 = vshrl.u32 %v5704, 7
    %v5706 = vsub.s32 %v5703, %v5705
    %v5707 = vrot.slane %v5700, %v5706
    %v5709 = vunpack.c.l.s4 1966171168
    %v5710 = vunpack.c.0.s8 %v5709
    %v5711 = vlaneseq
    %v5712 = vshrl.u32 %v5711, 7
    %v5713 = vsub.s32 %v5710, %v5712
    %v5714 = vrot.slane %v5707, %v5713
    %v5716 = vadd.f32 %v4985, %v5714
    %v5717 = vxor.u32 %v5716, 2147483648
    %v5718 = vmul.f32 %v5717, 1.442695
    %v5719 = vpow.pop %v5718
    %v5720 = vadd.f32 %v5719, 1.0
    %v5721 = vrcp.pop %v5720
    %v5722 = vmul.f32 1.0, %v5721
    %v5724 = vrot.slane %v4985, 2
    %v5728 = vcombine.low %v5651, %v5653
    %v5730 = vunpack.c.l.s4 1966171168
    %v5731 = vunpack.c.0.s8 %v5730
    %v5732 = vlaneseq
    %v5733 = vshrl.u32 %v5732, 7
    %v5734 = vsub.s32 %v5731, %v5733
    %v5735 = vrot.slane %v5728, %v5734
    %v5737 = vunpack.c.l.s4 1966171168
    %v5738 = vunpack.c.0.s8 %v5737
    %v5739 = vlaneseq
    %v5740 = vshrl.u32 %v5739, 7
    %v5741 = vsub.s32 %v5738, %v5740
    %v5742 = vrot.slane %v5735, %v5741
    %v5744 = vadd.f32 %v5724, %v5742
    %v5745 = vxor.u32 %v5744, 2147483648
    %v5746 = vmul.f32 %v5745, 1.442695
    %v5747 = vpow.pop %v5746
    %v5748 = vadd.f32 %v5747, 1.0
    %v5749 = vrcp.pop %v5748
    %v5750 = vmul.f32 1.0, %v5749
    %v5751 = vld [vmem:[%s5] sm:$0x3]
    %v5753 = vlaneseq
    %v5754 = vshrl.u32 %v5753, 7
    %v5755 = vsub.s32 0, %v5754
    %v5756 = vrot.slane %v5751, %v5755
    %v5757 = vlaneseq
    %v5758 = vshrl.u32 %v5757, 7
    %v5759 = vsub.s32 1, %v5758
    %v5760 = vrot.slane %v5751, %v5759
    %v5763 = vadd.f32 %v5692, %v5756
    %v5764 = vadd.f32 %v5694, %v5760
    %v5767 = vcombine.low %v5763, %v5764
    %v5769 = vunpack.c.l.s4 1966171168
    %v5770 = vunpack.c.0.s8 %v5769
    %v5771 = vlaneseq
    %v5772 = vshrl.u32 %v5771, 7
    %v5773 = vsub.s32 %v5770, %v5772
    %v5774 = vrot.slane %v5767, %v5773
    %v5776 = vunpack.c.l.s4 1966171168
    %v5777 = vunpack.c.0.s8 %v5776
    %v5778 = vlaneseq
    %v5779 = vshrl.u32 %v5778, 7
    %v5780 = vsub.s32 %v5777, %v5779
    %v5781 = vrot.slane %v5774, %v5780
    %v5783 = vmul.f32 %v5722, %v5781
    %v5784 = vrot.slane %v4985, 4
    %v5786 = vadd.f32 %v5784, %v5783
    %v5787 = vtanh.pop %v5786
    %v5788 = vsub.f32 1.0, %v5750
    %v5789 = vmul.f32 %v5788, %v5787
    %v5790 = vmul.f32 %v5750, %v4978
    %v5791 = vadd.f32 %v5789, %v5790
    %s5792 = scalar_lea.vmem [#allocation12], 5
    %5793 = vst.msk [vmem:[%s5792] ss:$8 sm:$0x3] %vm83, %v5791
    %5794 = vst.msk [vmem:[%s5792] ss:$8 sm:$0x0] %vm83, %v5791
    %s5795 = scalar_lea.vmem [#allocation3], 6
    %v5796 = vld [vmem:[%s5795] ss:$8 sm:$0xf]
    %v5797 = vld [vmem:[%s5795] ss:$8 sm:$0x30]
    %v5798 = vor.u32 %v5796, %v5797
    %v5800 = vlaneseq
    %v5801 = vshrl.u32 %v5800, 7
    %v5802 = vsub.s32 0, %v5801
    %v5803 = vrot.slane %v5791, %v5802
    %v5804 = vlaneseq
    %v5805 = vshrl.u32 %v5804, 7
    %v5806 = vsub.s32 1, %v5805
    %v5807 = vrot.slane %v5791, %v5806
    %v5810 = vpack.c.bf16 %v5803, %v5803
    %v5811 = vpack.c.bf16 %v5807, %v5807
    %v5812 = vld [vmem:[#allocation11] sm:$0xff]
    %v5813 = vld [vmem:[#allocation11 + $0x8] sm:$0xff]
    %v5814 = vld [vmem:[#allocation11 + $0x10] sm:$0xff]
    %v5815 = vld [vmem:[#allocation11 + $0x18] sm:$0xff]
    %v5816 = vld [vmem:[#allocation11 + $0x20] sm:$0xff]
    %v5817 = vld [vmem:[#allocation11 + $0x28] sm:$0xff]
    %v5818 = vld [vmem:[#allocation11 + $0x30] sm:$0xff]
    %v5819 = vld [vmem:[#allocation11 + $0x38] sm:$0xff]
    %v5820 = vld [vmem:[#allocation11 + $0x40] sm:$0xff]
    %v5821 = vld [vmem:[#allocation11 + $0x48] sm:$0xff]
    %v5822 = vld [vmem:[#allocation11 + $0x50] sm:$0xff]
    %v5823 = vld [vmem:[#allocation11 + $0x58] sm:$0xff]
    %v5824 = vld [vmem:[#allocation11 + $0x60] sm:$0xff]
    %v5825 = vld [vmem:[#allocation11 + $0x68] sm:$0xff]
    %v5826 = vld [vmem:[#allocation11 + $0x70] sm:$0xff]
    %v5827 = vld [vmem:[#allocation11 + $0x78] sm:$0xff]
    %v5828 = vld [vmem:[#allocation11 + $0x80] sm:$0xff]
    %v5829 = vld [vmem:[#allocation11 + $0x88] sm:$0xff]
    %v5830 = vld [vmem:[#allocation11 + $0x90] sm:$0xff]
    %v5831 = vld [vmem:[#allocation11 + $0x98] sm:$0xff]
    %v5832 = vld [vmem:[#allocation11 + $0xa0] sm:$0xff]
    %v5833 = vld [vmem:[#allocation11 + $0xa8] sm:$0xff]
    %v5834 = vld [vmem:[#allocation11 + $0xb0] sm:$0xff]
    %v5835 = vld [vmem:[#allocation11 + $0xb8] sm:$0xff]
    %v5836 = vld [vmem:[#allocation11 + $0xc0] sm:$0xff]
    %v5837 = vld [vmem:[#allocation11 + $0xc8] sm:$0xff]
    %v5838 = vld [vmem:[#allocation11 + $0xd0] sm:$0xff]
    %v5839 = vld [vmem:[#allocation11 + $0xd8] sm:$0xff]
    %v5840 = vld [vmem:[#allocation11 + $0xe0] sm:$0xff]
    %v5841 = vld [vmem:[#allocation11 + $0xe8] sm:$0xff]
    %v5842 = vld [vmem:[#allocation11 + $0xf0] sm:$0xff]
    %v5843 = vld [vmem:[#allocation11 + $0xf8] sm:$0xff]
    %v5844 = vld [vmem:[#allocation11 + $0x100] sm:$0xff]
    %v5845 = vld [vmem:[#allocation11 + $0x108] sm:$0xff]
    %v5846 = vld [vmem:[#allocation11 + $0x110] sm:$0xff]
    %v5847 = vld [vmem:[#allocation11 + $0x118] sm:$0xff]
    %v5848 = vld [vmem:[#allocation11 + $0x120] sm:$0xff]
    %v5849 = vld [vmem:[#allocation11 + $0x128] sm:$0xff]
    %v5850 = vld [vmem:[#allocation11 + $0x130] sm:$0xff]
    %v5851 = vld [vmem:[#allocation11 + $0x138] sm:$0xff]
    %v5852 = vld [vmem:[#allocation11 + $0x140] sm:$0xff]
    %v5853 = vld [vmem:[#allocation11 + $0x148] sm:$0xff]
    %v5854 = vld [vmem:[#allocation11 + $0x150] sm:$0xff]
    %v5855 = vld [vmem:[#allocation11 + $0x158] sm:$0xff]
    %v5856 = vld [vmem:[#allocation11 + $0x160] sm:$0xff]
    %v5857 = vld [vmem:[#allocation11 + $0x168] sm:$0xff]
    %v5858 = vld [vmem:[#allocation11 + $0x170] sm:$0xff]
    %v5859 = vld [vmem:[#allocation11 + $0x178] sm:$0xff]
    %v5860 = vld [vmem:[#allocation11 + $0x180] sm:$0xff]
    %v5861 = vld [vmem:[#allocation11 + $0x188] sm:$0xff]
    %v5862 = vld [vmem:[#allocation11 + $0x190] sm:$0xff]
    %v5863 = vld [vmem:[#allocation11 + $0x198] sm:$0xff]
    %v5864 = vld [vmem:[#allocation11 + $0x1a0] sm:$0xff]
    %v5865 = vld [vmem:[#allocation11 + $0x1a8] sm:$0xff]
    %v5866 = vld [vmem:[#allocation11 + $0x1b0] sm:$0xff]
    %v5867 = vld [vmem:[#allocation11 + $0x1b8] sm:$0xff]
    %v5868 = vld [vmem:[#allocation11 + $0x1c0] sm:$0xff]
    %v5869 = vld [vmem:[#allocation11 + $0x1c8] sm:$0xff]
    %v5870 = vld [vmem:[#allocation11 + $0x1d0] sm:$0xff]
    %v5871 = vld [vmem:[#allocation11 + $0x1d8] sm:$0xff]
    %v5872 = vld [vmem:[#allocation11 + $0x1e0] sm:$0xff]
    %v5873 = vld [vmem:[#allocation11 + $0x1e8] sm:$0xff]
    %v5874 = vld [vmem:[#allocation11 + $0x1f0] sm:$0xff]
    %v5875 = vld [vmem:[#allocation11 + $0x1f8] sm:$0xff]
    %v5876 = vld [vmem:[#allocation11 + $0x200] sm:$0xff]
    %v5877 = vld [vmem:[#allocation11 + $0x208] sm:$0xff]
    %v5878 = vld [vmem:[#allocation11 + $0x210] sm:$0xff]
    %v5879 = vld [vmem:[#allocation11 + $0x218] sm:$0xff]
    %v5880 = vld [vmem:[#allocation11 + $0x220] sm:$0xff]
    %v5881 = vld [vmem:[#allocation11 + $0x228] sm:$0xff]
    %v5882 = vld [vmem:[#allocation11 + $0x230] sm:$0xff]
    %v5883 = vld [vmem:[#allocation11 + $0x238] sm:$0xff]
    %v5884 = vld [vmem:[#allocation11 + $0x240] sm:$0xff]
    %v5885 = vld [vmem:[#allocation11 + $0x248] sm:$0xff]
    %v5886 = vld [vmem:[#allocation11 + $0x250] sm:$0xff]
    %v5887 = vld [vmem:[#allocation11 + $0x258] sm:$0xff]
    %v5888 = vld [vmem:[#allocation11 + $0x260] sm:$0xff]
    %v5889 = vld [vmem:[#allocation11 + $0x268] sm:$0xff]
    %v5890 = vld [vmem:[#allocation11 + $0x270] sm:$0xff]
    %v5891 = vld [vmem:[#allocation11 + $0x278] sm:$0xff]
    %v5892 = vld [vmem:[#allocation11 + $0x280] sm:$0xff]
    %v5893 = vld [vmem:[#allocation11 + $0x288] sm:$0xff]
    %v5894 = vld [vmem:[#allocation11 + $0x290] sm:$0xff]
    %v5895 = vld [vmem:[#allocation11 + $0x298] sm:$0xff]
    %v5896 = vld [vmem:[#allocation11 + $0x2a0] sm:$0xff]
    %v5897 = vld [vmem:[#allocation11 + $0x2a8] sm:$0xff]
    %v5898 = vld [vmem:[#allocation11 + $0x2b0] sm:$0xff]
    %v5899 = vld [vmem:[#allocation11 + $0x2b8] sm:$0xff]
    %v5900 = vld [vmem:[#allocation11 + $0x2c0] sm:$0xff]
    %v5901 = vld [vmem:[#allocation11 + $0x2c8] sm:$0xff]
    %v5902 = vld [vmem:[#allocation11 + $0x2d0] sm:$0xff]
    %v5903 = vld [vmem:[#allocation11 + $0x2d8] sm:$0xff]
    %v5904 = vld [vmem:[#allocation11 + $0x2e0] sm:$0xff]
    %v5905 = vld [vmem:[#allocation11 + $0x2e8] sm:$0xff]
    %v5906 = vld [vmem:[#allocation11 + $0x2f0] sm:$0xff]
    %v5907 = vld [vmem:[#allocation11 + $0x2f8] sm:$0xff]
    %v6004 = vunpack.c.l.b16 %v5812
    %v6005 = vunpack.c.h.b16 %v5812
    %v6006 = vunpack.c.l.b16 %v5813
    %v6007 = vunpack.c.h.b16 %v5813
    %v6008 = vunpack.c.l.b16 %v5814
    %v6009 = vunpack.c.h.b16 %v5814
    %v6010 = vunpack.c.l.b16 %v5815
    %v6011 = vunpack.c.h.b16 %v5815
    %v6012 = vunpack.c.l.b16 %v5816
    %v6013 = vunpack.c.h.b16 %v5816
    %v6014 = vunpack.c.l.b16 %v5817
    %v6015 = vunpack.c.h.b16 %v5817
    %v6016 = vunpack.c.l.b16 %v5818
    %v6017 = vunpack.c.h.b16 %v5818
    %v6018 = vunpack.c.l.b16 %v5819
    %v6019 = vunpack.c.h.b16 %v5819
    %v6020 = vunpack.c.l.b16 %v5820
    %v6021 = vunpack.c.h.b16 %v5820
    %v6022 = vunpack.c.l.b16 %v5821
    %v6023 = vunpack.c.h.b16 %v5821
    %v6024 = vunpack.c.l.b16 %v5822
    %v6025 = vunpack.c.h.b16 %v5822
    %v6026 = vunpack.c.l.b16 %v5823
    %v6027 = vunpack.c.h.b16 %v5823
    %v6028 = vunpack.c.l.b16 %v5824
    %v6029 = vunpack.c.h.b16 %v5824
    %v6030 = vunpack.c.l.b16 %v5825
    %v6031 = vunpack.c.h.b16 %v5825
    %v6032 = vunpack.c.l.b16 %v5826
    %v6033 = vunpack.c.h.b16 %v5826
    %v6034 = vunpack.c.l.b16 %v5827
    %v6035 = vunpack.c.h.b16 %v5827
    %v6036 = vunpack.c.l.b16 %v5828
    %v6037 = vunpack.c.h.b16 %v5828
    %v6038 = vunpack.c.l.b16 %v5829
    %v6039 = vunpack.c.h.b16 %v5829
    %v6040 = vunpack.c.l.b16 %v5830
    %v6041 = vunpack.c.h.b16 %v5830
    %v6042 = vunpack.c.l.b16 %v5831
    %v6043 = vunpack.c.h.b16 %v5831
    %v6044 = vunpack.c.l.b16 %v5832
    %v6045 = vunpack.c.h.b16 %v5832
    %v6046 = vunpack.c.l.b16 %v5833
    %v6047 = vunpack.c.h.b16 %v5833
    %v6048 = vunpack.c.l.b16 %v5834
    %v6049 = vunpack.c.h.b16 %v5834
    %v6050 = vunpack.c.l.b16 %v5835
    %v6051 = vunpack.c.h.b16 %v5835
    %v6052 = vunpack.c.l.b16 %v5836
    %v6053 = vunpack.c.h.b16 %v5836
    %v6054 = vunpack.c.l.b16 %v5837
    %v6055 = vunpack.c.h.b16 %v5837
    %v6056 = vunpack.c.l.b16 %v5838
    %v6057 = vunpack.c.h.b16 %v5838
    %v6058 = vunpack.c.l.b16 %v5839
    %v6059 = vunpack.c.h.b16 %v5839
    %v6060 = vunpack.c.l.b16 %v5840
    %v6061 = vunpack.c.h.b16 %v5840
    %v6062 = vunpack.c.l.b16 %v5841
    %v6063 = vunpack.c.h.b16 %v5841
    %v6064 = vunpack.c.l.b16 %v5842
    %v6065 = vunpack.c.h.b16 %v5842
    %v6066 = vunpack.c.l.b16 %v5843
    %v6067 = vunpack.c.h.b16 %v5843
    %v6068 = vunpack.c.l.b16 %v5844
    %v6069 = vunpack.c.h.b16 %v5844
    %v6070 = vunpack.c.l.b16 %v5845
    %v6071 = vunpack.c.h.b16 %v5845
    %v6072 = vunpack.c.l.b16 %v5846
    %v6073 = vunpack.c.h.b16 %v5846
    %v6074 = vunpack.c.l.b16 %v5847
    %v6075 = vunpack.c.h.b16 %v5847
    %v6076 = vunpack.c.l.b16 %v5848
    %v6077 = vunpack.c.h.b16 %v5848
    %v6078 = vunpack.c.l.b16 %v5849
    %v6079 = vunpack.c.h.b16 %v5849
    %v6080 = vunpack.c.l.b16 %v5850
    %v6081 = vunpack.c.h.b16 %v5850
    %v6082 = vunpack.c.l.b16 %v5851
    %v6083 = vunpack.c.h.b16 %v5851
    %v6084 = vunpack.c.l.b16 %v5852
    %v6085 = vunpack.c.h.b16 %v5852
    %v6086 = vunpack.c.l.b16 %v5853
    %v6087 = vunpack.c.h.b16 %v5853
    %v6088 = vunpack.c.l.b16 %v5854
    %v6089 = vunpack.c.h.b16 %v5854
    %v6090 = vunpack.c.l.b16 %v5855
    %v6091 = vunpack.c.h.b16 %v5855
    %v6092 = vunpack.c.l.b16 %v5856
    %v6093 = vunpack.c.h.b16 %v5856
    %v6094 = vunpack.c.l.b16 %v5857
    %v6095 = vunpack.c.h.b16 %v5857
    %v6096 = vunpack.c.l.b16 %v5858
    %v6097 = vunpack.c.h.b16 %v5858
    %v6098 = vunpack.c.l.b16 %v5859
    %v6099 = vunpack.c.h.b16 %v5859
    %v6100 = vunpack.c.l.b16 %v5860
    %v6101 = vunpack.c.h.b16 %v5860
    %v6102 = vunpack.c.l.b16 %v5861
    %v6103 = vunpack.c.h.b16 %v5861
    %v6104 = vunpack.c.l.b16 %v5862
    %v6105 = vunpack.c.h.b16 %v5862
    %v6106 = vunpack.c.l.b16 %v5863
    %v6107 = vunpack.c.h.b16 %v5863
    %v6108 = vunpack.c.l.b16 %v5864
    %v6109 = vunpack.c.h.b16 %v5864
    %v6110 = vunpack.c.l.b16 %v5865
    %v6111 = vunpack.c.h.b16 %v5865
    %v6112 = vunpack.c.l.b16 %v5866
    %v6113 = vunpack.c.h.b16 %v5866
    %v6114 = vunpack.c.l.b16 %v5867
    %v6115 = vunpack.c.h.b16 %v5867
    %v6116 = vunpack.c.l.b16 %v5868
    %v6117 = vunpack.c.h.b16 %v5868
    %v6118 = vunpack.c.l.b16 %v5869
    %v6119 = vunpack.c.h.b16 %v5869
    %v6120 = vunpack.c.l.b16 %v5870
    %v6121 = vunpack.c.h.b16 %v5870
    %v6122 = vunpack.c.l.b16 %v5871
    %v6123 = vunpack.c.h.b16 %v5871
    %v6124 = vunpack.c.l.b16 %v5872
    %v6125 = vunpack.c.h.b16 %v5872
    %v6126 = vunpack.c.l.b16 %v5873
    %v6127 = vunpack.c.h.b16 %v5873
    %v6128 = vunpack.c.l.b16 %v5874
    %v6129 = vunpack.c.h.b16 %v5874
    %v6130 = vunpack.c.l.b16 %v5875
    %v6131 = vunpack.c.h.b16 %v5875
    %v6132 = vunpack.c.l.b16 %v5876
    %v6133 = vunpack.c.h.b16 %v5876
    %v6134 = vunpack.c.l.b16 %v5877
    %v6135 = vunpack.c.h.b16 %v5877
    %v6136 = vunpack.c.l.b16 %v5878
    %v6137 = vunpack.c.h.b16 %v5878
    %v6138 = vunpack.c.l.b16 %v5879
    %v6139 = vunpack.c.h.b16 %v5879
    %v6140 = vunpack.c.l.b16 %v5880
    %v6141 = vunpack.c.h.b16 %v5880
    %v6142 = vunpack.c.l.b16 %v5881
    %v6143 = vunpack.c.h.b16 %v5881
    %v6144 = vunpack.c.l.b16 %v5882
    %v6145 = vunpack.c.h.b16 %v5882
    %v6146 = vunpack.c.l.b16 %v5883
    %v6147 = vunpack.c.h.b16 %v5883
    %v6148 = vunpack.c.l.b16 %v5884
    %v6149 = vunpack.c.h.b16 %v5884
    %v6150 = vunpack.c.l.b16 %v5885
    %v6151 = vunpack.c.h.b16 %v5885
    %v6152 = vunpack.c.l.b16 %v5886
    %v6153 = vunpack.c.h.b16 %v5886
    %v6154 = vunpack.c.l.b16 %v5887
    %v6155 = vunpack.c.h.b16 %v5887
    %v6156 = vunpack.c.l.b16 %v5888
    %v6157 = vunpack.c.h.b16 %v5888
    %v6158 = vunpack.c.l.b16 %v5889
    %v6159 = vunpack.c.h.b16 %v5889
    %v6160 = vunpack.c.l.b16 %v5890
    %v6161 = vunpack.c.h.b16 %v5890
    %v6162 = vunpack.c.l.b16 %v5891
    %v6163 = vunpack.c.h.b16 %v5891
    %v6164 = vunpack.c.l.b16 %v5892
    %v6165 = vunpack.c.h.b16 %v5892
    %v6166 = vunpack.c.l.b16 %v5893
    %v6167 = vunpack.c.h.b16 %v5893
    %v6168 = vunpack.c.l.b16 %v5894
    %v6169 = vunpack.c.h.b16 %v5894
    %v6170 = vunpack.c.l.b16 %v5895
    %v6171 = vunpack.c.h.b16 %v5895
    %v6172 = vunpack.c.l.b16 %v5896
    %v6173 = vunpack.c.h.b16 %v5896
    %v6174 = vunpack.c.l.b16 %v5897
    %v6175 = vunpack.c.h.b16 %v5897
    %v6176 = vunpack.c.l.b16 %v5898
    %v6177 = vunpack.c.h.b16 %v5898
    %v6178 = vunpack.c.l.b16 %v5899
    %v6179 = vunpack.c.h.b16 %v5899
    %v6180 = vunpack.c.l.b16 %v5900
    %v6181 = vunpack.c.h.b16 %v5900
    %v6182 = vunpack.c.l.b16 %v5901
    %v6183 = vunpack.c.h.b16 %v5901
    %v6184 = vunpack.c.l.b16 %v5902
    %v6185 = vunpack.c.h.b16 %v5902
    %v6186 = vunpack.c.l.b16 %v5903
    %v6187 = vunpack.c.h.b16 %v5903
    %v6188 = vunpack.c.l.b16 %v5904
    %v6189 = vunpack.c.h.b16 %v5904
    %v6190 = vunpack.c.l.b16 %v5905
    %v6191 = vunpack.c.h.b16 %v5905
    %v6192 = vunpack.c.l.b16 %v5906
    %v6193 = vunpack.c.h.b16 %v5906
    %v6194 = vunpack.c.l.b16 %v5907
    %v6195 = vunpack.c.h.b16 %v5907
    %v6196 = vpack.c.b16 %v6010, %v6004
    %v6197 = vpack.c.b16 %v6011, %v6005
    %v6198 = vpack.c.b16 %v6012, %v6006
    %v6199 = vpack.c.b16 %v6013, %v6007
    %v6200 = vpack.c.b16 %v6014, %v6008
    %v6201 = vpack.c.b16 %v6015, %v6009
    %v6202 = vpack.c.b16 %v6022, %v6016
    %v6203 = vpack.c.b16 %v6023, %v6017
    %v6204 = vpack.c.b16 %v6024, %v6018
    %v6205 = vpack.c.b16 %v6025, %v6019
    %v6206 = vpack.c.b16 %v6026, %v6020
    %v6207 = vpack.c.b16 %v6027, %v6021
    %v6208 = vpack.c.b16 %v6034, %v6028
    %v6209 = vpack.c.b16 %v6035, %v6029
    %v6210 = vpack.c.b16 %v6036, %v6030
    %v6211 = vpack.c.b16 %v6037, %v6031
    %v6212 = vpack.c.b16 %v6038, %v6032
    %v6213 = vpack.c.b16 %v6039, %v6033
    %v6214 = vpack.c.b16 %v6046, %v6040
    %v6215 = vpack.c.b16 %v6047, %v6041
    %v6216 = vpack.c.b16 %v6048, %v6042
    %v6217 = vpack.c.b16 %v6049, %v6043
    %v6218 = vpack.c.b16 %v6050, %v6044
    %v6219 = vpack.c.b16 %v6051, %v6045
    %v6220 = vpack.c.b16 %v6058, %v6052
    %v6221 = vpack.c.b16 %v6059, %v6053
    %v6222 = vpack.c.b16 %v6060, %v6054
    %v6223 = vpack.c.b16 %v6061, %v6055
    %v6224 = vpack.c.b16 %v6062, %v6056
    %v6225 = vpack.c.b16 %v6063, %v6057
    %v6226 = vpack.c.b16 %v6070, %v6064
    %v6227 = vpack.c.b16 %v6071, %v6065
    %v6228 = vpack.c.b16 %v6072, %v6066
    %v6229 = vpack.c.b16 %v6073, %v6067
    %v6230 = vpack.c.b16 %v6074, %v6068
    %v6231 = vpack.c.b16 %v6075, %v6069
    %v6232 = vpack.c.b16 %v6082, %v6076
    %v6233 = vpack.c.b16 %v6083, %v6077
    %v6234 = vpack.c.b16 %v6084, %v6078
    %v6235 = vpack.c.b16 %v6085, %v6079
    %v6236 = vpack.c.b16 %v6086, %v6080
    %v6237 = vpack.c.b16 %v6087, %v6081
    %v6238 = vpack.c.b16 %v6094, %v6088
    %v6239 = vpack.c.b16 %v6095, %v6089
    %v6240 = vpack.c.b16 %v6096, %v6090
    %v6241 = vpack.c.b16 %v6097, %v6091
    %v6242 = vpack.c.b16 %v6098, %v6092
    %v6243 = vpack.c.b16 %v6099, %v6093
    %v6244 = vpack.c.b16 %v6106, %v6100
    %v6245 = vpack.c.b16 %v6107, %v6101
    %v6246 = vpack.c.b16 %v6108, %v6102
    %v6247 = vpack.c.b16 %v6109, %v6103
    %v6248 = vpack.c.b16 %v6110, %v6104
    %v6249 = vpack.c.b16 %v6111, %v6105
    %v6250 = vpack.c.b16 %v6118, %v6112
    %v6251 = vpack.c.b16 %v6119, %v6113
    %v6252 = vpack.c.b16 %v6120, %v6114
    %v6253 = vpack.c.b16 %v6121, %v6115
    %v6254 = vpack.c.b16 %v6122, %v6116
    %v6255 = vpack.c.b16 %v6123, %v6117
    %v6256 = vpack.c.b16 %v6130, %v6124
    %v6257 = vpack.c.b16 %v6131, %v6125
    %v6258 = vpack.c.b16 %v6132, %v6126
    %v6259 = vpack.c.b16 %v6133, %v6127
    %v6260 = vpack.c.b16 %v6134, %v6128
    %v6261 = vpack.c.b16 %v6135, %v6129
    %v6262 = vpack.c.b16 %v6142, %v6136
    %v6263 = vpack.c.b16 %v6143, %v6137
    %v6264 = vpack.c.b16 %v6144, %v6138
    %v6265 = vpack.c.b16 %v6145, %v6139
    %v6266 = vpack.c.b16 %v6146, %v6140
    %v6267 = vpack.c.b16 %v6147, %v6141
    %v6268 = vpack.c.b16 %v6154, %v6148
    %v6269 = vpack.c.b16 %v6155, %v6149
    %v6270 = vpack.c.b16 %v6156, %v6150
    %v6271 = vpack.c.b16 %v6157, %v6151
    %v6272 = vpack.c.b16 %v6158, %v6152
    %v6273 = vpack.c.b16 %v6159, %v6153
    %v6274 = vpack.c.b16 %v6166, %v6160
    %v6275 = vpack.c.b16 %v6167, %v6161
    %v6276 = vpack.c.b16 %v6168, %v6162
    %v6277 = vpack.c.b16 %v6169, %v6163
    %v6278 = vpack.c.b16 %v6170, %v6164
    %v6279 = vpack.c.b16 %v6171, %v6165
    %v6280 = vpack.c.b16 %v6178, %v6172
    %v6281 = vpack.c.b16 %v6179, %v6173
    %v6282 = vpack.c.b16 %v6180, %v6174
    %v6283 = vpack.c.b16 %v6181, %v6175
    %v6284 = vpack.c.b16 %v6182, %v6176
    %v6285 = vpack.c.b16 %v6183, %v6177
    %v6286 = vpack.c.b16 %v6190, %v6184
    %v6287 = vpack.c.b16 %v6191, %v6185
    %v6288 = vpack.c.b16 %v6192, %v6186
    %v6289 = vpack.c.b16 %v6193, %v6187
    %v6290 = vpack.c.b16 %v6194, %v6188
    %v6291 = vpack.c.b16 %v6195, %v6189
    %6388 = vmatprep.subr.bf16.mxu0 %v6239
    %6389 = vmatpush1.bf16.msra.mxu0 %v6238
    %6390 = vmatprep.subr.bf16.mxu0 %v6233
    %6391 = vmatpush1.bf16.msra.mxu0 %v6232
    %6392 = vmatprep.subr.bf16.mxu0 %v6227
    %6393 = vmatpush1.bf16.msra.mxu0 %v6226
    %6394 = vmatprep.subr.bf16.mxu0 %v6221
    %6395 = vmatpush1.bf16.msra.mxu0 %v6220
    %6396 = vmatprep.subr.bf16.mxu0 %v6215
    %6397 = vmatpush1.bf16.msra.mxu0 %v6214
    %6398 = vmatprep.subr.bf16.mxu0 %v6209
    %6399 = vmatpush1.bf16.msra.mxu0 %v6208
    %6400 = vmatprep.subr.bf16.mxu0 %v6203
    %6401 = vmatpush1.bf16.msra.mxu0 %v6202
    %6402 = vmatprep.subr.bf16.mxu0 %v6197
    %6403 = vmatpush1.bf16.msra.mxu0 %v6196
    %6404 = vmatprep.subr.bf16.mxu0 %v6287
    %6405 = vmatpush2.bf16.msra.mxu0 %v6286
    %6406 = vmatprep.subr.bf16.mxu0 %v6281
    %6407 = vmatpush2.bf16.msra.mxu0 %v6280
    %6408 = vmatprep.subr.bf16.mxu0 %v6275
    %6409 = vmatpush2.bf16.msra.mxu0 %v6274
    %6410 = vmatprep.subr.bf16.mxu0 %v6269
    %6411 = vmatpush2.bf16.msra.mxu0 %v6268
    %6412 = vmatprep.subr.bf16.mxu0 %v6263
    %6413 = vmatpush2.bf16.msra.mxu0 %v6262
    %6414 = vmatprep.subr.bf16.mxu0 %v6257
    %6415 = vmatpush2.bf16.msra.mxu0 %v6256
    %6416 = vmatprep.subr.bf16.mxu0 %v6251
    %6417 = vmatpush2.bf16.msra.mxu0 %v6250
    %6418 = vmatprep.subr.bf16.mxu0 %v6245
    %6419 = vmatpush2.bf16.msra.mxu0 %v6244
    %6420 = vmatprep.mubr.bf16.mxu0 %v5811
    %6421 = vmatmul.mubr.bf16.gmra.mxu0 %v5810
    %v6422 = vpop.f32.mrf.mxu0
    %v6423 = vadd.f32 0.0, %v6422
    %v6424 = vpop.f32.mrf.mxu0
    %v6425 = vadd.f32 0.0, %v6424
    %v6426 = vpop.f32.mrf.mxu0
    %v6427 = vpop.f32.mrf.mxu0
    %6428 = vdwg.mxu0
    %6429 = vmatprep.subr.bf16.mxu0 %v6241
    %6430 = vmatpush1.bf16.msra.mxu0 %v6240
    %6431 = vmatprep.subr.bf16.mxu0 %v6235
    %6432 = vmatpush1.bf16.msra.mxu0 %v6234
    %6433 = vmatprep.subr.bf16.mxu0 %v6229
    %6434 = vmatpush1.bf16.msra.mxu0 %v6228
    %6435 = vmatprep.subr.bf16.mxu0 %v6223
    %6436 = vmatpush1.bf16.msra.mxu0 %v6222
    %6437 = vmatprep.subr.bf16.mxu0 %v6217
    %6438 = vmatpush1.bf16.msra.mxu0 %v6216
    %6439 = vmatprep.subr.bf16.mxu0 %v6211
    %6440 = vmatpush1.bf16.msra.mxu0 %v6210
    %6441 = vmatprep.subr.bf16.mxu0 %v6205
    %6442 = vmatpush1.bf16.msra.mxu0 %v6204
    %6443 = vmatprep.subr.bf16.mxu0 %v6199
    %6444 = vmatpush1.bf16.msra.mxu0 %v6198
    %6445 = vmatprep.subr.bf16.mxu0 %v6289
    %6446 = vmatpush2.bf16.msra.mxu0 %v6288
    %6447 = vmatprep.subr.bf16.mxu0 %v6283
    %6448 = vmatpush2.bf16.msra.mxu0 %v6282
    %6449 = vmatprep.subr.bf16.mxu0 %v6277
    %6450 = vmatpush2.bf16.msra.mxu0 %v6276
    %6451 = vmatprep.subr.bf16.mxu0 %v6271
    %6452 = vmatpush2.bf16.msra.mxu0 %v6270
    %6453 = vmatprep.subr.bf16.mxu0 %v6265
    %6454 = vmatpush2.bf16.msra.mxu0 %v6264
    %6455 = vmatprep.subr.bf16.mxu0 %v6259
    %6456 = vmatpush2.bf16.msra.mxu0 %v6258
    %6457 = vmatprep.subr.bf16.mxu0 %v6253
    %6458 = vmatpush2.bf16.msra.mxu0 %v6252
    %6459 = vmatprep.subr.bf16.mxu0 %v6247
    %6460 = vmatpush2.bf16.msra.mxu0 %v6246
    %6461 = vmatprep.mubr.bf16.mxu0 %v5811
    %6462 = vmatmul.mubr.bf16.gmra.mxu0 %v5810
    %v6463 = vpop.f32.mrf.mxu0
    %v6464 = vadd.f32 0.0, %v6463
    %v6465 = vpop.f32.mrf.mxu0
    %v6466 = vadd.f32 0.0, %v6465
    %v6467 = vpop.f32.mrf.mxu0
    %v6468 = vpop.f32.mrf.mxu0
    %6469 = vdwg.mxu0
    %6470 = vmatprep.subr.bf16.mxu0 %v6243
    %6471 = vmatpush1.bf16.msra.mxu0 %v6242
    %6472 = vmatprep.subr.bf16.mxu0 %v6237
    %6473 = vmatpush1.bf16.msra.mxu0 %v6236
    %6474 = vmatprep.subr.bf16.mxu0 %v6231
    %6475 = vmatpush1.bf16.msra.mxu0 %v6230
    %6476 = vmatprep.subr.bf16.mxu0 %v6225
    %6477 = vmatpush1.bf16.msra.mxu0 %v6224
    %6478 = vmatprep.subr.bf16.mxu0 %v6219
    %6479 = vmatpush1.bf16.msra.mxu0 %v6218
    %6480 = vmatprep.subr.bf16.mxu0 %v6213
    %6481 = vmatpush1.bf16.msra.mxu0 %v6212
    %6482 = vmatprep.subr.bf16.mxu0 %v6207
    %6483 = vmatpush1.bf16.msra.mxu0 %v6206
    %6484 = vmatprep.subr.bf16.mxu0 %v6201
    %6485 = vmatpush1.bf16.msra.mxu0 %v6200
    %6486 = vmatprep.subr.bf16.mxu0 %v6291
    %6487 = vmatpush2.bf16.msra.mxu0 %v6290
    %6488 = vmatprep.subr.bf16.mxu0 %v6285
    %6489 = vmatpush2.bf16.msra.mxu0 %v6284
    %6490 = vmatprep.subr.bf16.mxu0 %v6279
    %6491 = vmatpush2.bf16.msra.mxu0 %v6278
    %6492 = vmatprep.subr.bf16.mxu0 %v6273
    %6493 = vmatpush2.bf16.msra.mxu0 %v6272
    %6494 = vmatprep.subr.bf16.mxu0 %v6267
    %6495 = vmatpush2.bf16.msra.mxu0 %v6266
    %6496 = vmatprep.subr.bf16.mxu0 %v6261
    %6497 = vmatpush2.bf16.msra.mxu0 %v6260
    %6498 = vmatprep.subr.bf16.mxu0 %v6255
    %6499 = vmatpush2.bf16.msra.mxu0 %v6254
    %6500 = vmatprep.subr.bf16.mxu0 %v6249
    %6501 = vmatpush2.bf16.msra.mxu0 %v6248
    %6502 = vmatprep.mubr.bf16.mxu0 %v5811
    %6503 = vmatmul.mubr.bf16.gmra.mxu0 %v5810
    %v6504 = vpop.f32.mrf.mxu0
    %v6505 = vadd.f32 0.0, %v6504
    %v6506 = vpop.f32.mrf.mxu0
    %v6507 = vadd.f32 0.0, %v6506
    %v6508 = vpop.f32.mrf.mxu0
    %v6509 = vpop.f32.mrf.mxu0
    %6510 = vdwg.mxu0
    %v6513 = vcombine.low %v6423, %v6425
    %v6515 = vunpack.c.l.s4 1966171168
    %v6516 = vunpack.c.0.s8 %v6515
    %v6517 = vlaneseq
    %v6518 = vshrl.u32 %v6517, 7
    %v6519 = vsub.s32 %v6516, %v6518
    %v6520 = vrot.slane %v6513, %v6519
    %v6522 = vunpack.c.l.s4 1966171168
    %v6523 = vunpack.c.0.s8 %v6522
    %v6524 = vlaneseq
    %v6525 = vshrl.u32 %v6524, 7
    %v6526 = vsub.s32 %v6523, %v6525
    %v6527 = vrot.slane %v6520, %v6526
    %v6529 = vadd.f32 %v5798, %v6527
    %v6530 = vxor.u32 %v6529, 2147483648
    %v6531 = vmul.f32 %v6530, 1.442695
    %v6532 = vpow.pop %v6531
    %v6533 = vadd.f32 %v6532, 1.0
    %v6534 = vrcp.pop %v6533
    %v6535 = vmul.f32 1.0, %v6534
    %v6537 = vrot.slane %v5798, 2
    %v6541 = vcombine.low %v6464, %v6466
    %v6543 = vunpack.c.l.s4 1966171168
    %v6544 = vunpack.c.0.s8 %v6543
    %v6545 = vlaneseq
    %v6546 = vshrl.u32 %v6545, 7
    %v6547 = vsub.s32 %v6544, %v6546
    %v6548 = vrot.slane %v6541, %v6547
    %v6550 = vunpack.c.l.s4 1966171168
    %v6551 = vunpack.c.0.s8 %v6550
    %v6552 = vlaneseq
    %v6553 = vshrl.u32 %v6552, 7
    %v6554 = vsub.s32 %v6551, %v6553
    %v6555 = vrot.slane %v6548, %v6554
    %v6557 = vadd.f32 %v6537, %v6555
    %v6558 = vxor.u32 %v6557, 2147483648
    %v6559 = vmul.f32 %v6558, 1.442695
    %v6560 = vpow.pop %v6559
    %v6561 = vadd.f32 %v6560, 1.0
    %v6562 = vrcp.pop %v6561
    %v6563 = vmul.f32 1.0, %v6562
    %v6564 = vld [vmem:[%s5] sm:$0x3]
    %v6566 = vlaneseq
    %v6567 = vshrl.u32 %v6566, 7
    %v6568 = vsub.s32 0, %v6567
    %v6569 = vrot.slane %v6564, %v6568
    %v6570 = vlaneseq
    %v6571 = vshrl.u32 %v6570, 7
    %v6572 = vsub.s32 1, %v6571
    %v6573 = vrot.slane %v6564, %v6572
    %v6576 = vadd.f32 %v6505, %v6569
    %v6577 = vadd.f32 %v6507, %v6573
    %v6580 = vcombine.low %v6576, %v6577
    %v6582 = vunpack.c.l.s4 1966171168
    %v6583 = vunpack.c.0.s8 %v6582
    %v6584 = vlaneseq
    %v6585 = vshrl.u32 %v6584, 7
    %v6586 = vsub.s32 %v6583, %v6585
    %v6587 = vrot.slane %v6580, %v6586
    %v6589 = vunpack.c.l.s4 1966171168
    %v6590 = vunpack.c.0.s8 %v6589
    %v6591 = vlaneseq
    %v6592 = vshrl.u32 %v6591, 7
    %v6593 = vsub.s32 %v6590, %v6592
    %v6594 = vrot.slane %v6587, %v6593
    %v6596 = vmul.f32 %v6535, %v6594
    %v6597 = vrot.slane %v5798, 4
    %v6599 = vadd.f32 %v6597, %v6596
    %v6600 = vtanh.pop %v6599
    %v6601 = vsub.f32 1.0, %v6563
    %v6602 = vmul.f32 %v6601, %v6600
    %v6603 = vmul.f32 %v6563, %v5791
    %v6604 = vadd.f32 %v6602, %v6603
    %s6605 = scalar_lea.vmem [#allocation12], 6
    %6606 = vst.msk [vmem:[%s6605] ss:$8 sm:$0x3] %vm83, %v6604
    %6607 = vst.msk [vmem:[%s6605] ss:$8 sm:$0x0] %vm83, %v6604
    %s6608 = scalar_lea.vmem [#allocation3], 7
    %v6609 = vld [vmem:[%s6608] ss:$8 sm:$0xf]
    %v6610 = vld [vmem:[%s6608] ss:$8 sm:$0x30]
    %v6611 = vor.u32 %v6609, %v6610
    %v6613 = vlaneseq
    %v6614 = vshrl.u32 %v6613, 7
    %v6615 = vsub.s32 0, %v6614
    %v6616 = vrot.slane %v6604, %v6615
    %v6617 = vlaneseq
    %v6618 = vshrl.u32 %v6617, 7
    %v6619 = vsub.s32 1, %v6618
    %v6620 = vrot.slane %v6604, %v6619
    %v6623 = vpack.c.bf16 %v6616, %v6616
    %v6624 = vpack.c.bf16 %v6620, %v6620
    %v6625 = vld [vmem:[#allocation11] sm:$0xff]
    %v6626 = vld [vmem:[#allocation11 + $0x8] sm:$0xff]
    %v6627 = vld [vmem:[#allocation11 + $0x10] sm:$0xff]
    %v6628 = vld [vmem:[#allocation11 + $0x18] sm:$0xff]
    %v6629 = vld [vmem:[#allocation11 + $0x20] sm:$0xff]
    %v6630 = vld [vmem:[#allocation11 + $0x28] sm:$0xff]
    %v6631 = vld [vmem:[#allocation11 + $0x30] sm:$0xff]
    %v6632 = vld [vmem:[#allocation11 + $0x38] sm:$0xff]
    %v6633 = vld [vmem:[#allocation11 + $0x40] sm:$0xff]
    %v6634 = vld [vmem:[#allocation11 + $0x48] sm:$0xff]
    %v6635 = vld [vmem:[#allocation11 + $0x50] sm:$0xff]
    %v6636 = vld [vmem:[#allocation11 + $0x58] sm:$0xff]
    %v6637 = vld [vmem:[#allocation11 + $0x60] sm:$0xff]
    %v6638 = vld [vmem:[#allocation11 + $0x68] sm:$0xff]
    %v6639 = vld [vmem:[#allocation11 + $0x70] sm:$0xff]
    %v6640 = vld [vmem:[#allocation11 + $0x78] sm:$0xff]
    %v6641 = vld [vmem:[#allocation11 + $0x80] sm:$0xff]
    %v6642 = vld [vmem:[#allocation11 + $0x88] sm:$0xff]
    %v6643 = vld [vmem:[#allocation11 + $0x90] sm:$0xff]
    %v6644 = vld [vmem:[#allocation11 + $0x98] sm:$0xff]
    %v6645 = vld [vmem:[#allocation11 + $0xa0] sm:$0xff]
    %v6646 = vld [vmem:[#allocation11 + $0xa8] sm:$0xff]
    %v6647 = vld [vmem:[#allocation11 + $0xb0] sm:$0xff]
    %v6648 = vld [vmem:[#allocation11 + $0xb8] sm:$0xff]
    %v6649 = vld [vmem:[#allocation11 + $0xc0] sm:$0xff]
    %v6650 = vld [vmem:[#allocation11 + $0xc8] sm:$0xff]
    %v6651 = vld [vmem:[#allocation11 + $0xd0] sm:$0xff]
    %v6652 = vld [vmem:[#allocation11 + $0xd8] sm:$0xff]
    %v6653 = vld [vmem:[#allocation11 + $0xe0] sm:$0xff]
    %v6654 = vld [vmem:[#allocation11 + $0xe8] sm:$0xff]
    %v6655 = vld [vmem:[#allocation11 + $0xf0] sm:$0xff]
    %v6656 = vld [vmem:[#allocation11 + $0xf8] sm:$0xff]
    %v6657 = vld [vmem:[#allocation11 + $0x100] sm:$0xff]
    %v6658 = vld [vmem:[#allocation11 + $0x108] sm:$0xff]
    %v6659 = vld [vmem:[#allocation11 + $0x110] sm:$0xff]
    %v6660 = vld [vmem:[#allocation11 + $0x118] sm:$0xff]
    %v6661 = vld [vmem:[#allocation11 + $0x120] sm:$0xff]
    %v6662 = vld [vmem:[#allocation11 + $0x128] sm:$0xff]
    %v6663 = vld [vmem:[#allocation11 + $0x130] sm:$0xff]
    %v6664 = vld [vmem:[#allocation11 + $0x138] sm:$0xff]
    %v6665 = vld [vmem:[#allocation11 + $0x140] sm:$0xff]
    %v6666 = vld [vmem:[#allocation11 + $0x148] sm:$0xff]
    %v6667 = vld [vmem:[#allocation11 + $0x150] sm:$0xff]
    %v6668 = vld [vmem:[#allocation11 + $0x158] sm:$0xff]
    %v6669 = vld [vmem:[#allocation11 + $0x160] sm:$0xff]
    %v6670 = vld [vmem:[#allocation11 + $0x168] sm:$0xff]
    %v6671 = vld [vmem:[#allocation11 + $0x170] sm:$0xff]
    %v6672 = vld [vmem:[#allocation11 + $0x178] sm:$0xff]
    %v6673 = vld [vmem:[#allocation11 + $0x180] sm:$0xff]
    %v6674 = vld [vmem:[#allocation11 + $0x188] sm:$0xff]
    %v6675 = vld [vmem:[#allocation11 + $0x190] sm:$0xff]
    %v6676 = vld [vmem:[#allocation11 + $0x198] sm:$0xff]
    %v6677 = vld [vmem:[#allocation11 + $0x1a0] sm:$0xff]
    %v6678 = vld [vmem:[#allocation11 + $0x1a8] sm:$0xff]
    %v6679 = vld [vmem:[#allocation11 + $0x1b0] sm:$0xff]
    %v6680 = vld [vmem:[#allocation11 + $0x1b8] sm:$0xff]
    %v6681 = vld [vmem:[#allocation11 + $0x1c0] sm:$0xff]
    %v6682 = vld [vmem:[#allocation11 + $0x1c8] sm:$0xff]
    %v6683 = vld [vmem:[#allocation11 + $0x1d0] sm:$0xff]
    %v6684 = vld [vmem:[#allocation11 + $0x1d8] sm:$0xff]
    %v6685 = vld [vmem:[#allocation11 + $0x1e0] sm:$0xff]
    %v6686 = vld [vmem:[#allocation11 + $0x1e8] sm:$0xff]
    %v6687 = vld [vmem:[#allocation11 + $0x1f0] sm:$0xff]
    %v6688 = vld [vmem:[#allocation11 + $0x1f8] sm:$0xff]
    %v6689 = vld [vmem:[#allocation11 + $0x200] sm:$0xff]
    %v6690 = vld [vmem:[#allocation11 + $0x208] sm:$0xff]
    %v6691 = vld [vmem:[#allocation11 + $0x210] sm:$0xff]
    %v6692 = vld [vmem:[#allocation11 + $0x218] sm:$0xff]
    %v6693 = vld [vmem:[#allocation11 + $0x220] sm:$0xff]
    %v6694 = vld [vmem:[#allocation11 + $0x228] sm:$0xff]
    %v6695 = vld [vmem:[#allocation11 + $0x230] sm:$0xff]
    %v6696 = vld [vmem:[#allocation11 + $0x238] sm:$0xff]
    %v6697 = vld [vmem:[#allocation11 + $0x240] sm:$0xff]
    %v6698 = vld [vmem:[#allocation11 + $0x248] sm:$0xff]
    %v6699 = vld [vmem:[#allocation11 + $0x250] sm:$0xff]
    %v6700 = vld [vmem:[#allocation11 + $0x258] sm:$0xff]
    %v6701 = vld [vmem:[#allocation11 + $0x260] sm:$0xff]
    %v6702 = vld [vmem:[#allocation11 + $0x268] sm:$0xff]
    %v6703 = vld [vmem:[#allocation11 + $0x270] sm:$0xff]
    %v6704 = vld [vmem:[#allocation11 + $0x278] sm:$0xff]
    %v6705 = vld [vmem:[#allocation11 + $0x280] sm:$0xff]
    %v6706 = vld [vmem:[#allocation11 + $0x288] sm:$0xff]
    %v6707 = vld [vmem:[#allocation11 + $0x290] sm:$0xff]
    %v6708 = vld [vmem:[#allocation11 + $0x298] sm:$0xff]
    %v6709 = vld [vmem:[#allocation11 + $0x2a0] sm:$0xff]
    %v6710 = vld [vmem:[#allocation11 + $0x2a8] sm:$0xff]
    %v6711 = vld [vmem:[#allocation11 + $0x2b0] sm:$0xff]
    %v6712 = vld [vmem:[#allocation11 + $0x2b8] sm:$0xff]
    %v6713 = vld [vmem:[#allocation11 + $0x2c0] sm:$0xff]
    %v6714 = vld [vmem:[#allocation11 + $0x2c8] sm:$0xff]
    %v6715 = vld [vmem:[#allocation11 + $0x2d0] sm:$0xff]
    %v6716 = vld [vmem:[#allocation11 + $0x2d8] sm:$0xff]
    %v6717 = vld [vmem:[#allocation11 + $0x2e0] sm:$0xff]
    %v6718 = vld [vmem:[#allocation11 + $0x2e8] sm:$0xff]
    %v6719 = vld [vmem:[#allocation11 + $0x2f0] sm:$0xff]
    %v6720 = vld [vmem:[#allocation11 + $0x2f8] sm:$0xff]
    %v6817 = vunpack.c.l.b16 %v6625
    %v6818 = vunpack.c.h.b16 %v6625
    %v6819 = vunpack.c.l.b16 %v6626
    %v6820 = vunpack.c.h.b16 %v6626
    %v6821 = vunpack.c.l.b16 %v6627
    %v6822 = vunpack.c.h.b16 %v6627
    %v6823 = vunpack.c.l.b16 %v6628
    %v6824 = vunpack.c.h.b16 %v6628
    %v6825 = vunpack.c.l.b16 %v6629
    %v6826 = vunpack.c.h.b16 %v6629
    %v6827 = vunpack.c.l.b16 %v6630
    %v6828 = vunpack.c.h.b16 %v6630
    %v6829 = vunpack.c.l.b16 %v6631
    %v6830 = vunpack.c.h.b16 %v6631
    %v6831 = vunpack.c.l.b16 %v6632
    %v6832 = vunpack.c.h.b16 %v6632
    %v6833 = vunpack.c.l.b16 %v6633
    %v6834 = vunpack.c.h.b16 %v6633
    %v6835 = vunpack.c.l.b16 %v6634
    %v6836 = vunpack.c.h.b16 %v6634
    %v6837 = vunpack.c.l.b16 %v6635
    %v6838 = vunpack.c.h.b16 %v6635
    %v6839 = vunpack.c.l.b16 %v6636
    %v6840 = vunpack.c.h.b16 %v6636
    %v6841 = vunpack.c.l.b16 %v6637
    %v6842 = vunpack.c.h.b16 %v6637
    %v6843 = vunpack.c.l.b16 %v6638
    %v6844 = vunpack.c.h.b16 %v6638
    %v6845 = vunpack.c.l.b16 %v6639
    %v6846 = vunpack.c.h.b16 %v6639
    %v6847 = vunpack.c.l.b16 %v6640
    %v6848 = vunpack.c.h.b16 %v6640
    %v6849 = vunpack.c.l.b16 %v6641
    %v6850 = vunpack.c.h.b16 %v6641
    %v6851 = vunpack.c.l.b16 %v6642
    %v6852 = vunpack.c.h.b16 %v6642
    %v6853 = vunpack.c.l.b16 %v6643
    %v6854 = vunpack.c.h.b16 %v6643
    %v6855 = vunpack.c.l.b16 %v6644
    %v6856 = vunpack.c.h.b16 %v6644
    %v6857 = vunpack.c.l.b16 %v6645
    %v6858 = vunpack.c.h.b16 %v6645
    %v6859 = vunpack.c.l.b16 %v6646
    %v6860 = vunpack.c.h.b16 %v6646
    %v6861 = vunpack.c.l.b16 %v6647
    %v6862 = vunpack.c.h.b16 %v6647
    %v6863 = vunpack.c.l.b16 %v6648
    %v6864 = vunpack.c.h.b16 %v6648
    %v6865 = vunpack.c.l.b16 %v6649
    %v6866 = vunpack.c.h.b16 %v6649
    %v6867 = vunpack.c.l.b16 %v6650
    %v6868 = vunpack.c.h.b16 %v6650
    %v6869 = vunpack.c.l.b16 %v6651
    %v6870 = vunpack.c.h.b16 %v6651
    %v6871 = vunpack.c.l.b16 %v6652
    %v6872 = vunpack.c.h.b16 %v6652
    %v6873 = vunpack.c.l.b16 %v6653
    %v6874 = vunpack.c.h.b16 %v6653
    %v6875 = vunpack.c.l.b16 %v6654
    %v6876 = vunpack.c.h.b16 %v6654
    %v6877 = vunpack.c.l.b16 %v6655
    %v6878 = vunpack.c.h.b16 %v6655
    %v6879 = vunpack.c.l.b16 %v6656
    %v6880 = vunpack.c.h.b16 %v6656
    %v6881 = vunpack.c.l.b16 %v6657
    %v6882 = vunpack.c.h.b16 %v6657
    %v6883 = vunpack.c.l.b16 %v6658
    %v6884 = vunpack.c.h.b16 %v6658
    %v6885 = vunpack.c.l.b16 %v6659
    %v6886 = vunpack.c.h.b16 %v6659
    %v6887 = vunpack.c.l.b16 %v6660
    %v6888 = vunpack.c.h.b16 %v6660
    %v6889 = vunpack.c.l.b16 %v6661
    %v6890 = vunpack.c.h.b16 %v6661
    %v6891 = vunpack.c.l.b16 %v6662
    %v6892 = vunpack.c.h.b16 %v6662
    %v6893 = vunpack.c.l.b16 %v6663
    %v6894 = vunpack.c.h.b16 %v6663
    %v6895 = vunpack.c.l.b16 %v6664
    %v6896 = vunpack.c.h.b16 %v6664
    %v6897 = vunpack.c.l.b16 %v6665
    %v6898 = vunpack.c.h.b16 %v6665
    %v6899 = vunpack.c.l.b16 %v6666
    %v6900 = vunpack.c.h.b16 %v6666
    %v6901 = vunpack.c.l.b16 %v6667
    %v6902 = vunpack.c.h.b16 %v6667
    %v6903 = vunpack.c.l.b16 %v6668
    %v6904 = vunpack.c.h.b16 %v6668
    %v6905 = vunpack.c.l.b16 %v6669
    %v6906 = vunpack.c.h.b16 %v6669
    %v6907 = vunpack.c.l.b16 %v6670
    %v6908 = vunpack.c.h.b16 %v6670
    %v6909 = vunpack.c.l.b16 %v6671
    %v6910 = vunpack.c.h.b16 %v6671
    %v6911 = vunpack.c.l.b16 %v6672
    %v6912 = vunpack.c.h.b16 %v6672
    %v6913 = vunpack.c.l.b16 %v6673
    %v6914 = vunpack.c.h.b16 %v6673
    %v6915 = vunpack.c.l.b16 %v6674
    %v6916 = vunpack.c.h.b16 %v6674
    %v6917 = vunpack.c.l.b16 %v6675
    %v6918 = vunpack.c.h.b16 %v6675
    %v6919 = vunpack.c.l.b16 %v6676
    %v6920 = vunpack.c.h.b16 %v6676
    %v6921 = vunpack.c.l.b16 %v6677
    %v6922 = vunpack.c.h.b16 %v6677
    %v6923 = vunpack.c.l.b16 %v6678
    %v6924 = vunpack.c.h.b16 %v6678
    %v6925 = vunpack.c.l.b16 %v6679
    %v6926 = vunpack.c.h.b16 %v6679
    %v6927 = vunpack.c.l.b16 %v6680
    %v6928 = vunpack.c.h.b16 %v6680
    %v6929 = vunpack.c.l.b16 %v6681
    %v6930 = vunpack.c.h.b16 %v6681
    %v6931 = vunpack.c.l.b16 %v6682
    %v6932 = vunpack.c.h.b16 %v6682
    %v6933 = vunpack.c.l.b16 %v6683
    %v6934 = vunpack.c.h.b16 %v6683
    %v6935 = vunpack.c.l.b16 %v6684
    %v6936 = vunpack.c.h.b16 %v6684
    %v6937 = vunpack.c.l.b16 %v6685
    %v6938 = vunpack.c.h.b16 %v6685
    %v6939 = vunpack.c.l.b16 %v6686
    %v6940 = vunpack.c.h.b16 %v6686
    %v6941 = vunpack.c.l.b16 %v6687
    %v6942 = vunpack.c.h.b16 %v6687
    %v6943 = vunpack.c.l.b16 %v6688
    %v6944 = vunpack.c.h.b16 %v6688
    %v6945 = vunpack.c.l.b16 %v6689
    %v6946 = vunpack.c.h.b16 %v6689
    %v6947 = vunpack.c.l.b16 %v6690
    %v6948 = vunpack.c.h.b16 %v6690
    %v6949 = vunpack.c.l.b16 %v6691
    %v6950 = vunpack.c.h.b16 %v6691
    %v6951 = vunpack.c.l.b16 %v6692
    %v6952 = vunpack.c.h.b16 %v6692
    %v6953 = vunpack.c.l.b16 %v6693
    %v6954 = vunpack.c.h.b16 %v6693
    %v6955 = vunpack.c.l.b16 %v6694
    %v6956 = vunpack.c.h.b16 %v6694
    %v6957 = vunpack.c.l.b16 %v6695
    %v6958 = vunpack.c.h.b16 %v6695
    %v6959 = vunpack.c.l.b16 %v6696
    %v6960 = vunpack.c.h.b16 %v6696
    %v6961 = vunpack.c.l.b16 %v6697
    %v6962 = vunpack.c.h.b16 %v6697
    %v6963 = vunpack.c.l.b16 %v6698
    %v6964 = vunpack.c.h.b16 %v6698
    %v6965 = vunpack.c.l.b16 %v6699
    %v6966 = vunpack.c.h.b16 %v6699
    %v6967 = vunpack.c.l.b16 %v6700
    %v6968 = vunpack.c.h.b16 %v6700
    %v6969 = vunpack.c.l.b16 %v6701
    %v6970 = vunpack.c.h.b16 %v6701
    %v6971 = vunpack.c.l.b16 %v6702
    %v6972 = vunpack.c.h.b16 %v6702
    %v6973 = vunpack.c.l.b16 %v6703
    %v6974 = vunpack.c.h.b16 %v6703
    %v6975 = vunpack.c.l.b16 %v6704
    %v6976 = vunpack.c.h.b16 %v6704
    %v6977 = vunpack.c.l.b16 %v6705
    %v6978 = vunpack.c.h.b16 %v6705
    %v6979 = vunpack.c.l.b16 %v6706
    %v6980 = vunpack.c.h.b16 %v6706
    %v6981 = vunpack.c.l.b16 %v6707
    %v6982 = vunpack.c.h.b16 %v6707
    %v6983 = vunpack.c.l.b16 %v6708
    %v6984 = vunpack.c.h.b16 %v6708
    %v6985 = vunpack.c.l.b16 %v6709
    %v6986 = vunpack.c.h.b16 %v6709
    %v6987 = vunpack.c.l.b16 %v6710
    %v6988 = vunpack.c.h.b16 %v6710
    %v6989 = vunpack.c.l.b16 %v6711
    %v6990 = vunpack.c.h.b16 %v6711
    %v6991 = vunpack.c.l.b16 %v6712
    %v6992 = vunpack.c.h.b16 %v6712
    %v6993 = vunpack.c.l.b16 %v6713
    %v6994 = vunpack.c.h.b16 %v6713
    %v6995 = vunpack.c.l.b16 %v6714
    %v6996 = vunpack.c.h.b16 %v6714
    %v6997 = vunpack.c.l.b16 %v6715
    %v6998 = vunpack.c.h.b16 %v6715
    %v6999 = vunpack.c.l.b16 %v6716
    %v7000 = vunpack.c.h.b16 %v6716
    %v7001 = vunpack.c.l.b16 %v6717
    %v7002 = vunpack.c.h.b16 %v6717
    %v7003 = vunpack.c.l.b16 %v6718
    %v7004 = vunpack.c.h.b16 %v6718
    %v7005 = vunpack.c.l.b16 %v6719
    %v7006 = vunpack.c.h.b16 %v6719
    %v7007 = vunpack.c.l.b16 %v6720
    %v7008 = vunpack.c.h.b16 %v6720
    %v7009 = vpack.c.b16 %v6823, %v6817
    %v7010 = vpack.c.b16 %v6824, %v6818
    %v7011 = vpack.c.b16 %v6825, %v6819
    %v7012 = vpack.c.b16 %v6826, %v6820
    %v7013 = vpack.c.b16 %v6827, %v6821
    %v7014 = vpack.c.b16 %v6828, %v6822
    %v7015 = vpack.c.b16 %v6835, %v6829
    %v7016 = vpack.c.b16 %v6836, %v6830
    %v7017 = vpack.c.b16 %v6837, %v6831
    %v7018 = vpack.c.b16 %v6838, %v6832
    %v7019 = vpack.c.b16 %v6839, %v6833
    %v7020 = vpack.c.b16 %v6840, %v6834
    %v7021 = vpack.c.b16 %v6847, %v6841
    %v7022 = vpack.c.b16 %v6848, %v6842
    %v7023 = vpack.c.b16 %v6849, %v6843
    %v7024 = vpack.c.b16 %v6850, %v6844
    %v7025 = vpack.c.b16 %v6851, %v6845
    %v7026 = vpack.c.b16 %v6852, %v6846
    %v7027 = vpack.c.b16 %v6859, %v6853
    %v7028 = vpack.c.b16 %v6860, %v6854
    %v7029 = vpack.c.b16 %v6861, %v6855
    %v7030 = vpack.c.b16 %v6862, %v6856
    %v7031 = vpack.c.b16 %v6863, %v6857
    %v7032 = vpack.c.b16 %v6864, %v6858
    %v7033 = vpack.c.b16 %v6871, %v6865
    %v7034 = vpack.c.b16 %v6872, %v6866
    %v7035 = vpack.c.b16 %v6873, %v6867
    %v7036 = vpack.c.b16 %v6874, %v6868
    %v7037 = vpack.c.b16 %v6875, %v6869
    %v7038 = vpack.c.b16 %v6876, %v6870
    %v7039 = vpack.c.b16 %v6883, %v6877
    %v7040 = vpack.c.b16 %v6884, %v6878
    %v7041 = vpack.c.b16 %v6885, %v6879
    %v7042 = vpack.c.b16 %v6886, %v6880
    %v7043 = vpack.c.b16 %v6887, %v6881
    %v7044 = vpack.c.b16 %v6888, %v6882
    %v7045 = vpack.c.b16 %v6895, %v6889
    %v7046 = vpack.c.b16 %v6896, %v6890
    %v7047 = vpack.c.b16 %v6897, %v6891
    %v7048 = vpack.c.b16 %v6898, %v6892
    %v7049 = vpack.c.b16 %v6899, %v6893
    %v7050 = vpack.c.b16 %v6900, %v6894
    %v7051 = vpack.c.b16 %v6907, %v6901
    %v7052 = vpack.c.b16 %v6908, %v6902
    %v7053 = vpack.c.b16 %v6909, %v6903
    %v7054 = vpack.c.b16 %v6910, %v6904
    %v7055 = vpack.c.b16 %v6911, %v6905
    %v7056 = vpack.c.b16 %v6912, %v6906
    %v7057 = vpack.c.b16 %v6919, %v6913
    %v7058 = vpack.c.b16 %v6920, %v6914
    %v7059 = vpack.c.b16 %v6921, %v6915
    %v7060 = vpack.c.b16 %v6922, %v6916
    %v7061 = vpack.c.b16 %v6923, %v6917
    %v7062 = vpack.c.b16 %v6924, %v6918
    %v7063 = vpack.c.b16 %v6931, %v6925
    %v7064 = vpack.c.b16 %v6932, %v6926
    %v7065 = vpack.c.b16 %v6933, %v6927
    %v7066 = vpack.c.b16 %v6934, %v6928
    %v7067 = vpack.c.b16 %v6935, %v6929
    %v7068 = vpack.c.b16 %v6936, %v6930
    %v7069 = vpack.c.b16 %v6943, %v6937
    %v7070 = vpack.c.b16 %v6944, %v6938
    %v7071 = vpack.c.b16 %v6945, %v6939
    %v7072 = vpack.c.b16 %v6946, %v6940
    %v7073 = vpack.c.b16 %v6947, %v6941
    %v7074 = vpack.c.b16 %v6948, %v6942
    %v7075 = vpack.c.b16 %v6955, %v6949
    %v7076 = vpack.c.b16 %v6956, %v6950
    %v7077 = vpack.c.b16 %v6957, %v6951
    %v7078 = vpack.c.b16 %v6958, %v6952
    %v7079 = vpack.c.b16 %v6959, %v6953
    %v7080 = vpack.c.b16 %v6960, %v6954
    %v7081 = vpack.c.b16 %v6967, %v6961
    %v7082 = vpack.c.b16 %v6968, %v6962
    %v7083 = vpack.c.b16 %v6969, %v6963
    %v7084 = vpack.c.b16 %v6970, %v6964
    %v7085 = vpack.c.b16 %v6971, %v6965
    %v7086 = vpack.c.b16 %v6972, %v6966
    %v7087 = vpack.c.b16 %v6979, %v6973
    %v7088 = vpack.c.b16 %v6980, %v6974
    %v7089 = vpack.c.b16 %v6981, %v6975
    %v7090 = vpack.c.b16 %v6982, %v6976
    %v7091 = vpack.c.b16 %v6983, %v6977
    %v7092 = vpack.c.b16 %v6984, %v6978
    %v7093 = vpack.c.b16 %v6991, %v6985
    %v7094 = vpack.c.b16 %v6992, %v6986
    %v7095 = vpack.c.b16 %v6993, %v6987
    %v7096 = vpack.c.b16 %v6994, %v6988
    %v7097 = vpack.c.b16 %v6995, %v6989
    %v7098 = vpack.c.b16 %v6996, %v6990
    %v7099 = vpack.c.b16 %v7003, %v6997
    %v7100 = vpack.c.b16 %v7004, %v6998
    %v7101 = vpack.c.b16 %v7005, %v6999
    %v7102 = vpack.c.b16 %v7006, %v7000
    %v7103 = vpack.c.b16 %v7007, %v7001
    %v7104 = vpack.c.b16 %v7008, %v7002
    %7201 = vmatprep.subr.bf16.mxu0 %v7052
    %7202 = vmatpush1.bf16.msra.mxu0 %v7051
    %7203 = vmatprep.subr.bf16.mxu0 %v7046
    %7204 = vmatpush1.bf16.msra.mxu0 %v7045
    %7205 = vmatprep.subr.bf16.mxu0 %v7040
    %7206 = vmatpush1.bf16.msra.mxu0 %v7039
    %7207 = vmatprep.subr.bf16.mxu0 %v7034
    %7208 = vmatpush1.bf16.msra.mxu0 %v7033
    %7209 = vmatprep.subr.bf16.mxu0 %v7028
    %7210 = vmatpush1.bf16.msra.mxu0 %v7027
    %7211 = vmatprep.subr.bf16.mxu0 %v7022
    %7212 = vmatpush1.bf16.msra.mxu0 %v7021
    %7213 = vmatprep.subr.bf16.mxu0 %v7016
    %7214 = vmatpush1.bf16.msra.mxu0 %v7015
    %7215 = vmatprep.subr.bf16.mxu0 %v7010
    %7216 = vmatpush1.bf16.msra.mxu0 %v7009
    %7217 = vmatprep.subr.bf16.mxu0 %v7100
    %7218 = vmatpush2.bf16.msra.mxu0 %v7099
    %7219 = vmatprep.subr.bf16.mxu0 %v7094
    %7220 = vmatpush2.bf16.msra.mxu0 %v7093
    %7221 = vmatprep.subr.bf16.mxu0 %v7088
    %7222 = vmatpush2.bf16.msra.mxu0 %v7087
    %7223 = vmatprep.subr.bf16.mxu0 %v7082
    %7224 = vmatpush2.bf16.msra.mxu0 %v7081
    %7225 = vmatprep.subr.bf16.mxu0 %v7076
    %7226 = vmatpush2.bf16.msra.mxu0 %v7075
    %7227 = vmatprep.subr.bf16.mxu0 %v7070
    %7228 = vmatpush2.bf16.msra.mxu0 %v7069
    %7229 = vmatprep.subr.bf16.mxu0 %v7064
    %7230 = vmatpush2.bf16.msra.mxu0 %v7063
    %7231 = vmatprep.subr.bf16.mxu0 %v7058
    %7232 = vmatpush2.bf16.msra.mxu0 %v7057
    %7233 = vmatprep.mubr.bf16.mxu0 %v6624
    %7234 = vmatmul.mubr.bf16.gmra.mxu0 %v6623
    %v7235 = vpop.f32.mrf.mxu0
    %v7236 = vadd.f32 0.0, %v7235
    %v7237 = vpop.f32.mrf.mxu0
    %v7238 = vadd.f32 0.0, %v7237
    %v7239 = vpop.f32.mrf.mxu0
    %v7240 = vpop.f32.mrf.mxu0
    %7241 = vdwg.mxu0
    %7242 = vmatprep.subr.bf16.mxu0 %v7054
    %7243 = vmatpush1.bf16.msra.mxu0 %v7053
    %7244 = vmatprep.subr.bf16.mxu0 %v7048
    %7245 = vmatpush1.bf16.msra.mxu0 %v7047
    %7246 = vmatprep.subr.bf16.mxu0 %v7042
    %7247 = vmatpush1.bf16.msra.mxu0 %v7041
    %7248 = vmatprep.subr.bf16.mxu0 %v7036
    %7249 = vmatpush1.bf16.msra.mxu0 %v7035
    %7250 = vmatprep.subr.bf16.mxu0 %v7030
    %7251 = vmatpush1.bf16.msra.mxu0 %v7029
    %7252 = vmatprep.subr.bf16.mxu0 %v7024
    %7253 = vmatpush1.bf16.msra.mxu0 %v7023
    %7254 = vmatprep.subr.bf16.mxu0 %v7018
    %7255 = vmatpush1.bf16.msra.mxu0 %v7017
    %7256 = vmatprep.subr.bf16.mxu0 %v7012
    %7257 = vmatpush1.bf16.msra.mxu0 %v7011
    %7258 = vmatprep.subr.bf16.mxu0 %v7102
    %7259 = vmatpush2.bf16.msra.mxu0 %v7101
    %7260 = vmatprep.subr.bf16.mxu0 %v7096
    %7261 = vmatpush2.bf16.msra.mxu0 %v7095
    %7262 = vmatprep.subr.bf16.mxu0 %v7090
    %7263 = vmatpush2.bf16.msra.mxu0 %v7089
    %7264 = vmatprep.subr.bf16.mxu0 %v7084
    %7265 = vmatpush2.bf16.msra.mxu0 %v7083
    %7266 = vmatprep.subr.bf16.mxu0 %v7078
    %7267 = vmatpush2.bf16.msra.mxu0 %v7077
    %7268 = vmatprep.subr.bf16.mxu0 %v7072
    %7269 = vmatpush2.bf16.msra.mxu0 %v7071
    %7270 = vmatprep.subr.bf16.mxu0 %v7066
    %7271 = vmatpush2.bf16.msra.mxu0 %v7065
    %7272 = vmatprep.subr.bf16.mxu0 %v7060
    %7273 = vmatpush2.bf16.msra.mxu0 %v7059
    %7274 = vmatprep.mubr.bf16.mxu0 %v6624
    %7275 = vmatmul.mubr.bf16.gmra.mxu0 %v6623
    %v7276 = vpop.f32.mrf.mxu0
    %v7277 = vadd.f32 0.0, %v7276
    %v7278 = vpop.f32.mrf.mxu0
    %v7279 = vadd.f32 0.0, %v7278
    %v7280 = vpop.f32.mrf.mxu0
    %v7281 = vpop.f32.mrf.mxu0
    %7282 = vdwg.mxu0
    %7283 = vmatprep.subr.bf16.mxu0 %v7056
    %7284 = vmatpush1.bf16.msra.mxu0 %v7055
    %7285 = vmatprep.subr.bf16.mxu0 %v7050
    %7286 = vmatpush1.bf16.msra.mxu0 %v7049
    %7287 = vmatprep.subr.bf16.mxu0 %v7044
    %7288 = vmatpush1.bf16.msra.mxu0 %v7043
    %7289 = vmatprep.subr.bf16.mxu0 %v7038
    %7290 = vmatpush1.bf16.msra.mxu0 %v7037
    %7291 = vmatprep.subr.bf16.mxu0 %v7032
    %7292 = vmatpush1.bf16.msra.mxu0 %v7031
    %7293 = vmatprep.subr.bf16.mxu0 %v7026
    %7294 = vmatpush1.bf16.msra.mxu0 %v7025
    %7295 = vmatprep.subr.bf16.mxu0 %v7020
    %7296 = vmatpush1.bf16.msra.mxu0 %v7019
    %7297 = vmatprep.subr.bf16.mxu0 %v7014
    %7298 = vmatpush1.bf16.msra.mxu0 %v7013
    %7299 = vmatprep.subr.bf16.mxu0 %v7104
    %7300 = vmatpush2.bf16.msra.mxu0 %v7103
    %7301 = vmatprep.subr.bf16.mxu0 %v7098
    %7302 = vmatpush2.bf16.msra.mxu0 %v7097
    %7303 = vmatprep.subr.bf16.mxu0 %v7092
    %7304 = vmatpush2.bf16.msra.mxu0 %v7091
    %7305 = vmatprep.subr.bf16.mxu0 %v7086
    %7306 = vmatpush2.bf16.msra.mxu0 %v7085
    %7307 = vmatprep.subr.bf16.mxu0 %v7080
    %7308 = vmatpush2.bf16.msra.mxu0 %v7079
    %7309 = vmatprep.subr.bf16.mxu0 %v7074
    %7310 = vmatpush2.bf16.msra.mxu0 %v7073
    %7311 = vmatprep.subr.bf16.mxu0 %v7068
    %7312 = vmatpush2.bf16.msra.mxu0 %v7067
    %7313 = vmatprep.subr.bf16.mxu0 %v7062
    %7314 = vmatpush2.bf16.msra.mxu0 %v7061
    %7315 = vmatprep.mubr.bf16.mxu0 %v6624
    %7316 = vmatmul.mubr.bf16.gmra.mxu0 %v6623
    %v7317 = vpop.f32.mrf.mxu0
    %v7318 = vadd.f32 0.0, %v7317
    %v7319 = vpop.f32.mrf.mxu0
    %v7320 = vadd.f32 0.0, %v7319
    %v7321 = vpop.f32.mrf.mxu0
    %v7322 = vpop.f32.mrf.mxu0
    %7323 = vdwg.mxu0
    %v7326 = vcombine.low %v7236, %v7238
    %v7328 = vunpack.c.l.s4 1966171168
    %v7329 = vunpack.c.0.s8 %v7328
    %v7330 = vlaneseq
    %v7331 = vshrl.u32 %v7330, 7
    %v7332 = vsub.s32 %v7329, %v7331
    %v7333 = vrot.slane %v7326, %v7332
    %v7335 = vunpack.c.l.s4 1966171168
    %v7336 = vunpack.c.0.s8 %v7335
    %v7337 = vlaneseq
    %v7338 = vshrl.u32 %v7337, 7
    %v7339 = vsub.s32 %v7336, %v7338
    %v7340 = vrot.slane %v7333, %v7339
    %v7342 = vadd.f32 %v6611, %v7340
    %v7343 = vxor.u32 %v7342, 2147483648
    %v7344 = vmul.f32 %v7343, 1.442695
    %v7345 = vpow.pop %v7344
    %v7346 = vadd.f32 %v7345, 1.0
    %v7347 = vrcp.pop %v7346
    %v7348 = vmul.f32 1.0, %v7347
    %v7350 = vrot.slane %v6611, 2
    %v7354 = vcombine.low %v7277, %v7279
    %v7356 = vunpack.c.l.s4 1966171168
    %v7357 = vunpack.c.0.s8 %v7356
    %v7358 = vlaneseq
    %v7359 = vshrl.u32 %v7358, 7
    %v7360 = vsub.s32 %v7357, %v7359
    %v7361 = vrot.slane %v7354, %v7360
    %v7363 = vunpack.c.l.s4 1966171168
    %v7364 = vunpack.c.0.s8 %v7363
    %v7365 = vlaneseq
    %v7366 = vshrl.u32 %v7365, 7
    %v7367 = vsub.s32 %v7364, %v7366
    %v7368 = vrot.slane %v7361, %v7367
    %v7370 = vadd.f32 %v7350, %v7368
    %v7371 = vxor.u32 %v7370, 2147483648
    %v7372 = vmul.f32 %v7371, 1.442695
    %v7373 = vpow.pop %v7372
    %v7374 = vadd.f32 %v7373, 1.0
    %v7375 = vrcp.pop %v7374
    %v7376 = vmul.f32 1.0, %v7375
    %v7377 = vld [vmem:[%s5] sm:$0x3]
    %v7379 = vlaneseq
    %v7380 = vshrl.u32 %v7379, 7
    %v7381 = vsub.s32 0, %v7380
    %v7382 = vrot.slane %v7377, %v7381
    %v7383 = vlaneseq
    %v7384 = vshrl.u32 %v7383, 7
    %v7385 = vsub.s32 1, %v7384
    %v7386 = vrot.slane %v7377, %v7385
    %v7389 = vadd.f32 %v7318, %v7382
    %v7390 = vadd.f32 %v7320, %v7386
    %v7393 = vcombine.low %v7389, %v7390
    %v7395 = vunpack.c.l.s4 1966171168
    %v7396 = vunpack.c.0.s8 %v7395
    %v7397 = vlaneseq
    %v7398 = vshrl.u32 %v7397, 7
    %v7399 = vsub.s32 %v7396, %v7398
    %v7400 = vrot.slane %v7393, %v7399
    %v7402 = vunpack.c.l.s4 1966171168
    %v7403 = vunpack.c.0.s8 %v7402
    %v7404 = vlaneseq
    %v7405 = vshrl.u32 %v7404, 7
    %v7406 = vsub.s32 %v7403, %v7405
    %v7407 = vrot.slane %v7400, %v7406
    %v7409 = vmul.f32 %v7348, %v7407
    %v7410 = vrot.slane %v6611, 4
    %v7412 = vadd.f32 %v7410, %v7409
    %v7413 = vtanh.pop %v7412
    %v7414 = vsub.f32 1.0, %v7376
    %v7415 = vmul.f32 %v7414, %v7413
    %v7416 = vmul.f32 %v7376, %v6604
    %v7417 = vadd.f32 %v7415, %v7416
    %s7418 = scalar_lea.vmem [#allocation12], 7
    %7419 = vst.msk [vmem:[%s7418] ss:$8 sm:$0x3] %vm83, %v7417
    %7420 = vst.msk [vmem:[%s7418] ss:$8 sm:$0x0] %vm83, %v7417
    // Predicated region
    $region38: #{gru_sequence_pallas.1} parent=1 // pred_check
      _
    $region39: #{gru_sequence_pallas.1} parent=1 // pred_check_branch
      %7422 = sbr.rel (0) target = $region41
    $region40: #{gru_sequence_pallas.1} parent=1 // pred_region
      %s7424 = ssub.s32 256, 256
      %7425 = vsyncadd [#allocation8], %s7424
      %s7427 = sshll.u32 [#allocation12], 4
      %s7428 = int_to_ptr.vmem [resolvable:$true] %s7427
      %7430 = dma.vmem_to_hbm [thread:$0]  %s7428, 256, %s7, [#allocation8]
    $region41: #{gru_sequence_pallas.1} parent=1 // pred_fallthru
      _
    // Predicated region
    $region42: #{gru_sequence_pallas.1} parent=1 // pred_check
      _
    $region43: #{gru_sequence_pallas.1} parent=1 // pred_check_branch
      %7432 = sbr.rel (0) target = $region45
    $region44: #{gru_sequence_pallas.1} parent=1 // pred_region
      %7433 = dma.done [#allocation8], 256
    $region45: #{gru_sequence_pallas.1} parent=1 // pred_fallthru
      _
    %7434 = vsyncpa [#allocation7], 1
    %7435 = vsyncpa [#allocation10], 1
    %7436 = vsyncpa [#allocation8], 1

</llo_original>
